<compile_context>
chip_gen: v6e
topology: v6e:2x2x1
jax: 0.10.0
libtpu: 0.0.40
codegen_flags: <defaults>
</compile_context>

<pallas_src>
import functools

import numpy as np
import jax
import jax.numpy as jnp
from jax import lax
from jax.experimental import pallas as pl
from jax.experimental.pallas import tpu as pltpu


def _round_up(x, m):
    return (x + m - 1) // m * m


# ---------------------------------------------------------------------------
# Fused Pallas kernel: conv-as-matmul + bias + ReLU + FC + bias
# ---------------------------------------------------------------------------
def _convnet_fused_kernel(patches_ref, conv_w_ref, conv_b_ref, fc_w_ref, fc_b_ref,
                          out_ref, act_ref, *, bb, P):
    # patches: [bb*P, Kpad] bf16   conv_w: [Kpad, Fpad] bf16   conv_b: [1, Fpad] f32
    # fc_w:    [P, Fpad, Npad] bf16 (resident)                 fc_b:   [1, Npad] f32
    # out:     [bb, Npad] f32      act (scratch): [bb, P, Fpad] bf16
    Fpad = conv_w_ref.shape[-1]
    Npad = fc_w_ref.shape[-1]

    # --- conv hot path: one MXU matmul over the whole tile, f32 accumulation,
    #     f32 bias+ReLU epilogue (v5e has no bf16 VPU). ---
    act = jnp.dot(patches_ref[...], conv_w_ref[...],
                  preferred_element_type=jnp.float32)              # [bb*P, Fpad]
    act = jnp.maximum(act + conv_b_ref[...], 0.0)
    # Conv activations stay in VMEM (never written back to HBM).  Leading-dim split
    # (P % 8 == 0, Fpad = 128) is layout-preserving.
    act_ref[...] = act.astype(jnp.bfloat16).reshape(bb, P, Fpad)

    # --- fused FC: logits[b, n] = sum_p act[b, p, :] @ fc_w[p, :, n]  (the PyTorch
    #     channel-major flatten is already folded into fc_w's (p, f) layout).
    #     Static unroll over the P spatial positions -> P small lane-dense MXU dots
    #     contracting only the Fpad axis. ---
    acc = jnp.zeros((bb, Npad), jnp.float32)
    for p in range(P):
        acc = acc + jnp.dot(act_ref[:, p, :], fc_w_ref[p],
                            preferred_element_type=jnp.float32)
    out_ref[...] = acc + fc_b_ref[...]


def _fused_forward(patches, conv_wt, conv_b, fc_wk, fc_b, *, bb, P, Npad,
                   vmem_limit_bytes=32 * 1024 * 1024):
    Mp, Kpad = patches.shape
    Fpad = conv_wt.shape[-1]
    Bp = Mp // P
    assert Bp % bb == 0, (Bp, bb)
    grid = (Bp // bb,)

    flops = 2 * Mp * Kpad * Fpad + 2 * Mp * Fpad * Npad
    bytes_accessed = int(Mp * Kpad * 2 + Kpad * Fpad * 2 + Fpad * 4
                         + P * Fpad * Npad * 2 + Npad * 4 + Bp * Npad * 4)

    return pl.pallas_call(
        functools.partial(_convnet_fused_kernel, bb=bb, P=P),
        out_shape=jax.ShapeDtypeStruct((Bp, Npad), jnp.float32),
        grid=grid,
        in_specs=[
            pl.BlockSpec((bb * P, Kpad), lambda i: (i, 0)),      # patch stream (M-tiled)
            pl.BlockSpec((Kpad, Fpad), lambda i: (0, 0)),        # conv weight resident
            pl.BlockSpec((1, Fpad), lambda i: (0, 0)),           # conv bias resident
            pl.BlockSpec((P, Fpad, Npad), lambda i: (0, 0, 0)),  # fc weight resident (~2 MiB)
            pl.BlockSpec((1, Npad), lambda i: (0, 0)),           # fc bias resident
        ],
        out_specs=pl.BlockSpec((bb, Npad), lambda i: (i, 0)),
        scratch_shapes=[pltpu.VMEM((bb, P, Fpad), jnp.bfloat16)],  # conv acts, VMEM-only
        compiler_params=pltpu.CompilerParams(
            dimension_semantics=("parallel",),                   # megacore-shard image tiles
            vmem_limit_bytes=vmem_limit_bytes,
        ),
        cost_estimate=pl.CostEstimate(flops=flops, transcendentals=0,
                                      bytes_accessed=bytes_accessed),
    )(patches, conv_wt, conv_b, fc_wk, fc_b)


# ---------------------------------------------------------------------------
# Parameters: init (matches module shapes) + one-time prep (transpose/pad/permute)
# ---------------------------------------------------------------------------
def init_convnet_params(key, nb_filters, channels):
    ksize = 11 if channels == 3 else 7
    k1, k2, k3, k4 = jax.random.split(key, 4)
    fan_in_c = channels * ksize * ksize
    fan_in_f = nb_filters * 8 * 8               # module hardcodes 8x8 spatial output
    conv_w = jax.random.uniform(k1, (nb_filters, channels, ksize, ksize), jnp.float32,
                                -1.0 / np.sqrt(fan_in_c), 1.0 / np.sqrt(fan_in_c))
    conv_b = jax.random.uniform(k2, (nb_filters,), jnp.float32,
                                -1.0 / np.sqrt(fan_in_c), 1.0 / np.sqrt(fan_in_c))
    fc_w = jax.random.uniform(k3, (10, fan_in_f), jnp.float32,
                              -1.0 / np.sqrt(fan_in_f), 1.0 / np.sqrt(fan_in_f))
    fc_b = jax.random.uniform(k4, (10,), jnp.float32,
                              -1.0 / np.sqrt(fan_in_f), 1.0 / np.sqrt(fan_in_f))
    return dict(conv_w=conv_w, conv_b=conv_b, fc_w=fc_w, fc_b=fc_b)


def prep_convnet_params(params, *, stride=3):
    """One-time layout prep: per-channel (kh,kw)-pad + transpose of the conv weight,
    128-lane padding of filters/logits, and the PyTorch channel-major flatten folded
    into a (p, f)-indexed FC weight."""
    conv_w, conv_b = params["conv_w"], params["conv_b"]
    fc_w, fc_b = params["fc_w"], params["fc_b"]
    F, C, KH, KW = conv_w.shape
    KK = KH * KW
    KKpad = _round_up(KK, 128)                  # 121 -> 128 per channel
    Kpad = C * KKpad                            # 384 (lane-dense, matches patch layout)
    Fpad = _round_up(F, 128)
    N_out, FP = fc_w.shape
    P = FP // F                                 # OH*OW = 64
    Npad = _round_up(N_out, 128)

    # conv: [F, C, KH, KW] -> per-channel pad of the (kh,kw) axis -> [Kpad, Fpad] bf16
    w = conv_w.reshape(F, C, KK)
    w = jnp.pad(w, ((0, 0), (0, 0), (0, KKpad - KK))).reshape(F, Kpad)
    conv_wt = jnp.pad(w.T, ((0, 0), (0, Fpad - F))).astype(jnp.bfloat16)
    conv_bp = jnp.pad(conv_b, (0, Fpad - F)).reshape(1, Fpad).astype(jnp.float32)
    # The padded filter lanes MUST stay exactly 0 through bias+ReLU; the fused FC
    # relies on it (its padded fc_wk rows are also 0, so this is doubly safe).
    pad_bias = conv_bp[0, F:]
    assert pad_bias.size == 0 or float(jnp.max(jnp.abs(pad_bias))) == 0.0

    # fc: original column index is f*P + p (channel-major flatten).  The kernel holds
    # activations as [b, p, f], so store the weight as fc_wk[p, f, n] = fc_w[n, f*P+p].
    fc_w3 = jnp.transpose(fc_w.reshape(N_out, F, P), (2, 1, 0))        # [P, F, 10]
    fc_wk = jnp.pad(fc_w3, ((0, 0), (0, Fpad - F), (0, Npad - N_out))).astype(jnp.bfloat16)
    fc_bp = jnp.pad(fc_b, (0, Npad - N_out)).reshape(1, Npad).astype(jnp.float32)

    meta = dict(F=F, C=C, KH=KH, KW=KW, KK=KK, KKpad=KKpad, Kpad=Kpad, Fpad=Fpad,
                P=P, N_out=N_out, Npad=Npad, stride=stride)
    return dict(conv_wt=conv_wt, conv_b=conv_bp, fc_wk=fc_wk, fc_b=fc_bp, meta=meta)


# ---------------------------------------------------------------------------
# Forward
# ---------------------------------------------------------------------------
def _extract_patches(x, KH, KW, KKpad, stride, OH, OW):
    """im2col via static strided slices (no XLA gather), with the K padding folded
    into the stack (zero slabs) so there is no second pad pass over the patch matrix.
    x: [B, C, H, W] -> [B*OH*OW, C*KKpad], columns ordered (c, kh*KW+kw)."""
    B, C, _, _ = x.shape
    slabs = [x[:, :,
               kh: kh + stride * (OH - 1) + 1: stride,
               kw: kw + stride * (OW - 1) + 1: stride]            # [B, C, OH, OW]
             for kh in range(KH) for kw in range(KW)]
    if KKpad > KH * KW:
        slabs = slabs + [jnp.zeros_like(slabs[0])] * (KKpad - KH * KW)
    p = jnp.stack(slabs, axis=2)                                  # [B, C, KKpad, OH, OW]
    p = jnp.transpose(p, (0, 3, 4, 1, 2))                         # [B, OH, OW, C, KKpad]
    return p.reshape(B * OH * OW, C * KKpad)


def _tile_plan(B, bb_max=32):
    """-> (Bp, bb): images per grid step.  bb | Bp (no patch-matrix padding), bb % 8 == 0
    whenever bb < Bp (keeps the (8,128) block rule on the output), and Bp // bb >= 2
    when possible so both v7x TensorCores get work under ("parallel",)."""
    if B <= bb_max:
        for bb in range(B // 2, 7, -1):          # split small batches without padding
            if B % bb == 0 and bb % 8 == 0:
                return B, bb
        return B, B                               # single full block (== full array dims)
    Bp = _round_up(B, 8)                          # cheap pad of raw x, not of the patches
    for bb in range(min(bb_max, Bp // 2), 7, -1):
        if Bp % bb == 0 and bb % 8 == 0:
            return Bp, bb
    return Bp, 8


def convnet_forward(x, prepped, *, bb_max=32):
    m = prepped["meta"]
    B, C, H, W = x.shape
    assert C == m["C"]
    stride, KH, KW = m["stride"], m["KH"], m["KW"]
    OH = (H - KH) // stride + 1
    OW = (W - KW) // stride + 1
    assert OH * OW == m["P"], (OH, OW, m["P"])

    Bp, bb = _tile_plan(B, bb_max)

    # --- layout glue (XLA): bf16 cast, optional batch pad on raw x (cheap), and
    #     strided-slice im2col with the K padding folded into the same fusion ---
    xb = x.astype(jnp.bfloat16)
    if Bp != B:
        xb = jnp.pad(xb, ((0, Bp - B), (0, 0), (0, 0), (0, 0)))
    patches = _extract_patches(xb, KH, KW, m["KKpad"], stride, OH, OW)   # [Bp*P, Kpad]

    # --- fused conv+ReLU+FC Pallas kernel (single HBM pass over the activations) ---
    logits = _fused_forward(patches, prepped["conv_wt"], prepped["conv_b"],
                            prepped["fc_wk"], prepped["fc_b"],
                            bb=bb, P=m["P"], Npad=m["Npad"])             # [Bp, Npad]
    return logits[:B, :m["N_out"]]


def convnet_reference(x, params, *, stride=3):
    """Pure-JAX f32 reference mirroring the PyTorch forward."""
    conv_w, conv_b = params["conv_w"], params["conv_b"]
    fc_w, fc_b = params["fc_w"], params["fc_b"]
    y = lax.conv_general_dilated(
        x, conv_w, window_strides=(stride, stride), padding="VALID",
        dimension_numbers=("NCHW", "OIHW", "NCHW"))
    y = jnp.maximum(y + conv_b[None, :, None, None], 0.0)
    y = y.reshape(x.shape[0], -1)               # NCHW flatten == view(-1, F*8*8)
    return y @ fc_w.T + fc_b[None, :]


if __name__ == "__main__":
    nb_filters = 4
    channels = 3
    B, H, W = 16, 32, 32         # (32 - 11) // 3 + 1 = 8 -> fc input F*8*8; 2 grid steps

    key = jax.random.PRNGKey(0)
    kx, kp = jax.random.split(key)
    x = jax.random.normal(kx, (B, channels, H, W), jnp.float32)
    params = init_convnet_params(kp, nb_filters, channels)
    prepped = prep_convnet_params(params)

    fwd = jax.jit(lambda xx: convnet_forward(xx, prepped))
    out = jax.block_until_ready(fwd(x))
    ref = jax.block_until_ready(convnet_reference(x, params))

    assert out.shape == (B, 10), out.shape
    # bf16 MXU operands (f32 accumulation) vs f32 reference: relaxed but tight tol.
    np.testing.assert_allclose(np.asarray(out), np.asarray(ref), rtol=2e-2, atol=2e-2)
    print("KERNEL_OK")
</pallas_src>

<mosaic_0001>
module attributes {stable_mosaic.version = 11 : i64} {
  func.func @_convnet_fused_kernel(%arg0: i32, %arg1: memref<512x384xbf16, #tpu.memory_space<vmem>>, %arg2: memref<384x128xbf16, #tpu.memory_space<vmem>>, %arg3: memref<1x128xf32, #tpu.memory_space<vmem>>, %arg4: memref<64x128x128xbf16, #tpu.memory_space<vmem>>, %arg5: memref<1x128xf32, #tpu.memory_space<vmem>>, %arg6: memref<8x128xf32, #tpu.memory_space<vmem>>, %arg7: memref<8x64x128xbf16, #tpu.memory_space<vmem>>) attributes {dimension_semantics = [#tpu.dimension_semantics<parallel>], iteration_bounds = array<i64: 2>, scalar_prefetch = 0 : i64, scratch_operands = 1 : i64, tpu.core_type = #tpu.core_type<tc>, window_params = [{transform_indices = @transform_0, window_bounds = array<i64: 512, 384>}, {pipeline_mode = #tpu.pipeline_mode<synchronous>, transform_indices = @transform_1, window_bounds = array<i64: 384, 128>}, {pipeline_mode = #tpu.pipeline_mode<synchronous>, transform_indices = @transform_2, window_bounds = array<i64: 1, 128>}, {pipeline_mode = #tpu.pipeline_mode<synchronous>, transform_indices = @transform_3, window_bounds = array<i64: 64, 128, 128>}, {pipeline_mode = #tpu.pipeline_mode<synchronous>, transform_indices = @transform_4, window_bounds = array<i64: 1, 128>}, {transform_indices = @transform_5, window_bounds = array<i64: 8, 128>}]} {
    %c0 = arith.constant 0 : index
    %c0_0 = arith.constant 0 : index
    %0 = vector.load %arg1[%c0, %c0_0] : memref<512x384xbf16, #tpu.memory_space<vmem>>, vector<512x384xbf16>
    %c0_1 = arith.constant 0 : index
    %c0_2 = arith.constant 0 : index
    %1 = vector.load %arg2[%c0_1, %c0_2] : memref<384x128xbf16, #tpu.memory_space<vmem>>, vector<384x128xbf16>
    %cst = arith.constant dense<0.000000e+00> : vector<512x128xf32>
    %2 = tpu.matmul %0, %1, %cst {dimension_numbers = #tpu.dot_dimension_numbers<[1], [0], [0], [1], [0, 0, 1, 1], [], []>} : vector<512x384xbf16>, vector<384x128xbf16>, vector<512x128xf32> -> vector<512x128xf32>
    %c0_3 = arith.constant 0 : index
    %c0_4 = arith.constant 0 : index
    %3 = vector.load %arg3[%c0_3, %c0_4] : memref<1x128xf32, #tpu.memory_space<vmem>>, vector<1x128xf32>
    %4 = vector.broadcast %3 : vector<1x128xf32> to vector<512x128xf32>
    %5 = arith.addf %2, %4 : vector<512x128xf32>
    %cst_5 = arith.constant 0.000000e+00 : f32
    %6 = vector.broadcast %cst_5 : f32 to vector<512x128xf32>
    %7 = arith.maximumf %5, %6 : vector<512x128xf32>
    %8 = arith.truncf %7 : vector<512x128xf32> to vector<512x128xbf16>
    %9 = vector.shape_cast %8 : vector<512x128xbf16> to vector<8x64x128xbf16>
    %c0_6 = arith.constant 0 : index
    %c0_7 = arith.constant 0 : index
    %c0_8 = arith.constant 0 : index
    %10 = vector.load %arg7[%c0_6, %c0_7, %c0_8] : memref<8x64x128xbf16, #tpu.memory_space<vmem>>, vector<8x64x128xbf16>
    tpu.vector_store %arg7[%c0_6, %c0_7, %c0_8], %9 {strides = array<i32>} : memref<8x64x128xbf16, #tpu.memory_space<vmem>>, vector<8x64x128xbf16>,
    %cst_9 = arith.constant 0.000000e+00 : f32
    %11 = vector.broadcast %cst_9 : f32 to vector<8x128xf32>
    %c0_10 = arith.constant 0 : index
    %c0_11 = arith.constant 0 : index
    %c0_12 = arith.constant 0 : index
    %12 = vector.load %arg7[%c0_10, %c0_11, %c0_12] : memref<8x64x128xbf16, #tpu.memory_space<vmem>>, vector<8x1x128xbf16>
    %13 = vector.shape_cast %12 : vector<8x1x128xbf16> to vector<8x128xbf16>
    %c0_13 = arith.constant 0 : index
    %c0_14 = arith.constant 0 : index
    %c0_15 = arith.constant 0 : index
    %14 = vector.load %arg4[%c0_13, %c0_14, %c0_15] : memref<64x128x128xbf16, #tpu.memory_space<vmem>>, vector<1x128x128xbf16>
    %15 = vector.shape_cast %14 : vector<1x128x128xbf16> to vector<128x128xbf16>
    %cst_16 = arith.constant dense<0.000000e+00> : vector<8x128xf32>
    %16 = tpu.matmul %13, %15, %cst_16 {dimension_numbers = #tpu.dot_dimension_numbers<[1], [0], [0], [1], [0, 0, 1, 1], [], []>} : vector<8x128xbf16>, vector<128x128xbf16>, vector<8x128xf32> -> vector<8x128xf32>
    %17 = arith.addf %11, %16 : vector<8x128xf32>
    %c0_17 = arith.constant 0 : index
    %c1 = arith.constant 1 : index
    %c0_18 = arith.constant 0 : index
    %18 = vector.load %arg7[%c0_17, %c1, %c0_18] : memref<8x64x128xbf16, #tpu.memory_space<vmem>>, vector<8x1x128xbf16>
    %19 = vector.shape_cast %18 : vector<8x1x128xbf16> to vector<8x128xbf16>
    %c1_19 = arith.constant 1 : index
    %c0_20 = arith.constant 0 : index
    %c0_21 = arith.constant 0 : index
    %20 = vector.load %arg4[%c1_19, %c0_20, %c0_21] : memref<64x128x128xbf16, #tpu.memory_space<vmem>>, vector<1x128x128xbf16>
    %21 = vector.shape_cast %20 : vector<1x128x128xbf16> to vector<128x128xbf16>
    %cst_22 = arith.constant dense<0.000000e+00> : vector<8x128xf32>
    %22 = tpu.matmul %19, %21, %cst_22 {dimension_numbers = #tpu.dot_dimension_numbers<[1], [0], [0], [1], [0, 0, 1, 1], [], []>} : vector<8x128xbf16>, vector<128x128xbf16>, vector<8x128xf32> -> vector<8x128xf32>
    %23 = arith.addf %17, %22 : vector<8x128xf32>
    %c0_23 = arith.constant 0 : index
    %c2 = arith.constant 2 : index
    %c0_24 = arith.constant 0 : index
    %24 = vector.load %arg7[%c0_23, %c2, %c0_24] : memref<8x64x128xbf16, #tpu.memory_space<vmem>>, vector<8x1x128xbf16>
    %25 = vector.shape_cast %24 : vector<8x1x128xbf16> to vector<8x128xbf16>
    %c2_25 = arith.constant 2 : index
    %c0_26 = arith.constant 0 : index
    %c0_27 = arith.constant 0 : index
    %26 = vector.load %arg4[%c2_25, %c0_26, %c0_27] : memref<64x128x128xbf16, #tpu.memory_space<vmem>>, vector<1x128x128xbf16>
    %27 = vector.shape_cast %26 : vector<1x128x128xbf16> to vector<128x128xbf16>
    %cst_28 = arith.constant dense<0.000000e+00> : vector<8x128xf32>
    %28 = tpu.matmul %25, %27, %cst_28 {dimension_numbers = #tpu.dot_dimension_numbers<[1], [0], [0], [1], [0, 0, 1, 1], [], []>} : vector<8x128xbf16>, vector<128x128xbf16>, vector<8x128xf32> -> vector<8x128xf32>
    %29 = arith.addf %23, %28 : vector<8x128xf32>
    %c0_29 = arith.constant 0 : index
    %c3 = arith.constant 3 : index
    %c0_30 = arith.constant 0 : index
    %30 = vector.load %arg7[%c0_29, %c3, %c0_30] : memref<8x64x128xbf16, #tpu.memory_space<vmem>>, vector<8x1x128xbf16>
    %31 = vector.shape_cast %30 : vector<8x1x128xbf16> to vector<8x128xbf16>
    %c3_31 = arith.constant 3 : index
    %c0_32 = arith.constant 0 : index
    %c0_33 = arith.constant 0 : index
    %32 = vector.load %arg4[%c3_31, %c0_32, %c0_33] : memref<64x128x128xbf16, #tpu.memory_space<vmem>>, vector<1x128x128xbf16>
    %33 = vector.shape_cast %32 : vector<1x128x128xbf16> to vector<128x128xbf16>
    %cst_34 = arith.constant dense<0.000000e+00> : vector<8x128xf32>
    %34 = tpu.matmul %31, %33, %cst_34 {dimension_numbers = #tpu.dot_dimension_numbers<[1], [0], [0], [1], [0, 0, 1, 1], [], []>} : vector<8x128xbf16>, vector<128x128xbf16>, vector<8x128xf32> -> vector<8x128xf32>
    %35 = arith.addf %29, %34 : vector<8x128xf32>
    %c0_35 = arith.constant 0 : index
    %c4 = arith.constant 4 : index
    %c0_36 = arith.constant 0 : index
    %36 = vector.load %arg7[%c0_35, %c4, %c0_36] : memref<8x64x128xbf16, #tpu.memory_space<vmem>>, vector<8x1x128xbf16>
    %37 = vector.shape_cast %36 : vector<8x1x128xbf16> to vector<8x128xbf16>
    %c4_37 = arith.constant 4 : index
    %c0_38 = arith.constant 0 : index
    %c0_39 = arith.constant 0 : index
    %38 = vector.load %arg4[%c4_37, %c0_38, %c0_39] : memref<64x128x128xbf16, #tpu.memory_space<vmem>>, vector<1x128x128xbf16>
    %39 = vector.shape_cast %38 : vector<1x128x128xbf16> to vector<128x128xbf16>
    %cst_40 = arith.constant dense<0.000000e+00> : vector<8x128xf32>
    %40 = tpu.matmul %37, %39, %cst_40 {dimension_numbers = #tpu.dot_dimension_numbers<[1], [0], [0], [1], [0, 0, 1, 1], [], []>} : vector<8x128xbf16>, vector<128x128xbf16>, vector<8x128xf32> -> vector<8x128xf32>
    %41 = arith.addf %35, %40 : vector<8x128xf32>
    %c0_41 = arith.constant 0 : index
    %c5 = arith.constant 5 : index
    %c0_42 = arith.constant 0 : index
    %42 = vector.load %arg7[%c0_41, %c5, %c0_42] : memref<8x64x128xbf16, #tpu.memory_space<vmem>>, vector<8x1x128xbf16>
    %43 = vector.shape_cast %42 : vector<8x1x128xbf16> to vector<8x128xbf16>
    %c5_43 = arith.constant 5 : index
    %c0_44 = arith.constant 0 : index
    %c0_45 = arith.constant 0 : index
    %44 = vector.load %arg4[%c5_43, %c0_44, %c0_45] : memref<64x128x128xbf16, #tpu.memory_space<vmem>>, vector<1x128x128xbf16>
    %45 = vector.shape_cast %44 : vector<1x128x128xbf16> to vector<128x128xbf16>
    %cst_46 = arith.constant dense<0.000000e+00> : vector<8x128xf32>
    %46 = tpu.matmul %43, %45, %cst_46 {dimension_numbers = #tpu.dot_dimension_numbers<[1], [0], [0], [1], [0, 0, 1, 1], [], []>} : vector<8x128xbf16>, vector<128x128xbf16>, vector<8x128xf32> -> vector<8x128xf32>
    %47 = arith.addf %41, %46 : vector<8x128xf32>
    %c0_47 = arith.constant 0 : index
    %c6 = arith.constant 6 : index
    %c0_48 = arith.constant 0 : index
    %48 = vector.load %arg7[%c0_47, %c6, %c0_48] : memref<8x64x128xbf16, #tpu.memory_space<vmem>>, vector<8x1x128xbf16>
    %49 = vector.shape_cast %48 : vector<8x1x128xbf16> to vector<8x128xbf16>
    %c6_49 = arith.constant 6 : index
    %c0_50 = arith.constant 0 : index
    %c0_51 = arith.constant 0 : index
    %50 = vector.load %arg4[%c6_49, %c0_50, %c0_51] : memref<64x128x128xbf16, #tpu.memory_space<vmem>>, vector<1x128x128xbf16>
    %51 = vector.shape_cast %50 : vector<1x128x128xbf16> to vector<128x128xbf16>
    %cst_52 = arith.constant dense<0.000000e+00> : vector<8x128xf32>
    %52 = tpu.matmul %49, %51, %cst_52 {dimension_numbers = #tpu.dot_dimension_numbers<[1], [0], [0], [1], [0, 0, 1, 1], [], []>} : vector<8x128xbf16>, vector<128x128xbf16>, vector<8x128xf32> -> vector<8x128xf32>
    %53 = arith.addf %47, %52 : vector<8x128xf32>
    %c0_53 = arith.constant 0 : index
    %c7 = arith.constant 7 : index
    %c0_54 = arith.constant 0 : index
    %54 = vector.load %arg7[%c0_53, %c7, %c0_54] : memref<8x64x128xbf16, #tpu.memory_space<vmem>>, vector<8x1x128xbf16>
    %55 = vector.shape_cast %54 : vector<8x1x128xbf16> to vector<8x128xbf16>
    %c7_55 = arith.constant 7 : index
    %c0_56 = arith.constant 0 : index
    %c0_57 = arith.constant 0 : index
    %56 = vector.load %arg4[%c7_55, %c0_56, %c0_57] : memref<64x128x128xbf16, #tpu.memory_space<vmem>>, vector<1x128x128xbf16>
    %57 = vector.shape_cast %56 : vector<1x128x128xbf16> to vector<128x128xbf16>
    %cst_58 = arith.constant dense<0.000000e+00> : vector<8x128xf32>
    %58 = tpu.matmul %55, %57, %cst_58 {dimension_numbers = #tpu.dot_dimension_numbers<[1], [0], [0], [1], [0, 0, 1, 1], [], []>} : vector<8x128xbf16>, vector<128x128xbf16>, vector<8x128xf32> -> vector<8x128xf32>
    %59 = arith.addf %53, %58 : vector<8x128xf32>
    %c0_59 = arith.constant 0 : index
    %c8 = arith.constant 8 : index
    %c0_60 = arith.constant 0 : index
    %60 = vector.load %arg7[%c0_59, %c8, %c0_60] : memref<8x64x128xbf16, #tpu.memory_space<vmem>>, vector<8x1x128xbf16>
    %61 = vector.shape_cast %60 : vector<8x1x128xbf16> to vector<8x128xbf16>
    %c8_61 = arith.constant 8 : index
    %c0_62 = arith.constant 0 : index
    %c0_63 = arith.constant 0 : index
    %62 = vector.load %arg4[%c8_61, %c0_62, %c0_63] : memref<64x128x128xbf16, #tpu.memory_space<vmem>>, vector<1x128x128xbf16>
    %63 = vector.shape_cast %62 : vector<1x128x128xbf16> to vector<128x128xbf16>
    %cst_64 = arith.constant dense<0.000000e+00> : vector<8x128xf32>
    %64 = tpu.matmul %61, %63, %cst_64 {dimension_numbers = #tpu.dot_dimension_numbers<[1], [0], [0], [1], [0, 0, 1, 1], [], []>} : vector<8x128xbf16>, vector<128x128xbf16>, vector<8x128xf32> -> vector<8x128xf32>
    %65 = arith.addf %59, %64 : vector<8x128xf32>
    %c0_65 = arith.constant 0 : index
    %c9 = arith.constant 9 : index
    %c0_66 = arith.constant 0 : index
    %66 = vector.load %arg7[%c0_65, %c9, %c0_66] : memref<8x64x128xbf16, #tpu.memory_space<vmem>>, vector<8x1x128xbf16>
    %67 = vector.shape_cast %66 : vector<8x1x128xbf16> to vector<8x128xbf16>
    %c9_67 = arith.constant 9 : index
    %c0_68 = arith.constant 0 : index
    %c0_69 = arith.constant 0 : index
    %68 = vector.load %arg4[%c9_67, %c0_68, %c0_69] : memref<64x128x128xbf16, #tpu.memory_space<vmem>>, vector<1x128x128xbf16>
    %69 = vector.shape_cast %68 : vector<1x128x128xbf16> to vector<128x128xbf16>
    %cst_70 = arith.constant dense<0.000000e+00> : vector<8x128xf32>
    %70 = tpu.matmul %67, %69, %cst_70 {dimension_numbers = #tpu.dot_dimension_numbers<[1], [0], [0], [1], [0, 0, 1, 1], [], []>} : vector<8x128xbf16>, vector<128x128xbf16>, vector<8x128xf32> -> vector<8x128xf32>
    %71 = arith.addf %65, %70 : vector<8x128xf32>
    %c0_71 = arith.constant 0 : index
    %c10 = arith.constant 10 : index
    %c0_72 = arith.constant 0 : index
    %72 = vector.load %arg7[%c0_71, %c10, %c0_72] : memref<8x64x128xbf16, #tpu.memory_space<vmem>>, vector<8x1x128xbf16>
    %73 = vector.shape_cast %72 : vector<8x1x128xbf16> to vector<8x128xbf16>
    %c10_73 = arith.constant 10 : index
    %c0_74 = arith.constant 0 : index
    %c0_75 = arith.constant 0 : index
    %74 = vector.load %arg4[%c10_73, %c0_74, %c0_75] : memref<64x128x128xbf16, #tpu.memory_space<vmem>>, vector<1x128x128xbf16>
    %75 = vector.shape_cast %74 : vector<1x128x128xbf16> to vector<128x128xbf16>
    %cst_76 = arith.constant dense<0.000000e+00> : vector<8x128xf32>
    %76 = tpu.matmul %73, %75, %cst_76 {dimension_numbers = #tpu.dot_dimension_numbers<[1], [0], [0], [1], [0, 0, 1, 1], [], []>} : vector<8x128xbf16>, vector<128x128xbf16>, vector<8x128xf32> -> vector<8x128xf32>
    %77 = arith.addf %71, %76 : vector<8x128xf32>
    %c0_77 = arith.constant 0 : index
    %c11 = arith.constant 11 : index
    %c0_78 = arith.constant 0 : index
    %78 = vector.load %arg7[%c0_77, %c11, %c0_78] : memref<8x64x128xbf16, #tpu.memory_space<vmem>>, vector<8x1x128xbf16>
    %79 = vector.shape_cast %78 : vector<8x1x128xbf16> to vector<8x128xbf16>
    %c11_79 = arith.constant 11 : index
    %c0_80 = arith.constant 0 : index
    %c0_81 = arith.constant 0 : index
    %80 = vector.load %arg4[%c11_79, %c0_80, %c0_81] : memref<64x128x128xbf16, #tpu.memory_space<vmem>>, vector<1x128x128xbf16>
    %81 = vector.shape_cast %80 : vector<1x128x128xbf16> to vector<128x128xbf16>
    %cst_82 = arith.constant dense<0.000000e+00> : vector<8x128xf32>
    %82 = tpu.matmul %79, %81, %cst_82 {dimension_numbers = #tpu.dot_dimension_numbers<[1], [0], [0], [1], [0, 0, 1, 1], [], []>} : vector<8x128xbf16>, vector<128x128xbf16>, vector<8x128xf32> -> vector<8x128xf32>
    %83 = arith.addf %77, %82 : vector<8x128xf32>
    %c0_83 = arith.constant 0 : index
    %c12 = arith.constant 12 : index
    %c0_84 = arith.constant 0 : index
    %84 = vector.load %arg7[%c0_83, %c12, %c0_84] : memref<8x64x128xbf16, #tpu.memory_space<vmem>>, vector<8x1x128xbf16>
    %85 = vector.shape_cast %84 : vector<8x1x128xbf16> to vector<8x128xbf16>
    %c12_85 = arith.constant 12 : index
    %c0_86 = arith.constant 0 : index
    %c0_87 = arith.constant 0 : index
    %86 = vector.load %arg4[%c12_85, %c0_86, %c0_87] : memref<64x128x128xbf16, #tpu.memory_space<vmem>>, vector<1x128x128xbf16>
    %87 = vector.shape_cast %86 : vector<1x128x128xbf16> to vector<128x128xbf16>
    %cst_88 = arith.constant dense<0.000000e+00> : vector<8x128xf32>
    %88 = tpu.matmul %85, %87, %cst_88 {dimension_numbers = #tpu.dot_dimension_numbers<[1], [0], [0], [1], [0, 0, 1, 1], [], []>} : vector<8x128xbf16>, vector<128x128xbf16>, vector<8x128xf32> -> vector<8x128xf32>
    %89 = arith.addf %83, %88 : vector<8x128xf32>
    %c0_89 = arith.constant 0 : index
    %c13 = arith.constant 13 : index
    %c0_90 = arith.constant 0 : index
    %90 = vector.load %arg7[%c0_89, %c13, %c0_90] : memref<8x64x128xbf16, #tpu.memory_space<vmem>>, vector<8x1x128xbf16>
    %91 = vector.shape_cast %90 : vector<8x1x128xbf16> to vector<8x128xbf16>
    %c13_91 = arith.constant 13 : index
    %c0_92 = arith.constant 0 : index
    %c0_93 = arith.constant 0 : index
    %92 = vector.load %arg4[%c13_91, %c0_92, %c0_93] : memref<64x128x128xbf16, #tpu.memory_space<vmem>>, vector<1x128x128xbf16>
    %93 = vector.shape_cast %92 : vector<1x128x128xbf16> to vector<128x128xbf16>
    %cst_94 = arith.constant dense<0.000000e+00> : vector<8x128xf32>
    %94 = tpu.matmul %91, %93, %cst_94 {dimension_numbers = #tpu.dot_dimension_numbers<[1], [0], [0], [1], [0, 0, 1, 1], [], []>} : vector<8x128xbf16>, vector<128x128xbf16>, vector<8x128xf32> -> vector<8x128xf32>
    %95 = arith.addf %89, %94 : vector<8x128xf32>
    %c0_95 = arith.constant 0 : index
    %c14 = arith.constant 14 : index
    %c0_96 = arith.constant 0 : index
    %96 = vector.load %arg7[%c0_95, %c14, %c0_96] : memref<8x64x128xbf16, #tpu.memory_space<vmem>>, vector<8x1x128xbf16>
    %97 = vector.shape_cast %96 : vector<8x1x128xbf16> to vector<8x128xbf16>
    %c14_97 = arith.constant 14 : index
    %c0_98 = arith.constant 0 : index
    %c0_99 = arith.constant 0 : index
    %98 = vector.load %arg4[%c14_97, %c0_98, %c0_99] : memref<64x128x128xbf16, #tpu.memory_space<vmem>>, vector<1x128x128xbf16>
    %99 = vector.shape_cast %98 : vector<1x128x128xbf16> to vector<128x128xbf16>
    %cst_100 = arith.constant dense<0.000000e+00> : vector<8x128xf32>
    %100 = tpu.matmul %97, %99, %cst_100 {dimension_numbers = #tpu.dot_dimension_numbers<[1], [0], [0], [1], [0, 0, 1, 1], [], []>} : vector<8x128xbf16>, vector<128x128xbf16>, vector<8x128xf32> -> vector<8x128xf32>
    %101 = arith.addf %95, %100 : vector<8x128xf32>
    %c0_101 = arith.constant 0 : index
    %c15 = arith.constant 15 : index
    %c0_102 = arith.constant 0 : index
    %102 = vector.load %arg7[%c0_101, %c15, %c0_102] : memref<8x64x128xbf16, #tpu.memory_space<vmem>>, vector<8x1x128xbf16>
    %103 = vector.shape_cast %102 : vector<8x1x128xbf16> to vector<8x128xbf16>
    %c15_103 = arith.constant 15 : index
    %c0_104 = arith.constant 0 : index
    %c0_105 = arith.constant 0 : index
    %104 = vector.load %arg4[%c15_103, %c0_104, %c0_105] : memref<64x128x128xbf16, #tpu.memory_space<vmem>>, vector<1x128x128xbf16>
    %105 = vector.shape_cast %104 : vector<1x128x128xbf16> to vector<128x128xbf16>
    %cst_106 = arith.constant dense<0.000000e+00> : vector<8x128xf32>
    %106 = tpu.matmul %103, %105, %cst_106 {dimension_numbers = #tpu.dot_dimension_numbers<[1], [0], [0], [1], [0, 0, 1, 1], [], []>} : vector<8x128xbf16>, vector<128x128xbf16>, vector<8x128xf32> -> vector<8x128xf32>
    %107 = arith.addf %101, %106 : vector<8x128xf32>
    %c0_107 = arith.constant 0 : index
    %c16 = arith.constant 16 : index
    %c0_108 = arith.constant 0 : index
    %108 = vector.load %arg7[%c0_107, %c16, %c0_108] : memref<8x64x128xbf16, #tpu.memory_space<vmem>>, vector<8x1x128xbf16>
    %109 = vector.shape_cast %108 : vector<8x1x128xbf16> to vector<8x128xbf16>
    %c16_109 = arith.constant 16 : index
    %c0_110 = arith.constant 0 : index
    %c0_111 = arith.constant 0 : index
    %110 = vector.load %arg4[%c16_109, %c0_110, %c0_111] : memref<64x128x128xbf16, #tpu.memory_space<vmem>>, vector<1x128x128xbf16>
    %111 = vector.shape_cast %110 : vector<1x128x128xbf16> to vector<128x128xbf16>
    %cst_112 = arith.constant dense<0.000000e+00> : vector<8x128xf32>
    %112 = tpu.matmul %109, %111, %cst_112 {dimension_numbers = #tpu.dot_dimension_numbers<[1], [0], [0], [1], [0, 0, 1, 1], [], []>} : vector<8x128xbf16>, vector<128x128xbf16>, vector<8x128xf32> -> vector<8x128xf32>
    %113 = arith.addf %107, %112 : vector<8x128xf32>
    %c0_113 = arith.constant 0 : index
    %c17 = arith.constant 17 : index
    %c0_114 = arith.constant 0 : index
    %114 = vector.load %arg7[%c0_113, %c17, %c0_114] : memref<8x64x128xbf16, #tpu.memory_space<vmem>>, vector<8x1x128xbf16>
    %115 = vector.shape_cast %114 : vector<8x1x128xbf16> to vector<8x128xbf16>
    %c17_115 = arith.constant 17 : index
    %c0_116 = arith.constant 0 : index
    %c0_117 = arith.constant 0 : index
    %116 = vector.load %arg4[%c17_115, %c0_116, %c0_117] : memref<64x128x128xbf16, #tpu.memory_space<vmem>>, vector<1x128x128xbf16>
    %117 = vector.shape_cast %116 : vector<1x128x128xbf16> to vector<128x128xbf16>
    %cst_118 = arith.constant dense<0.000000e+00> : vector<8x128xf32>
    %118 = tpu.matmul %115, %117, %cst_118 {dimension_numbers = #tpu.dot_dimension_numbers<[1], [0], [0], [1], [0, 0, 1, 1], [], []>} : vector<8x128xbf16>, vector<128x128xbf16>, vector<8x128xf32> -> vector<8x128xf32>
    %119 = arith.addf %113, %118 : vector<8x128xf32>
    %c0_119 = arith.constant 0 : index
    %c18 = arith.constant 18 : index
    %c0_120 = arith.constant 0 : index
    %120 = vector.load %arg7[%c0_119, %c18, %c0_120] : memref<8x64x128xbf16, #tpu.memory_space<vmem>>, vector<8x1x128xbf16>
    %121 = vector.shape_cast %120 : vector<8x1x128xbf16> to vector<8x128xbf16>
    %c18_121 = arith.constant 18 : index
    %c0_122 = arith.constant 0 : index
    %c0_123 = arith.constant 0 : index
    %122 = vector.load %arg4[%c18_121, %c0_122, %c0_123] : memref<64x128x128xbf16, #tpu.memory_space<vmem>>, vector<1x128x128xbf16>
    %123 = vector.shape_cast %122 : vector<1x128x128xbf16> to vector<128x128xbf16>
    %cst_124 = arith.constant dense<0.000000e+00> : vector<8x128xf32>
    %124 = tpu.matmul %121, %123, %cst_124 {dimension_numbers = #tpu.dot_dimension_numbers<[1], [0], [0], [1], [0, 0, 1, 1], [], []>} : vector<8x128xbf16>, vector<128x128xbf16>, vector<8x128xf32> -> vector<8x128xf32>
    %125 = arith.addf %119, %124 : vector<8x128xf32>
    %c0_125 = arith.constant 0 : index
    %c19 = arith.constant 19 : index
    %c0_126 = arith.constant 0 : index
    %126 = vector.load %arg7[%c0_125, %c19, %c0_126] : memref<8x64x128xbf16, #tpu.memory_space<vmem>>, vector<8x1x128xbf16>
    %127 = vector.shape_cast %126 : vector<8x1x128xbf16> to vector<8x128xbf16>
    %c19_127 = arith.constant 19 : index
    %c0_128 = arith.constant 0 : index
    %c0_129 = arith.constant 0 : index
    %128 = vector.load %arg4[%c19_127, %c0_128, %c0_129] : memref<64x128x128xbf16, #tpu.memory_space<vmem>>, vector<1x128x128xbf16>
    %129 = vector.shape_cast %128 : vector<1x128x128xbf16> to vector<128x128xbf16>
    %cst_130 = arith.constant dense<0.000000e+00> : vector<8x128xf32>
    %130 = tpu.matmul %127, %129, %cst_130 {dimension_numbers = #tpu.dot_dimension_numbers<[1], [0], [0], [1], [0, 0, 1, 1], [], []>} : vector<8x128xbf16>, vector<128x128xbf16>, vector<8x128xf32> -> vector<8x128xf32>
    %131 = arith.addf %125, %130 : vector<8x128xf32>
    %c0_131 = arith.constant 0 : index
    %c20 = arith.constant 20 : index
    %c0_132 = arith.constant 0 : index
    %132 = vector.load %arg7[%c0_131, %c20, %c0_132] : memref<8x64x128xbf16, #tpu.memory_space<vmem>>, vector<8x1x128xbf16>
    %133 = vector.shape_cast %132 : vector<8x1x128xbf16> to vector<8x128xbf16>
    %c20_133 = arith.constant 20 : index
    %c0_134 = arith.constant 0 : index
    %c0_135 = arith.constant 0 : index
    %134 = vector.load %arg4[%c20_133, %c0_134, %c0_135] : memref<64x128x128xbf16, #tpu.memory_space<vmem>>, vector<1x128x128xbf16>
    %135 = vector.shape_cast %134 : vector<1x128x128xbf16> to vector<128x128xbf16>
    %cst_136 = arith.constant dense<0.000000e+00> : vector<8x128xf32>
    %136 = tpu.matmul %133, %135, %cst_136 {dimension_numbers = #tpu.dot_dimension_numbers<[1], [0], [0], [1], [0, 0, 1, 1], [], []>} : vector<8x128xbf16>, vector<128x128xbf16>, vector<8x128xf32> -> vector<8x128xf32>
    %137 = arith.addf %131, %136 : vector<8x128xf32>
    %c0_137 = arith.constant 0 : index
    %c21 = arith.constant 21 : index
    %c0_138 = arith.constant 0 : index
    %138 = vector.load %arg7[%c0_137, %c21, %c0_138] : memref<8x64x128xbf16, #tpu.memory_space<vmem>>, vector<8x1x128xbf16>
    %139 = vector.shape_cast %138 : vector<8x1x128xbf16> to vector<8x128xbf16>
    %c21_139 = arith.constant 21 : index
    %c0_140 = arith.constant 0 : index
    %c0_141 = arith.constant 0 : index
    %140 = vector.load %arg4[%c21_139, %c0_140, %c0_141] : memref<64x128x128xbf16, #tpu.memory_space<vmem>>, vector<1x128x128xbf16>
    %141 = vector.shape_cast %140 : vector<1x128x128xbf16> to vector<128x128xbf16>
    %cst_142 = arith.constant dense<0.000000e+00> : vector<8x128xf32>
    %142 = tpu.matmul %139, %141, %cst_142 {dimension_numbers = #tpu.dot_dimension_numbers<[1], [0], [0], [1], [0, 0, 1, 1], [], []>} : vector<8x128xbf16>, vector<128x128xbf16>, vector<8x128xf32> -> vector<8x128xf32>
    %143 = arith.addf %137, %142 : vector<8x128xf32>
    %c0_143 = arith.constant 0 : index
    %c22 = arith.constant 22 : index
    %c0_144 = arith.constant 0 : index
    %144 = vector.load %arg7[%c0_143, %c22, %c0_144] : memref<8x64x128xbf16, #tpu.memory_space<vmem>>, vector<8x1x128xbf16>
    %145 = vector.shape_cast %144 : vector<8x1x128xbf16> to vector<8x128xbf16>
    %c22_145 = arith.constant 22 : index
    %c0_146 = arith.constant 0 : index
    %c0_147 = arith.constant 0 : index
    %146 = vector.load %arg4[%c22_145, %c0_146, %c0_147] : memref<64x128x128xbf16, #tpu.memory_space<vmem>>, vector<1x128x128xbf16>
    %147 = vector.shape_cast %146 : vector<1x128x128xbf16> to vector<128x128xbf16>
    %cst_148 = arith.constant dense<0.000000e+00> : vector<8x128xf32>
    %148 = tpu.matmul %145, %147, %cst_148 {dimension_numbers = #tpu.dot_dimension_numbers<[1], [0], [0], [1], [0, 0, 1, 1], [], []>} : vector<8x128xbf16>, vector<128x128xbf16>, vector<8x128xf32> -> vector<8x128xf32>
    %149 = arith.addf %143, %148 : vector<8x128xf32>
    %c0_149 = arith.constant 0 : index
    %c23 = arith.constant 23 : index
    %c0_150 = arith.constant 0 : index
    %150 = vector.load %arg7[%c0_149, %c23, %c0_150] : memref<8x64x128xbf16, #tpu.memory_space<vmem>>, vector<8x1x128xbf16>
    %151 = vector.shape_cast %150 : vector<8x1x128xbf16> to vector<8x128xbf16>
    %c23_151 = arith.constant 23 : index
    %c0_152 = arith.constant 0 : index
    %c0_153 = arith.constant 0 : index
    %152 = vector.load %arg4[%c23_151, %c0_152, %c0_153] : memref<64x128x128xbf16, #tpu.memory_space<vmem>>, vector<1x128x128xbf16>
    %153 = vector.shape_cast %152 : vector<1x128x128xbf16> to vector<128x128xbf16>
    %cst_154 = arith.constant dense<0.000000e+00> : vector<8x128xf32>
    %154 = tpu.matmul %151, %153, %cst_154 {dimension_numbers = #tpu.dot_dimension_numbers<[1], [0], [0], [1], [0, 0, 1, 1], [], []>} : vector<8x128xbf16>, vector<128x128xbf16>, vector<8x128xf32> -> vector<8x128xf32>
    %155 = arith.addf %149, %154 : vector<8x128xf32>
    %c0_155 = arith.constant 0 : index
    %c24 = arith.constant 24 : index
    %c0_156 = arith.constant 0 : index
    %156 = vector.load %arg7[%c0_155, %c24, %c0_156] : memref<8x64x128xbf16, #tpu.memory_space<vmem>>, vector<8x1x128xbf16>
    %157 = vector.shape_cast %156 : vector<8x1x128xbf16> to vector<8x128xbf16>
    %c24_157 = arith.constant 24 : index
    %c0_158 = arith.constant 0 : index
    %c0_159 = arith.constant 0 : index
    %158 = vector.load %arg4[%c24_157, %c0_158, %c0_159] : memref<64x128x128xbf16, #tpu.memory_space<vmem>>, vector<1x128x128xbf16>
    %159 = vector.shape_cast %158 : vector<1x128x128xbf16> to vector<128x128xbf16>
    %cst_160 = arith.constant dense<0.000000e+00> : vector<8x128xf32>
    %160 = tpu.matmul %157, %159, %cst_160 {dimension_numbers = #tpu.dot_dimension_numbers<[1], [0], [0], [1], [0, 0, 1, 1], [], []>} : vector<8x128xbf16>, vector<128x128xbf16>, vector<8x128xf32> -> vector<8x128xf32>
    %161 = arith.addf %155, %160 : vector<8x128xf32>
    %c0_161 = arith.constant 0 : index
    %c25 = arith.constant 25 : index
    %c0_162 = arith.constant 0 : index
    %162 = vector.load %arg7[%c0_161, %c25, %c0_162] : memref<8x64x128xbf16, #tpu.memory_space<vmem>>, vector<8x1x128xbf16>
    %163 = vector.shape_cast %162 : vector<8x1x128xbf16> to vector<8x128xbf16>
    %c25_163 = arith.constant 25 : index
    %c0_164 = arith.constant 0 : index
    %c0_165 = arith.constant 0 : index
    %164 = vector.load %arg4[%c25_163, %c0_164, %c0_165] : memref<64x128x128xbf16, #tpu.memory_space<vmem>>, vector<1x128x128xbf16>
    %165 = vector.shape_cast %164 : vector<1x128x128xbf16> to vector<128x128xbf16>
    %cst_166 = arith.constant dense<0.000000e+00> : vector<8x128xf32>
    %166 = tpu.matmul %163, %165, %cst_166 {dimension_numbers = #tpu.dot_dimension_numbers<[1], [0], [0], [1], [0, 0, 1, 1], [], []>} : vector<8x128xbf16>, vector<128x128xbf16>, vector<8x128xf32> -> vector<8x128xf32>
    %167 = arith.addf %161, %166 : vector<8x128xf32>
    %c0_167 = arith.constant 0 : index
    %c26 = arith.constant 26 : index
    %c0_168 = arith.constant 0 : index
    %168 = vector.load %arg7[%c0_167, %c26, %c0_168] : memref<8x64x128xbf16, #tpu.memory_space<vmem>>, vector<8x1x128xbf16>
    %169 = vector.shape_cast %168 : vector<8x1x128xbf16> to vector<8x128xbf16>
    %c26_169 = arith.constant 26 : index
    %c0_170 = arith.constant 0 : index
    %c0_171 = arith.constant 0 : index
    %170 = vector.load %arg4[%c26_169, %c0_170, %c0_171] : memref<64x128x128xbf16, #tpu.memory_space<vmem>>, vector<1x128x128xbf16>
    %171 = vector.shape_cast %170 : vector<1x128x128xbf16> to vector<128x128xbf16>
    %cst_172 = arith.constant dense<0.000000e+00> : vector<8x128xf32>
    %172 = tpu.matmul %169, %171, %cst_172 {dimension_numbers = #tpu.dot_dimension_numbers<[1], [0], [0], [1], [0, 0, 1, 1], [], []>} : vector<8x128xbf16>, vector<128x128xbf16>, vector<8x128xf32> -> vector<8x128xf32>
    %173 = arith.addf %167, %172 : vector<8x128xf32>
    %c0_173 = arith.constant 0 : index
    %c27 = arith.constant 27 : index
    %c0_174 = arith.constant 0 : index
    %174 = vector.load %arg7[%c0_173, %c27, %c0_174] : memref<8x64x128xbf16, #tpu.memory_space<vmem>>, vector<8x1x128xbf16>
    %175 = vector.shape_cast %174 : vector<8x1x128xbf16> to vector<8x128xbf16>
    %c27_175 = arith.constant 27 : index
    %c0_176 = arith.constant 0 : index
    %c0_177 = arith.constant 0 : index
    %176 = vector.load %arg4[%c27_175, %c0_176, %c0_177] : memref<64x128x128xbf16, #tpu.memory_space<vmem>>, vector<1x128x128xbf16>
    %177 = vector.shape_cast %176 : vector<1x128x128xbf16> to vector<128x128xbf16>
    %cst_178 = arith.constant dense<0.000000e+00> : vector<8x128xf32>
    %178 = tpu.matmul %175, %177, %cst_178 {dimension_numbers = #tpu.dot_dimension_numbers<[1], [0], [0], [1], [0, 0, 1, 1], [], []>} : vector<8x128xbf16>, vector<128x128xbf16>, vector<8x128xf32> -> vector<8x128xf32>
    %179 = arith.addf %173, %178 : vector<8x128xf32>
    %c0_179 = arith.constant 0 : index
    %c28 = arith.constant 28 : index
    %c0_180 = arith.constant 0 : index
    %180 = vector.load %arg7[%c0_179, %c28, %c0_180] : memref<8x64x128xbf16, #tpu.memory_space<vmem>>, vector<8x1x128xbf16>
    %181 = vector.shape_cast %180 : vector<8x1x128xbf16> to vector<8x128xbf16>
    %c28_181 = arith.constant 28 : index
    %c0_182 = arith.constant 0 : index
    %c0_183 = arith.constant 0 : index
    %182 = vector.load %arg4[%c28_181, %c0_182, %c0_183] : memref<64x128x128xbf16, #tpu.memory_space<vmem>>, vector<1x128x128xbf16>
    %183 = vector.shape_cast %182 : vector<1x128x128xbf16> to vector<128x128xbf16>
    %cst_184 = arith.constant dense<0.000000e+00> : vector<8x128xf32>
    %184 = tpu.matmul %181, %183, %cst_184 {dimension_numbers = #tpu.dot_dimension_numbers<[1], [0], [0], [1], [0, 0, 1, 1], [], []>} : vector<8x128xbf16>, vector<128x128xbf16>, vector<8x128xf32> -> vector<8x128xf32>
    %185 = arith.addf %179, %184 : vector<8x128xf32>
    %c0_185 = arith.constant 0 : index
    %c29 = arith.constant 29 : index
    %c0_186 = arith.constant 0 : index
    %186 = vector.load %arg7[%c0_185, %c29, %c0_186] : memref<8x64x128xbf16, #tpu.memory_space<vmem>>, vector<8x1x128xbf16>
    %187 = vector.shape_cast %186 : vector<8x1x128xbf16> to vector<8x128xbf16>
    %c29_187 = arith.constant 29 : index
    %c0_188 = arith.constant 0 : index
    %c0_189 = arith.constant 0 : index
    %188 = vector.load %arg4[%c29_187, %c0_188, %c0_189] : memref<64x128x128xbf16, #tpu.memory_space<vmem>>, vector<1x128x128xbf16>
    %189 = vector.shape_cast %188 : vector<1x128x128xbf16> to vector<128x128xbf16>
    %cst_190 = arith.constant dense<0.000000e+00> : vector<8x128xf32>
    %190 = tpu.matmul %187, %189, %cst_190 {dimension_numbers = #tpu.dot_dimension_numbers<[1], [0], [0], [1], [0, 0, 1, 1], [], []>} : vector<8x128xbf16>, vector<128x128xbf16>, vector<8x128xf32> -> vector<8x128xf32>
    %191 = arith.addf %185, %190 : vector<8x128xf32>
    %c0_191 = arith.constant 0 : index
    %c30 = arith.constant 30 : index
    %c0_192 = arith.constant 0 : index
    %192 = vector.load %arg7[%c0_191, %c30, %c0_192] : memref<8x64x128xbf16, #tpu.memory_space<vmem>>, vector<8x1x128xbf16>
    %193 = vector.shape_cast %192 : vector<8x1x128xbf16> to vector<8x128xbf16>
    %c30_193 = arith.constant 30 : index
    %c0_194 = arith.constant 0 : index
    %c0_195 = arith.constant 0 : index
    %194 = vector.load %arg4[%c30_193, %c0_194, %c0_195] : memref<64x128x128xbf16, #tpu.memory_space<vmem>>, vector<1x128x128xbf16>
    %195 = vector.shape_cast %194 : vector<1x128x128xbf16> to vector<128x128xbf16>
    %cst_196 = arith.constant dense<0.000000e+00> : vector<8x128xf32>
    %196 = tpu.matmul %193, %195, %cst_196 {dimension_numbers = #tpu.dot_dimension_numbers<[1], [0], [0], [1], [0, 0, 1, 1], [], []>} : vector<8x128xbf16>, vector<128x128xbf16>, vector<8x128xf32> -> vector<8x128xf32>
    %197 = arith.addf %191, %196 : vector<8x128xf32>
    %c0_197 = arith.constant 0 : index
    %c31 = arith.constant 31 : index
    %c0_198 = arith.constant 0 : index
    %198 = vector.load %arg7[%c0_197, %c31, %c0_198] : memref<8x64x128xbf16, #tpu.memory_space<vmem>>, vector<8x1x128xbf16>
    %199 = vector.shape_cast %198 : vector<8x1x128xbf16> to vector<8x128xbf16>
    %c31_199 = arith.constant 31 : index
    %c0_200 = arith.constant 0 : index
    %c0_201 = arith.constant 0 : index
    %200 = vector.load %arg4[%c31_199, %c0_200, %c0_201] : memref<64x128x128xbf16, #tpu.memory_space<vmem>>, vector<1x128x128xbf16>
    %201 = vector.shape_cast %200 : vector<1x128x128xbf16> to vector<128x128xbf16>
    %cst_202 = arith.constant dense<0.000000e+00> : vector<8x128xf32>
    %202 = tpu.matmul %199, %201, %cst_202 {dimension_numbers = #tpu.dot_dimension_numbers<[1], [0], [0], [1], [0, 0, 1, 1], [], []>} : vector<8x128xbf16>, vector<128x128xbf16>, vector<8x128xf32> -> vector<8x128xf32>
    %203 = arith.addf %197, %202 : vector<8x128xf32>
    %c0_203 = arith.constant 0 : index
    %c32 = arith.constant 32 : index
    %c0_204 = arith.constant 0 : index
    %204 = vector.load %arg7[%c0_203, %c32, %c0_204] : memref<8x64x128xbf16, #tpu.memory_space<vmem>>, vector<8x1x128xbf16>
    %205 = vector.shape_cast %204 : vector<8x1x128xbf16> to vector<8x128xbf16>
    %c32_205 = arith.constant 32 : index
    %c0_206 = arith.constant 0 : index
    %c0_207 = arith.constant 0 : index
    %206 = vector.load %arg4[%c32_205, %c0_206, %c0_207] : memref<64x128x128xbf16, #tpu.memory_space<vmem>>, vector<1x128x128xbf16>
    %207 = vector.shape_cast %206 : vector<1x128x128xbf16> to vector<128x128xbf16>
    %cst_208 = arith.constant dense<0.000000e+00> : vector<8x128xf32>
    %208 = tpu.matmul %205, %207, %cst_208 {dimension_numbers = #tpu.dot_dimension_numbers<[1], [0], [0], [1], [0, 0, 1, 1], [], []>} : vector<8x128xbf16>, vector<128x128xbf16>, vector<8x128xf32> -> vector<8x128xf32>
    %209 = arith.addf %203, %208 : vector<8x128xf32>
    %c0_209 = arith.constant 0 : index
    %c33 = arith.constant 33 : index
    %c0_210 = arith.constant 0 : index
    %210 = vector.load %arg7[%c0_209, %c33, %c0_210] : memref<8x64x128xbf16, #tpu.memory_space<vmem>>, vector<8x1x128xbf16>
    %211 = vector.shape_cast %210 : vector<8x1x128xbf16> to vector<8x128xbf16>
    %c33_211 = arith.constant 33 : index
    %c0_212 = arith.constant 0 : index
    %c0_213 = arith.constant 0 : index
    %212 = vector.load %arg4[%c33_211, %c0_212, %c0_213] : memref<64x128x128xbf16, #tpu.memory_space<vmem>>, vector<1x128x128xbf16>
    %213 = vector.shape_cast %212 : vector<1x128x128xbf16> to vector<128x128xbf16>
    %cst_214 = arith.constant dense<0.000000e+00> : vector<8x128xf32>
    %214 = tpu.matmul %211, %213, %cst_214 {dimension_numbers = #tpu.dot_dimension_numbers<[1], [0], [0], [1], [0, 0, 1, 1], [], []>} : vector<8x128xbf16>, vector<128x128xbf16>, vector<8x128xf32> -> vector<8x128xf32>
    %215 = arith.addf %209, %214 : vector<8x128xf32>
    %c0_215 = arith.constant 0 : index
    %c34 = arith.constant 34 : index
    %c0_216 = arith.constant 0 : index
    %216 = vector.load %arg7[%c0_215, %c34, %c0_216] : memref<8x64x128xbf16, #tpu.memory_space<vmem>>, vector<8x1x128xbf16>
    %217 = vector.shape_cast %216 : vector<8x1x128xbf16> to vector<8x128xbf16>
    %c34_217 = arith.constant 34 : index
    %c0_218 = arith.constant 0 : index
    %c0_219 = arith.constant 0 : index
    %218 = vector.load %arg4[%c34_217, %c0_218, %c0_219] : memref<64x128x128xbf16, #tpu.memory_space<vmem>>, vector<1x128x128xbf16>
    %219 = vector.shape_cast %218 : vector<1x128x128xbf16> to vector<128x128xbf16>
    %cst_220 = arith.constant dense<0.000000e+00> : vector<8x128xf32>
    %220 = tpu.matmul %217, %219, %cst_220 {dimension_numbers = #tpu.dot_dimension_numbers<[1], [0], [0], [1], [0, 0, 1, 1], [], []>} : vector<8x128xbf16>, vector<128x128xbf16>, vector<8x128xf32> -> vector<8x128xf32>
    %221 = arith.addf %215, %220 : vector<8x128xf32>
    %c0_221 = arith.constant 0 : index
    %c35 = arith.constant 35 : index
    %c0_222 = arith.constant 0 : index
    %222 = vector.load %arg7[%c0_221, %c35, %c0_222] : memref<8x64x128xbf16, #tpu.memory_space<vmem>>, vector<8x1x128xbf16>
    %223 = vector.shape_cast %222 : vector<8x1x128xbf16> to vector<8x128xbf16>
    %c35_223 = arith.constant 35 : index
    %c0_224 = arith.constant 0 : index
    %c0_225 = arith.constant 0 : index
    %224 = vector.load %arg4[%c35_223, %c0_224, %c0_225] : memref<64x128x128xbf16, #tpu.memory_space<vmem>>, vector<1x128x128xbf16>
    %225 = vector.shape_cast %224 : vector<1x128x128xbf16> to vector<128x128xbf16>
    %cst_226 = arith.constant dense<0.000000e+00> : vector<8x128xf32>
    %226 = tpu.matmul %223, %225, %cst_226 {dimension_numbers = #tpu.dot_dimension_numbers<[1], [0], [0], [1], [0, 0, 1, 1], [], []>} : vector<8x128xbf16>, vector<128x128xbf16>, vector<8x128xf32> -> vector<8x128xf32>
    %227 = arith.addf %221, %226 : vector<8x128xf32>
    %c0_227 = arith.constant 0 : index
    %c36 = arith.constant 36 : index
    %c0_228 = arith.constant 0 : index
    %228 = vector.load %arg7[%c0_227, %c36, %c0_228] : memref<8x64x128xbf16, #tpu.memory_space<vmem>>, vector<8x1x128xbf16>
    %229 = vector.shape_cast %228 : vector<8x1x128xbf16> to vector<8x128xbf16>
    %c36_229 = arith.constant 36 : index
    %c0_230 = arith.constant 0 : index
    %c0_231 = arith.constant 0 : index
    %230 = vector.load %arg4[%c36_229, %c0_230, %c0_231] : memref<64x128x128xbf16, #tpu.memory_space<vmem>>, vector<1x128x128xbf16>
    %231 = vector.shape_cast %230 : vector<1x128x128xbf16> to vector<128x128xbf16>
    %cst_232 = arith.constant dense<0.000000e+00> : vector<8x128xf32>
    %232 = tpu.matmul %229, %231, %cst_232 {dimension_numbers = #tpu.dot_dimension_numbers<[1], [0], [0], [1], [0, 0, 1, 1], [], []>} : vector<8x128xbf16>, vector<128x128xbf16>, vector<8x128xf32> -> vector<8x128xf32>
    %233 = arith.addf %227, %232 : vector<8x128xf32>
    %c0_233 = arith.constant 0 : index
    %c37 = arith.constant 37 : index
    %c0_234 = arith.constant 0 : index
    %234 = vector.load %arg7[%c0_233, %c37, %c0_234] : memref<8x64x128xbf16, #tpu.memory_space<vmem>>, vector<8x1x128xbf16>
    %235 = vector.shape_cast %234 : vector<8x1x128xbf16> to vector<8x128xbf16>
    %c37_235 = arith.constant 37 : index
    %c0_236 = arith.constant 0 : index
    %c0_237 = arith.constant 0 : index
    %236 = vector.load %arg4[%c37_235, %c0_236, %c0_237] : memref<64x128x128xbf16, #tpu.memory_space<vmem>>, vector<1x128x128xbf16>
    %237 = vector.shape_cast %236 : vector<1x128x128xbf16> to vector<128x128xbf16>
    %cst_238 = arith.constant dense<0.000000e+00> : vector<8x128xf32>
    %238 = tpu.matmul %235, %237, %cst_238 {dimension_numbers = #tpu.dot_dimension_numbers<[1], [0], [0], [1], [0, 0, 1, 1], [], []>} : vector<8x128xbf16>, vector<128x128xbf16>, vector<8x128xf32> -> vector<8x128xf32>
    %239 = arith.addf %233, %238 : vector<8x128xf32>
    %c0_239 = arith.constant 0 : index
    %c38 = arith.constant 38 : index
    %c0_240 = arith.constant 0 : index
    %240 = vector.load %arg7[%c0_239, %c38, %c0_240] : memref<8x64x128xbf16, #tpu.memory_space<vmem>>, vector<8x1x128xbf16>
    %241 = vector.shape_cast %240 : vector<8x1x128xbf16> to vector<8x128xbf16>
    %c38_241 = arith.constant 38 : index
    %c0_242 = arith.constant 0 : index
    %c0_243 = arith.constant 0 : index
    %242 = vector.load %arg4[%c38_241, %c0_242, %c0_243] : memref<64x128x128xbf16, #tpu.memory_space<vmem>>, vector<1x128x128xbf16>
    %243 = vector.shape_cast %242 : vector<1x128x128xbf16> to vector<128x128xbf16>
    %cst_244 = arith.constant dense<0.000000e+00> : vector<8x128xf32>
    %244 = tpu.matmul %241, %243, %cst_244 {dimension_numbers = #tpu.dot_dimension_numbers<[1], [0], [0], [1], [0, 0, 1, 1], [], []>} : vector<8x128xbf16>, vector<128x128xbf16>, vector<8x128xf32> -> vector<8x128xf32>
    %245 = arith.addf %239, %244 : vector<8x128xf32>
    %c0_245 = arith.constant 0 : index
    %c39 = arith.constant 39 : index
    %c0_246 = arith.constant 0 : index
    %246 = vector.load %arg7[%c0_245, %c39, %c0_246] : memref<8x64x128xbf16, #tpu.memory_space<vmem>>, vector<8x1x128xbf16>
    %247 = vector.shape_cast %246 : vector<8x1x128xbf16> to vector<8x128xbf16>
    %c39_247 = arith.constant 39 : index
    %c0_248 = arith.constant 0 : index
    %c0_249 = arith.constant 0 : index
    %248 = vector.load %arg4[%c39_247, %c0_248, %c0_249] : memref<64x128x128xbf16, #tpu.memory_space<vmem>>, vector<1x128x128xbf16>
    %249 = vector.shape_cast %248 : vector<1x128x128xbf16> to vector<128x128xbf16>
    %cst_250 = arith.constant dense<0.000000e+00> : vector<8x128xf32>
    %250 = tpu.matmul %247, %249, %cst_250 {dimension_numbers = #tpu.dot_dimension_numbers<[1], [0], [0], [1], [0, 0, 1, 1], [], []>} : vector<8x128xbf16>, vector<128x128xbf16>, vector<8x128xf32> -> vector<8x128xf32>
    %251 = arith.addf %245, %250 : vector<8x128xf32>
    %c0_251 = arith.constant 0 : index
    %c40 = arith.constant 40 : index
    %c0_252 = arith.constant 0 : index
    %252 = vector.load %arg7[%c0_251, %c40, %c0_252] : memref<8x64x128xbf16, #tpu.memory_space<vmem>>, vector<8x1x128xbf16>
    %253 = vector.shape_cast %252 : vector<8x1x128xbf16> to vector<8x128xbf16>
    %c40_253 = arith.constant 40 : index
    %c0_254 = arith.constant 0 : index
    %c0_255 = arith.constant 0 : index
    %254 = vector.load %arg4[%c40_253, %c0_254, %c0_255] : memref<64x128x128xbf16, #tpu.memory_space<vmem>>, vector<1x128x128xbf16>
    %255 = vector.shape_cast %254 : vector<1x128x128xbf16> to vector<128x128xbf16>
    %cst_256 = arith.constant dense<0.000000e+00> : vector<8x128xf32>
    %256 = tpu.matmul %253, %255, %cst_256 {dimension_numbers = #tpu.dot_dimension_numbers<[1], [0], [0], [1], [0, 0, 1, 1], [], []>} : vector<8x128xbf16>, vector<128x128xbf16>, vector<8x128xf32> -> vector<8x128xf32>
    %257 = arith.addf %251, %256 : vector<8x128xf32>
    %c0_257 = arith.constant 0 : index
    %c41 = arith.constant 41 : index
    %c0_258 = arith.constant 0 : index
    %258 = vector.load %arg7[%c0_257, %c41, %c0_258] : memref<8x64x128xbf16, #tpu.memory_space<vmem>>, vector<8x1x128xbf16>
    %259 = vector.shape_cast %258 : vector<8x1x128xbf16> to vector<8x128xbf16>
    %c41_259 = arith.constant 41 : index
    %c0_260 = arith.constant 0 : index
    %c0_261 = arith.constant 0 : index
    %260 = vector.load %arg4[%c41_259, %c0_260, %c0_261] : memref<64x128x128xbf16, #tpu.memory_space<vmem>>, vector<1x128x128xbf16>
    %261 = vector.shape_cast %260 : vector<1x128x128xbf16> to vector<128x128xbf16>
    %cst_262 = arith.constant dense<0.000000e+00> : vector<8x128xf32>
    %262 = tpu.matmul %259, %261, %cst_262 {dimension_numbers = #tpu.dot_dimension_numbers<[1], [0], [0], [1], [0, 0, 1, 1], [], []>} : vector<8x128xbf16>, vector<128x128xbf16>, vector<8x128xf32> -> vector<8x128xf32>
    %263 = arith.addf %257, %262 : vector<8x128xf32>
    %c0_263 = arith.constant 0 : index
    %c42 = arith.constant 42 : index
    %c0_264 = arith.constant 0 : index
    %264 = vector.load %arg7[%c0_263, %c42, %c0_264] : memref<8x64x128xbf16, #tpu.memory_space<vmem>>, vector<8x1x128xbf16>
    %265 = vector.shape_cast %264 : vector<8x1x128xbf16> to vector<8x128xbf16>
    %c42_265 = arith.constant 42 : index
    %c0_266 = arith.constant 0 : index
    %c0_267 = arith.constant 0 : index
    %266 = vector.load %arg4[%c42_265, %c0_266, %c0_267] : memref<64x128x128xbf16, #tpu.memory_space<vmem>>, vector<1x128x128xbf16>
    %267 = vector.shape_cast %266 : vector<1x128x128xbf16> to vector<128x128xbf16>
    %cst_268 = arith.constant dense<0.000000e+00> : vector<8x128xf32>
    %268 = tpu.matmul %265, %267, %cst_268 {dimension_numbers = #tpu.dot_dimension_numbers<[1], [0], [0], [1], [0, 0, 1, 1], [], []>} : vector<8x128xbf16>, vector<128x128xbf16>, vector<8x128xf32> -> vector<8x128xf32>
    %269 = arith.addf %263, %268 : vector<8x128xf32>
    %c0_269 = arith.constant 0 : index
    %c43 = arith.constant 43 : index
    %c0_270 = arith.constant 0 : index
    %270 = vector.load %arg7[%c0_269, %c43, %c0_270] : memref<8x64x128xbf16, #tpu.memory_space<vmem>>, vector<8x1x128xbf16>
    %271 = vector.shape_cast %270 : vector<8x1x128xbf16> to vector<8x128xbf16>
    %c43_271 = arith.constant 43 : index
    %c0_272 = arith.constant 0 : index
    %c0_273 = arith.constant 0 : index
    %272 = vector.load %arg4[%c43_271, %c0_272, %c0_273] : memref<64x128x128xbf16, #tpu.memory_space<vmem>>, vector<1x128x128xbf16>
    %273 = vector.shape_cast %272 : vector<1x128x128xbf16> to vector<128x128xbf16>
    %cst_274 = arith.constant dense<0.000000e+00> : vector<8x128xf32>
    %274 = tpu.matmul %271, %273, %cst_274 {dimension_numbers = #tpu.dot_dimension_numbers<[1], [0], [0], [1], [0, 0, 1, 1], [], []>} : vector<8x128xbf16>, vector<128x128xbf16>, vector<8x128xf32> -> vector<8x128xf32>
    %275 = arith.addf %269, %274 : vector<8x128xf32>
    %c0_275 = arith.constant 0 : index
    %c44 = arith.constant 44 : index
    %c0_276 = arith.constant 0 : index
    %276 = vector.load %arg7[%c0_275, %c44, %c0_276] : memref<8x64x128xbf16, #tpu.memory_space<vmem>>, vector<8x1x128xbf16>
    %277 = vector.shape_cast %276 : vector<8x1x128xbf16> to vector<8x128xbf16>
    %c44_277 = arith.constant 44 : index
    %c0_278 = arith.constant 0 : index
    %c0_279 = arith.constant 0 : index
    %278 = vector.load %arg4[%c44_277, %c0_278, %c0_279] : memref<64x128x128xbf16, #tpu.memory_space<vmem>>, vector<1x128x128xbf16>
    %279 = vector.shape_cast %278 : vector<1x128x128xbf16> to vector<128x128xbf16>
    %cst_280 = arith.constant dense<0.000000e+00> : vector<8x128xf32>
    %280 = tpu.matmul %277, %279, %cst_280 {dimension_numbers = #tpu.dot_dimension_numbers<[1], [0], [0], [1], [0, 0, 1, 1], [], []>} : vector<8x128xbf16>, vector<128x128xbf16>, vector<8x128xf32> -> vector<8x128xf32>
    %281 = arith.addf %275, %280 : vector<8x128xf32>
    %c0_281 = arith.constant 0 : index
    %c45 = arith.constant 45 : index
    %c0_282 = arith.constant 0 : index
    %282 = vector.load %arg7[%c0_281, %c45, %c0_282] : memref<8x64x128xbf16, #tpu.memory_space<vmem>>, vector<8x1x128xbf16>
    %283 = vector.shape_cast %282 : vector<8x1x128xbf16> to vector<8x128xbf16>
    %c45_283 = arith.constant 45 : index
    %c0_284 = arith.constant 0 : index
    %c0_285 = arith.constant 0 : index
    %284 = vector.load %arg4[%c45_283, %c0_284, %c0_285] : memref<64x128x128xbf16, #tpu.memory_space<vmem>>, vector<1x128x128xbf16>
    %285 = vector.shape_cast %284 : vector<1x128x128xbf16> to vector<128x128xbf16>
    %cst_286 = arith.constant dense<0.000000e+00> : vector<8x128xf32>
    %286 = tpu.matmul %283, %285, %cst_286 {dimension_numbers = #tpu.dot_dimension_numbers<[1], [0], [0], [1], [0, 0, 1, 1], [], []>} : vector<8x128xbf16>, vector<128x128xbf16>, vector<8x128xf32> -> vector<8x128xf32>
    %287 = arith.addf %281, %286 : vector<8x128xf32>
    %c0_287 = arith.constant 0 : index
    %c46 = arith.constant 46 : index
    %c0_288 = arith.constant 0 : index
    %288 = vector.load %arg7[%c0_287, %c46, %c0_288] : memref<8x64x128xbf16, #tpu.memory_space<vmem>>, vector<8x1x128xbf16>
    %289 = vector.shape_cast %288 : vector<8x1x128xbf16> to vector<8x128xbf16>
    %c46_289 = arith.constant 46 : index
    %c0_290 = arith.constant 0 : index
    %c0_291 = arith.constant 0 : index
    %290 = vector.load %arg4[%c46_289, %c0_290, %c0_291] : memref<64x128x128xbf16, #tpu.memory_space<vmem>>, vector<1x128x128xbf16>
    %291 = vector.shape_cast %290 : vector<1x128x128xbf16> to vector<128x128xbf16>
    %cst_292 = arith.constant dense<0.000000e+00> : vector<8x128xf32>
    %292 = tpu.matmul %289, %291, %cst_292 {dimension_numbers = #tpu.dot_dimension_numbers<[1], [0], [0], [1], [0, 0, 1, 1], [], []>} : vector<8x128xbf16>, vector<128x128xbf16>, vector<8x128xf32> -> vector<8x128xf32>
    %293 = arith.addf %287, %292 : vector<8x128xf32>
    %c0_293 = arith.constant 0 : index
    %c47 = arith.constant 47 : index
    %c0_294 = arith.constant 0 : index
    %294 = vector.load %arg7[%c0_293, %c47, %c0_294] : memref<8x64x128xbf16, #tpu.memory_space<vmem>>, vector<8x1x128xbf16>
    %295 = vector.shape_cast %294 : vector<8x1x128xbf16> to vector<8x128xbf16>
    %c47_295 = arith.constant 47 : index
    %c0_296 = arith.constant 0 : index
    %c0_297 = arith.constant 0 : index
    %296 = vector.load %arg4[%c47_295, %c0_296, %c0_297] : memref<64x128x128xbf16, #tpu.memory_space<vmem>>, vector<1x128x128xbf16>
    %297 = vector.shape_cast %296 : vector<1x128x128xbf16> to vector<128x128xbf16>
    %cst_298 = arith.constant dense<0.000000e+00> : vector<8x128xf32>
    %298 = tpu.matmul %295, %297, %cst_298 {dimension_numbers = #tpu.dot_dimension_numbers<[1], [0], [0], [1], [0, 0, 1, 1], [], []>} : vector<8x128xbf16>, vector<128x128xbf16>, vector<8x128xf32> -> vector<8x128xf32>
    %299 = arith.addf %293, %298 : vector<8x128xf32>
    %c0_299 = arith.constant 0 : index
    %c48 = arith.constant 48 : index
    %c0_300 = arith.constant 0 : index
    %300 = vector.load %arg7[%c0_299, %c48, %c0_300] : memref<8x64x128xbf16, #tpu.memory_space<vmem>>, vector<8x1x128xbf16>
    %301 = vector.shape_cast %300 : vector<8x1x128xbf16> to vector<8x128xbf16>
    %c48_301 = arith.constant 48 : index
    %c0_302 = arith.constant 0 : index
    %c0_303 = arith.constant 0 : index
    %302 = vector.load %arg4[%c48_301, %c0_302, %c0_303] : memref<64x128x128xbf16, #tpu.memory_space<vmem>>, vector<1x128x128xbf16>
    %303 = vector.shape_cast %302 : vector<1x128x128xbf16> to vector<128x128xbf16>
    %cst_304 = arith.constant dense<0.000000e+00> : vector<8x128xf32>
    %304 = tpu.matmul %301, %303, %cst_304 {dimension_numbers = #tpu.dot_dimension_numbers<[1], [0], [0], [1], [0, 0, 1, 1], [], []>} : vector<8x128xbf16>, vector<128x128xbf16>, vector<8x128xf32> -> vector<8x128xf32>
    %305 = arith.addf %299, %304 : vector<8x128xf32>
    %c0_305 = arith.constant 0 : index
    %c49 = arith.constant 49 : index
    %c0_306 = arith.constant 0 : index
    %306 = vector.load %arg7[%c0_305, %c49, %c0_306] : memref<8x64x128xbf16, #tpu.memory_space<vmem>>, vector<8x1x128xbf16>
    %307 = vector.shape_cast %306 : vector<8x1x128xbf16> to vector<8x128xbf16>
    %c49_307 = arith.constant 49 : index
    %c0_308 = arith.constant 0 : index
    %c0_309 = arith.constant 0 : index
    %308 = vector.load %arg4[%c49_307, %c0_308, %c0_309] : memref<64x128x128xbf16, #tpu.memory_space<vmem>>, vector<1x128x128xbf16>
    %309 = vector.shape_cast %308 : vector<1x128x128xbf16> to vector<128x128xbf16>
    %cst_310 = arith.constant dense<0.000000e+00> : vector<8x128xf32>
    %310 = tpu.matmul %307, %309, %cst_310 {dimension_numbers = #tpu.dot_dimension_numbers<[1], [0], [0], [1], [0, 0, 1, 1], [], []>} : vector<8x128xbf16>, vector<128x128xbf16>, vector<8x128xf32> -> vector<8x128xf32>
    %311 = arith.addf %305, %310 : vector<8x128xf32>
    %c0_311 = arith.constant 0 : index
    %c50 = arith.constant 50 : index
    %c0_312 = arith.constant 0 : index
    %312 = vector.load %arg7[%c0_311, %c50, %c0_312] : memref<8x64x128xbf16, #tpu.memory_space<vmem>>, vector<8x1x128xbf16>
    %313 = vector.shape_cast %312 : vector<8x1x128xbf16> to vector<8x128xbf16>
    %c50_313 = arith.constant 50 : index
    %c0_314 = arith.constant 0 : index
    %c0_315 = arith.constant 0 : index
    %314 = vector.load %arg4[%c50_313, %c0_314, %c0_315] : memref<64x128x128xbf16, #tpu.memory_space<vmem>>, vector<1x128x128xbf16>
    %315 = vector.shape_cast %314 : vector<1x128x128xbf16> to vector<128x128xbf16>
    %cst_316 = arith.constant dense<0.000000e+00> : vector<8x128xf32>
    %316 = tpu.matmul %313, %315, %cst_316 {dimension_numbers = #tpu.dot_dimension_numbers<[1], [0], [0], [1], [0, 0, 1, 1], [], []>} : vector<8x128xbf16>, vector<128x128xbf16>, vector<8x128xf32> -> vector<8x128xf32>
    %317 = arith.addf %311, %316 : vector<8x128xf32>
    %c0_317 = arith.constant 0 : index
    %c51 = arith.constant 51 : index
    %c0_318 = arith.constant 0 : index
    %318 = vector.load %arg7[%c0_317, %c51, %c0_318] : memref<8x64x128xbf16, #tpu.memory_space<vmem>>, vector<8x1x128xbf16>
    %319 = vector.shape_cast %318 : vector<8x1x128xbf16> to vector<8x128xbf16>
    %c51_319 = arith.constant 51 : index
    %c0_320 = arith.constant 0 : index
    %c0_321 = arith.constant 0 : index
    %320 = vector.load %arg4[%c51_319, %c0_320, %c0_321] : memref<64x128x128xbf16, #tpu.memory_space<vmem>>, vector<1x128x128xbf16>
    %321 = vector.shape_cast %320 : vector<1x128x128xbf16> to vector<128x128xbf16>
    %cst_322 = arith.constant dense<0.000000e+00> : vector<8x128xf32>
    %322 = tpu.matmul %319, %321, %cst_322 {dimension_numbers = #tpu.dot_dimension_numbers<[1], [0], [0], [1], [0, 0, 1, 1], [], []>} : vector<8x128xbf16>, vector<128x128xbf16>, vector<8x128xf32> -> vector<8x128xf32>
    %323 = arith.addf %317, %322 : vector<8x128xf32>
    %c0_323 = arith.constant 0 : index
    %c52 = arith.constant 52 : index
    %c0_324 = arith.constant 0 : index
    %324 = vector.load %arg7[%c0_323, %c52, %c0_324] : memref<8x64x128xbf16, #tpu.memory_space<vmem>>, vector<8x1x128xbf16>
    %325 = vector.shape_cast %324 : vector<8x1x128xbf16> to vector<8x128xbf16>
    %c52_325 = arith.constant 52 : index
    %c0_326 = arith.constant 0 : index
    %c0_327 = arith.constant 0 : index
    %326 = vector.load %arg4[%c52_325, %c0_326, %c0_327] : memref<64x128x128xbf16, #tpu.memory_space<vmem>>, vector<1x128x128xbf16>
    %327 = vector.shape_cast %326 : vector<1x128x128xbf16> to vector<128x128xbf16>
    %cst_328 = arith.constant dense<0.000000e+00> : vector<8x128xf32>
    %328 = tpu.matmul %325, %327, %cst_328 {dimension_numbers = #tpu.dot_dimension_numbers<[1], [0], [0], [1], [0, 0, 1, 1], [], []>} : vector<8x128xbf16>, vector<128x128xbf16>, vector<8x128xf32> -> vector<8x128xf32>
    %329 = arith.addf %323, %328 : vector<8x128xf32>
    %c0_329 = arith.constant 0 : index
    %c53 = arith.constant 53 : index
    %c0_330 = arith.constant 0 : index
    %330 = vector.load %arg7[%c0_329, %c53, %c0_330] : memref<8x64x128xbf16, #tpu.memory_space<vmem>>, vector<8x1x128xbf16>
    %331 = vector.shape_cast %330 : vector<8x1x128xbf16> to vector<8x128xbf16>
    %c53_331 = arith.constant 53 : index
    %c0_332 = arith.constant 0 : index
    %c0_333 = arith.constant 0 : index
    %332 = vector.load %arg4[%c53_331, %c0_332, %c0_333] : memref<64x128x128xbf16, #tpu.memory_space<vmem>>, vector<1x128x128xbf16>
    %333 = vector.shape_cast %332 : vector<1x128x128xbf16> to vector<128x128xbf16>
    %cst_334 = arith.constant dense<0.000000e+00> : vector<8x128xf32>
    %334 = tpu.matmul %331, %333, %cst_334 {dimension_numbers = #tpu.dot_dimension_numbers<[1], [0], [0], [1], [0, 0, 1, 1], [], []>} : vector<8x128xbf16>, vector<128x128xbf16>, vector<8x128xf32> -> vector<8x128xf32>
    %335 = arith.addf %329, %334 : vector<8x128xf32>
    %c0_335 = arith.constant 0 : index
    %c54 = arith.constant 54 : index
    %c0_336 = arith.constant 0 : index
    %336 = vector.load %arg7[%c0_335, %c54, %c0_336] : memref<8x64x128xbf16, #tpu.memory_space<vmem>>, vector<8x1x128xbf16>
    %337 = vector.shape_cast %336 : vector<8x1x128xbf16> to vector<8x128xbf16>
    %c54_337 = arith.constant 54 : index
    %c0_338 = arith.constant 0 : index
    %c0_339 = arith.constant 0 : index
    %338 = vector.load %arg4[%c54_337, %c0_338, %c0_339] : memref<64x128x128xbf16, #tpu.memory_space<vmem>>, vector<1x128x128xbf16>
    %339 = vector.shape_cast %338 : vector<1x128x128xbf16> to vector<128x128xbf16>
    %cst_340 = arith.constant dense<0.000000e+00> : vector<8x128xf32>
    %340 = tpu.matmul %337, %339, %cst_340 {dimension_numbers = #tpu.dot_dimension_numbers<[1], [0], [0], [1], [0, 0, 1, 1], [], []>} : vector<8x128xbf16>, vector<128x128xbf16>, vector<8x128xf32> -> vector<8x128xf32>
    %341 = arith.addf %335, %340 : vector<8x128xf32>
    %c0_341 = arith.constant 0 : index
    %c55 = arith.constant 55 : index
    %c0_342 = arith.constant 0 : index
    %342 = vector.load %arg7[%c0_341, %c55, %c0_342] : memref<8x64x128xbf16, #tpu.memory_space<vmem>>, vector<8x1x128xbf16>
    %343 = vector.shape_cast %342 : vector<8x1x128xbf16> to vector<8x128xbf16>
    %c55_343 = arith.constant 55 : index
    %c0_344 = arith.constant 0 : index
    %c0_345 = arith.constant 0 : index
    %344 = vector.load %arg4[%c55_343, %c0_344, %c0_345] : memref<64x128x128xbf16, #tpu.memory_space<vmem>>, vector<1x128x128xbf16>
    %345 = vector.shape_cast %344 : vector<1x128x128xbf16> to vector<128x128xbf16>
    %cst_346 = arith.constant dense<0.000000e+00> : vector<8x128xf32>
    %346 = tpu.matmul %343, %345, %cst_346 {dimension_numbers = #tpu.dot_dimension_numbers<[1], [0], [0], [1], [0, 0, 1, 1], [], []>} : vector<8x128xbf16>, vector<128x128xbf16>, vector<8x128xf32> -> vector<8x128xf32>
    %347 = arith.addf %341, %346 : vector<8x128xf32>
    %c0_347 = arith.constant 0 : index
    %c56 = arith.constant 56 : index
    %c0_348 = arith.constant 0 : index
    %348 = vector.load %arg7[%c0_347, %c56, %c0_348] : memref<8x64x128xbf16, #tpu.memory_space<vmem>>, vector<8x1x128xbf16>
    %349 = vector.shape_cast %348 : vector<8x1x128xbf16> to vector<8x128xbf16>
    %c56_349 = arith.constant 56 : index
    %c0_350 = arith.constant 0 : index
    %c0_351 = arith.constant 0 : index
    %350 = vector.load %arg4[%c56_349, %c0_350, %c0_351] : memref<64x128x128xbf16, #tpu.memory_space<vmem>>, vector<1x128x128xbf16>
    %351 = vector.shape_cast %350 : vector<1x128x128xbf16> to vector<128x128xbf16>
    %cst_352 = arith.constant dense<0.000000e+00> : vector<8x128xf32>
    %352 = tpu.matmul %349, %351, %cst_352 {dimension_numbers = #tpu.dot_dimension_numbers<[1], [0], [0], [1], [0, 0, 1, 1], [], []>} : vector<8x128xbf16>, vector<128x128xbf16>, vector<8x128xf32> -> vector<8x128xf32>
    %353 = arith.addf %347, %352 : vector<8x128xf32>
    %c0_353 = arith.constant 0 : index
    %c57 = arith.constant 57 : index
    %c0_354 = arith.constant 0 : index
    %354 = vector.load %arg7[%c0_353, %c57, %c0_354] : memref<8x64x128xbf16, #tpu.memory_space<vmem>>, vector<8x1x128xbf16>
    %355 = vector.shape_cast %354 : vector<8x1x128xbf16> to vector<8x128xbf16>
    %c57_355 = arith.constant 57 : index
    %c0_356 = arith.constant 0 : index
    %c0_357 = arith.constant 0 : index
    %356 = vector.load %arg4[%c57_355, %c0_356, %c0_357] : memref<64x128x128xbf16, #tpu.memory_space<vmem>>, vector<1x128x128xbf16>
    %357 = vector.shape_cast %356 : vector<1x128x128xbf16> to vector<128x128xbf16>
    %cst_358 = arith.constant dense<0.000000e+00> : vector<8x128xf32>
    %358 = tpu.matmul %355, %357, %cst_358 {dimension_numbers = #tpu.dot_dimension_numbers<[1], [0], [0], [1], [0, 0, 1, 1], [], []>} : vector<8x128xbf16>, vector<128x128xbf16>, vector<8x128xf32> -> vector<8x128xf32>
    %359 = arith.addf %353, %358 : vector<8x128xf32>
    %c0_359 = arith.constant 0 : index
    %c58 = arith.constant 58 : index
    %c0_360 = arith.constant 0 : index
    %360 = vector.load %arg7[%c0_359, %c58, %c0_360] : memref<8x64x128xbf16, #tpu.memory_space<vmem>>, vector<8x1x128xbf16>
    %361 = vector.shape_cast %360 : vector<8x1x128xbf16> to vector<8x128xbf16>
    %c58_361 = arith.constant 58 : index
    %c0_362 = arith.constant 0 : index
    %c0_363 = arith.constant 0 : index
    %362 = vector.load %arg4[%c58_361, %c0_362, %c0_363] : memref<64x128x128xbf16, #tpu.memory_space<vmem>>, vector<1x128x128xbf16>
    %363 = vector.shape_cast %362 : vector<1x128x128xbf16> to vector<128x128xbf16>
    %cst_364 = arith.constant dense<0.000000e+00> : vector<8x128xf32>
    %364 = tpu.matmul %361, %363, %cst_364 {dimension_numbers = #tpu.dot_dimension_numbers<[1], [0], [0], [1], [0, 0, 1, 1], [], []>} : vector<8x128xbf16>, vector<128x128xbf16>, vector<8x128xf32> -> vector<8x128xf32>
    %365 = arith.addf %359, %364 : vector<8x128xf32>
    %c0_365 = arith.constant 0 : index
    %c59 = arith.constant 59 : index
    %c0_366 = arith.constant 0 : index
    %366 = vector.load %arg7[%c0_365, %c59, %c0_366] : memref<8x64x128xbf16, #tpu.memory_space<vmem>>, vector<8x1x128xbf16>
    %367 = vector.shape_cast %366 : vector<8x1x128xbf16> to vector<8x128xbf16>
    %c59_367 = arith.constant 59 : index
    %c0_368 = arith.constant 0 : index
    %c0_369 = arith.constant 0 : index
    %368 = vector.load %arg4[%c59_367, %c0_368, %c0_369] : memref<64x128x128xbf16, #tpu.memory_space<vmem>>, vector<1x128x128xbf16>
    %369 = vector.shape_cast %368 : vector<1x128x128xbf16> to vector<128x128xbf16>
    %cst_370 = arith.constant dense<0.000000e+00> : vector<8x128xf32>
    %370 = tpu.matmul %367, %369, %cst_370 {dimension_numbers = #tpu.dot_dimension_numbers<[1], [0], [0], [1], [0, 0, 1, 1], [], []>} : vector<8x128xbf16>, vector<128x128xbf16>, vector<8x128xf32> -> vector<8x128xf32>
    %371 = arith.addf %365, %370 : vector<8x128xf32>
    %c0_371 = arith.constant 0 : index
    %c60 = arith.constant 60 : index
    %c0_372 = arith.constant 0 : index
    %372 = vector.load %arg7[%c0_371, %c60, %c0_372] : memref<8x64x128xbf16, #tpu.memory_space<vmem>>, vector<8x1x128xbf16>
    %373 = vector.shape_cast %372 : vector<8x1x128xbf16> to vector<8x128xbf16>
    %c60_373 = arith.constant 60 : index
    %c0_374 = arith.constant 0 : index
    %c0_375 = arith.constant 0 : index
    %374 = vector.load %arg4[%c60_373, %c0_374, %c0_375] : memref<64x128x128xbf16, #tpu.memory_space<vmem>>, vector<1x128x128xbf16>
    %375 = vector.shape_cast %374 : vector<1x128x128xbf16> to vector<128x128xbf16>
    %cst_376 = arith.constant dense<0.000000e+00> : vector<8x128xf32>
    %376 = tpu.matmul %373, %375, %cst_376 {dimension_numbers = #tpu.dot_dimension_numbers<[1], [0], [0], [1], [0, 0, 1, 1], [], []>} : vector<8x128xbf16>, vector<128x128xbf16>, vector<8x128xf32> -> vector<8x128xf32>
    %377 = arith.addf %371, %376 : vector<8x128xf32>
    %c0_377 = arith.constant 0 : index
    %c61 = arith.constant 61 : index
    %c0_378 = arith.constant 0 : index
    %378 = vector.load %arg7[%c0_377, %c61, %c0_378] : memref<8x64x128xbf16, #tpu.memory_space<vmem>>, vector<8x1x128xbf16>
    %379 = vector.shape_cast %378 : vector<8x1x128xbf16> to vector<8x128xbf16>
    %c61_379 = arith.constant 61 : index
    %c0_380 = arith.constant 0 : index
    %c0_381 = arith.constant 0 : index
    %380 = vector.load %arg4[%c61_379, %c0_380, %c0_381] : memref<64x128x128xbf16, #tpu.memory_space<vmem>>, vector<1x128x128xbf16>
    %381 = vector.shape_cast %380 : vector<1x128x128xbf16> to vector<128x128xbf16>
    %cst_382 = arith.constant dense<0.000000e+00> : vector<8x128xf32>
    %382 = tpu.matmul %379, %381, %cst_382 {dimension_numbers = #tpu.dot_dimension_numbers<[1], [0], [0], [1], [0, 0, 1, 1], [], []>} : vector<8x128xbf16>, vector<128x128xbf16>, vector<8x128xf32> -> vector<8x128xf32>
    %383 = arith.addf %377, %382 : vector<8x128xf32>
    %c0_383 = arith.constant 0 : index
    %c62 = arith.constant 62 : index
    %c0_384 = arith.constant 0 : index
    %384 = vector.load %arg7[%c0_383, %c62, %c0_384] : memref<8x64x128xbf16, #tpu.memory_space<vmem>>, vector<8x1x128xbf16>
    %385 = vector.shape_cast %384 : vector<8x1x128xbf16> to vector<8x128xbf16>
    %c62_385 = arith.constant 62 : index
    %c0_386 = arith.constant 0 : index
    %c0_387 = arith.constant 0 : index
    %386 = vector.load %arg4[%c62_385, %c0_386, %c0_387] : memref<64x128x128xbf16, #tpu.memory_space<vmem>>, vector<1x128x128xbf16>
    %387 = vector.shape_cast %386 : vector<1x128x128xbf16> to vector<128x128xbf16>
    %cst_388 = arith.constant dense<0.000000e+00> : vector<8x128xf32>
    %388 = tpu.matmul %385, %387, %cst_388 {dimension_numbers = #tpu.dot_dimension_numbers<[1], [0], [0], [1], [0, 0, 1, 1], [], []>} : vector<8x128xbf16>, vector<128x128xbf16>, vector<8x128xf32> -> vector<8x128xf32>
    %389 = arith.addf %383, %388 : vector<8x128xf32>
    %c0_389 = arith.constant 0 : index
    %c63 = arith.constant 63 : index
    %c0_390 = arith.constant 0 : index
    %390 = vector.load %arg7[%c0_389, %c63, %c0_390] : memref<8x64x128xbf16, #tpu.memory_space<vmem>>, vector<8x1x128xbf16>
    %391 = vector.shape_cast %390 : vector<8x1x128xbf16> to vector<8x128xbf16>
    %c63_391 = arith.constant 63 : index
    %c0_392 = arith.constant 0 : index
    %c0_393 = arith.constant 0 : index
    %392 = vector.load %arg4[%c63_391, %c0_392, %c0_393] : memref<64x128x128xbf16, #tpu.memory_space<vmem>>, vector<1x128x128xbf16>
    %393 = vector.shape_cast %392 : vector<1x128x128xbf16> to vector<128x128xbf16>
    %cst_394 = arith.constant dense<0.000000e+00> : vector<8x128xf32>
    %394 = tpu.matmul %391, %393, %cst_394 {dimension_numbers = #tpu.dot_dimension_numbers<[1], [0], [0], [1], [0, 0, 1, 1], [], []>} : vector<8x128xbf16>, vector<128x128xbf16>, vector<8x128xf32> -> vector<8x128xf32>
    %395 = arith.addf %389, %394 : vector<8x128xf32>
    %c0_395 = arith.constant 0 : index
    %c0_396 = arith.constant 0 : index
    %396 = vector.load %arg5[%c0_395, %c0_396] : memref<1x128xf32, #tpu.memory_space<vmem>>, vector<1x128xf32>
    %397 = vector.broadcast %396 : vector<1x128xf32> to vector<8x128xf32>
    %398 = arith.addf %395, %397 : vector<8x128xf32>
    %c0_397 = arith.constant 0 : index
    %c0_398 = arith.constant 0 : index
    %399 = vector.load %arg6[%c0_397, %c0_398] : memref<8x128xf32, #tpu.memory_space<vmem>>, vector<8x128xf32>
    tpu.vector_store %arg6[%c0_397, %c0_398], %398 {strides = array<i32>} : memref<8x128xf32, #tpu.memory_space<vmem>>, vector<8x128xf32>,
    return
  }
  func.func @transform_0(%arg0: i32) -> (i32, i32) {
    %c0_i32 = arith.constant 0 : i32
    %c0_i32_0 = arith.constant 0 : i32
    return %arg0, %c0_i32 : i32, i32
  }
  func.func @transform_1(%arg0: i32) -> (i32, i32) {
    %c0_i32 = arith.constant 0 : i32
    %c0_i32_0 = arith.constant 0 : i32
    %c0_i32_1 = arith.constant 0 : i32
    return %c0_i32, %c0_i32_0 : i32, i32
  }
  func.func @transform_2(%arg0: i32) -> (i32, i32) {
    %c0_i32 = arith.constant 0 : i32
    %c0_i32_0 = arith.constant 0 : i32
    %c0_i32_1 = arith.constant 0 : i32
    return %c0_i32, %c0_i32_0 : i32, i32
  }
  func.func @transform_3(%arg0: i32) -> (i32, i32, i32) {
    %c0_i32 = arith.constant 0 : i32
    %c0_i32_0 = arith.constant 0 : i32
    %c0_i32_1 = arith.constant 0 : i32
    %c0_i32_2 = arith.constant 0 : i32
    return %c0_i32, %c0_i32_0, %c0_i32_1 : i32, i32, i32
  }
  func.func @transform_4(%arg0: i32) -> (i32, i32) {
    %c0_i32 = arith.constant 0 : i32
    %c0_i32_0 = arith.constant 0 : i32
    %c0_i32_1 = arith.constant 0 : i32
    return %c0_i32, %c0_i32_0 : i32, i32
  }
  func.func @transform_5(%arg0: i32) -> (i32, i32) {
    %c0_i32 = arith.constant 0 : i32
    %c0_i32_0 = arith.constant 0 : i32
    return %arg0, %c0_i32 : i32, i32
  }
}

</mosaic_0001>

<llo_original>
// kernel: _lambda_.1
$region0: #{_lambda_.1}
  #allocation0 [shape = 'u32[]', space=smem, size = 0x4, offset = 0x4, fixed_abs, tag = 'smem constant byte address 0x4 - core index']
  #allocation1 [shape = 'u32[144,128]{1,0:T(1,128)}', space=vmem, size = 0x12000, scoped, tag = 'internal scratch']
  #allocation2 [shape = 'bf16[8,64,128]{2,1,0:T(8,128)(2,1)}', space=vmem, size = 0x20000, scoped, tag = 'scratch operand']
  %s0 = inlined_call_operand.vmem [shape: bf16[1024,384], index: 0, kind: input, shape index: {}]
  %s1 = inlined_call_operand.vmem [shape: bf16[384,128], index: 1, kind: input, shape index: {}]
  %s2 = inlined_call_operand.vmem [shape: f32[1,128], index: 2, kind: input, shape index: {}]
  %s3 = inlined_call_operand.vmem [shape: bf16[64,128,128], index: 3, kind: input, shape index: {}]
  %s4 = inlined_call_operand.vmem [shape: f32[1,128], index: 4, kind: input, shape index: {}]
  %s5 = inlined_call_operand.hbm [shape: f32[16,128], index: 5, kind: output, shape index: {}]
  %s6 = sld [smem:[#allocation0]]
  $region53: #{_lambda_.1} parent=0
    _
  %s8 = ssub.s32 1, %s6
  %s9 = scalar_select 0, %s8, %s6
  $region1: #{_lambda_.1} parent=0
    #allocation3 [shape = 'u8[8192]{0}', space=vmem, size = 0x2000, scoped, tag = 'output window, operand 0']
    #allocation4 [shape = 's32[2]{0}', space=sflag, size = 0x8, scoped, tag = 'scoped memory for _lambda_.1']
    %10 = vsyncpa [#allocation4], 0
    %s11 = scalar_lea.sflag [#allocation4], 1
    %12 = vsyncpa %s11, 0
    loop: start=0, step=1, limit=4
    $region2: #{_lambda_.1} parent=1 // loop_pre_header
      _
    $region3: #{_lambda_.1} parent=1 // loop_header
      %s14 = sphi 0, %s18
      %p15 = scmp.ge.s32.totalorder %s14, 4
      %s24 = sphi 0, %s26
      %s27 = sphi 0, %s24
      %s28 = sphi 0, %s27
      %s44 = sphi 0, %s28
      %s48 = sphi 0, %s48
      %s50 = sphi 0, %s48
      %s51 = sphi 0, %s50
      %s65 = sphi 0, %s51
      %s69 = sphi 0, %s69
      %s71 = sphi 0, %s69
      %s72 = sphi 0, %s71
      %s86 = sphi 0, %s72
      %s90 = sphi 0, %s90
      %s92 = sphi 0, %s90
      %s93 = sphi 0, %s92
      %s107 = sphi 0, %s93
      %s111 = sphi 0, %s111
      %s113 = sphi 0, %s111
      %s114 = sphi 0, %s113
      %s128 = sphi 0, %s114
      %s134 = sphi 0, %s136
      %s137 = sphi 0, %s134
      %s138 = sphi 0, %s137
      %s154 = sphi 0, %s138
    $region4: #{_lambda_.1} parent=1 // loop_header_branch
      %17 = sbr.rel (%p15) target = $region8
    $region5: #{_lambda_.1} parent=1 // loop_body
      %s19 = ssub.s32 %s14, 1
      %s20 = ssub.s32 %s14, 2
      %s21 = sadd.s32 %s14, 1
      %s22 = ssub.s32 %s14, %s21
      %p23 = scmp.eq.s32.totalorder %s22, 0
      %s25 = sadd.s32 %s24, 1
      %s26 = scalar_select %p23, %s24, %s25
      %p29 = pneg %p23
      %p30 = scmp.eq.s32.totalorder %s14, 1
      %p31 = por %p29, %p30
      %p32 = scmp.ne.s32.totalorder %s24, %s27
      %p33 = scmp.eq.s32.totalorder %s14, 0
      %p34 = por %p32, %p33
      %p35 = scmp.ne.s32.totalorder %s24, %s27
      %p36 = scmp.eq.s32.totalorder %s19, 1
      %p37 = por %p35, %p36
      %p38 = scmp.ne.s32.totalorder %s27, %s28
      %p39 = scmp.eq.s32.totalorder %s19, 0
      %p40 = por %p38, %p39
      %p41 = scmp.ne.s32.totalorder %s27, %s28
      %p42 = scmp.eq.s32.totalorder %s20, 1
      %p43 = por %p41, %p42
      %p45 = scmp.ne.s32.totalorder %s28, %s44
      %p46 = scmp.eq.s32.totalorder %s20, 0
      %p47 = por %p45, %p46
      %s49 = sadd.s32 %s48, 1
      %p52 = scmp.eq.s32.totalorder %s14, 1
      %p53 = scmp.ne.s32.totalorder %s48, %s50
      %p54 = scmp.eq.s32.totalorder %s14, 0
      %p55 = por %p53, %p54
      %p56 = scmp.ne.s32.totalorder %s48, %s50
      %p57 = scmp.eq.s32.totalorder %s19, 1
      %p58 = por %p56, %p57
      %p59 = scmp.ne.s32.totalorder %s50, %s51
      %p60 = scmp.eq.s32.totalorder %s19, 0
      %p61 = por %p59, %p60
      %p62 = scmp.ne.s32.totalorder %s50, %s51
      %p63 = scmp.eq.s32.totalorder %s20, 1
      %p64 = por %p62, %p63
      %p66 = scmp.ne.s32.totalorder %s51, %s65
      %p67 = scmp.eq.s32.totalorder %s20, 0
      %p68 = por %p66, %p67
      %s70 = sadd.s32 %s69, 1
      %p73 = scmp.eq.s32.totalorder %s14, 1
      %p74 = scmp.ne.s32.totalorder %s69, %s71
      %p75 = scmp.eq.s32.totalorder %s14, 0
      %p76 = por %p74, %p75
      %p77 = scmp.ne.s32.totalorder %s69, %s71
      %p78 = scmp.eq.s32.totalorder %s19, 1
      %p79 = por %p77, %p78
      %p80 = scmp.ne.s32.totalorder %s71, %s72
      %p81 = scmp.eq.s32.totalorder %s19, 0
      %p82 = por %p80, %p81
      %p83 = scmp.ne.s32.totalorder %s71, %s72
      %p84 = scmp.eq.s32.totalorder %s20, 1
      %p85 = por %p83, %p84
      %p87 = scmp.ne.s32.totalorder %s72, %s86
      %p88 = scmp.eq.s32.totalorder %s20, 0
      %p89 = por %p87, %p88
      %s91 = sadd.s32 %s90, 1
      %p94 = scmp.eq.s32.totalorder %s14, 1
      %p95 = scmp.ne.s32.totalorder %s90, %s92
      %p96 = scmp.eq.s32.totalorder %s14, 0
      %p97 = por %p95, %p96
      %p98 = scmp.ne.s32.totalorder %s90, %s92
      %p99 = scmp.eq.s32.totalorder %s19, 1
      %p100 = por %p98, %p99
      %p101 = scmp.ne.s32.totalorder %s92, %s93
      %p102 = scmp.eq.s32.totalorder %s19, 0
      %p103 = por %p101, %p102
      %p104 = scmp.ne.s32.totalorder %s92, %s93
      %p105 = scmp.eq.s32.totalorder %s20, 1
      %p106 = por %p104, %p105
      %p108 = scmp.ne.s32.totalorder %s93, %s107
      %p109 = scmp.eq.s32.totalorder %s20, 0
      %p110 = por %p108, %p109
      %s112 = sadd.s32 %s111, 1
      %p115 = scmp.eq.s32.totalorder %s14, 1
      %p116 = scmp.ne.s32.totalorder %s111, %s113
      %p117 = scmp.eq.s32.totalorder %s14, 0
      %p118 = por %p116, %p117
      %p119 = scmp.ne.s32.totalorder %s111, %s113
      %p120 = scmp.eq.s32.totalorder %s19, 1
      %p121 = por %p119, %p120
      %p122 = scmp.ne.s32.totalorder %s113, %s114
      %p123 = scmp.eq.s32.totalorder %s19, 0
      %p124 = por %p122, %p123
      %p125 = scmp.ne.s32.totalorder %s113, %s114
      %p126 = scmp.eq.s32.totalorder %s20, 1
      %p127 = por %p125, %p126
      %p129 = scmp.ne.s32.totalorder %s114, %s128
      %p130 = scmp.eq.s32.totalorder %s20, 0
      %p131 = por %p129, %p130
      %s132 = ssub.s32 %s14, %s21
      %p133 = scmp.eq.s32.totalorder %s132, 0
      %s135 = sadd.s32 %s134, 1
      %s136 = scalar_select %p133, %s134, %s135
      %p139 = pneg %p133
      %p140 = scmp.eq.s32.totalorder %s14, 1
      %p141 = por %p139, %p140
      %p142 = scmp.ne.s32.totalorder %s134, %s137
      %p143 = scmp.eq.s32.totalorder %s14, 0
      %p144 = por %p142, %p143
      %p145 = scmp.ne.s32.totalorder %s134, %s137
      %p146 = scmp.eq.s32.totalorder %s19, 1
      %p147 = por %p145, %p146
      %p148 = scmp.ne.s32.totalorder %s137, %s138
      %p149 = scmp.eq.s32.totalorder %s19, 0
      %p150 = por %p148, %p149
      %p151 = scmp.ne.s32.totalorder %s137, %s138
      %p152 = scmp.eq.s32.totalorder %s20, 1
      %p153 = por %p151, %p152
      %p155 = scmp.ne.s32.totalorder %s138, %s154
      %p156 = scmp.eq.s32.totalorder %s20, 0
      %p157 = por %p155, %p156
      %p158 = scmp.le.s32.totalorder 1, %s14
      %p159 = scmp.lt.s32.totalorder %s14, 3
      %p160 = pnand %p158, %p159
      %p161 = pneg %p160
      // Predicated region
      $region9: #{_lambda_.1} parent=5 // pred_check
        _
      $region10: #{_lambda_.1} parent=5 // pred_check_branch
        %163 = sbr.rel (%p160) target = $region12
      $region11: #{_lambda_.1} parent=5 // pred_region
        %s164 = ssub.s32 %s14, 1
        // Predicated region
        $region13: #{_lambda_.1} parent=11 // pred_check
          %p165 = pneg %p61
        $region14: #{_lambda_.1} parent=11 // pred_check_branch
          %167 = sbr.rel (%p165) target = $region16
        $region15: #{_lambda_.1} parent=11 // pred_region
          _
        $region16: #{_lambda_.1} parent=11 // pred_fallthru
          _
        // Predicated region
        $region17: #{_lambda_.1} parent=11 // pred_check
          %p168 = pneg %p82
        $region18: #{_lambda_.1} parent=11 // pred_check_branch
          %170 = sbr.rel (%p168) target = $region20
        $region19: #{_lambda_.1} parent=11 // pred_region
          _
        $region20: #{_lambda_.1} parent=11 // pred_fallthru
          _
        // Predicated region
        $region21: #{_lambda_.1} parent=11 // pred_check
          %p171 = pneg %p103
        $region22: #{_lambda_.1} parent=11 // pred_check_branch
          %173 = sbr.rel (%p171) target = $region24
        $region23: #{_lambda_.1} parent=11 // pred_region
          _
        $region24: #{_lambda_.1} parent=11 // pred_fallthru
          _
        // Predicated region
        $region25: #{_lambda_.1} parent=11 // pred_check
          %p174 = pneg %p124
        $region26: #{_lambda_.1} parent=11 // pred_check_branch
          %176 = sbr.rel (%p174) target = $region28
        $region27: #{_lambda_.1} parent=11 // pred_region
          _
        $region28: #{_lambda_.1} parent=11 // pred_fallthru
          _
      $region12: #{_lambda_.1} parent=5 // pred_fallthru
        _
      %p177 = scmp.lt.s32.totalorder %s14, 2
      // Predicated region
      $region29: #{_lambda_.1} parent=5 // pred_check
        %p178 = pneg %p177
      $region30: #{_lambda_.1} parent=5 // pred_check_branch
        %180 = sbr.rel (%p178) target = $region32
      $region31: #{_lambda_.1} parent=5 // pred_region
        // Predicated region
        $region33: #{_lambda_.1} parent=31 // pred_check
          %p181 = pneg %p34
        $region34: #{_lambda_.1} parent=31 // pred_check_branch
          %183 = sbr.rel (%p181) target = $region36
        $region35: #{_lambda_.1} parent=31 // pred_region
          %s184 = smul.u32 64, %s14
          %p185 = scmp.lt.s32.totalorder %s184, 127
          %s186 = scalar_select %p185, %s184, 127
          %s187 = smul.addr %s186, 3
          %s188 = smul.addr %s187, 4
          %s189 = scalar_lea.vmem %s0, %s188
          %s190 = smul.u32 64, %s14
        $region36: #{_lambda_.1} parent=31 // pred_fallthru
          _
      $region32: #{_lambda_.1} parent=5 // pred_fallthru
        _
      %p191 = scmp.le.s32.totalorder 1, %s14
      %p192 = scmp.lt.s32.totalorder %s14, 3
      %p193 = pnand %p191, %p192
      %p194 = pneg %p193
      // Predicated region
      $region37: #{_lambda_.1} parent=5 // pred_check
        _
      $region38: #{_lambda_.1} parent=5 // pred_check_branch
        %196 = sbr.rel (%p193) target = $region40
      $region39: #{_lambda_.1} parent=5 // pred_region
        %s197 = ssub.s32 %s14, 1
        %s198 = smul.u32 64, %s19
        %p199 = scmp.lt.s32.totalorder %s198, 127
        %s200 = scalar_select %p199, %s198, 127
        %s201 = smul.addr %s200, 3
        %s202 = smul.addr %s201, 4
        %s203 = scalar_lea.vmem %s0, %s202
        %p204 = pneg %p40
        %p205 = pneg %p37
        %p206 = pneg %p61
        %p207 = pneg %p58
        %p208 = pneg %p82
        %p209 = pneg %p79
        %p210 = pneg %p103
        %p211 = pneg %p100
        %p212 = pneg %p124
        %p213 = pneg %p121
        %p214 = pneg %p150
        %p215 = pneg %p147
        %s216 = sand.u32 %s137, 1
        %s217 = scalar_lea.sflag [#allocation4], %s216
        %s218 = sand.u32 %s137, 1
        %s219 = smul.addr %s218, 8
        %s220 = scalar_lea.vmem [#allocation3], %s219
        %s221 = smul.u32 64, %s19
        %p222 = scmp.lt.s32.totalorder %s221, 127
        %s223 = scalar_select %p222, %s221, 127
        %s224 = smul.addr %s223, 3
        %s225 = smul.addr %s224, 4
        %s226 = scalar_lea.vmem %s0, %s225
        %s227 = smul.u32 64, %s19
        %v229 = vld [vmem:[%s226] sm:$0xff]
        %v230 = vld [vmem:[%s226 + $0x8] sm:$0xf]
        %v231 = vld [vmem:[%s226 + $0xc] sm:$0xff]
        %v232 = vld [vmem:[%s226 + $0x14] sm:$0xf]
        %v233 = vld [vmem:[%s226 + $0x18] sm:$0xff]
        %v234 = vld [vmem:[%s226 + $0x20] sm:$0xf]
        %v235 = vld [vmem:[%s226 + $0x24] sm:$0xff]
        %v236 = vld [vmem:[%s226 + $0x2c] sm:$0xf]
        %v237 = vld [vmem:[%s226 + $0x30] sm:$0xff]
        %v238 = vld [vmem:[%s226 + $0x38] sm:$0xf]
        %v239 = vld [vmem:[%s226 + $0x3c] sm:$0xff]
        %v240 = vld [vmem:[%s226 + $0x44] sm:$0xf]
        %v241 = vld [vmem:[%s226 + $0x48] sm:$0xff]
        %v242 = vld [vmem:[%s226 + $0x50] sm:$0xf]
        %v243 = vld [vmem:[%s226 + $0x54] sm:$0xff]
        %v244 = vld [vmem:[%s226 + $0x5c] sm:$0xf]
        %v245 = vld [vmem:[%s226 + $0x60] sm:$0xff]
        %v246 = vld [vmem:[%s226 + $0x68] sm:$0xf]
        %v247 = vld [vmem:[%s226 + $0x6c] sm:$0xff]
        %v248 = vld [vmem:[%s226 + $0x74] sm:$0xf]
        %v249 = vld [vmem:[%s226 + $0x78] sm:$0xff]
        %v250 = vld [vmem:[%s226 + $0x80] sm:$0xf]
        %v251 = vld [vmem:[%s226 + $0x84] sm:$0xff]
        %v252 = vld [vmem:[%s226 + $0x8c] sm:$0xf]
        %v253 = vld [vmem:[%s226 + $0x90] sm:$0xff]
        %v254 = vld [vmem:[%s226 + $0x98] sm:$0xf]
        %v255 = vld [vmem:[%s226 + $0x9c] sm:$0xff]
        %v256 = vld [vmem:[%s226 + $0xa4] sm:$0xf]
        %v257 = vld [vmem:[%s226 + $0xa8] sm:$0xff]
        %v258 = vld [vmem:[%s226 + $0xb0] sm:$0xf]
        %v259 = vld [vmem:[%s226 + $0xb4] sm:$0xff]
        %v260 = vld [vmem:[%s226 + $0xbc] sm:$0xf]
        %v261 = vld [vmem:[%s226 + $0xc0] sm:$0xff]
        %v262 = vld [vmem:[%s226 + $0xc8] sm:$0xf]
        %v263 = vld [vmem:[%s226 + $0xcc] sm:$0xff]
        %v264 = vld [vmem:[%s226 + $0xd4] sm:$0xf]
        %v265 = vld [vmem:[%s226 + $0xd8] sm:$0xff]
        %v266 = vld [vmem:[%s226 + $0xe0] sm:$0xf]
        %v267 = vld [vmem:[%s226 + $0xe4] sm:$0xff]
        %v268 = vld [vmem:[%s226 + $0xec] sm:$0xf]
        %v269 = vld [vmem:[%s226 + $0xf0] sm:$0xff]
        %v270 = vld [vmem:[%s226 + $0xf8] sm:$0xf]
        %v271 = vld [vmem:[%s226 + $0xfc] sm:$0xff]
        %v272 = vld [vmem:[%s226 + $0x104] sm:$0xf]
        %v273 = vld [vmem:[%s226 + $0x108] sm:$0xff]
        %v274 = vld [vmem:[%s226 + $0x110] sm:$0xf]
        %v275 = vld [vmem:[%s226 + $0x114] sm:$0xff]
        %v276 = vld [vmem:[%s226 + $0x11c] sm:$0xf]
        %v277 = vld [vmem:[%s226 + $0x120] sm:$0xff]
        %v278 = vld [vmem:[%s226 + $0x128] sm:$0xf]
        %v279 = vld [vmem:[%s226 + $0x12c] sm:$0xff]
        %v280 = vld [vmem:[%s226 + $0x134] sm:$0xf]
        %v281 = vld [vmem:[%s226 + $0x138] sm:$0xff]
        %v282 = vld [vmem:[%s226 + $0x140] sm:$0xf]
        %v283 = vld [vmem:[%s226 + $0x144] sm:$0xff]
        %v284 = vld [vmem:[%s226 + $0x14c] sm:$0xf]
        %v285 = vld [vmem:[%s226 + $0x150] sm:$0xff]
        %v286 = vld [vmem:[%s226 + $0x158] sm:$0xf]
        %v287 = vld [vmem:[%s226 + $0x15c] sm:$0xff]
        %v288 = vld [vmem:[%s226 + $0x164] sm:$0xf]
        %v289 = vld [vmem:[%s226 + $0x168] sm:$0xff]
        %v290 = vld [vmem:[%s226 + $0x170] sm:$0xf]
        %v291 = vld [vmem:[%s226 + $0x174] sm:$0xff]
        %v292 = vld [vmem:[%s226 + $0x17c] sm:$0xf]
        %v293 = vld [vmem:[%s226 + $0x180] sm:$0xff]
        %v294 = vld [vmem:[%s226 + $0x188] sm:$0xf]
        %v295 = vld [vmem:[%s226 + $0x18c] sm:$0xff]
        %v296 = vld [vmem:[%s226 + $0x194] sm:$0xf]
        %v297 = vld [vmem:[%s226 + $0x198] sm:$0xff]
        %v298 = vld [vmem:[%s226 + $0x1a0] sm:$0xf]
        %v299 = vld [vmem:[%s226 + $0x1a4] sm:$0xff]
        %v300 = vld [vmem:[%s226 + $0x1ac] sm:$0xf]
        %v301 = vld [vmem:[%s226 + $0x1b0] sm:$0xff]
        %v302 = vld [vmem:[%s226 + $0x1b8] sm:$0xf]
        %v303 = vld [vmem:[%s226 + $0x1bc] sm:$0xff]
        %v304 = vld [vmem:[%s226 + $0x1c4] sm:$0xf]
        %v305 = vld [vmem:[%s226 + $0x1c8] sm:$0xff]
        %v306 = vld [vmem:[%s226 + $0x1d0] sm:$0xf]
        %v307 = vld [vmem:[%s226 + $0x1d4] sm:$0xff]
        %v308 = vld [vmem:[%s226 + $0x1dc] sm:$0xf]
        %v309 = vld [vmem:[%s226 + $0x1e0] sm:$0xff]
        %v310 = vld [vmem:[%s226 + $0x1e8] sm:$0xf]
        %v311 = vld [vmem:[%s226 + $0x1ec] sm:$0xff]
        %v312 = vld [vmem:[%s226 + $0x1f4] sm:$0xf]
        %v313 = vld [vmem:[%s226 + $0x1f8] sm:$0xff]
        %v314 = vld [vmem:[%s226 + $0x200] sm:$0xf]
        %v315 = vld [vmem:[%s226 + $0x204] sm:$0xff]
        %v316 = vld [vmem:[%s226 + $0x20c] sm:$0xf]
        %v317 = vld [vmem:[%s226 + $0x210] sm:$0xff]
        %v318 = vld [vmem:[%s226 + $0x218] sm:$0xf]
        %v319 = vld [vmem:[%s226 + $0x21c] sm:$0xff]
        %v320 = vld [vmem:[%s226 + $0x224] sm:$0xf]
        %v321 = vld [vmem:[%s226 + $0x228] sm:$0xff]
        %v322 = vld [vmem:[%s226 + $0x230] sm:$0xf]
        %v323 = vld [vmem:[%s226 + $0x234] sm:$0xff]
        %v324 = vld [vmem:[%s226 + $0x23c] sm:$0xf]
        %v325 = vld [vmem:[%s226 + $0x240] sm:$0xff]
        %v326 = vld [vmem:[%s226 + $0x248] sm:$0xf]
        %v327 = vld [vmem:[%s226 + $0x24c] sm:$0xff]
        %v328 = vld [vmem:[%s226 + $0x254] sm:$0xf]
        %v329 = vld [vmem:[%s226 + $0x258] sm:$0xff]
        %v330 = vld [vmem:[%s226 + $0x260] sm:$0xf]
        %v331 = vld [vmem:[%s226 + $0x264] sm:$0xff]
        %v332 = vld [vmem:[%s226 + $0x26c] sm:$0xf]
        %v333 = vld [vmem:[%s226 + $0x270] sm:$0xff]
        %v334 = vld [vmem:[%s226 + $0x278] sm:$0xf]
        %v335 = vld [vmem:[%s226 + $0x27c] sm:$0xff]
        %v336 = vld [vmem:[%s226 + $0x284] sm:$0xf]
        %v337 = vld [vmem:[%s226 + $0x288] sm:$0xff]
        %v338 = vld [vmem:[%s226 + $0x290] sm:$0xf]
        %v339 = vld [vmem:[%s226 + $0x294] sm:$0xff]
        %v340 = vld [vmem:[%s226 + $0x29c] sm:$0xf]
        %v341 = vld [vmem:[%s226 + $0x2a0] sm:$0xff]
        %v342 = vld [vmem:[%s226 + $0x2a8] sm:$0xf]
        %v343 = vld [vmem:[%s226 + $0x2ac] sm:$0xff]
        %v344 = vld [vmem:[%s226 + $0x2b4] sm:$0xf]
        %v345 = vld [vmem:[%s226 + $0x2b8] sm:$0xff]
        %v346 = vld [vmem:[%s226 + $0x2c0] sm:$0xf]
        %v347 = vld [vmem:[%s226 + $0x2c4] sm:$0xff]
        %v348 = vld [vmem:[%s226 + $0x2cc] sm:$0xf]
        %v349 = vld [vmem:[%s226 + $0x2d0] sm:$0xff]
        %v350 = vld [vmem:[%s226 + $0x2d8] sm:$0xf]
        %v351 = vld [vmem:[%s226 + $0x2dc] sm:$0xff]
        %v352 = vld [vmem:[%s226 + $0x2e4] sm:$0xf]
        %v353 = vld [vmem:[%s226 + $0x2e8] sm:$0xff]
        %v354 = vld [vmem:[%s226 + $0x2f0] sm:$0xf]
        %v355 = vld [vmem:[%s226 + $0x2f4] sm:$0xff]
        %v356 = vld [vmem:[%s226 + $0x2fc] sm:$0xf]
        %v357 = vld [vmem:[%s1] sm:$0xf]
        %v358 = vld [vmem:[%s1 + $0x4] sm:$0xf]
        %v359 = vld [vmem:[%s1 + $0x8] sm:$0xf]
        %v360 = vld [vmem:[%s1 + $0xc] sm:$0xf]
        %v361 = vld [vmem:[%s1 + $0x10] sm:$0xf]
        %v362 = vld [vmem:[%s1 + $0x14] sm:$0xf]
        %v363 = vld [vmem:[%s1 + $0x18] sm:$0xf]
        %v364 = vld [vmem:[%s1 + $0x1c] sm:$0xf]
        %v365 = vld [vmem:[%s1 + $0x20] sm:$0xf]
        %v366 = vld [vmem:[%s1 + $0x24] sm:$0xf]
        %v367 = vld [vmem:[%s1 + $0x28] sm:$0xf]
        %v368 = vld [vmem:[%s1 + $0x2c] sm:$0xf]
        %v369 = vld [vmem:[%s1 + $0x30] sm:$0xf]
        %v370 = vld [vmem:[%s1 + $0x34] sm:$0xf]
        %v371 = vld [vmem:[%s1 + $0x38] sm:$0xf]
        %v372 = vld [vmem:[%s1 + $0x3c] sm:$0xf]
        %v373 = vld [vmem:[%s1 + $0x40] sm:$0xf]
        %v374 = vld [vmem:[%s1 + $0x44] sm:$0xf]
        %v375 = vld [vmem:[%s1 + $0x48] sm:$0xf]
        %v376 = vld [vmem:[%s1 + $0x4c] sm:$0xf]
        %v377 = vld [vmem:[%s1 + $0x50] sm:$0xf]
        %v378 = vld [vmem:[%s1 + $0x54] sm:$0xf]
        %v379 = vld [vmem:[%s1 + $0x58] sm:$0xf]
        %v380 = vld [vmem:[%s1 + $0x5c] sm:$0xf]
        %v381 = vld [vmem:[%s1 + $0x60] sm:$0xf]
        %v382 = vld [vmem:[%s1 + $0x64] sm:$0xf]
        %v383 = vld [vmem:[%s1 + $0x68] sm:$0xf]
        %v384 = vld [vmem:[%s1 + $0x6c] sm:$0xf]
        %v385 = vld [vmem:[%s1 + $0x70] sm:$0xf]
        %v386 = vld [vmem:[%s1 + $0x74] sm:$0xf]
        %v387 = vld [vmem:[%s1 + $0x78] sm:$0xf]
        %v388 = vld [vmem:[%s1 + $0x7c] sm:$0xf]
        %v389 = vld [vmem:[%s1 + $0x80] sm:$0xf]
        %v390 = vld [vmem:[%s1 + $0x84] sm:$0xf]
        %v391 = vld [vmem:[%s1 + $0x88] sm:$0xf]
        %v392 = vld [vmem:[%s1 + $0x8c] sm:$0xf]
        %v393 = vld [vmem:[%s1 + $0x90] sm:$0xf]
        %v394 = vld [vmem:[%s1 + $0x94] sm:$0xf]
        %v395 = vld [vmem:[%s1 + $0x98] sm:$0xf]
        %v396 = vld [vmem:[%s1 + $0x9c] sm:$0xf]
        %v397 = vld [vmem:[%s1 + $0xa0] sm:$0xf]
        %v398 = vld [vmem:[%s1 + $0xa4] sm:$0xf]
        %v399 = vld [vmem:[%s1 + $0xa8] sm:$0xf]
        %v400 = vld [vmem:[%s1 + $0xac] sm:$0xf]
        %v401 = vld [vmem:[%s1 + $0xb0] sm:$0xf]
        %v402 = vld [vmem:[%s1 + $0xb4] sm:$0xf]
        %v403 = vld [vmem:[%s1 + $0xb8] sm:$0xf]
        %v404 = vld [vmem:[%s1 + $0xbc] sm:$0xf]
        %v405 = vld [vmem:[%s2] sm:$0x1]
        %v407 = vlaneseq
        %v408 = vshrl.u32 %v407, 7
        %v409 = vsub.s32 0, %v408
        %v410 = vrot.slane %v405, %v409
        %v540 = vunpack.c.l.b16 %v229
        %v541 = vunpack.c.h.b16 %v229
        %v542 = vunpack.c.l.b16 %v230
        %v543 = vunpack.c.l.b16 %v231
        %v544 = vunpack.c.h.b16 %v231
        %v545 = vunpack.c.l.b16 %v232
        %v546 = vunpack.c.l.b16 %v233
        %v547 = vunpack.c.h.b16 %v233
        %v548 = vunpack.c.l.b16 %v234
        %v549 = vunpack.c.l.b16 %v235
        %v550 = vunpack.c.h.b16 %v235
        %v551 = vunpack.c.l.b16 %v236
        %v552 = vunpack.c.l.b16 %v237
        %v553 = vunpack.c.h.b16 %v237
        %v554 = vunpack.c.l.b16 %v238
        %v555 = vunpack.c.l.b16 %v239
        %v556 = vunpack.c.h.b16 %v239
        %v557 = vunpack.c.l.b16 %v240
        %v558 = vunpack.c.l.b16 %v241
        %v559 = vunpack.c.h.b16 %v241
        %v560 = vunpack.c.l.b16 %v242
        %v561 = vunpack.c.l.b16 %v243
        %v562 = vunpack.c.h.b16 %v243
        %v563 = vunpack.c.l.b16 %v244
        %v564 = vunpack.c.l.b16 %v245
        %v565 = vunpack.c.h.b16 %v245
        %v566 = vunpack.c.l.b16 %v246
        %v567 = vunpack.c.l.b16 %v247
        %v568 = vunpack.c.h.b16 %v247
        %v569 = vunpack.c.l.b16 %v248
        %v570 = vunpack.c.l.b16 %v249
        %v571 = vunpack.c.h.b16 %v249
        %v572 = vunpack.c.l.b16 %v250
        %v573 = vunpack.c.l.b16 %v251
        %v574 = vunpack.c.h.b16 %v251
        %v575 = vunpack.c.l.b16 %v252
        %v576 = vunpack.c.l.b16 %v253
        %v577 = vunpack.c.h.b16 %v253
        %v578 = vunpack.c.l.b16 %v254
        %v579 = vunpack.c.l.b16 %v255
        %v580 = vunpack.c.h.b16 %v255
        %v581 = vunpack.c.l.b16 %v256
        %v582 = vunpack.c.l.b16 %v257
        %v583 = vunpack.c.h.b16 %v257
        %v584 = vunpack.c.l.b16 %v258
        %v585 = vunpack.c.l.b16 %v259
        %v586 = vunpack.c.h.b16 %v259
        %v587 = vunpack.c.l.b16 %v260
        %v588 = vunpack.c.l.b16 %v261
        %v589 = vunpack.c.h.b16 %v261
        %v590 = vunpack.c.l.b16 %v262
        %v591 = vunpack.c.l.b16 %v263
        %v592 = vunpack.c.h.b16 %v263
        %v593 = vunpack.c.l.b16 %v264
        %v594 = vunpack.c.l.b16 %v265
        %v595 = vunpack.c.h.b16 %v265
        %v596 = vunpack.c.l.b16 %v266
        %v597 = vunpack.c.l.b16 %v267
        %v598 = vunpack.c.h.b16 %v267
        %v599 = vunpack.c.l.b16 %v268
        %v600 = vunpack.c.l.b16 %v269
        %v601 = vunpack.c.h.b16 %v269
        %v602 = vunpack.c.l.b16 %v270
        %v603 = vunpack.c.l.b16 %v271
        %v604 = vunpack.c.h.b16 %v271
        %v605 = vunpack.c.l.b16 %v272
        %v606 = vunpack.c.l.b16 %v273
        %v607 = vunpack.c.h.b16 %v273
        %v608 = vunpack.c.l.b16 %v274
        %v609 = vunpack.c.l.b16 %v275
        %v610 = vunpack.c.h.b16 %v275
        %v611 = vunpack.c.l.b16 %v276
        %v612 = vunpack.c.l.b16 %v277
        %v613 = vunpack.c.h.b16 %v277
        %v614 = vunpack.c.l.b16 %v278
        %v615 = vunpack.c.l.b16 %v279
        %v616 = vunpack.c.h.b16 %v279
        %v617 = vunpack.c.l.b16 %v280
        %v618 = vunpack.c.l.b16 %v281
        %v619 = vunpack.c.h.b16 %v281
        %v620 = vunpack.c.l.b16 %v282
        %v621 = vunpack.c.l.b16 %v283
        %v622 = vunpack.c.h.b16 %v283
        %v623 = vunpack.c.l.b16 %v284
        %v624 = vunpack.c.l.b16 %v285
        %v625 = vunpack.c.h.b16 %v285
        %v626 = vunpack.c.l.b16 %v286
        %v627 = vunpack.c.l.b16 %v287
        %v628 = vunpack.c.h.b16 %v287
        %v629 = vunpack.c.l.b16 %v288
        %v630 = vunpack.c.l.b16 %v289
        %v631 = vunpack.c.h.b16 %v289
        %v632 = vunpack.c.l.b16 %v290
        %v633 = vunpack.c.l.b16 %v291
        %v634 = vunpack.c.h.b16 %v291
        %v635 = vunpack.c.l.b16 %v292
        %v636 = vunpack.c.l.b16 %v293
        %v637 = vunpack.c.h.b16 %v293
        %v638 = vunpack.c.l.b16 %v294
        %v639 = vunpack.c.l.b16 %v295
        %v640 = vunpack.c.h.b16 %v295
        %v641 = vunpack.c.l.b16 %v296
        %v642 = vunpack.c.l.b16 %v297
        %v643 = vunpack.c.h.b16 %v297
        %v644 = vunpack.c.l.b16 %v298
        %v645 = vunpack.c.l.b16 %v299
        %v646 = vunpack.c.h.b16 %v299
        %v647 = vunpack.c.l.b16 %v300
        %v648 = vunpack.c.l.b16 %v301
        %v649 = vunpack.c.h.b16 %v301
        %v650 = vunpack.c.l.b16 %v302
        %v651 = vunpack.c.l.b16 %v303
        %v652 = vunpack.c.h.b16 %v303
        %v653 = vunpack.c.l.b16 %v304
        %v654 = vunpack.c.l.b16 %v305
        %v655 = vunpack.c.h.b16 %v305
        %v656 = vunpack.c.l.b16 %v306
        %v657 = vunpack.c.l.b16 %v307
        %v658 = vunpack.c.h.b16 %v307
        %v659 = vunpack.c.l.b16 %v308
        %v660 = vunpack.c.l.b16 %v309
        %v661 = vunpack.c.h.b16 %v309
        %v662 = vunpack.c.l.b16 %v310
        %v663 = vunpack.c.l.b16 %v311
        %v664 = vunpack.c.h.b16 %v311
        %v665 = vunpack.c.l.b16 %v312
        %v666 = vunpack.c.l.b16 %v313
        %v667 = vunpack.c.h.b16 %v313
        %v668 = vunpack.c.l.b16 %v314
        %v669 = vunpack.c.l.b16 %v315
        %v670 = vunpack.c.h.b16 %v315
        %v671 = vunpack.c.l.b16 %v316
        %v672 = vunpack.c.l.b16 %v317
        %v673 = vunpack.c.h.b16 %v317
        %v674 = vunpack.c.l.b16 %v318
        %v675 = vunpack.c.l.b16 %v319
        %v676 = vunpack.c.h.b16 %v319
        %v677 = vunpack.c.l.b16 %v320
        %v678 = vunpack.c.l.b16 %v321
        %v679 = vunpack.c.h.b16 %v321
        %v680 = vunpack.c.l.b16 %v322
        %v681 = vunpack.c.l.b16 %v323
        %v682 = vunpack.c.h.b16 %v323
        %v683 = vunpack.c.l.b16 %v324
        %v684 = vunpack.c.l.b16 %v325
        %v685 = vunpack.c.h.b16 %v325
        %v686 = vunpack.c.l.b16 %v326
        %v687 = vunpack.c.l.b16 %v327
        %v688 = vunpack.c.h.b16 %v327
        %v689 = vunpack.c.l.b16 %v328
        %v690 = vunpack.c.l.b16 %v329
        %v691 = vunpack.c.h.b16 %v329
        %v692 = vunpack.c.l.b16 %v330
        %v693 = vunpack.c.l.b16 %v331
        %v694 = vunpack.c.h.b16 %v331
        %v695 = vunpack.c.l.b16 %v332
        %v696 = vunpack.c.l.b16 %v333
        %v697 = vunpack.c.h.b16 %v333
        %v698 = vunpack.c.l.b16 %v334
        %v699 = vunpack.c.l.b16 %v335
        %v700 = vunpack.c.h.b16 %v335
        %v701 = vunpack.c.l.b16 %v336
        %v702 = vunpack.c.l.b16 %v337
        %v703 = vunpack.c.h.b16 %v337
        %v704 = vunpack.c.l.b16 %v338
        %v705 = vunpack.c.l.b16 %v339
        %v706 = vunpack.c.h.b16 %v339
        %v707 = vunpack.c.l.b16 %v340
        %v708 = vunpack.c.l.b16 %v341
        %v709 = vunpack.c.h.b16 %v341
        %v710 = vunpack.c.l.b16 %v342
        %v711 = vunpack.c.l.b16 %v343
        %v712 = vunpack.c.h.b16 %v343
        %v713 = vunpack.c.l.b16 %v344
        %v714 = vunpack.c.l.b16 %v345
        %v715 = vunpack.c.h.b16 %v345
        %v716 = vunpack.c.l.b16 %v346
        %v717 = vunpack.c.l.b16 %v347
        %v718 = vunpack.c.h.b16 %v347
        %v719 = vunpack.c.l.b16 %v348
        %v720 = vunpack.c.l.b16 %v349
        %v721 = vunpack.c.h.b16 %v349
        %v722 = vunpack.c.l.b16 %v350
        %v723 = vunpack.c.l.b16 %v351
        %v724 = vunpack.c.h.b16 %v351
        %v725 = vunpack.c.l.b16 %v352
        %v726 = vunpack.c.l.b16 %v353
        %v727 = vunpack.c.h.b16 %v353
        %v728 = vunpack.c.l.b16 %v354
        %v729 = vunpack.c.l.b16 %v355
        %v730 = vunpack.c.h.b16 %v355
        %v731 = vunpack.c.l.b16 %v356
        %v732 = vpack.c.b16 %v543, %v540
        %v733 = vpack.c.b16 %v544, %v541
        %v734 = vpack.c.b16 %v545, %v542
        %v735 = vpack.c.b16 %v549, %v546
        %v736 = vpack.c.b16 %v550, %v547
        %v737 = vpack.c.b16 %v551, %v548
        %v738 = vpack.c.b16 %v555, %v552
        %v739 = vpack.c.b16 %v556, %v553
        %v740 = vpack.c.b16 %v557, %v554
        %v741 = vpack.c.b16 %v561, %v558
        %v742 = vpack.c.b16 %v562, %v559
        %v743 = vpack.c.b16 %v563, %v560
        %v744 = vpack.c.b16 %v567, %v564
        %v745 = vpack.c.b16 %v568, %v565
        %v746 = vpack.c.b16 %v569, %v566
        %v747 = vpack.c.b16 %v573, %v570
        %v748 = vpack.c.b16 %v574, %v571
        %v749 = vpack.c.b16 %v575, %v572
        %v750 = vpack.c.b16 %v579, %v576
        %v751 = vpack.c.b16 %v580, %v577
        %v752 = vpack.c.b16 %v581, %v578
        %v753 = vpack.c.b16 %v585, %v582
        %v754 = vpack.c.b16 %v586, %v583
        %v755 = vpack.c.b16 %v587, %v584
        %v756 = vpack.c.b16 %v591, %v588
        %v757 = vpack.c.b16 %v592, %v589
        %v758 = vpack.c.b16 %v593, %v590
        %v759 = vpack.c.b16 %v597, %v594
        %v760 = vpack.c.b16 %v598, %v595
        %v761 = vpack.c.b16 %v599, %v596
        %v762 = vpack.c.b16 %v603, %v600
        %v763 = vpack.c.b16 %v604, %v601
        %v764 = vpack.c.b16 %v605, %v602
        %v765 = vpack.c.b16 %v609, %v606
        %v766 = vpack.c.b16 %v610, %v607
        %v767 = vpack.c.b16 %v611, %v608
        %v768 = vpack.c.b16 %v615, %v612
        %v769 = vpack.c.b16 %v616, %v613
        %v770 = vpack.c.b16 %v617, %v614
        %v771 = vpack.c.b16 %v621, %v618
        %v772 = vpack.c.b16 %v622, %v619
        %v773 = vpack.c.b16 %v623, %v620
        %v774 = vpack.c.b16 %v627, %v624
        %v775 = vpack.c.b16 %v628, %v625
        %v776 = vpack.c.b16 %v629, %v626
        %v777 = vpack.c.b16 %v633, %v630
        %v778 = vpack.c.b16 %v634, %v631
        %v779 = vpack.c.b16 %v635, %v632
        %v780 = vpack.c.b16 %v639, %v636
        %v781 = vpack.c.b16 %v640, %v637
        %v782 = vpack.c.b16 %v641, %v638
        %v783 = vpack.c.b16 %v645, %v642
        %v784 = vpack.c.b16 %v646, %v643
        %v785 = vpack.c.b16 %v647, %v644
        %v786 = vpack.c.b16 %v651, %v648
        %v787 = vpack.c.b16 %v652, %v649
        %v788 = vpack.c.b16 %v653, %v650
        %v789 = vpack.c.b16 %v657, %v654
        %v790 = vpack.c.b16 %v658, %v655
        %v791 = vpack.c.b16 %v659, %v656
        %v792 = vpack.c.b16 %v663, %v660
        %v793 = vpack.c.b16 %v664, %v661
        %v794 = vpack.c.b16 %v665, %v662
        %v795 = vpack.c.b16 %v669, %v666
        %v796 = vpack.c.b16 %v670, %v667
        %v797 = vpack.c.b16 %v671, %v668
        %v798 = vpack.c.b16 %v675, %v672
        %v799 = vpack.c.b16 %v676, %v673
        %v800 = vpack.c.b16 %v677, %v674
        %v801 = vpack.c.b16 %v681, %v678
        %v802 = vpack.c.b16 %v682, %v679
        %v803 = vpack.c.b16 %v683, %v680
        %v804 = vpack.c.b16 %v687, %v684
        %v805 = vpack.c.b16 %v688, %v685
        %v806 = vpack.c.b16 %v689, %v686
        %v807 = vpack.c.b16 %v693, %v690
        %v808 = vpack.c.b16 %v694, %v691
        %v809 = vpack.c.b16 %v695, %v692
        %v810 = vpack.c.b16 %v699, %v696
        %v811 = vpack.c.b16 %v700, %v697
        %v812 = vpack.c.b16 %v701, %v698
        %v813 = vpack.c.b16 %v705, %v702
        %v814 = vpack.c.b16 %v706, %v703
        %v815 = vpack.c.b16 %v707, %v704
        %v816 = vpack.c.b16 %v711, %v708
        %v817 = vpack.c.b16 %v712, %v709
        %v818 = vpack.c.b16 %v713, %v710
        %v819 = vpack.c.b16 %v717, %v714
        %v820 = vpack.c.b16 %v718, %v715
        %v821 = vpack.c.b16 %v719, %v716
        %v822 = vpack.c.b16 %v723, %v720
        %v823 = vpack.c.b16 %v724, %v721
        %v824 = vpack.c.b16 %v725, %v722
        %v825 = vpack.c.b16 %v729, %v726
        %v826 = vpack.c.b16 %v730, %v727
        %v827 = vpack.c.b16 %v731, %v728
        %v972 = vunpack.c.l.b16 %v357
        %v973 = vunpack.c.l.b16 %v358
        %v974 = vunpack.c.l.b16 %v359
        %v975 = vunpack.c.l.b16 %v360
        %v976 = vunpack.c.l.b16 %v361
        %v977 = vunpack.c.l.b16 %v362
        %v978 = vunpack.c.l.b16 %v363
        %v979 = vunpack.c.l.b16 %v364
        %v980 = vunpack.c.l.b16 %v365
        %v981 = vunpack.c.l.b16 %v366
        %v982 = vunpack.c.l.b16 %v367
        %v983 = vunpack.c.l.b16 %v368
        %v984 = vunpack.c.l.b16 %v369
        %v985 = vunpack.c.l.b16 %v370
        %v986 = vunpack.c.l.b16 %v371
        %v987 = vunpack.c.l.b16 %v372
        %v988 = vunpack.c.l.b16 %v373
        %v989 = vunpack.c.l.b16 %v374
        %v990 = vunpack.c.l.b16 %v375
        %v991 = vunpack.c.l.b16 %v376
        %v992 = vunpack.c.l.b16 %v377
        %v993 = vunpack.c.l.b16 %v378
        %v994 = vunpack.c.l.b16 %v379
        %v995 = vunpack.c.l.b16 %v380
        %v996 = vunpack.c.l.b16 %v381
        %v997 = vunpack.c.l.b16 %v382
        %v998 = vunpack.c.l.b16 %v383
        %v999 = vunpack.c.l.b16 %v384
        %v1000 = vunpack.c.l.b16 %v385
        %v1001 = vunpack.c.l.b16 %v386
        %v1002 = vunpack.c.l.b16 %v387
        %v1003 = vunpack.c.l.b16 %v388
        %v1004 = vunpack.c.l.b16 %v389
        %v1005 = vunpack.c.l.b16 %v390
        %v1006 = vunpack.c.l.b16 %v391
        %v1007 = vunpack.c.l.b16 %v392
        %v1008 = vunpack.c.l.b16 %v393
        %v1009 = vunpack.c.l.b16 %v394
        %v1010 = vunpack.c.l.b16 %v395
        %v1011 = vunpack.c.l.b16 %v396
        %v1012 = vunpack.c.l.b16 %v397
        %v1013 = vunpack.c.l.b16 %v398
        %v1014 = vunpack.c.l.b16 %v399
        %v1015 = vunpack.c.l.b16 %v400
        %v1016 = vunpack.c.l.b16 %v401
        %v1017 = vunpack.c.l.b16 %v402
        %v1018 = vunpack.c.l.b16 %v403
        %v1019 = vunpack.c.l.b16 %v404
        %v1020 = vpack.c.b16 %v973, %v972
        %v1021 = vpack.c.b16 %v975, %v974
        %v1022 = vpack.c.b16 %v977, %v976
        %v1023 = vpack.c.b16 %v979, %v978
        %v1024 = vpack.c.b16 %v981, %v980
        %v1025 = vpack.c.b16 %v983, %v982
        %v1026 = vpack.c.b16 %v985, %v984
        %v1027 = vpack.c.b16 %v987, %v986
        %v1028 = vpack.c.b16 %v989, %v988
        %v1029 = vpack.c.b16 %v991, %v990
        %v1030 = vpack.c.b16 %v993, %v992
        %v1031 = vpack.c.b16 %v995, %v994
        %v1032 = vpack.c.b16 %v997, %v996
        %v1033 = vpack.c.b16 %v999, %v998
        %v1034 = vpack.c.b16 %v1001, %v1000
        %v1035 = vpack.c.b16 %v1003, %v1002
        %v1036 = vpack.c.b16 %v1005, %v1004
        %v1037 = vpack.c.b16 %v1007, %v1006
        %v1038 = vpack.c.b16 %v1009, %v1008
        %v1039 = vpack.c.b16 %v1011, %v1010
        %v1040 = vpack.c.b16 %v1013, %v1012
        %v1041 = vpack.c.b16 %v1015, %v1014
        %v1042 = vpack.c.b16 %v1017, %v1016
        %v1043 = vpack.c.b16 %v1019, %v1018
        %1068 = vmatprep.subr.bf16.mxu0 0
        %1069 = vmatpush1.bf16.msra.mxu0 %v1027
        %1070 = vmatprep.subr.bf16.mxu0 0
        %1071 = vmatpush1.bf16.msra.mxu0 %v1026
        %1072 = vmatprep.subr.bf16.mxu0 0
        %1073 = vmatpush1.bf16.msra.mxu0 %v1025
        %1074 = vmatprep.subr.bf16.mxu0 0
        %1075 = vmatpush1.bf16.msra.mxu0 %v1024
        %1076 = vmatprep.subr.bf16.mxu0 0
        %1077 = vmatpush1.bf16.msra.mxu0 %v1023
        %1078 = vmatprep.subr.bf16.mxu0 0
        %1079 = vmatpush1.bf16.msra.mxu0 %v1022
        %1080 = vmatprep.subr.bf16.mxu0 0
        %1081 = vmatpush1.bf16.msra.mxu0 %v1021
        %1082 = vmatprep.subr.bf16.mxu0 0
        %1083 = vmatpush1.bf16.msra.mxu0 %v1020
        %1084 = vmatprep.subr.bf16.mxu0 0
        %1085 = vmatpush2.bf16.msra.mxu0 %v1035
        %1086 = vmatprep.subr.bf16.mxu0 0
        %1087 = vmatpush2.bf16.msra.mxu0 %v1034
        %1088 = vmatprep.subr.bf16.mxu0 0
        %1089 = vmatpush2.bf16.msra.mxu0 %v1033
        %1090 = vmatprep.subr.bf16.mxu0 0
        %1091 = vmatpush2.bf16.msra.mxu0 %v1032
        %1092 = vmatprep.subr.bf16.mxu0 0
        %1093 = vmatpush2.bf16.msra.mxu0 %v1031
        %1094 = vmatprep.subr.bf16.mxu0 0
        %1095 = vmatpush2.bf16.msra.mxu0 %v1030
        %1096 = vmatprep.subr.bf16.mxu0 0
        %1097 = vmatpush2.bf16.msra.mxu0 %v1029
        %1098 = vmatprep.subr.bf16.mxu0 0
        %1099 = vmatpush2.bf16.msra.mxu0 %v1028
        %1100 = vmatprep.mubr.bf16.mxu0 %v733
        %1101 = vmatmul.mubr.bf16.gmra.mxu0 %v732
        %v1102 = vpop.f32.mrf.mxu0
        %v1103 = vadd.f32 %v410, %v1102
        %v1104 = vpop.f32.mrf.mxu0
        %v1105 = vpop.f32.mrf.mxu0
        %v1106 = vadd.f32 %v410, %v1105
        %v1107 = vpop.f32.mrf.mxu0
        %1108 = vmatprep.mubr.bf16.mxu0 %v736
        %1109 = vmatmul.mubr.bf16.gmra.mxu0 %v735
        %v1110 = vpop.f32.mrf.mxu0
        %v1111 = vadd.f32 %v410, %v1110
        %v1112 = vpop.f32.mrf.mxu0
        %v1113 = vpop.f32.mrf.mxu0
        %v1114 = vadd.f32 %v410, %v1113
        %v1115 = vpop.f32.mrf.mxu0
        %1116 = vmatprep.mubr.bf16.mxu0 %v739
        %1117 = vmatmul.mubr.bf16.gmra.mxu0 %v738
        %v1118 = vpop.f32.mrf.mxu0
        %v1119 = vadd.f32 %v410, %v1118
        %v1120 = vpop.f32.mrf.mxu0
        %v1121 = vpop.f32.mrf.mxu0
        %v1122 = vadd.f32 %v410, %v1121
        %v1123 = vpop.f32.mrf.mxu0
        %1124 = vmatprep.mubr.bf16.mxu0 %v742
        %1125 = vmatmul.mubr.bf16.gmra.mxu0 %v741
        %v1126 = vpop.f32.mrf.mxu0
        %v1127 = vadd.f32 %v410, %v1126
        %v1128 = vpop.f32.mrf.mxu0
        %v1129 = vpop.f32.mrf.mxu0
        %v1130 = vadd.f32 %v410, %v1129
        %v1131 = vpop.f32.mrf.mxu0
        %1132 = vmatprep.mubr.bf16.mxu0 %v745
        %1133 = vmatmul.mubr.bf16.gmra.mxu0 %v744
        %v1134 = vpop.f32.mrf.mxu0
        %v1135 = vadd.f32 %v410, %v1134
        %v1136 = vpop.f32.mrf.mxu0
        %v1137 = vpop.f32.mrf.mxu0
        %v1138 = vadd.f32 %v410, %v1137
        %v1139 = vpop.f32.mrf.mxu0
        %1140 = vmatprep.mubr.bf16.mxu0 %v748
        %1141 = vmatmul.mubr.bf16.gmra.mxu0 %v747
        %v1142 = vpop.f32.mrf.mxu0
        %v1143 = vadd.f32 %v410, %v1142
        %v1144 = vpop.f32.mrf.mxu0
        %v1145 = vpop.f32.mrf.mxu0
        %v1146 = vadd.f32 %v410, %v1145
        %v1147 = vpop.f32.mrf.mxu0
        %1148 = vmatprep.mubr.bf16.mxu0 %v751
        %1149 = vmatmul.mubr.bf16.gmra.mxu0 %v750
        %v1150 = vpop.f32.mrf.mxu0
        %v1151 = vadd.f32 %v410, %v1150
        %v1152 = vpop.f32.mrf.mxu0
        %v1153 = vpop.f32.mrf.mxu0
        %v1154 = vadd.f32 %v410, %v1153
        %v1155 = vpop.f32.mrf.mxu0
        %1156 = vmatprep.mubr.bf16.mxu0 %v754
        %1157 = vmatmul.mubr.bf16.gmra.mxu0 %v753
        %v1158 = vpop.f32.mrf.mxu0
        %v1159 = vadd.f32 %v410, %v1158
        %v1160 = vpop.f32.mrf.mxu0
        %v1161 = vpop.f32.mrf.mxu0
        %v1162 = vadd.f32 %v410, %v1161
        %v1163 = vpop.f32.mrf.mxu0
        %1164 = vmatprep.mubr.bf16.mxu0 %v757
        %1165 = vmatmul.mubr.bf16.gmra.mxu0 %v756
        %v1166 = vpop.f32.mrf.mxu0
        %v1167 = vadd.f32 %v410, %v1166
        %v1168 = vpop.f32.mrf.mxu0
        %v1169 = vpop.f32.mrf.mxu0
        %v1170 = vadd.f32 %v410, %v1169
        %v1171 = vpop.f32.mrf.mxu0
        %1172 = vmatprep.mubr.bf16.mxu0 %v760
        %1173 = vmatmul.mubr.bf16.gmra.mxu0 %v759
        %v1174 = vpop.f32.mrf.mxu0
        %v1175 = vadd.f32 %v410, %v1174
        %v1176 = vpop.f32.mrf.mxu0
        %v1177 = vpop.f32.mrf.mxu0
        %v1178 = vadd.f32 %v410, %v1177
        %v1179 = vpop.f32.mrf.mxu0
        %1180 = vmatprep.mubr.bf16.mxu0 %v763
        %1181 = vmatmul.mubr.bf16.gmra.mxu0 %v762
        %v1182 = vpop.f32.mrf.mxu0
        %v1183 = vadd.f32 %v410, %v1182
        %v1184 = vpop.f32.mrf.mxu0
        %v1185 = vpop.f32.mrf.mxu0
        %v1186 = vadd.f32 %v410, %v1185
        %v1187 = vpop.f32.mrf.mxu0
        %1188 = vmatprep.mubr.bf16.mxu0 %v766
        %1189 = vmatmul.mubr.bf16.gmra.mxu0 %v765
        %v1190 = vpop.f32.mrf.mxu0
        %v1191 = vadd.f32 %v410, %v1190
        %v1192 = vpop.f32.mrf.mxu0
        %v1193 = vpop.f32.mrf.mxu0
        %v1194 = vadd.f32 %v410, %v1193
        %v1195 = vpop.f32.mrf.mxu0
        %1196 = vmatprep.mubr.bf16.mxu0 %v769
        %1197 = vmatmul.mubr.bf16.gmra.mxu0 %v768
        %v1198 = vpop.f32.mrf.mxu0
        %v1199 = vadd.f32 %v410, %v1198
        %v1200 = vpop.f32.mrf.mxu0
        %v1201 = vpop.f32.mrf.mxu0
        %v1202 = vadd.f32 %v410, %v1201
        %v1203 = vpop.f32.mrf.mxu0
        %1204 = vmatprep.mubr.bf16.mxu0 %v772
        %1205 = vmatmul.mubr.bf16.gmra.mxu0 %v771
        %v1206 = vpop.f32.mrf.mxu0
        %v1207 = vadd.f32 %v410, %v1206
        %v1208 = vpop.f32.mrf.mxu0
        %v1209 = vpop.f32.mrf.mxu0
        %v1210 = vadd.f32 %v410, %v1209
        %v1211 = vpop.f32.mrf.mxu0
        %1212 = vmatprep.mubr.bf16.mxu0 %v775
        %1213 = vmatmul.mubr.bf16.gmra.mxu0 %v774
        %v1214 = vpop.f32.mrf.mxu0
        %v1215 = vadd.f32 %v410, %v1214
        %v1216 = vpop.f32.mrf.mxu0
        %v1217 = vpop.f32.mrf.mxu0
        %v1218 = vadd.f32 %v410, %v1217
        %v1219 = vpop.f32.mrf.mxu0
        %1220 = vmatprep.mubr.bf16.mxu0 %v778
        %1221 = vmatmul.mubr.bf16.gmra.mxu0 %v777
        %v1222 = vpop.f32.mrf.mxu0
        %v1223 = vadd.f32 %v410, %v1222
        %v1224 = vpop.f32.mrf.mxu0
        %v1225 = vpop.f32.mrf.mxu0
        %v1226 = vadd.f32 %v410, %v1225
        %v1227 = vpop.f32.mrf.mxu0
        %1228 = vmatprep.mubr.bf16.mxu0 %v781
        %1229 = vmatmul.mubr.bf16.gmra.mxu0 %v780
        %v1230 = vpop.f32.mrf.mxu0
        %v1231 = vadd.f32 %v410, %v1230
        %v1232 = vpop.f32.mrf.mxu0
        %v1233 = vpop.f32.mrf.mxu0
        %v1234 = vadd.f32 %v410, %v1233
        %v1235 = vpop.f32.mrf.mxu0
        %1236 = vmatprep.mubr.bf16.mxu0 %v784
        %1237 = vmatmul.mubr.bf16.gmra.mxu0 %v783
        %v1238 = vpop.f32.mrf.mxu0
        %v1239 = vadd.f32 %v410, %v1238
        %v1240 = vpop.f32.mrf.mxu0
        %v1241 = vpop.f32.mrf.mxu0
        %v1242 = vadd.f32 %v410, %v1241
        %v1243 = vpop.f32.mrf.mxu0
        %1244 = vmatprep.mubr.bf16.mxu0 %v787
        %1245 = vmatmul.mubr.bf16.gmra.mxu0 %v786
        %v1246 = vpop.f32.mrf.mxu0
        %v1247 = vadd.f32 %v410, %v1246
        %v1248 = vpop.f32.mrf.mxu0
        %v1249 = vpop.f32.mrf.mxu0
        %v1250 = vadd.f32 %v410, %v1249
        %v1251 = vpop.f32.mrf.mxu0
        %1252 = vmatprep.mubr.bf16.mxu0 %v790
        %1253 = vmatmul.mubr.bf16.gmra.mxu0 %v789
        %v1254 = vpop.f32.mrf.mxu0
        %v1255 = vadd.f32 %v410, %v1254
        %v1256 = vpop.f32.mrf.mxu0
        %v1257 = vpop.f32.mrf.mxu0
        %v1258 = vadd.f32 %v410, %v1257
        %v1259 = vpop.f32.mrf.mxu0
        %1260 = vmatprep.mubr.bf16.mxu0 %v793
        %1261 = vmatmul.mubr.bf16.gmra.mxu0 %v792
        %v1262 = vpop.f32.mrf.mxu0
        %v1263 = vadd.f32 %v410, %v1262
        %v1264 = vpop.f32.mrf.mxu0
        %v1265 = vpop.f32.mrf.mxu0
        %v1266 = vadd.f32 %v410, %v1265
        %v1267 = vpop.f32.mrf.mxu0
        %1268 = vmatprep.mubr.bf16.mxu0 %v796
        %1269 = vmatmul.mubr.bf16.gmra.mxu0 %v795
        %v1270 = vpop.f32.mrf.mxu0
        %v1271 = vadd.f32 %v410, %v1270
        %v1272 = vpop.f32.mrf.mxu0
        %v1273 = vpop.f32.mrf.mxu0
        %v1274 = vadd.f32 %v410, %v1273
        %v1275 = vpop.f32.mrf.mxu0
        %1276 = vmatprep.mubr.bf16.mxu0 %v799
        %1277 = vmatmul.mubr.bf16.gmra.mxu0 %v798
        %v1278 = vpop.f32.mrf.mxu0
        %v1279 = vadd.f32 %v410, %v1278
        %v1280 = vpop.f32.mrf.mxu0
        %v1281 = vpop.f32.mrf.mxu0
        %v1282 = vadd.f32 %v410, %v1281
        %v1283 = vpop.f32.mrf.mxu0
        %1284 = vmatprep.mubr.bf16.mxu0 %v802
        %1285 = vmatmul.mubr.bf16.gmra.mxu0 %v801
        %v1286 = vpop.f32.mrf.mxu0
        %v1287 = vadd.f32 %v410, %v1286
        %v1288 = vpop.f32.mrf.mxu0
        %v1289 = vpop.f32.mrf.mxu0
        %v1290 = vadd.f32 %v410, %v1289
        %v1291 = vpop.f32.mrf.mxu0
        %1292 = vmatprep.mubr.bf16.mxu0 %v805
        %1293 = vmatmul.mubr.bf16.gmra.mxu0 %v804
        %v1294 = vpop.f32.mrf.mxu0
        %v1295 = vadd.f32 %v410, %v1294
        %v1296 = vpop.f32.mrf.mxu0
        %v1297 = vpop.f32.mrf.mxu0
        %v1298 = vadd.f32 %v410, %v1297
        %v1299 = vpop.f32.mrf.mxu0
        %1300 = vmatprep.mubr.bf16.mxu0 %v808
        %1301 = vmatmul.mubr.bf16.gmra.mxu0 %v807
        %v1302 = vpop.f32.mrf.mxu0
        %v1303 = vadd.f32 %v410, %v1302
        %v1304 = vpop.f32.mrf.mxu0
        %v1305 = vpop.f32.mrf.mxu0
        %v1306 = vadd.f32 %v410, %v1305
        %v1307 = vpop.f32.mrf.mxu0
        %1308 = vmatprep.mubr.bf16.mxu0 %v811
        %1309 = vmatmul.mubr.bf16.gmra.mxu0 %v810
        %v1310 = vpop.f32.mrf.mxu0
        %v1311 = vadd.f32 %v410, %v1310
        %v1312 = vpop.f32.mrf.mxu0
        %v1313 = vpop.f32.mrf.mxu0
        %v1314 = vadd.f32 %v410, %v1313
        %v1315 = vpop.f32.mrf.mxu0
        %1316 = vmatprep.mubr.bf16.mxu0 %v814
        %1317 = vmatmul.mubr.bf16.gmra.mxu0 %v813
        %v1318 = vpop.f32.mrf.mxu0
        %v1319 = vadd.f32 %v410, %v1318
        %v1320 = vpop.f32.mrf.mxu0
        %v1321 = vpop.f32.mrf.mxu0
        %v1322 = vadd.f32 %v410, %v1321
        %v1323 = vpop.f32.mrf.mxu0
        %1324 = vmatprep.mubr.bf16.mxu0 %v817
        %1325 = vmatmul.mubr.bf16.gmra.mxu0 %v816
        %v1326 = vpop.f32.mrf.mxu0
        %v1327 = vadd.f32 %v410, %v1326
        %v1328 = vpop.f32.mrf.mxu0
        %v1329 = vpop.f32.mrf.mxu0
        %v1330 = vadd.f32 %v410, %v1329
        %v1331 = vpop.f32.mrf.mxu0
        %1332 = vmatprep.mubr.bf16.mxu0 %v820
        %1333 = vmatmul.mubr.bf16.gmra.mxu0 %v819
        %v1334 = vpop.f32.mrf.mxu0
        %v1335 = vadd.f32 %v410, %v1334
        %v1336 = vpop.f32.mrf.mxu0
        %v1337 = vpop.f32.mrf.mxu0
        %v1338 = vadd.f32 %v410, %v1337
        %v1339 = vpop.f32.mrf.mxu0
        %1340 = vmatprep.mubr.bf16.mxu0 %v823
        %1341 = vmatmul.mubr.bf16.gmra.mxu0 %v822
        %v1342 = vpop.f32.mrf.mxu0
        %v1343 = vadd.f32 %v410, %v1342
        %v1344 = vpop.f32.mrf.mxu0
        %v1345 = vpop.f32.mrf.mxu0
        %v1346 = vadd.f32 %v410, %v1345
        %v1347 = vpop.f32.mrf.mxu0
        %1348 = vmatprep.mubr.bf16.mxu0 %v826
        %1349 = vmatmul.mubr.bf16.gmra.mxu0 %v825
        %v1350 = vpop.f32.mrf.mxu0
        %v1351 = vadd.f32 %v410, %v1350
        %v1352 = vpop.f32.mrf.mxu0
        %v1353 = vpop.f32.mrf.mxu0
        %v1354 = vadd.f32 %v410, %v1353
        %v1355 = vpop.f32.mrf.mxu0
        %1356 = vdwg.mxu0
        %1357 = vmatprep.subr.bf16.mxu0 0
        %1358 = vmatpush1.bf16.msra.mxu0 %v1043
        %1359 = vmatprep.subr.bf16.mxu0 0
        %1360 = vmatpush1.bf16.msra.mxu0 %v1042
        %1361 = vmatprep.subr.bf16.mxu0 0
        %1362 = vmatpush1.bf16.msra.mxu0 %v1041
        %1363 = vmatprep.subr.bf16.mxu0 0
        %1364 = vmatpush1.bf16.msra.mxu0 %v1040
        %1365 = vmatprep.subr.bf16.mxu0 0
        %1366 = vmatpush1.bf16.msra.mxu0 %v1039
        %1367 = vmatprep.subr.bf16.mxu0 0
        %1368 = vmatpush1.bf16.msra.mxu0 %v1038
        %1369 = vmatprep.subr.bf16.mxu0 0
        %1370 = vmatpush1.bf16.msra.mxu0 %v1037
        %1371 = vmatprep.subr.bf16.mxu0 0
        %1372 = vmatpush1.bf16.msra.mxu0 %v1036
        %1373 = vmatprep.subr.bf16.mxu0 0
        %1374 = vmatpush2.bf16.msra.mxu0 0
        %1375 = vmatprep.subr.bf16.mxu0 0
        %1376 = vmatpush2.bf16.msra.mxu0 0
        %1377 = vmatprep.subr.bf16.mxu0 0
        %1378 = vmatpush2.bf16.msra.mxu0 0
        %1379 = vmatprep.subr.bf16.mxu0 0
        %1380 = vmatpush2.bf16.msra.mxu0 0
        %1381 = vmatprep.subr.bf16.mxu0 0
        %1382 = vmatpush2.bf16.msra.mxu0 0
        %1383 = vmatprep.subr.bf16.mxu0 0
        %1384 = vmatpush2.bf16.msra.mxu0 0
        %1385 = vmatprep.subr.bf16.mxu0 0
        %1386 = vmatpush2.bf16.msra.mxu0 0
        %1387 = vmatprep.subr.bf16.mxu0 0
        %1388 = vmatpush2.bf16.msra.mxu0 0
        %1389 = vmatprep.mubr.bf16.mxu0 0
        %1390 = vmatmul.mubr.bf16.gmra.mxu0 %v734
        %v1391 = vpop.f32.mrf.mxu0
        %v1392 = vadd.f32 %v1103, %v1391
        %v1393 = vpop.f32.mrf.mxu0
        %v1394 = vpop.f32.mrf.mxu0
        %v1395 = vadd.f32 %v1106, %v1394
        %v1396 = vpop.f32.mrf.mxu0
        %1397 = vmatprep.mubr.bf16.mxu0 0
        %1398 = vmatmul.mubr.bf16.gmra.mxu0 %v737
        %v1399 = vpop.f32.mrf.mxu0
        %v1400 = vadd.f32 %v1111, %v1399
        %v1401 = vpop.f32.mrf.mxu0
        %v1402 = vpop.f32.mrf.mxu0
        %v1403 = vadd.f32 %v1114, %v1402
        %v1404 = vpop.f32.mrf.mxu0
        %1405 = vmatprep.mubr.bf16.mxu0 0
        %1406 = vmatmul.mubr.bf16.gmra.mxu0 %v740
        %v1407 = vpop.f32.mrf.mxu0
        %v1408 = vadd.f32 %v1119, %v1407
        %v1409 = vpop.f32.mrf.mxu0
        %v1410 = vpop.f32.mrf.mxu0
        %v1411 = vadd.f32 %v1122, %v1410
        %v1412 = vpop.f32.mrf.mxu0
        %1413 = vmatprep.mubr.bf16.mxu0 0
        %1414 = vmatmul.mubr.bf16.gmra.mxu0 %v743
        %v1415 = vpop.f32.mrf.mxu0
        %v1416 = vadd.f32 %v1127, %v1415
        %v1417 = vpop.f32.mrf.mxu0
        %v1418 = vpop.f32.mrf.mxu0
        %v1419 = vadd.f32 %v1130, %v1418
        %v1420 = vpop.f32.mrf.mxu0
        %1421 = vmatprep.mubr.bf16.mxu0 0
        %1422 = vmatmul.mubr.bf16.gmra.mxu0 %v746
        %v1423 = vpop.f32.mrf.mxu0
        %v1424 = vadd.f32 %v1135, %v1423
        %v1425 = vpop.f32.mrf.mxu0
        %v1426 = vpop.f32.mrf.mxu0
        %v1427 = vadd.f32 %v1138, %v1426
        %v1428 = vpop.f32.mrf.mxu0
        %1429 = vmatprep.mubr.bf16.mxu0 0
        %1430 = vmatmul.mubr.bf16.gmra.mxu0 %v749
        %v1431 = vpop.f32.mrf.mxu0
        %v1432 = vadd.f32 %v1143, %v1431
        %v1433 = vpop.f32.mrf.mxu0
        %v1434 = vpop.f32.mrf.mxu0
        %v1435 = vadd.f32 %v1146, %v1434
        %v1436 = vpop.f32.mrf.mxu0
        %1437 = vmatprep.mubr.bf16.mxu0 0
        %1438 = vmatmul.mubr.bf16.gmra.mxu0 %v752
        %v1439 = vpop.f32.mrf.mxu0
        %v1440 = vadd.f32 %v1151, %v1439
        %v1441 = vpop.f32.mrf.mxu0
        %v1442 = vpop.f32.mrf.mxu0
        %v1443 = vadd.f32 %v1154, %v1442
        %v1444 = vpop.f32.mrf.mxu0
        %1445 = vmatprep.mubr.bf16.mxu0 0
        %1446 = vmatmul.mubr.bf16.gmra.mxu0 %v755
        %v1447 = vpop.f32.mrf.mxu0
        %v1448 = vadd.f32 %v1159, %v1447
        %v1449 = vpop.f32.mrf.mxu0
        %v1450 = vpop.f32.mrf.mxu0
        %v1451 = vadd.f32 %v1162, %v1450
        %v1452 = vpop.f32.mrf.mxu0
        %1453 = vmatprep.mubr.bf16.mxu0 0
        %1454 = vmatmul.mubr.bf16.gmra.mxu0 %v758
        %v1455 = vpop.f32.mrf.mxu0
        %v1456 = vadd.f32 %v1167, %v1455
        %v1457 = vpop.f32.mrf.mxu0
        %v1458 = vpop.f32.mrf.mxu0
        %v1459 = vadd.f32 %v1170, %v1458
        %v1460 = vpop.f32.mrf.mxu0
        %1461 = vmatprep.mubr.bf16.mxu0 0
        %1462 = vmatmul.mubr.bf16.gmra.mxu0 %v761
        %v1463 = vpop.f32.mrf.mxu0
        %v1464 = vadd.f32 %v1175, %v1463
        %v1465 = vpop.f32.mrf.mxu0
        %v1466 = vpop.f32.mrf.mxu0
        %v1467 = vadd.f32 %v1178, %v1466
        %v1468 = vpop.f32.mrf.mxu0
        %1469 = vmatprep.mubr.bf16.mxu0 0
        %1470 = vmatmul.mubr.bf16.gmra.mxu0 %v764
        %v1471 = vpop.f32.mrf.mxu0
        %v1472 = vadd.f32 %v1183, %v1471
        %v1473 = vpop.f32.mrf.mxu0
        %v1474 = vpop.f32.mrf.mxu0
        %v1475 = vadd.f32 %v1186, %v1474
        %v1476 = vpop.f32.mrf.mxu0
        %1477 = vmatprep.mubr.bf16.mxu0 0
        %1478 = vmatmul.mubr.bf16.gmra.mxu0 %v767
        %v1479 = vpop.f32.mrf.mxu0
        %v1480 = vadd.f32 %v1191, %v1479
        %v1481 = vpop.f32.mrf.mxu0
        %v1482 = vpop.f32.mrf.mxu0
        %v1483 = vadd.f32 %v1194, %v1482
        %v1484 = vpop.f32.mrf.mxu0
        %1485 = vmatprep.mubr.bf16.mxu0 0
        %1486 = vmatmul.mubr.bf16.gmra.mxu0 %v770
        %v1487 = vpop.f32.mrf.mxu0
        %v1488 = vadd.f32 %v1199, %v1487
        %v1489 = vpop.f32.mrf.mxu0
        %v1490 = vpop.f32.mrf.mxu0
        %v1491 = vadd.f32 %v1202, %v1490
        %v1492 = vpop.f32.mrf.mxu0
        %1493 = vmatprep.mubr.bf16.mxu0 0
        %1494 = vmatmul.mubr.bf16.gmra.mxu0 %v773
        %v1495 = vpop.f32.mrf.mxu0
        %v1496 = vadd.f32 %v1207, %v1495
        %v1497 = vpop.f32.mrf.mxu0
        %v1498 = vpop.f32.mrf.mxu0
        %v1499 = vadd.f32 %v1210, %v1498
        %v1500 = vpop.f32.mrf.mxu0
        %1501 = vmatprep.mubr.bf16.mxu0 0
        %1502 = vmatmul.mubr.bf16.gmra.mxu0 %v776
        %v1503 = vpop.f32.mrf.mxu0
        %v1504 = vadd.f32 %v1215, %v1503
        %v1505 = vpop.f32.mrf.mxu0
        %v1506 = vpop.f32.mrf.mxu0
        %v1507 = vadd.f32 %v1218, %v1506
        %v1508 = vpop.f32.mrf.mxu0
        %1509 = vmatprep.mubr.bf16.mxu0 0
        %1510 = vmatmul.mubr.bf16.gmra.mxu0 %v779
        %v1511 = vpop.f32.mrf.mxu0
        %v1512 = vadd.f32 %v1223, %v1511
        %v1513 = vpop.f32.mrf.mxu0
        %v1514 = vpop.f32.mrf.mxu0
        %v1515 = vadd.f32 %v1226, %v1514
        %v1516 = vpop.f32.mrf.mxu0
        %1517 = vmatprep.mubr.bf16.mxu0 0
        %1518 = vmatmul.mubr.bf16.gmra.mxu0 %v782
        %v1519 = vpop.f32.mrf.mxu0
        %v1520 = vadd.f32 %v1231, %v1519
        %v1521 = vpop.f32.mrf.mxu0
        %v1522 = vpop.f32.mrf.mxu0
        %v1523 = vadd.f32 %v1234, %v1522
        %v1524 = vpop.f32.mrf.mxu0
        %1525 = vmatprep.mubr.bf16.mxu0 0
        %1526 = vmatmul.mubr.bf16.gmra.mxu0 %v785
        %v1527 = vpop.f32.mrf.mxu0
        %v1528 = vadd.f32 %v1239, %v1527
        %v1529 = vpop.f32.mrf.mxu0
        %v1530 = vpop.f32.mrf.mxu0
        %v1531 = vadd.f32 %v1242, %v1530
        %v1532 = vpop.f32.mrf.mxu0
        %1533 = vmatprep.mubr.bf16.mxu0 0
        %1534 = vmatmul.mubr.bf16.gmra.mxu0 %v788
        %v1535 = vpop.f32.mrf.mxu0
        %v1536 = vadd.f32 %v1247, %v1535
        %v1537 = vpop.f32.mrf.mxu0
        %v1538 = vpop.f32.mrf.mxu0
        %v1539 = vadd.f32 %v1250, %v1538
        %v1540 = vpop.f32.mrf.mxu0
        %1541 = vmatprep.mubr.bf16.mxu0 0
        %1542 = vmatmul.mubr.bf16.gmra.mxu0 %v791
        %v1543 = vpop.f32.mrf.mxu0
        %v1544 = vadd.f32 %v1255, %v1543
        %v1545 = vpop.f32.mrf.mxu0
        %v1546 = vpop.f32.mrf.mxu0
        %v1547 = vadd.f32 %v1258, %v1546
        %v1548 = vpop.f32.mrf.mxu0
        %1549 = vmatprep.mubr.bf16.mxu0 0
        %1550 = vmatmul.mubr.bf16.gmra.mxu0 %v794
        %v1551 = vpop.f32.mrf.mxu0
        %v1552 = vadd.f32 %v1263, %v1551
        %v1553 = vpop.f32.mrf.mxu0
        %v1554 = vpop.f32.mrf.mxu0
        %v1555 = vadd.f32 %v1266, %v1554
        %v1556 = vpop.f32.mrf.mxu0
        %1557 = vmatprep.mubr.bf16.mxu0 0
        %1558 = vmatmul.mubr.bf16.gmra.mxu0 %v797
        %v1559 = vpop.f32.mrf.mxu0
        %v1560 = vadd.f32 %v1271, %v1559
        %v1561 = vpop.f32.mrf.mxu0
        %v1562 = vpop.f32.mrf.mxu0
        %v1563 = vadd.f32 %v1274, %v1562
        %v1564 = vpop.f32.mrf.mxu0
        %1565 = vmatprep.mubr.bf16.mxu0 0
        %1566 = vmatmul.mubr.bf16.gmra.mxu0 %v800
        %v1567 = vpop.f32.mrf.mxu0
        %v1568 = vadd.f32 %v1279, %v1567
        %v1569 = vpop.f32.mrf.mxu0
        %v1570 = vpop.f32.mrf.mxu0
        %v1571 = vadd.f32 %v1282, %v1570
        %v1572 = vpop.f32.mrf.mxu0
        %1573 = vmatprep.mubr.bf16.mxu0 0
        %1574 = vmatmul.mubr.bf16.gmra.mxu0 %v803
        %v1575 = vpop.f32.mrf.mxu0
        %v1576 = vadd.f32 %v1287, %v1575
        %v1577 = vpop.f32.mrf.mxu0
        %v1578 = vpop.f32.mrf.mxu0
        %v1579 = vadd.f32 %v1290, %v1578
        %v1580 = vpop.f32.mrf.mxu0
        %1581 = vmatprep.mubr.bf16.mxu0 0
        %1582 = vmatmul.mubr.bf16.gmra.mxu0 %v806
        %v1583 = vpop.f32.mrf.mxu0
        %v1584 = vadd.f32 %v1295, %v1583
        %v1585 = vpop.f32.mrf.mxu0
        %v1586 = vpop.f32.mrf.mxu0
        %v1587 = vadd.f32 %v1298, %v1586
        %v1588 = vpop.f32.mrf.mxu0
        %1589 = vmatprep.mubr.bf16.mxu0 0
        %1590 = vmatmul.mubr.bf16.gmra.mxu0 %v809
        %v1591 = vpop.f32.mrf.mxu0
        %v1592 = vadd.f32 %v1303, %v1591
        %v1593 = vpop.f32.mrf.mxu0
        %v1594 = vpop.f32.mrf.mxu0
        %v1595 = vadd.f32 %v1306, %v1594
        %v1596 = vpop.f32.mrf.mxu0
        %1597 = vmatprep.mubr.bf16.mxu0 0
        %1598 = vmatmul.mubr.bf16.gmra.mxu0 %v812
        %v1599 = vpop.f32.mrf.mxu0
        %v1600 = vadd.f32 %v1311, %v1599
        %v1601 = vpop.f32.mrf.mxu0
        %v1602 = vpop.f32.mrf.mxu0
        %v1603 = vadd.f32 %v1314, %v1602
        %v1604 = vpop.f32.mrf.mxu0
        %1605 = vmatprep.mubr.bf16.mxu0 0
        %1606 = vmatmul.mubr.bf16.gmra.mxu0 %v815
        %v1607 = vpop.f32.mrf.mxu0
        %v1608 = vadd.f32 %v1319, %v1607
        %v1609 = vpop.f32.mrf.mxu0
        %v1610 = vpop.f32.mrf.mxu0
        %v1611 = vadd.f32 %v1322, %v1610
        %v1612 = vpop.f32.mrf.mxu0
        %1613 = vmatprep.mubr.bf16.mxu0 0
        %1614 = vmatmul.mubr.bf16.gmra.mxu0 %v818
        %v1615 = vpop.f32.mrf.mxu0
        %v1616 = vadd.f32 %v1327, %v1615
        %v1617 = vpop.f32.mrf.mxu0
        %v1618 = vpop.f32.mrf.mxu0
        %v1619 = vadd.f32 %v1330, %v1618
        %v1620 = vpop.f32.mrf.mxu0
        %1621 = vmatprep.mubr.bf16.mxu0 0
        %1622 = vmatmul.mubr.bf16.gmra.mxu0 %v821
        %v1623 = vpop.f32.mrf.mxu0
        %v1624 = vadd.f32 %v1335, %v1623
        %v1625 = vpop.f32.mrf.mxu0
        %v1626 = vpop.f32.mrf.mxu0
        %v1627 = vadd.f32 %v1338, %v1626
        %v1628 = vpop.f32.mrf.mxu0
        %1629 = vmatprep.mubr.bf16.mxu0 0
        %1630 = vmatmul.mubr.bf16.gmra.mxu0 %v824
        %v1631 = vpop.f32.mrf.mxu0
        %v1632 = vadd.f32 %v1343, %v1631
        %v1633 = vpop.f32.mrf.mxu0
        %v1634 = vpop.f32.mrf.mxu0
        %v1635 = vadd.f32 %v1346, %v1634
        %v1636 = vpop.f32.mrf.mxu0
        %1637 = vmatprep.mubr.bf16.mxu0 0
        %1638 = vmatmul.mubr.bf16.gmra.mxu0 %v827
        %v1639 = vpop.f32.mrf.mxu0
        %v1640 = vadd.f32 %v1351, %v1639
        %v1641 = vpop.f32.mrf.mxu0
        %v1642 = vpop.f32.mrf.mxu0
        %v1643 = vadd.f32 %v1354, %v1642
        %v1644 = vpop.f32.mrf.mxu0
        %1645 = vdwg.mxu0
        %v1646 = vmax.f32 %v1392, 0.0
        %v1647 = vmax.f32 %v1395, 0.0
        %v1648 = vmax.f32 %v1400, 0.0
        %v1649 = vmax.f32 %v1403, 0.0
        %v1650 = vmax.f32 %v1408, 0.0
        %v1651 = vmax.f32 %v1411, 0.0
        %v1652 = vmax.f32 %v1416, 0.0
        %v1653 = vmax.f32 %v1419, 0.0
        %v1654 = vmax.f32 %v1424, 0.0
        %v1655 = vmax.f32 %v1427, 0.0
        %v1656 = vmax.f32 %v1432, 0.0
        %v1657 = vmax.f32 %v1435, 0.0
        %v1658 = vmax.f32 %v1440, 0.0
        %v1659 = vmax.f32 %v1443, 0.0
        %v1660 = vmax.f32 %v1448, 0.0
        %v1661 = vmax.f32 %v1451, 0.0
        %v1662 = vmax.f32 %v1456, 0.0
        %v1663 = vmax.f32 %v1459, 0.0
        %v1664 = vmax.f32 %v1464, 0.0
        %v1665 = vmax.f32 %v1467, 0.0
        %v1666 = vmax.f32 %v1472, 0.0
        %v1667 = vmax.f32 %v1475, 0.0
        %v1668 = vmax.f32 %v1480, 0.0
        %v1669 = vmax.f32 %v1483, 0.0
        %v1670 = vmax.f32 %v1488, 0.0
        %v1671 = vmax.f32 %v1491, 0.0
        %v1672 = vmax.f32 %v1496, 0.0
        %v1673 = vmax.f32 %v1499, 0.0
        %v1674 = vmax.f32 %v1504, 0.0
        %v1675 = vmax.f32 %v1507, 0.0
        %v1676 = vmax.f32 %v1512, 0.0
        %v1677 = vmax.f32 %v1515, 0.0
        %v1678 = vmax.f32 %v1520, 0.0
        %v1679 = vmax.f32 %v1523, 0.0
        %v1680 = vmax.f32 %v1528, 0.0
        %v1681 = vmax.f32 %v1531, 0.0
        %v1682 = vmax.f32 %v1536, 0.0
        %v1683 = vmax.f32 %v1539, 0.0
        %v1684 = vmax.f32 %v1544, 0.0
        %v1685 = vmax.f32 %v1547, 0.0
        %v1686 = vmax.f32 %v1552, 0.0
        %v1687 = vmax.f32 %v1555, 0.0
        %v1688 = vmax.f32 %v1560, 0.0
        %v1689 = vmax.f32 %v1563, 0.0
        %v1690 = vmax.f32 %v1568, 0.0
        %v1691 = vmax.f32 %v1571, 0.0
        %v1692 = vmax.f32 %v1576, 0.0
        %v1693 = vmax.f32 %v1579, 0.0
        %v1694 = vmax.f32 %v1584, 0.0
        %v1695 = vmax.f32 %v1587, 0.0
        %v1696 = vmax.f32 %v1592, 0.0
        %v1697 = vmax.f32 %v1595, 0.0
        %v1698 = vmax.f32 %v1600, 0.0
        %v1699 = vmax.f32 %v1603, 0.0
        %v1700 = vmax.f32 %v1608, 0.0
        %v1701 = vmax.f32 %v1611, 0.0
        %v1702 = vmax.f32 %v1616, 0.0
        %v1703 = vmax.f32 %v1619, 0.0
        %v1704 = vmax.f32 %v1624, 0.0
        %v1705 = vmax.f32 %v1627, 0.0
        %v1706 = vmax.f32 %v1632, 0.0
        %v1707 = vmax.f32 %v1635, 0.0
        %v1708 = vmax.f32 %v1640, 0.0
        %v1709 = vmax.f32 %v1643, 0.0
        %v1710 = vpack.c.bf16 %v1647, %v1646
        %v1711 = vpack.c.bf16 %v1649, %v1648
        %v1712 = vpack.c.bf16 %v1651, %v1650
        %v1713 = vpack.c.bf16 %v1653, %v1652
        %v1714 = vpack.c.bf16 %v1655, %v1654
        %v1715 = vpack.c.bf16 %v1657, %v1656
        %v1716 = vpack.c.bf16 %v1659, %v1658
        %v1717 = vpack.c.bf16 %v1661, %v1660
        %v1718 = vpack.c.bf16 %v1663, %v1662
        %v1719 = vpack.c.bf16 %v1665, %v1664
        %v1720 = vpack.c.bf16 %v1667, %v1666
        %v1721 = vpack.c.bf16 %v1669, %v1668
        %v1722 = vpack.c.bf16 %v1671, %v1670
        %v1723 = vpack.c.bf16 %v1673, %v1672
        %v1724 = vpack.c.bf16 %v1675, %v1674
        %v1725 = vpack.c.bf16 %v1677, %v1676
        %v1726 = vpack.c.bf16 %v1679, %v1678
        %v1727 = vpack.c.bf16 %v1681, %v1680
        %v1728 = vpack.c.bf16 %v1683, %v1682
        %v1729 = vpack.c.bf16 %v1685, %v1684
        %v1730 = vpack.c.bf16 %v1687, %v1686
        %v1731 = vpack.c.bf16 %v1689, %v1688
        %v1732 = vpack.c.bf16 %v1691, %v1690
        %v1733 = vpack.c.bf16 %v1693, %v1692
        %v1734 = vpack.c.bf16 %v1695, %v1694
        %v1735 = vpack.c.bf16 %v1697, %v1696
        %v1736 = vpack.c.bf16 %v1699, %v1698
        %v1737 = vpack.c.bf16 %v1701, %v1700
        %v1738 = vpack.c.bf16 %v1703, %v1702
        %v1739 = vpack.c.bf16 %v1705, %v1704
        %v1740 = vpack.c.bf16 %v1707, %v1706
        %v1741 = vpack.c.bf16 %v1709, %v1708
        %v1774 = vunpack.c.l.b16 %v1710
        %v1775 = vunpack.c.h.b16 %v1710
        %v1776 = vunpack.c.l.b16 %v1711
        %v1777 = vunpack.c.h.b16 %v1711
        %v1778 = vunpack.c.l.b16 %v1712
        %v1779 = vunpack.c.h.b16 %v1712
        %v1780 = vunpack.c.l.b16 %v1713
        %v1781 = vunpack.c.h.b16 %v1713
        %v1782 = vunpack.c.l.b16 %v1714
        %v1783 = vunpack.c.h.b16 %v1714
        %v1784 = vunpack.c.l.b16 %v1715
        %v1785 = vunpack.c.h.b16 %v1715
        %v1786 = vunpack.c.l.b16 %v1716
        %v1787 = vunpack.c.h.b16 %v1716
        %v1788 = vunpack.c.l.b16 %v1717
        %v1789 = vunpack.c.h.b16 %v1717
        %v1790 = vunpack.c.l.b16 %v1718
        %v1791 = vunpack.c.h.b16 %v1718
        %v1792 = vunpack.c.l.b16 %v1719
        %v1793 = vunpack.c.h.b16 %v1719
        %v1794 = vunpack.c.l.b16 %v1720
        %v1795 = vunpack.c.h.b16 %v1720
        %v1796 = vunpack.c.l.b16 %v1721
        %v1797 = vunpack.c.h.b16 %v1721
        %v1798 = vunpack.c.l.b16 %v1722
        %v1799 = vunpack.c.h.b16 %v1722
        %v1800 = vunpack.c.l.b16 %v1723
        %v1801 = vunpack.c.h.b16 %v1723
        %v1802 = vunpack.c.l.b16 %v1724
        %v1803 = vunpack.c.h.b16 %v1724
        %v1804 = vunpack.c.l.b16 %v1725
        %v1805 = vunpack.c.h.b16 %v1725
        %v1806 = vunpack.c.l.b16 %v1726
        %v1807 = vunpack.c.h.b16 %v1726
        %v1808 = vunpack.c.l.b16 %v1727
        %v1809 = vunpack.c.h.b16 %v1727
        %v1810 = vunpack.c.l.b16 %v1728
        %v1811 = vunpack.c.h.b16 %v1728
        %v1812 = vunpack.c.l.b16 %v1729
        %v1813 = vunpack.c.h.b16 %v1729
        %v1814 = vunpack.c.l.b16 %v1730
        %v1815 = vunpack.c.h.b16 %v1730
        %v1816 = vunpack.c.l.b16 %v1731
        %v1817 = vunpack.c.h.b16 %v1731
        %v1818 = vunpack.c.l.b16 %v1732
        %v1819 = vunpack.c.h.b16 %v1732
        %v1820 = vunpack.c.l.b16 %v1733
        %v1821 = vunpack.c.h.b16 %v1733
        %v1822 = vunpack.c.l.b16 %v1734
        %v1823 = vunpack.c.h.b16 %v1734
        %v1824 = vunpack.c.l.b16 %v1735
        %v1825 = vunpack.c.h.b16 %v1735
        %v1826 = vunpack.c.l.b16 %v1736
        %v1827 = vunpack.c.h.b16 %v1736
        %v1828 = vunpack.c.l.b16 %v1737
        %v1829 = vunpack.c.h.b16 %v1737
        %v1830 = vunpack.c.l.b16 %v1738
        %v1831 = vunpack.c.h.b16 %v1738
        %v1832 = vunpack.c.l.b16 %v1739
        %v1833 = vunpack.c.h.b16 %v1739
        %v1834 = vunpack.c.l.b16 %v1740
        %v1835 = vunpack.c.h.b16 %v1740
        %v1836 = vunpack.c.l.b16 %v1741
        %v1837 = vunpack.c.h.b16 %v1741
        %v1838 = vpack.c.b16 %v1774, %v1774
        %v1839 = vpack.c.b16 %v1775, %v1775
        %v1840 = vpack.c.b16 %v1776, %v1776
        %v1841 = vpack.c.b16 %v1777, %v1777
        %v1842 = vpack.c.b16 %v1778, %v1778
        %v1843 = vpack.c.b16 %v1779, %v1779
        %v1844 = vpack.c.b16 %v1780, %v1780
        %v1845 = vpack.c.b16 %v1781, %v1781
        %v1846 = vpack.c.b16 %v1782, %v1782
        %v1847 = vpack.c.b16 %v1783, %v1783
        %v1848 = vpack.c.b16 %v1784, %v1784
        %v1849 = vpack.c.b16 %v1785, %v1785
        %v1850 = vpack.c.b16 %v1786, %v1786
        %v1851 = vpack.c.b16 %v1787, %v1787
        %v1852 = vpack.c.b16 %v1788, %v1788
        %v1853 = vpack.c.b16 %v1789, %v1789
        %v1854 = vpack.c.b16 %v1790, %v1790
        %v1855 = vpack.c.b16 %v1791, %v1791
        %v1856 = vpack.c.b16 %v1792, %v1792
        %v1857 = vpack.c.b16 %v1793, %v1793
        %v1858 = vpack.c.b16 %v1794, %v1794
        %v1859 = vpack.c.b16 %v1795, %v1795
        %v1860 = vpack.c.b16 %v1796, %v1796
        %v1861 = vpack.c.b16 %v1797, %v1797
        %v1862 = vpack.c.b16 %v1798, %v1798
        %v1863 = vpack.c.b16 %v1799, %v1799
        %v1864 = vpack.c.b16 %v1800, %v1800
        %v1865 = vpack.c.b16 %v1801, %v1801
        %v1866 = vpack.c.b16 %v1802, %v1802
        %v1867 = vpack.c.b16 %v1803, %v1803
        %v1868 = vpack.c.b16 %v1804, %v1804
        %v1869 = vpack.c.b16 %v1805, %v1805
        %v1870 = vpack.c.b16 %v1806, %v1806
        %v1871 = vpack.c.b16 %v1807, %v1807
        %v1872 = vpack.c.b16 %v1808, %v1808
        %v1873 = vpack.c.b16 %v1809, %v1809
        %v1874 = vpack.c.b16 %v1810, %v1810
        %v1875 = vpack.c.b16 %v1811, %v1811
        %v1876 = vpack.c.b16 %v1812, %v1812
        %v1877 = vpack.c.b16 %v1813, %v1813
        %v1878 = vpack.c.b16 %v1814, %v1814
        %v1879 = vpack.c.b16 %v1815, %v1815
        %v1880 = vpack.c.b16 %v1816, %v1816
        %v1881 = vpack.c.b16 %v1817, %v1817
        %v1882 = vpack.c.b16 %v1818, %v1818
        %v1883 = vpack.c.b16 %v1819, %v1819
        %v1884 = vpack.c.b16 %v1820, %v1820
        %v1885 = vpack.c.b16 %v1821, %v1821
        %v1886 = vpack.c.b16 %v1822, %v1822
        %v1887 = vpack.c.b16 %v1823, %v1823
        %v1888 = vpack.c.b16 %v1824, %v1824
        %v1889 = vpack.c.b16 %v1825, %v1825
        %v1890 = vpack.c.b16 %v1826, %v1826
        %v1891 = vpack.c.b16 %v1827, %v1827
        %v1892 = vpack.c.b16 %v1828, %v1828
        %v1893 = vpack.c.b16 %v1829, %v1829
        %v1894 = vpack.c.b16 %v1830, %v1830
        %v1895 = vpack.c.b16 %v1831, %v1831
        %v1896 = vpack.c.b16 %v1832, %v1832
        %v1897 = vpack.c.b16 %v1833, %v1833
        %v1898 = vpack.c.b16 %v1834, %v1834
        %v1899 = vpack.c.b16 %v1835, %v1835
        %v1900 = vpack.c.b16 %v1836, %v1836
        %v1901 = vpack.c.b16 %v1837, %v1837
        %1966 = vst [vmem:[#allocation2] sm:$0xf] %v1838
        %1967 = vst [vmem:[#allocation2 + $0x4] sm:$0xf] %v1839
        %1968 = vst [vmem:[#allocation2 + $0x8] sm:$0xf] %v1840
        %1969 = vst [vmem:[#allocation2 + $0xc] sm:$0xf] %v1841
        %1970 = vst [vmem:[#allocation2 + $0x10] sm:$0xf] %v1842
        %1971 = vst [vmem:[#allocation2 + $0x14] sm:$0xf] %v1843
        %1972 = vst [vmem:[#allocation2 + $0x18] sm:$0xf] %v1844
        %1973 = vst [vmem:[#allocation2 + $0x1c] sm:$0xf] %v1845
        %1974 = vst [vmem:[#allocation2 + $0x20] sm:$0xf] %v1846
        %1975 = vst [vmem:[#allocation2 + $0x24] sm:$0xf] %v1847
        %1976 = vst [vmem:[#allocation2 + $0x28] sm:$0xf] %v1848
        %1977 = vst [vmem:[#allocation2 + $0x2c] sm:$0xf] %v1849
        %1978 = vst [vmem:[#allocation2 + $0x30] sm:$0xf] %v1850
        %1979 = vst [vmem:[#allocation2 + $0x34] sm:$0xf] %v1851
        %1980 = vst [vmem:[#allocation2 + $0x38] sm:$0xf] %v1852
        %1981 = vst [vmem:[#allocation2 + $0x3c] sm:$0xf] %v1853
        %1982 = vst [vmem:[#allocation2 + $0x40] sm:$0xf] %v1854
        %1983 = vst [vmem:[#allocation2 + $0x44] sm:$0xf] %v1855
        %1984 = vst [vmem:[#allocation2 + $0x48] sm:$0xf] %v1856
        %1985 = vst [vmem:[#allocation2 + $0x4c] sm:$0xf] %v1857
        %1986 = vst [vmem:[#allocation2 + $0x50] sm:$0xf] %v1858
        %1987 = vst [vmem:[#allocation2 + $0x54] sm:$0xf] %v1859
        %1988 = vst [vmem:[#allocation2 + $0x58] sm:$0xf] %v1860
        %1989 = vst [vmem:[#allocation2 + $0x5c] sm:$0xf] %v1861
        %1990 = vst [vmem:[#allocation2 + $0x60] sm:$0xf] %v1862
        %1991 = vst [vmem:[#allocation2 + $0x64] sm:$0xf] %v1863
        %1992 = vst [vmem:[#allocation2 + $0x68] sm:$0xf] %v1864
        %1993 = vst [vmem:[#allocation2 + $0x6c] sm:$0xf] %v1865
        %1994 = vst [vmem:[#allocation2 + $0x70] sm:$0xf] %v1866
        %1995 = vst [vmem:[#allocation2 + $0x74] sm:$0xf] %v1867
        %1996 = vst [vmem:[#allocation2 + $0x78] sm:$0xf] %v1868
        %1997 = vst [vmem:[#allocation2 + $0x7c] sm:$0xf] %v1869
        %1998 = vst [vmem:[#allocation2 + $0x80] sm:$0xf] %v1870
        %1999 = vst [vmem:[#allocation2 + $0x84] sm:$0xf] %v1871
        %2000 = vst [vmem:[#allocation2 + $0x88] sm:$0xf] %v1872
        %2001 = vst [vmem:[#allocation2 + $0x8c] sm:$0xf] %v1873
        %2002 = vst [vmem:[#allocation2 + $0x90] sm:$0xf] %v1874
        %2003 = vst [vmem:[#allocation2 + $0x94] sm:$0xf] %v1875
        %2004 = vst [vmem:[#allocation2 + $0x98] sm:$0xf] %v1876
        %2005 = vst [vmem:[#allocation2 + $0x9c] sm:$0xf] %v1877
        %2006 = vst [vmem:[#allocation2 + $0xa0] sm:$0xf] %v1878
        %2007 = vst [vmem:[#allocation2 + $0xa4] sm:$0xf] %v1879
        %2008 = vst [vmem:[#allocation2 + $0xa8] sm:$0xf] %v1880
        %2009 = vst [vmem:[#allocation2 + $0xac] sm:$0xf] %v1881
        %2010 = vst [vmem:[#allocation2 + $0xb0] sm:$0xf] %v1882
        %2011 = vst [vmem:[#allocation2 + $0xb4] sm:$0xf] %v1883
        %2012 = vst [vmem:[#allocation2 + $0xb8] sm:$0xf] %v1884
        %2013 = vst [vmem:[#allocation2 + $0xbc] sm:$0xf] %v1885
        %2014 = vst [vmem:[#allocation2 + $0xc0] sm:$0xf] %v1886
        %2015 = vst [vmem:[#allocation2 + $0xc4] sm:$0xf] %v1887
        %2016 = vst [vmem:[#allocation2 + $0xc8] sm:$0xf] %v1888
        %2017 = vst [vmem:[#allocation2 + $0xcc] sm:$0xf] %v1889
        %2018 = vst [vmem:[#allocation2 + $0xd0] sm:$0xf] %v1890
        %2019 = vst [vmem:[#allocation2 + $0xd4] sm:$0xf] %v1891
        %2020 = vst [vmem:[#allocation2 + $0xd8] sm:$0xf] %v1892
        %2021 = vst [vmem:[#allocation2 + $0xdc] sm:$0xf] %v1893
        %2022 = vst [vmem:[#allocation2 + $0xe0] sm:$0xf] %v1894
        %2023 = vst [vmem:[#allocation2 + $0xe4] sm:$0xf] %v1895
        %2024 = vst [vmem:[#allocation2 + $0xe8] sm:$0xf] %v1896
        %2025 = vst [vmem:[#allocation2 + $0xec] sm:$0xf] %v1897
        %2026 = vst [vmem:[#allocation2 + $0xf0] sm:$0xf] %v1898
        %2027 = vst [vmem:[#allocation2 + $0xf4] sm:$0xf] %v1899
        %2028 = vst [vmem:[#allocation2 + $0xf8] sm:$0xf] %v1900
        %2029 = vst [vmem:[#allocation2 + $0xfc] sm:$0xf] %v1901
        %v2030 = vld [vmem:[#allocation2] sm:$0x1]
        %v2031 = vld [vmem:[#allocation2 + $0x20] sm:$0x1]
        %v2032 = vld [vmem:[#allocation2 + $0x40] sm:$0x1]
        %v2033 = vld [vmem:[#allocation2 + $0x60] sm:$0x1]
        %v2034 = vld [vmem:[#allocation2 + $0x80] sm:$0x1]
        %v2035 = vld [vmem:[#allocation2 + $0xa0] sm:$0x1]
        %v2036 = vld [vmem:[#allocation2 + $0xc0] sm:$0x1]
        %v2037 = vld [vmem:[#allocation2 + $0xe0] sm:$0x1]
        %v2038 = vld [vmem:[%s3] sm:$0xf]
        %v2039 = vld [vmem:[%s3 + $0x4] sm:$0xf]
        %v2040 = vld [vmem:[%s3 + $0x8] sm:$0xf]
        %v2041 = vld [vmem:[%s3 + $0xc] sm:$0xf]
        %v2042 = vld [vmem:[%s3 + $0x10] sm:$0xf]
        %v2043 = vld [vmem:[%s3 + $0x14] sm:$0xf]
        %v2044 = vld [vmem:[%s3 + $0x18] sm:$0xf]
        %v2045 = vld [vmem:[%s3 + $0x1c] sm:$0xf]
        %v2046 = vld [vmem:[%s3 + $0x20] sm:$0xf]
        %v2047 = vld [vmem:[%s3 + $0x24] sm:$0xf]
        %v2048 = vld [vmem:[%s3 + $0x28] sm:$0xf]
        %v2049 = vld [vmem:[%s3 + $0x2c] sm:$0xf]
        %v2050 = vld [vmem:[%s3 + $0x30] sm:$0xf]
        %v2051 = vld [vmem:[%s3 + $0x34] sm:$0xf]
        %v2052 = vld [vmem:[%s3 + $0x38] sm:$0xf]
        %v2053 = vld [vmem:[%s3 + $0x3c] sm:$0xf]
        %s2054 = scalar_lea.vmem %s3, 64
        %v2055 = vld [vmem:[%s2054] sm:$0xf]
        %v2056 = vld [vmem:[%s2054 + $0x4] sm:$0xf]
        %v2057 = vld [vmem:[%s2054 + $0x8] sm:$0xf]
        %v2058 = vld [vmem:[%s2054 + $0xc] sm:$0xf]
        %v2059 = vld [vmem:[%s2054 + $0x10] sm:$0xf]
        %v2060 = vld [vmem:[%s2054 + $0x14] sm:$0xf]
        %v2061 = vld [vmem:[%s2054 + $0x18] sm:$0xf]
        %v2062 = vld [vmem:[%s2054 + $0x1c] sm:$0xf]
        %v2063 = vld [vmem:[%s2054 + $0x20] sm:$0xf]
        %v2064 = vld [vmem:[%s2054 + $0x24] sm:$0xf]
        %v2065 = vld [vmem:[%s2054 + $0x28] sm:$0xf]
        %v2066 = vld [vmem:[%s2054 + $0x2c] sm:$0xf]
        %v2067 = vld [vmem:[%s2054 + $0x30] sm:$0xf]
        %v2068 = vld [vmem:[%s2054 + $0x34] sm:$0xf]
        %v2069 = vld [vmem:[%s2054 + $0x38] sm:$0xf]
        %v2070 = vld [vmem:[%s2054 + $0x3c] sm:$0xf]
        %v2079 = vunpack.c.l.b16 %v2030
        %v2080 = vunpack.c.l.b16 %v2031
        %v2081 = vunpack.c.l.b16 %v2032
        %v2082 = vunpack.c.l.b16 %v2033
        %v2083 = vunpack.c.l.b16 %v2034
        %v2084 = vunpack.c.l.b16 %v2035
        %v2085 = vunpack.c.l.b16 %v2036
        %v2086 = vunpack.c.l.b16 %v2037
        %v2087 = vpack.c.b16 %v2079, %v2079
        %v2088 = vpack.c.b16 %v2080, %v2080
        %v2089 = vpack.c.b16 %v2081, %v2081
        %v2090 = vpack.c.b16 %v2082, %v2082
        %v2091 = vpack.c.b16 %v2083, %v2083
        %v2092 = vpack.c.b16 %v2084, %v2084
        %v2093 = vpack.c.b16 %v2085, %v2085
        %v2094 = vpack.c.b16 %v2086, %v2086
        %v2095 = vunpack.c.l.b16 %v2087
        %v2096 = vunpack.c.l.b16 %v2088
        %v2097 = vunpack.c.l.b16 %v2089
        %v2098 = vunpack.c.l.b16 %v2090
        %v2099 = vunpack.c.l.b16 %v2091
        %v2100 = vunpack.c.l.b16 %v2092
        %v2101 = vunpack.c.l.b16 %v2093
        %v2102 = vunpack.c.l.b16 %v2094
        %v2103 = vrot.slane %v2095, 1
        %vm2104 = vcmask 1041409
        %v2105 = vsel %vm2104, %v2096, %v2103
        %v2106 = vrot.slane %v2097, 7
        %vm2107 = vcmask 1042434
        %v2108 = vsel %vm2107, %v2106, %v2105
        %v2109 = vrot.slane %v2098, 6
        %vm2110 = vcmask 1043459
        %v2111 = vsel %vm2110, %v2109, %v2108
        %v2112 = vrot.slane %v2099, 5
        %vm2113 = vcmask 1044484
        %v2114 = vsel %vm2113, %v2112, %v2111
        %v2115 = vrot.slane %v2100, 4
        %vm2116 = vcmask 1045509
        %v2117 = vsel %vm2116, %v2115, %v2114
        %v2118 = vrot.slane %v2101, 3
        %vm2119 = vcmask 1046534
        %v2120 = vsel %vm2119, %v2118, %v2117
        %v2121 = vrot.slane %v2102, 2
        %vm2122 = vcmask 1047559
        %v2123 = vsel %vm2122, %v2121, %v2120
        %v2124 = vpack.c.b16 %v2123, %v2123
        %v2142 = vunpack.c.l.b16 %v2055
        %v2143 = vunpack.c.l.b16 %v2056
        %v2144 = vunpack.c.l.b16 %v2057
        %v2145 = vunpack.c.l.b16 %v2058
        %v2146 = vunpack.c.l.b16 %v2059
        %v2147 = vunpack.c.l.b16 %v2060
        %v2148 = vunpack.c.l.b16 %v2061
        %v2149 = vunpack.c.l.b16 %v2062
        %v2150 = vunpack.c.l.b16 %v2063
        %v2151 = vunpack.c.l.b16 %v2064
        %v2152 = vunpack.c.l.b16 %v2065
        %v2153 = vunpack.c.l.b16 %v2066
        %v2154 = vunpack.c.l.b16 %v2067
        %v2155 = vunpack.c.l.b16 %v2068
        %v2156 = vunpack.c.l.b16 %v2069
        %v2157 = vunpack.c.l.b16 %v2070
        %v2158 = vpack.c.b16 %v2143, %v2142
        %v2159 = vpack.c.b16 %v2145, %v2144
        %v2160 = vpack.c.b16 %v2147, %v2146
        %v2161 = vpack.c.b16 %v2149, %v2148
        %v2162 = vpack.c.b16 %v2151, %v2150
        %v2163 = vpack.c.b16 %v2153, %v2152
        %v2164 = vpack.c.b16 %v2155, %v2154
        %v2165 = vpack.c.b16 %v2157, %v2156
        %2174 = vmatprep.subr.bf16.mxu0 0
        %2175 = vmatpush1.bf16.msra.mxu0 %v2165
        %2176 = vmatprep.subr.bf16.mxu0 0
        %2177 = vmatpush1.bf16.msra.mxu0 %v2164
        %2178 = vmatprep.subr.bf16.mxu0 0
        %2179 = vmatpush1.bf16.msra.mxu0 %v2163
        %2180 = vmatprep.subr.bf16.mxu0 0
        %2181 = vmatpush1.bf16.msra.mxu0 %v2162
        %2182 = vmatprep.subr.bf16.mxu0 0
        %2183 = vmatpush1.bf16.msra.mxu0 %v2161
        %2184 = vmatprep.subr.bf16.mxu0 0
        %2185 = vmatpush1.bf16.msra.mxu0 %v2160
        %2186 = vmatprep.subr.bf16.mxu0 0
        %2187 = vmatpush1.bf16.msra.mxu0 %v2159
        %2188 = vmatprep.subr.bf16.mxu0 0
        %2189 = vmatpush1.bf16.msra.mxu0 %v2158
        %2190 = vmatprep.subr.bf16.mxu0 0
        %2191 = vmatpush2.bf16.msra.mxu0 0
        %2192 = vmatprep.subr.bf16.mxu0 0
        %2193 = vmatpush2.bf16.msra.mxu0 0
        %2194 = vmatprep.subr.bf16.mxu0 0
        %2195 = vmatpush2.bf16.msra.mxu0 0
        %2196 = vmatprep.subr.bf16.mxu0 0
        %2197 = vmatpush2.bf16.msra.mxu0 0
        %2198 = vmatprep.subr.bf16.mxu0 0
        %2199 = vmatpush2.bf16.msra.mxu0 0
        %2200 = vmatprep.subr.bf16.mxu0 0
        %2201 = vmatpush2.bf16.msra.mxu0 0
        %2202 = vmatprep.subr.bf16.mxu0 0
        %2203 = vmatpush2.bf16.msra.mxu0 0
        %2204 = vmatprep.subr.bf16.mxu0 0
        %2205 = vmatpush2.bf16.msra.mxu0 0
        %2206 = vmatprep.mubr.bf16.mxu0 0
        %2207 = vmatmul.mubr.bf16.gmra.mxu0 %v2124
        %v2208 = vpop.f32.mrf.mxu0
        %v2209 = vadd.f32 0.0, %v2208
        %v2210 = vpop.f32.mrf.mxu0
        %v2211 = vpop.f32.mrf.mxu0
        %v2212 = vpop.f32.mrf.mxu0
        %2213 = vdwg.mxu0
        %v2214 = vrot.slane %v2096, 7
        %v2215 = vsel %vm2104, %v2214, %v2095
        %v2216 = vrot.slane %v2097, 6
        %v2217 = vsel %vm2107, %v2216, %v2215
        %v2218 = vrot.slane %v2098, 5
        %v2219 = vsel %vm2110, %v2218, %v2217
        %v2220 = vrot.slane %v2099, 4
        %v2221 = vsel %vm2113, %v2220, %v2219
        %v2222 = vrot.slane %v2100, 3
        %v2223 = vsel %vm2116, %v2222, %v2221
        %v2224 = vrot.slane %v2101, 2
        %v2225 = vsel %vm2119, %v2224, %v2223
        %v2226 = vrot.slane %v2102, 1
        %v2227 = vsel %vm2122, %v2226, %v2225
        %v2228 = vpack.c.b16 %v2227, %v2227
        %v2246 = vunpack.c.l.b16 %v2038
        %v2247 = vunpack.c.l.b16 %v2039
        %v2248 = vunpack.c.l.b16 %v2040
        %v2249 = vunpack.c.l.b16 %v2041
        %v2250 = vunpack.c.l.b16 %v2042
        %v2251 = vunpack.c.l.b16 %v2043
        %v2252 = vunpack.c.l.b16 %v2044
        %v2253 = vunpack.c.l.b16 %v2045
        %v2254 = vunpack.c.l.b16 %v2046
        %v2255 = vunpack.c.l.b16 %v2047
        %v2256 = vunpack.c.l.b16 %v2048
        %v2257 = vunpack.c.l.b16 %v2049
        %v2258 = vunpack.c.l.b16 %v2050
        %v2259 = vunpack.c.l.b16 %v2051
        %v2260 = vunpack.c.l.b16 %v2052
        %v2261 = vunpack.c.l.b16 %v2053
        %v2262 = vpack.c.b16 %v2247, %v2246
        %v2263 = vpack.c.b16 %v2249, %v2248
        %v2264 = vpack.c.b16 %v2251, %v2250
        %v2265 = vpack.c.b16 %v2253, %v2252
        %v2266 = vpack.c.b16 %v2255, %v2254
        %v2267 = vpack.c.b16 %v2257, %v2256
        %v2268 = vpack.c.b16 %v2259, %v2258
        %v2269 = vpack.c.b16 %v2261, %v2260
        %2278 = vmatprep.subr.bf16.mxu0 0
        %2279 = vmatpush1.bf16.msra.mxu0 %v2269
        %2280 = vmatprep.subr.bf16.mxu0 0
        %2281 = vmatpush1.bf16.msra.mxu0 %v2268
        %2282 = vmatprep.subr.bf16.mxu0 0
        %2283 = vmatpush1.bf16.msra.mxu0 %v2267
        %2284 = vmatprep.subr.bf16.mxu0 0
        %2285 = vmatpush1.bf16.msra.mxu0 %v2266
        %2286 = vmatprep.subr.bf16.mxu0 0
        %2287 = vmatpush1.bf16.msra.mxu0 %v2265
        %2288 = vmatprep.subr.bf16.mxu0 0
        %2289 = vmatpush1.bf16.msra.mxu0 %v2264
        %2290 = vmatprep.subr.bf16.mxu0 0
        %2291 = vmatpush1.bf16.msra.mxu0 %v2263
        %2292 = vmatprep.subr.bf16.mxu0 0
        %2293 = vmatpush1.bf16.msra.mxu0 %v2262
        %2294 = vmatprep.subr.bf16.mxu0 0
        %2295 = vmatpush2.bf16.msra.mxu0 0
        %2296 = vmatprep.subr.bf16.mxu0 0
        %2297 = vmatpush2.bf16.msra.mxu0 0
        %2298 = vmatprep.subr.bf16.mxu0 0
        %2299 = vmatpush2.bf16.msra.mxu0 0
        %2300 = vmatprep.subr.bf16.mxu0 0
        %2301 = vmatpush2.bf16.msra.mxu0 0
        %2302 = vmatprep.subr.bf16.mxu0 0
        %2303 = vmatpush2.bf16.msra.mxu0 0
        %2304 = vmatprep.subr.bf16.mxu0 0
        %2305 = vmatpush2.bf16.msra.mxu0 0
        %2306 = vmatprep.subr.bf16.mxu0 0
        %2307 = vmatpush2.bf16.msra.mxu0 0
        %2308 = vmatprep.subr.bf16.mxu0 0
        %2309 = vmatpush2.bf16.msra.mxu0 0
        %2310 = vmatprep.mubr.bf16.mxu0 0
        %2311 = vmatmul.mubr.bf16.gmra.mxu0 %v2228
        %v2312 = vpop.f32.mrf.mxu0
        %v2313 = vadd.f32 %v2209, %v2312
        %v2314 = vpop.f32.mrf.mxu0
        %v2315 = vpop.f32.mrf.mxu0
        %v2316 = vpop.f32.mrf.mxu0
        %2317 = vdwg.mxu0
        %v2318 = vld [vmem:[#allocation2] sm:$0x2]
        %v2319 = vld [vmem:[#allocation2 + $0x20] sm:$0x2]
        %v2320 = vld [vmem:[#allocation2 + $0x40] sm:$0x2]
        %v2321 = vld [vmem:[#allocation2 + $0x60] sm:$0x2]
        %v2322 = vld [vmem:[#allocation2 + $0x80] sm:$0x2]
        %v2323 = vld [vmem:[#allocation2 + $0xa0] sm:$0x2]
        %v2324 = vld [vmem:[#allocation2 + $0xc0] sm:$0x2]
        %v2325 = vld [vmem:[#allocation2 + $0xe0] sm:$0x2]
        %s2326 = scalar_lea.vmem %s3, 128
        %v2327 = vld [vmem:[%s2326] sm:$0xf]
        %v2328 = vld [vmem:[%s2326 + $0x4] sm:$0xf]
        %v2329 = vld [vmem:[%s2326 + $0x8] sm:$0xf]
        %v2330 = vld [vmem:[%s2326 + $0xc] sm:$0xf]
        %v2331 = vld [vmem:[%s2326 + $0x10] sm:$0xf]
        %v2332 = vld [vmem:[%s2326 + $0x14] sm:$0xf]
        %v2333 = vld [vmem:[%s2326 + $0x18] sm:$0xf]
        %v2334 = vld [vmem:[%s2326 + $0x1c] sm:$0xf]
        %v2335 = vld [vmem:[%s2326 + $0x20] sm:$0xf]
        %v2336 = vld [vmem:[%s2326 + $0x24] sm:$0xf]
        %v2337 = vld [vmem:[%s2326 + $0x28] sm:$0xf]
        %v2338 = vld [vmem:[%s2326 + $0x2c] sm:$0xf]
        %v2339 = vld [vmem:[%s2326 + $0x30] sm:$0xf]
        %v2340 = vld [vmem:[%s2326 + $0x34] sm:$0xf]
        %v2341 = vld [vmem:[%s2326 + $0x38] sm:$0xf]
        %v2342 = vld [vmem:[%s2326 + $0x3c] sm:$0xf]
        %v2351 = vunpack.c.l.b16 %v2318
        %v2352 = vunpack.c.l.b16 %v2319
        %v2353 = vunpack.c.l.b16 %v2320
        %v2354 = vunpack.c.l.b16 %v2321
        %v2355 = vunpack.c.l.b16 %v2322
        %v2356 = vunpack.c.l.b16 %v2323
        %v2357 = vunpack.c.l.b16 %v2324
        %v2358 = vunpack.c.l.b16 %v2325
        %v2359 = vpack.c.b16 %v2351, %v2351
        %v2360 = vpack.c.b16 %v2352, %v2352
        %v2361 = vpack.c.b16 %v2353, %v2353
        %v2362 = vpack.c.b16 %v2354, %v2354
        %v2363 = vpack.c.b16 %v2355, %v2355
        %v2364 = vpack.c.b16 %v2356, %v2356
        %v2365 = vpack.c.b16 %v2357, %v2357
        %v2366 = vpack.c.b16 %v2358, %v2358
        %v2367 = vunpack.c.l.b16 %v2359
        %v2368 = vunpack.c.l.b16 %v2360
        %v2369 = vunpack.c.l.b16 %v2361
        %v2370 = vunpack.c.l.b16 %v2362
        %v2371 = vunpack.c.l.b16 %v2363
        %v2372 = vunpack.c.l.b16 %v2364
        %v2373 = vunpack.c.l.b16 %v2365
        %v2374 = vunpack.c.l.b16 %v2366
        %v2375 = vrot.slane %v2367, 2
        %v2376 = vrot.slane %v2368, 1
        %v2377 = vsel %vm2104, %v2376, %v2375
        %v2378 = vsel %vm2107, %v2369, %v2377
        %v2379 = vrot.slane %v2370, 7
        %v2380 = vsel %vm2110, %v2379, %v2378
        %v2381 = vrot.slane %v2371, 6
        %v2382 = vsel %vm2113, %v2381, %v2380
        %v2383 = vrot.slane %v2372, 5
        %v2384 = vsel %vm2116, %v2383, %v2382
        %v2385 = vrot.slane %v2373, 4
        %v2386 = vsel %vm2119, %v2385, %v2384
        %v2387 = vrot.slane %v2374, 3
        %v2388 = vsel %vm2122, %v2387, %v2386
        %v2389 = vpack.c.b16 %v2388, %v2388
        %v2407 = vunpack.c.l.b16 %v2327
        %v2408 = vunpack.c.l.b16 %v2328
        %v2409 = vunpack.c.l.b16 %v2329
        %v2410 = vunpack.c.l.b16 %v2330
        %v2411 = vunpack.c.l.b16 %v2331
        %v2412 = vunpack.c.l.b16 %v2332
        %v2413 = vunpack.c.l.b16 %v2333
        %v2414 = vunpack.c.l.b16 %v2334
        %v2415 = vunpack.c.l.b16 %v2335
        %v2416 = vunpack.c.l.b16 %v2336
        %v2417 = vunpack.c.l.b16 %v2337
        %v2418 = vunpack.c.l.b16 %v2338
        %v2419 = vunpack.c.l.b16 %v2339
        %v2420 = vunpack.c.l.b16 %v2340
        %v2421 = vunpack.c.l.b16 %v2341
        %v2422 = vunpack.c.l.b16 %v2342
        %v2423 = vpack.c.b16 %v2408, %v2407
        %v2424 = vpack.c.b16 %v2410, %v2409
        %v2425 = vpack.c.b16 %v2412, %v2411
        %v2426 = vpack.c.b16 %v2414, %v2413
        %v2427 = vpack.c.b16 %v2416, %v2415
        %v2428 = vpack.c.b16 %v2418, %v2417
        %v2429 = vpack.c.b16 %v2420, %v2419
        %v2430 = vpack.c.b16 %v2422, %v2421
        %2439 = vmatprep.subr.bf16.mxu0 0
        %2440 = vmatpush1.bf16.msra.mxu0 %v2430
        %2441 = vmatprep.subr.bf16.mxu0 0
        %2442 = vmatpush1.bf16.msra.mxu0 %v2429
        %2443 = vmatprep.subr.bf16.mxu0 0
        %2444 = vmatpush1.bf16.msra.mxu0 %v2428
        %2445 = vmatprep.subr.bf16.mxu0 0
        %2446 = vmatpush1.bf16.msra.mxu0 %v2427
        %2447 = vmatprep.subr.bf16.mxu0 0
        %2448 = vmatpush1.bf16.msra.mxu0 %v2426
        %2449 = vmatprep.subr.bf16.mxu0 0
        %2450 = vmatpush1.bf16.msra.mxu0 %v2425
        %2451 = vmatprep.subr.bf16.mxu0 0
        %2452 = vmatpush1.bf16.msra.mxu0 %v2424
        %2453 = vmatprep.subr.bf16.mxu0 0
        %2454 = vmatpush1.bf16.msra.mxu0 %v2423
        %2455 = vmatprep.subr.bf16.mxu0 0
        %2456 = vmatpush2.bf16.msra.mxu0 0
        %2457 = vmatprep.subr.bf16.mxu0 0
        %2458 = vmatpush2.bf16.msra.mxu0 0
        %2459 = vmatprep.subr.bf16.mxu0 0
        %2460 = vmatpush2.bf16.msra.mxu0 0
        %2461 = vmatprep.subr.bf16.mxu0 0
        %2462 = vmatpush2.bf16.msra.mxu0 0
        %2463 = vmatprep.subr.bf16.mxu0 0
        %2464 = vmatpush2.bf16.msra.mxu0 0
        %2465 = vmatprep.subr.bf16.mxu0 0
        %2466 = vmatpush2.bf16.msra.mxu0 0
        %2467 = vmatprep.subr.bf16.mxu0 0
        %2468 = vmatpush2.bf16.msra.mxu0 0
        %2469 = vmatprep.subr.bf16.mxu0 0
        %2470 = vmatpush2.bf16.msra.mxu0 0
        %2471 = vmatprep.mubr.bf16.mxu0 0
        %2472 = vmatmul.mubr.bf16.gmra.mxu0 %v2389
        %v2473 = vpop.f32.mrf.mxu0
        %v2474 = vadd.f32 0.0, %v2473
        %v2475 = vpop.f32.mrf.mxu0
        %v2476 = vpop.f32.mrf.mxu0
        %v2477 = vpop.f32.mrf.mxu0
        %2478 = vdwg.mxu0
        %v2479 = vadd.f32 %v2313, %v2474
        %s2480 = scalar_lea.vmem %s3, 192
        %v2481 = vld [vmem:[%s2480] sm:$0xf]
        %v2482 = vld [vmem:[%s2480 + $0x4] sm:$0xf]
        %v2483 = vld [vmem:[%s2480 + $0x8] sm:$0xf]
        %v2484 = vld [vmem:[%s2480 + $0xc] sm:$0xf]
        %v2485 = vld [vmem:[%s2480 + $0x10] sm:$0xf]
        %v2486 = vld [vmem:[%s2480 + $0x14] sm:$0xf]
        %v2487 = vld [vmem:[%s2480 + $0x18] sm:$0xf]
        %v2488 = vld [vmem:[%s2480 + $0x1c] sm:$0xf]
        %v2489 = vld [vmem:[%s2480 + $0x20] sm:$0xf]
        %v2490 = vld [vmem:[%s2480 + $0x24] sm:$0xf]
        %v2491 = vld [vmem:[%s2480 + $0x28] sm:$0xf]
        %v2492 = vld [vmem:[%s2480 + $0x2c] sm:$0xf]
        %v2493 = vld [vmem:[%s2480 + $0x30] sm:$0xf]
        %v2494 = vld [vmem:[%s2480 + $0x34] sm:$0xf]
        %v2495 = vld [vmem:[%s2480 + $0x38] sm:$0xf]
        %v2496 = vld [vmem:[%s2480 + $0x3c] sm:$0xf]
        %v2497 = vrot.slane %v2367, 3
        %v2498 = vrot.slane %v2368, 2
        %v2499 = vsel %vm2104, %v2498, %v2497
        %v2500 = vrot.slane %v2369, 1
        %v2501 = vsel %vm2107, %v2500, %v2499
        %v2502 = vsel %vm2110, %v2370, %v2501
        %v2503 = vrot.slane %v2371, 7
        %v2504 = vsel %vm2113, %v2503, %v2502
        %v2505 = vrot.slane %v2372, 6
        %v2506 = vsel %vm2116, %v2505, %v2504
        %v2507 = vrot.slane %v2373, 5
        %v2508 = vsel %vm2119, %v2507, %v2506
        %v2509 = vrot.slane %v2374, 4
        %v2510 = vsel %vm2122, %v2509, %v2508
        %v2511 = vpack.c.b16 %v2510, %v2510
        %v2529 = vunpack.c.l.b16 %v2481
        %v2530 = vunpack.c.l.b16 %v2482
        %v2531 = vunpack.c.l.b16 %v2483
        %v2532 = vunpack.c.l.b16 %v2484
        %v2533 = vunpack.c.l.b16 %v2485
        %v2534 = vunpack.c.l.b16 %v2486
        %v2535 = vunpack.c.l.b16 %v2487
        %v2536 = vunpack.c.l.b16 %v2488
        %v2537 = vunpack.c.l.b16 %v2489
        %v2538 = vunpack.c.l.b16 %v2490
        %v2539 = vunpack.c.l.b16 %v2491
        %v2540 = vunpack.c.l.b16 %v2492
        %v2541 = vunpack.c.l.b16 %v2493
        %v2542 = vunpack.c.l.b16 %v2494
        %v2543 = vunpack.c.l.b16 %v2495
        %v2544 = vunpack.c.l.b16 %v2496
        %v2545 = vpack.c.b16 %v2530, %v2529
        %v2546 = vpack.c.b16 %v2532, %v2531
        %v2547 = vpack.c.b16 %v2534, %v2533
        %v2548 = vpack.c.b16 %v2536, %v2535
        %v2549 = vpack.c.b16 %v2538, %v2537
        %v2550 = vpack.c.b16 %v2540, %v2539
        %v2551 = vpack.c.b16 %v2542, %v2541
        %v2552 = vpack.c.b16 %v2544, %v2543
        %2561 = vmatprep.subr.bf16.mxu0 0
        %2562 = vmatpush1.bf16.msra.mxu0 %v2552
        %2563 = vmatprep.subr.bf16.mxu0 0
        %2564 = vmatpush1.bf16.msra.mxu0 %v2551
        %2565 = vmatprep.subr.bf16.mxu0 0
        %2566 = vmatpush1.bf16.msra.mxu0 %v2550
        %2567 = vmatprep.subr.bf16.mxu0 0
        %2568 = vmatpush1.bf16.msra.mxu0 %v2549
        %2569 = vmatprep.subr.bf16.mxu0 0
        %2570 = vmatpush1.bf16.msra.mxu0 %v2548
        %2571 = vmatprep.subr.bf16.mxu0 0
        %2572 = vmatpush1.bf16.msra.mxu0 %v2547
        %2573 = vmatprep.subr.bf16.mxu0 0
        %2574 = vmatpush1.bf16.msra.mxu0 %v2546
        %2575 = vmatprep.subr.bf16.mxu0 0
        %2576 = vmatpush1.bf16.msra.mxu0 %v2545
        %2577 = vmatprep.subr.bf16.mxu0 0
        %2578 = vmatpush2.bf16.msra.mxu0 0
        %2579 = vmatprep.subr.bf16.mxu0 0
        %2580 = vmatpush2.bf16.msra.mxu0 0
        %2581 = vmatprep.subr.bf16.mxu0 0
        %2582 = vmatpush2.bf16.msra.mxu0 0
        %2583 = vmatprep.subr.bf16.mxu0 0
        %2584 = vmatpush2.bf16.msra.mxu0 0
        %2585 = vmatprep.subr.bf16.mxu0 0
        %2586 = vmatpush2.bf16.msra.mxu0 0
        %2587 = vmatprep.subr.bf16.mxu0 0
        %2588 = vmatpush2.bf16.msra.mxu0 0
        %2589 = vmatprep.subr.bf16.mxu0 0
        %2590 = vmatpush2.bf16.msra.mxu0 0
        %2591 = vmatprep.subr.bf16.mxu0 0
        %2592 = vmatpush2.bf16.msra.mxu0 0
        %2593 = vmatprep.mubr.bf16.mxu0 0
        %2594 = vmatmul.mubr.bf16.gmra.mxu0 %v2511
        %v2595 = vpop.f32.mrf.mxu0
        %v2596 = vadd.f32 0.0, %v2595
        %v2597 = vpop.f32.mrf.mxu0
        %v2598 = vpop.f32.mrf.mxu0
        %v2599 = vpop.f32.mrf.mxu0
        %2600 = vdwg.mxu0
        %v2601 = vadd.f32 %v2479, %v2596
        %v2602 = vld [vmem:[#allocation2] sm:$0x4]
        %v2603 = vld [vmem:[#allocation2 + $0x20] sm:$0x4]
        %v2604 = vld [vmem:[#allocation2 + $0x40] sm:$0x4]
        %v2605 = vld [vmem:[#allocation2 + $0x60] sm:$0x4]
        %v2606 = vld [vmem:[#allocation2 + $0x80] sm:$0x4]
        %v2607 = vld [vmem:[#allocation2 + $0xa0] sm:$0x4]
        %v2608 = vld [vmem:[#allocation2 + $0xc0] sm:$0x4]
        %v2609 = vld [vmem:[#allocation2 + $0xe0] sm:$0x4]
        %s2610 = scalar_lea.vmem %s3, 256
        %v2611 = vld [vmem:[%s2610] sm:$0xf]
        %v2612 = vld [vmem:[%s2610 + $0x4] sm:$0xf]
        %v2613 = vld [vmem:[%s2610 + $0x8] sm:$0xf]
        %v2614 = vld [vmem:[%s2610 + $0xc] sm:$0xf]
        %v2615 = vld [vmem:[%s2610 + $0x10] sm:$0xf]
        %v2616 = vld [vmem:[%s2610 + $0x14] sm:$0xf]
        %v2617 = vld [vmem:[%s2610 + $0x18] sm:$0xf]
        %v2618 = vld [vmem:[%s2610 + $0x1c] sm:$0xf]
        %v2619 = vld [vmem:[%s2610 + $0x20] sm:$0xf]
        %v2620 = vld [vmem:[%s2610 + $0x24] sm:$0xf]
        %v2621 = vld [vmem:[%s2610 + $0x28] sm:$0xf]
        %v2622 = vld [vmem:[%s2610 + $0x2c] sm:$0xf]
        %v2623 = vld [vmem:[%s2610 + $0x30] sm:$0xf]
        %v2624 = vld [vmem:[%s2610 + $0x34] sm:$0xf]
        %v2625 = vld [vmem:[%s2610 + $0x38] sm:$0xf]
        %v2626 = vld [vmem:[%s2610 + $0x3c] sm:$0xf]
        %v2635 = vunpack.c.l.b16 %v2602
        %v2636 = vunpack.c.l.b16 %v2603
        %v2637 = vunpack.c.l.b16 %v2604
        %v2638 = vunpack.c.l.b16 %v2605
        %v2639 = vunpack.c.l.b16 %v2606
        %v2640 = vunpack.c.l.b16 %v2607
        %v2641 = vunpack.c.l.b16 %v2608
        %v2642 = vunpack.c.l.b16 %v2609
        %v2643 = vpack.c.b16 %v2635, %v2635
        %v2644 = vpack.c.b16 %v2636, %v2636
        %v2645 = vpack.c.b16 %v2637, %v2637
        %v2646 = vpack.c.b16 %v2638, %v2638
        %v2647 = vpack.c.b16 %v2639, %v2639
        %v2648 = vpack.c.b16 %v2640, %v2640
        %v2649 = vpack.c.b16 %v2641, %v2641
        %v2650 = vpack.c.b16 %v2642, %v2642
        %v2651 = vunpack.c.l.b16 %v2643
        %v2652 = vunpack.c.l.b16 %v2644
        %v2653 = vunpack.c.l.b16 %v2645
        %v2654 = vunpack.c.l.b16 %v2646
        %v2655 = vunpack.c.l.b16 %v2647
        %v2656 = vunpack.c.l.b16 %v2648
        %v2657 = vunpack.c.l.b16 %v2649
        %v2658 = vunpack.c.l.b16 %v2650
        %v2659 = vrot.slane %v2651, 4
        %v2660 = vrot.slane %v2652, 3
        %v2661 = vsel %vm2104, %v2660, %v2659
        %v2662 = vrot.slane %v2653, 2
        %v2663 = vsel %vm2107, %v2662, %v2661
        %v2664 = vrot.slane %v2654, 1
        %v2665 = vsel %vm2110, %v2664, %v2663
        %v2666 = vsel %vm2113, %v2655, %v2665
        %v2667 = vrot.slane %v2656, 7
        %v2668 = vsel %vm2116, %v2667, %v2666
        %v2669 = vrot.slane %v2657, 6
        %v2670 = vsel %vm2119, %v2669, %v2668
        %v2671 = vrot.slane %v2658, 5
        %v2672 = vsel %vm2122, %v2671, %v2670
        %v2673 = vpack.c.b16 %v2672, %v2672
        %v2691 = vunpack.c.l.b16 %v2611
        %v2692 = vunpack.c.l.b16 %v2612
        %v2693 = vunpack.c.l.b16 %v2613
        %v2694 = vunpack.c.l.b16 %v2614
        %v2695 = vunpack.c.l.b16 %v2615
        %v2696 = vunpack.c.l.b16 %v2616
        %v2697 = vunpack.c.l.b16 %v2617
        %v2698 = vunpack.c.l.b16 %v2618
        %v2699 = vunpack.c.l.b16 %v2619
        %v2700 = vunpack.c.l.b16 %v2620
        %v2701 = vunpack.c.l.b16 %v2621
        %v2702 = vunpack.c.l.b16 %v2622
        %v2703 = vunpack.c.l.b16 %v2623
        %v2704 = vunpack.c.l.b16 %v2624
        %v2705 = vunpack.c.l.b16 %v2625
        %v2706 = vunpack.c.l.b16 %v2626
        %v2707 = vpack.c.b16 %v2692, %v2691
        %v2708 = vpack.c.b16 %v2694, %v2693
        %v2709 = vpack.c.b16 %v2696, %v2695
        %v2710 = vpack.c.b16 %v2698, %v2697
        %v2711 = vpack.c.b16 %v2700, %v2699
        %v2712 = vpack.c.b16 %v2702, %v2701
        %v2713 = vpack.c.b16 %v2704, %v2703
        %v2714 = vpack.c.b16 %v2706, %v2705
        %2723 = vmatprep.subr.bf16.mxu0 0
        %2724 = vmatpush1.bf16.msra.mxu0 %v2714
        %2725 = vmatprep.subr.bf16.mxu0 0
        %2726 = vmatpush1.bf16.msra.mxu0 %v2713
        %2727 = vmatprep.subr.bf16.mxu0 0
        %2728 = vmatpush1.bf16.msra.mxu0 %v2712
        %2729 = vmatprep.subr.bf16.mxu0 0
        %2730 = vmatpush1.bf16.msra.mxu0 %v2711
        %2731 = vmatprep.subr.bf16.mxu0 0
        %2732 = vmatpush1.bf16.msra.mxu0 %v2710
        %2733 = vmatprep.subr.bf16.mxu0 0
        %2734 = vmatpush1.bf16.msra.mxu0 %v2709
        %2735 = vmatprep.subr.bf16.mxu0 0
        %2736 = vmatpush1.bf16.msra.mxu0 %v2708
        %2737 = vmatprep.subr.bf16.mxu0 0
        %2738 = vmatpush1.bf16.msra.mxu0 %v2707
        %2739 = vmatprep.subr.bf16.mxu0 0
        %2740 = vmatpush2.bf16.msra.mxu0 0
        %2741 = vmatprep.subr.bf16.mxu0 0
        %2742 = vmatpush2.bf16.msra.mxu0 0
        %2743 = vmatprep.subr.bf16.mxu0 0
        %2744 = vmatpush2.bf16.msra.mxu0 0
        %2745 = vmatprep.subr.bf16.mxu0 0
        %2746 = vmatpush2.bf16.msra.mxu0 0
        %2747 = vmatprep.subr.bf16.mxu0 0
        %2748 = vmatpush2.bf16.msra.mxu0 0
        %2749 = vmatprep.subr.bf16.mxu0 0
        %2750 = vmatpush2.bf16.msra.mxu0 0
        %2751 = vmatprep.subr.bf16.mxu0 0
        %2752 = vmatpush2.bf16.msra.mxu0 0
        %2753 = vmatprep.subr.bf16.mxu0 0
        %2754 = vmatpush2.bf16.msra.mxu0 0
        %2755 = vmatprep.mubr.bf16.mxu0 0
        %2756 = vmatmul.mubr.bf16.gmra.mxu0 %v2673
        %v2757 = vpop.f32.mrf.mxu0
        %v2758 = vadd.f32 0.0, %v2757
        %v2759 = vpop.f32.mrf.mxu0
        %v2760 = vpop.f32.mrf.mxu0
        %v2761 = vpop.f32.mrf.mxu0
        %2762 = vdwg.mxu0
        %v2763 = vadd.f32 %v2601, %v2758
        %s2764 = scalar_lea.vmem %s3, 320
        %v2765 = vld [vmem:[%s2764] sm:$0xf]
        %v2766 = vld [vmem:[%s2764 + $0x4] sm:$0xf]
        %v2767 = vld [vmem:[%s2764 + $0x8] sm:$0xf]
        %v2768 = vld [vmem:[%s2764 + $0xc] sm:$0xf]
        %v2769 = vld [vmem:[%s2764 + $0x10] sm:$0xf]
        %v2770 = vld [vmem:[%s2764 + $0x14] sm:$0xf]
        %v2771 = vld [vmem:[%s2764 + $0x18] sm:$0xf]
        %v2772 = vld [vmem:[%s2764 + $0x1c] sm:$0xf]
        %v2773 = vld [vmem:[%s2764 + $0x20] sm:$0xf]
        %v2774 = vld [vmem:[%s2764 + $0x24] sm:$0xf]
        %v2775 = vld [vmem:[%s2764 + $0x28] sm:$0xf]
        %v2776 = vld [vmem:[%s2764 + $0x2c] sm:$0xf]
        %v2777 = vld [vmem:[%s2764 + $0x30] sm:$0xf]
        %v2778 = vld [vmem:[%s2764 + $0x34] sm:$0xf]
        %v2779 = vld [vmem:[%s2764 + $0x38] sm:$0xf]
        %v2780 = vld [vmem:[%s2764 + $0x3c] sm:$0xf]
        %v2781 = vrot.slane %v2651, 5
        %v2782 = vrot.slane %v2652, 4
        %v2783 = vsel %vm2104, %v2782, %v2781
        %v2784 = vrot.slane %v2653, 3
        %v2785 = vsel %vm2107, %v2784, %v2783
        %v2786 = vrot.slane %v2654, 2
        %v2787 = vsel %vm2110, %v2786, %v2785
        %v2788 = vrot.slane %v2655, 1
        %v2789 = vsel %vm2113, %v2788, %v2787
        %v2790 = vsel %vm2116, %v2656, %v2789
        %v2791 = vrot.slane %v2657, 7
        %v2792 = vsel %vm2119, %v2791, %v2790
        %v2793 = vrot.slane %v2658, 6
        %v2794 = vsel %vm2122, %v2793, %v2792
        %v2795 = vpack.c.b16 %v2794, %v2794
        %v2813 = vunpack.c.l.b16 %v2765
        %v2814 = vunpack.c.l.b16 %v2766
        %v2815 = vunpack.c.l.b16 %v2767
        %v2816 = vunpack.c.l.b16 %v2768
        %v2817 = vunpack.c.l.b16 %v2769
        %v2818 = vunpack.c.l.b16 %v2770
        %v2819 = vunpack.c.l.b16 %v2771
        %v2820 = vunpack.c.l.b16 %v2772
        %v2821 = vunpack.c.l.b16 %v2773
        %v2822 = vunpack.c.l.b16 %v2774
        %v2823 = vunpack.c.l.b16 %v2775
        %v2824 = vunpack.c.l.b16 %v2776
        %v2825 = vunpack.c.l.b16 %v2777
        %v2826 = vunpack.c.l.b16 %v2778
        %v2827 = vunpack.c.l.b16 %v2779
        %v2828 = vunpack.c.l.b16 %v2780
        %v2829 = vpack.c.b16 %v2814, %v2813
        %v2830 = vpack.c.b16 %v2816, %v2815
        %v2831 = vpack.c.b16 %v2818, %v2817
        %v2832 = vpack.c.b16 %v2820, %v2819
        %v2833 = vpack.c.b16 %v2822, %v2821
        %v2834 = vpack.c.b16 %v2824, %v2823
        %v2835 = vpack.c.b16 %v2826, %v2825
        %v2836 = vpack.c.b16 %v2828, %v2827
        %2845 = vmatprep.subr.bf16.mxu0 0
        %2846 = vmatpush1.bf16.msra.mxu0 %v2836
        %2847 = vmatprep.subr.bf16.mxu0 0
        %2848 = vmatpush1.bf16.msra.mxu0 %v2835
        %2849 = vmatprep.subr.bf16.mxu0 0
        %2850 = vmatpush1.bf16.msra.mxu0 %v2834
        %2851 = vmatprep.subr.bf16.mxu0 0
        %2852 = vmatpush1.bf16.msra.mxu0 %v2833
        %2853 = vmatprep.subr.bf16.mxu0 0
        %2854 = vmatpush1.bf16.msra.mxu0 %v2832
        %2855 = vmatprep.subr.bf16.mxu0 0
        %2856 = vmatpush1.bf16.msra.mxu0 %v2831
        %2857 = vmatprep.subr.bf16.mxu0 0
        %2858 = vmatpush1.bf16.msra.mxu0 %v2830
        %2859 = vmatprep.subr.bf16.mxu0 0
        %2860 = vmatpush1.bf16.msra.mxu0 %v2829
        %2861 = vmatprep.subr.bf16.mxu0 0
        %2862 = vmatpush2.bf16.msra.mxu0 0
        %2863 = vmatprep.subr.bf16.mxu0 0
        %2864 = vmatpush2.bf16.msra.mxu0 0
        %2865 = vmatprep.subr.bf16.mxu0 0
        %2866 = vmatpush2.bf16.msra.mxu0 0
        %2867 = vmatprep.subr.bf16.mxu0 0
        %2868 = vmatpush2.bf16.msra.mxu0 0
        %2869 = vmatprep.subr.bf16.mxu0 0
        %2870 = vmatpush2.bf16.msra.mxu0 0
        %2871 = vmatprep.subr.bf16.mxu0 0
        %2872 = vmatpush2.bf16.msra.mxu0 0
        %2873 = vmatprep.subr.bf16.mxu0 0
        %2874 = vmatpush2.bf16.msra.mxu0 0
        %2875 = vmatprep.subr.bf16.mxu0 0
        %2876 = vmatpush2.bf16.msra.mxu0 0
        %2877 = vmatprep.mubr.bf16.mxu0 0
        %2878 = vmatmul.mubr.bf16.gmra.mxu0 %v2795
        %v2879 = vpop.f32.mrf.mxu0
        %v2880 = vadd.f32 0.0, %v2879
        %v2881 = vpop.f32.mrf.mxu0
        %v2882 = vpop.f32.mrf.mxu0
        %v2883 = vpop.f32.mrf.mxu0
        %2884 = vdwg.mxu0
        %v2885 = vadd.f32 %v2763, %v2880
        %v2886 = vld [vmem:[#allocation2] sm:$0x8]
        %v2887 = vld [vmem:[#allocation2 + $0x20] sm:$0x8]
        %v2888 = vld [vmem:[#allocation2 + $0x40] sm:$0x8]
        %v2889 = vld [vmem:[#allocation2 + $0x60] sm:$0x8]
        %v2890 = vld [vmem:[#allocation2 + $0x80] sm:$0x8]
        %v2891 = vld [vmem:[#allocation2 + $0xa0] sm:$0x8]
        %v2892 = vld [vmem:[#allocation2 + $0xc0] sm:$0x8]
        %v2893 = vld [vmem:[#allocation2 + $0xe0] sm:$0x8]
        %s2894 = scalar_lea.vmem %s3, 384
        %v2895 = vld [vmem:[%s2894] sm:$0xf]
        %v2896 = vld [vmem:[%s2894 + $0x4] sm:$0xf]
        %v2897 = vld [vmem:[%s2894 + $0x8] sm:$0xf]
        %v2898 = vld [vmem:[%s2894 + $0xc] sm:$0xf]
        %v2899 = vld [vmem:[%s2894 + $0x10] sm:$0xf]
        %v2900 = vld [vmem:[%s2894 + $0x14] sm:$0xf]
        %v2901 = vld [vmem:[%s2894 + $0x18] sm:$0xf]
        %v2902 = vld [vmem:[%s2894 + $0x1c] sm:$0xf]
        %v2903 = vld [vmem:[%s2894 + $0x20] sm:$0xf]
        %v2904 = vld [vmem:[%s2894 + $0x24] sm:$0xf]
        %v2905 = vld [vmem:[%s2894 + $0x28] sm:$0xf]
        %v2906 = vld [vmem:[%s2894 + $0x2c] sm:$0xf]
        %v2907 = vld [vmem:[%s2894 + $0x30] sm:$0xf]
        %v2908 = vld [vmem:[%s2894 + $0x34] sm:$0xf]
        %v2909 = vld [vmem:[%s2894 + $0x38] sm:$0xf]
        %v2910 = vld [vmem:[%s2894 + $0x3c] sm:$0xf]
        %v2919 = vunpack.c.l.b16 %v2886
        %v2920 = vunpack.c.l.b16 %v2887
        %v2921 = vunpack.c.l.b16 %v2888
        %v2922 = vunpack.c.l.b16 %v2889
        %v2923 = vunpack.c.l.b16 %v2890
        %v2924 = vunpack.c.l.b16 %v2891
        %v2925 = vunpack.c.l.b16 %v2892
        %v2926 = vunpack.c.l.b16 %v2893
        %v2927 = vpack.c.b16 %v2919, %v2919
        %v2928 = vpack.c.b16 %v2920, %v2920
        %v2929 = vpack.c.b16 %v2921, %v2921
        %v2930 = vpack.c.b16 %v2922, %v2922
        %v2931 = vpack.c.b16 %v2923, %v2923
        %v2932 = vpack.c.b16 %v2924, %v2924
        %v2933 = vpack.c.b16 %v2925, %v2925
        %v2934 = vpack.c.b16 %v2926, %v2926
        %v2935 = vunpack.c.l.b16 %v2927
        %v2936 = vunpack.c.l.b16 %v2928
        %v2937 = vunpack.c.l.b16 %v2929
        %v2938 = vunpack.c.l.b16 %v2930
        %v2939 = vunpack.c.l.b16 %v2931
        %v2940 = vunpack.c.l.b16 %v2932
        %v2941 = vunpack.c.l.b16 %v2933
        %v2942 = vunpack.c.l.b16 %v2934
        %v2943 = vrot.slane %v2935, 6
        %v2944 = vrot.slane %v2936, 5
        %v2945 = vsel %vm2104, %v2944, %v2943
        %v2946 = vrot.slane %v2937, 4
        %v2947 = vsel %vm2107, %v2946, %v2945
        %v2948 = vrot.slane %v2938, 3
        %v2949 = vsel %vm2110, %v2948, %v2947
        %v2950 = vrot.slane %v2939, 2
        %v2951 = vsel %vm2113, %v2950, %v2949
        %v2952 = vrot.slane %v2940, 1
        %v2953 = vsel %vm2116, %v2952, %v2951
        %v2954 = vsel %vm2119, %v2941, %v2953
        %v2955 = vrot.slane %v2942, 7
        %v2956 = vsel %vm2122, %v2955, %v2954
        %v2957 = vpack.c.b16 %v2956, %v2956
        %v2975 = vunpack.c.l.b16 %v2895
        %v2976 = vunpack.c.l.b16 %v2896
        %v2977 = vunpack.c.l.b16 %v2897
        %v2978 = vunpack.c.l.b16 %v2898
        %v2979 = vunpack.c.l.b16 %v2899
        %v2980 = vunpack.c.l.b16 %v2900
        %v2981 = vunpack.c.l.b16 %v2901
        %v2982 = vunpack.c.l.b16 %v2902
        %v2983 = vunpack.c.l.b16 %v2903
        %v2984 = vunpack.c.l.b16 %v2904
        %v2985 = vunpack.c.l.b16 %v2905
        %v2986 = vunpack.c.l.b16 %v2906
        %v2987 = vunpack.c.l.b16 %v2907
        %v2988 = vunpack.c.l.b16 %v2908
        %v2989 = vunpack.c.l.b16 %v2909
        %v2990 = vunpack.c.l.b16 %v2910
        %v2991 = vpack.c.b16 %v2976, %v2975
        %v2992 = vpack.c.b16 %v2978, %v2977
        %v2993 = vpack.c.b16 %v2980, %v2979
        %v2994 = vpack.c.b16 %v2982, %v2981
        %v2995 = vpack.c.b16 %v2984, %v2983
        %v2996 = vpack.c.b16 %v2986, %v2985
        %v2997 = vpack.c.b16 %v2988, %v2987
        %v2998 = vpack.c.b16 %v2990, %v2989
        %3007 = vmatprep.subr.bf16.mxu0 0
        %3008 = vmatpush1.bf16.msra.mxu0 %v2998
        %3009 = vmatprep.subr.bf16.mxu0 0
        %3010 = vmatpush1.bf16.msra.mxu0 %v2997
        %3011 = vmatprep.subr.bf16.mxu0 0
        %3012 = vmatpush1.bf16.msra.mxu0 %v2996
        %3013 = vmatprep.subr.bf16.mxu0 0
        %3014 = vmatpush1.bf16.msra.mxu0 %v2995
        %3015 = vmatprep.subr.bf16.mxu0 0
        %3016 = vmatpush1.bf16.msra.mxu0 %v2994
        %3017 = vmatprep.subr.bf16.mxu0 0
        %3018 = vmatpush1.bf16.msra.mxu0 %v2993
        %3019 = vmatprep.subr.bf16.mxu0 0
        %3020 = vmatpush1.bf16.msra.mxu0 %v2992
        %3021 = vmatprep.subr.bf16.mxu0 0
        %3022 = vmatpush1.bf16.msra.mxu0 %v2991
        %3023 = vmatprep.subr.bf16.mxu0 0
        %3024 = vmatpush2.bf16.msra.mxu0 0
        %3025 = vmatprep.subr.bf16.mxu0 0
        %3026 = vmatpush2.bf16.msra.mxu0 0
        %3027 = vmatprep.subr.bf16.mxu0 0
        %3028 = vmatpush2.bf16.msra.mxu0 0
        %3029 = vmatprep.subr.bf16.mxu0 0
        %3030 = vmatpush2.bf16.msra.mxu0 0
        %3031 = vmatprep.subr.bf16.mxu0 0
        %3032 = vmatpush2.bf16.msra.mxu0 0
        %3033 = vmatprep.subr.bf16.mxu0 0
        %3034 = vmatpush2.bf16.msra.mxu0 0
        %3035 = vmatprep.subr.bf16.mxu0 0
        %3036 = vmatpush2.bf16.msra.mxu0 0
        %3037 = vmatprep.subr.bf16.mxu0 0
        %3038 = vmatpush2.bf16.msra.mxu0 0
        %3039 = vmatprep.mubr.bf16.mxu0 0
        %3040 = vmatmul.mubr.bf16.gmra.mxu0 %v2957
        %v3041 = vpop.f32.mrf.mxu0
        %v3042 = vadd.f32 0.0, %v3041
        %v3043 = vpop.f32.mrf.mxu0
        %v3044 = vpop.f32.mrf.mxu0
        %v3045 = vpop.f32.mrf.mxu0
        %3046 = vdwg.mxu0
        %v3047 = vadd.f32 %v2885, %v3042
        %s3048 = scalar_lea.vmem %s3, 448
        %v3049 = vld [vmem:[%s3048] sm:$0xf]
        %v3050 = vld [vmem:[%s3048 + $0x4] sm:$0xf]
        %v3051 = vld [vmem:[%s3048 + $0x8] sm:$0xf]
        %v3052 = vld [vmem:[%s3048 + $0xc] sm:$0xf]
        %v3053 = vld [vmem:[%s3048 + $0x10] sm:$0xf]
        %v3054 = vld [vmem:[%s3048 + $0x14] sm:$0xf]
        %v3055 = vld [vmem:[%s3048 + $0x18] sm:$0xf]
        %v3056 = vld [vmem:[%s3048 + $0x1c] sm:$0xf]
        %v3057 = vld [vmem:[%s3048 + $0x20] sm:$0xf]
        %v3058 = vld [vmem:[%s3048 + $0x24] sm:$0xf]
        %v3059 = vld [vmem:[%s3048 + $0x28] sm:$0xf]
        %v3060 = vld [vmem:[%s3048 + $0x2c] sm:$0xf]
        %v3061 = vld [vmem:[%s3048 + $0x30] sm:$0xf]
        %v3062 = vld [vmem:[%s3048 + $0x34] sm:$0xf]
        %v3063 = vld [vmem:[%s3048 + $0x38] sm:$0xf]
        %v3064 = vld [vmem:[%s3048 + $0x3c] sm:$0xf]
        %v3065 = vrot.slane %v2935, 7
        %v3066 = vrot.slane %v2936, 6
        %v3067 = vsel %vm2104, %v3066, %v3065
        %v3068 = vrot.slane %v2937, 5
        %v3069 = vsel %vm2107, %v3068, %v3067
        %v3070 = vrot.slane %v2938, 4
        %v3071 = vsel %vm2110, %v3070, %v3069
        %v3072 = vrot.slane %v2939, 3
        %v3073 = vsel %vm2113, %v3072, %v3071
        %v3074 = vrot.slane %v2940, 2
        %v3075 = vsel %vm2116, %v3074, %v3073
        %v3076 = vrot.slane %v2941, 1
        %v3077 = vsel %vm2119, %v3076, %v3075
        %v3078 = vsel %vm2122, %v2942, %v3077
        %v3079 = vpack.c.b16 %v3078, %v3078
        %v3097 = vunpack.c.l.b16 %v3049
        %v3098 = vunpack.c.l.b16 %v3050
        %v3099 = vunpack.c.l.b16 %v3051
        %v3100 = vunpack.c.l.b16 %v3052
        %v3101 = vunpack.c.l.b16 %v3053
        %v3102 = vunpack.c.l.b16 %v3054
        %v3103 = vunpack.c.l.b16 %v3055
        %v3104 = vunpack.c.l.b16 %v3056
        %v3105 = vunpack.c.l.b16 %v3057
        %v3106 = vunpack.c.l.b16 %v3058
        %v3107 = vunpack.c.l.b16 %v3059
        %v3108 = vunpack.c.l.b16 %v3060
        %v3109 = vunpack.c.l.b16 %v3061
        %v3110 = vunpack.c.l.b16 %v3062
        %v3111 = vunpack.c.l.b16 %v3063
        %v3112 = vunpack.c.l.b16 %v3064
        %v3113 = vpack.c.b16 %v3098, %v3097
        %v3114 = vpack.c.b16 %v3100, %v3099
        %v3115 = vpack.c.b16 %v3102, %v3101
        %v3116 = vpack.c.b16 %v3104, %v3103
        %v3117 = vpack.c.b16 %v3106, %v3105
        %v3118 = vpack.c.b16 %v3108, %v3107
        %v3119 = vpack.c.b16 %v3110, %v3109
        %v3120 = vpack.c.b16 %v3112, %v3111
        %3129 = vmatprep.subr.bf16.mxu0 0
        %3130 = vmatpush1.bf16.msra.mxu0 %v3120
        %3131 = vmatprep.subr.bf16.mxu0 0
        %3132 = vmatpush1.bf16.msra.mxu0 %v3119
        %3133 = vmatprep.subr.bf16.mxu0 0
        %3134 = vmatpush1.bf16.msra.mxu0 %v3118
        %3135 = vmatprep.subr.bf16.mxu0 0
        %3136 = vmatpush1.bf16.msra.mxu0 %v3117
        %3137 = vmatprep.subr.bf16.mxu0 0
        %3138 = vmatpush1.bf16.msra.mxu0 %v3116
        %3139 = vmatprep.subr.bf16.mxu0 0
        %3140 = vmatpush1.bf16.msra.mxu0 %v3115
        %3141 = vmatprep.subr.bf16.mxu0 0
        %3142 = vmatpush1.bf16.msra.mxu0 %v3114
        %3143 = vmatprep.subr.bf16.mxu0 0
        %3144 = vmatpush1.bf16.msra.mxu0 %v3113
        %3145 = vmatprep.subr.bf16.mxu0 0
        %3146 = vmatpush2.bf16.msra.mxu0 0
        %3147 = vmatprep.subr.bf16.mxu0 0
        %3148 = vmatpush2.bf16.msra.mxu0 0
        %3149 = vmatprep.subr.bf16.mxu0 0
        %3150 = vmatpush2.bf16.msra.mxu0 0
        %3151 = vmatprep.subr.bf16.mxu0 0
        %3152 = vmatpush2.bf16.msra.mxu0 0
        %3153 = vmatprep.subr.bf16.mxu0 0
        %3154 = vmatpush2.bf16.msra.mxu0 0
        %3155 = vmatprep.subr.bf16.mxu0 0
        %3156 = vmatpush2.bf16.msra.mxu0 0
        %3157 = vmatprep.subr.bf16.mxu0 0
        %3158 = vmatpush2.bf16.msra.mxu0 0
        %3159 = vmatprep.subr.bf16.mxu0 0
        %3160 = vmatpush2.bf16.msra.mxu0 0
        %3161 = vmatprep.mubr.bf16.mxu0 0
        %3162 = vmatmul.mubr.bf16.gmra.mxu0 %v3079
        %v3163 = vpop.f32.mrf.mxu0
        %v3164 = vadd.f32 0.0, %v3163
        %v3165 = vpop.f32.mrf.mxu0
        %v3166 = vpop.f32.mrf.mxu0
        %v3167 = vpop.f32.mrf.mxu0
        %3168 = vdwg.mxu0
        %v3169 = vadd.f32 %v3047, %v3164
        %v3170 = vld [vmem:[#allocation2 + $0x4] sm:$0x1]
        %v3171 = vld [vmem:[#allocation2 + $0x24] sm:$0x1]
        %v3172 = vld [vmem:[#allocation2 + $0x44] sm:$0x1]
        %v3173 = vld [vmem:[#allocation2 + $0x64] sm:$0x1]
        %v3174 = vld [vmem:[#allocation2 + $0x84] sm:$0x1]
        %v3175 = vld [vmem:[#allocation2 + $0xa4] sm:$0x1]
        %v3176 = vld [vmem:[#allocation2 + $0xc4] sm:$0x1]
        %v3177 = vld [vmem:[#allocation2 + $0xe4] sm:$0x1]
        %s3178 = scalar_lea.vmem %s3, 512
        %v3179 = vld [vmem:[%s3178] sm:$0xf]
        %v3180 = vld [vmem:[%s3178 + $0x4] sm:$0xf]
        %v3181 = vld [vmem:[%s3178 + $0x8] sm:$0xf]
        %v3182 = vld [vmem:[%s3178 + $0xc] sm:$0xf]
        %v3183 = vld [vmem:[%s3178 + $0x10] sm:$0xf]
        %v3184 = vld [vmem:[%s3178 + $0x14] sm:$0xf]
        %v3185 = vld [vmem:[%s3178 + $0x18] sm:$0xf]
        %v3186 = vld [vmem:[%s3178 + $0x1c] sm:$0xf]
        %v3187 = vld [vmem:[%s3178 + $0x20] sm:$0xf]
        %v3188 = vld [vmem:[%s3178 + $0x24] sm:$0xf]
        %v3189 = vld [vmem:[%s3178 + $0x28] sm:$0xf]
        %v3190 = vld [vmem:[%s3178 + $0x2c] sm:$0xf]
        %v3191 = vld [vmem:[%s3178 + $0x30] sm:$0xf]
        %v3192 = vld [vmem:[%s3178 + $0x34] sm:$0xf]
        %v3193 = vld [vmem:[%s3178 + $0x38] sm:$0xf]
        %v3194 = vld [vmem:[%s3178 + $0x3c] sm:$0xf]
        %v3203 = vunpack.c.l.b16 %v3170
        %v3204 = vunpack.c.l.b16 %v3171
        %v3205 = vunpack.c.l.b16 %v3172
        %v3206 = vunpack.c.l.b16 %v3173
        %v3207 = vunpack.c.l.b16 %v3174
        %v3208 = vunpack.c.l.b16 %v3175
        %v3209 = vunpack.c.l.b16 %v3176
        %v3210 = vunpack.c.l.b16 %v3177
        %v3211 = vpack.c.b16 %v3203, %v3203
        %v3212 = vpack.c.b16 %v3204, %v3204
        %v3213 = vpack.c.b16 %v3205, %v3205
        %v3214 = vpack.c.b16 %v3206, %v3206
        %v3215 = vpack.c.b16 %v3207, %v3207
        %v3216 = vpack.c.b16 %v3208, %v3208
        %v3217 = vpack.c.b16 %v3209, %v3209
        %v3218 = vpack.c.b16 %v3210, %v3210
        %v3219 = vunpack.c.l.b16 %v3211
        %v3220 = vunpack.c.l.b16 %v3212
        %v3221 = vunpack.c.l.b16 %v3213
        %v3222 = vunpack.c.l.b16 %v3214
        %v3223 = vunpack.c.l.b16 %v3215
        %v3224 = vunpack.c.l.b16 %v3216
        %v3225 = vunpack.c.l.b16 %v3217
        %v3226 = vunpack.c.l.b16 %v3218
        %v3227 = vrot.slane %v3220, 7
        %v3228 = vsel %vm2104, %v3227, %v3219
        %v3229 = vrot.slane %v3221, 6
        %v3230 = vsel %vm2107, %v3229, %v3228
        %v3231 = vrot.slane %v3222, 5
        %v3232 = vsel %vm2110, %v3231, %v3230
        %v3233 = vrot.slane %v3223, 4
        %v3234 = vsel %vm2113, %v3233, %v3232
        %v3235 = vrot.slane %v3224, 3
        %v3236 = vsel %vm2116, %v3235, %v3234
        %v3237 = vrot.slane %v3225, 2
        %v3238 = vsel %vm2119, %v3237, %v3236
        %v3239 = vrot.slane %v3226, 1
        %v3240 = vsel %vm2122, %v3239, %v3238
        %v3241 = vpack.c.b16 %v3240, %v3240
        %v3259 = vunpack.c.l.b16 %v3179
        %v3260 = vunpack.c.l.b16 %v3180
        %v3261 = vunpack.c.l.b16 %v3181
        %v3262 = vunpack.c.l.b16 %v3182
        %v3263 = vunpack.c.l.b16 %v3183
        %v3264 = vunpack.c.l.b16 %v3184
        %v3265 = vunpack.c.l.b16 %v3185
        %v3266 = vunpack.c.l.b16 %v3186
        %v3267 = vunpack.c.l.b16 %v3187
        %v3268 = vunpack.c.l.b16 %v3188
        %v3269 = vunpack.c.l.b16 %v3189
        %v3270 = vunpack.c.l.b16 %v3190
        %v3271 = vunpack.c.l.b16 %v3191
        %v3272 = vunpack.c.l.b16 %v3192
        %v3273 = vunpack.c.l.b16 %v3193
        %v3274 = vunpack.c.l.b16 %v3194
        %v3275 = vpack.c.b16 %v3260, %v3259
        %v3276 = vpack.c.b16 %v3262, %v3261
        %v3277 = vpack.c.b16 %v3264, %v3263
        %v3278 = vpack.c.b16 %v3266, %v3265
        %v3279 = vpack.c.b16 %v3268, %v3267
        %v3280 = vpack.c.b16 %v3270, %v3269
        %v3281 = vpack.c.b16 %v3272, %v3271
        %v3282 = vpack.c.b16 %v3274, %v3273
        %3291 = vmatprep.subr.bf16.mxu0 0
        %3292 = vmatpush1.bf16.msra.mxu0 %v3282
        %3293 = vmatprep.subr.bf16.mxu0 0
        %3294 = vmatpush1.bf16.msra.mxu0 %v3281
        %3295 = vmatprep.subr.bf16.mxu0 0
        %3296 = vmatpush1.bf16.msra.mxu0 %v3280
        %3297 = vmatprep.subr.bf16.mxu0 0
        %3298 = vmatpush1.bf16.msra.mxu0 %v3279
        %3299 = vmatprep.subr.bf16.mxu0 0
        %3300 = vmatpush1.bf16.msra.mxu0 %v3278
        %3301 = vmatprep.subr.bf16.mxu0 0
        %3302 = vmatpush1.bf16.msra.mxu0 %v3277
        %3303 = vmatprep.subr.bf16.mxu0 0
        %3304 = vmatpush1.bf16.msra.mxu0 %v3276
        %3305 = vmatprep.subr.bf16.mxu0 0
        %3306 = vmatpush1.bf16.msra.mxu0 %v3275
        %3307 = vmatprep.subr.bf16.mxu0 0
        %3308 = vmatpush2.bf16.msra.mxu0 0
        %3309 = vmatprep.subr.bf16.mxu0 0
        %3310 = vmatpush2.bf16.msra.mxu0 0
        %3311 = vmatprep.subr.bf16.mxu0 0
        %3312 = vmatpush2.bf16.msra.mxu0 0
        %3313 = vmatprep.subr.bf16.mxu0 0
        %3314 = vmatpush2.bf16.msra.mxu0 0
        %3315 = vmatprep.subr.bf16.mxu0 0
        %3316 = vmatpush2.bf16.msra.mxu0 0
        %3317 = vmatprep.subr.bf16.mxu0 0
        %3318 = vmatpush2.bf16.msra.mxu0 0
        %3319 = vmatprep.subr.bf16.mxu0 0
        %3320 = vmatpush2.bf16.msra.mxu0 0
        %3321 = vmatprep.subr.bf16.mxu0 0
        %3322 = vmatpush2.bf16.msra.mxu0 0
        %3323 = vmatprep.mubr.bf16.mxu0 0
        %3324 = vmatmul.mubr.bf16.gmra.mxu0 %v3241
        %v3325 = vpop.f32.mrf.mxu0
        %v3326 = vadd.f32 0.0, %v3325
        %v3327 = vpop.f32.mrf.mxu0
        %v3328 = vpop.f32.mrf.mxu0
        %v3329 = vpop.f32.mrf.mxu0
        %3330 = vdwg.mxu0
        %v3331 = vadd.f32 %v3169, %v3326
        %s3332 = scalar_lea.vmem %s3, 576
        %v3333 = vld [vmem:[%s3332] sm:$0xf]
        %v3334 = vld [vmem:[%s3332 + $0x4] sm:$0xf]
        %v3335 = vld [vmem:[%s3332 + $0x8] sm:$0xf]
        %v3336 = vld [vmem:[%s3332 + $0xc] sm:$0xf]
        %v3337 = vld [vmem:[%s3332 + $0x10] sm:$0xf]
        %v3338 = vld [vmem:[%s3332 + $0x14] sm:$0xf]
        %v3339 = vld [vmem:[%s3332 + $0x18] sm:$0xf]
        %v3340 = vld [vmem:[%s3332 + $0x1c] sm:$0xf]
        %v3341 = vld [vmem:[%s3332 + $0x20] sm:$0xf]
        %v3342 = vld [vmem:[%s3332 + $0x24] sm:$0xf]
        %v3343 = vld [vmem:[%s3332 + $0x28] sm:$0xf]
        %v3344 = vld [vmem:[%s3332 + $0x2c] sm:$0xf]
        %v3345 = vld [vmem:[%s3332 + $0x30] sm:$0xf]
        %v3346 = vld [vmem:[%s3332 + $0x34] sm:$0xf]
        %v3347 = vld [vmem:[%s3332 + $0x38] sm:$0xf]
        %v3348 = vld [vmem:[%s3332 + $0x3c] sm:$0xf]
        %v3349 = vrot.slane %v3219, 1
        %v3350 = vsel %vm2104, %v3220, %v3349
        %v3351 = vrot.slane %v3221, 7
        %v3352 = vsel %vm2107, %v3351, %v3350
        %v3353 = vrot.slane %v3222, 6
        %v3354 = vsel %vm2110, %v3353, %v3352
        %v3355 = vrot.slane %v3223, 5
        %v3356 = vsel %vm2113, %v3355, %v3354
        %v3357 = vrot.slane %v3224, 4
        %v3358 = vsel %vm2116, %v3357, %v3356
        %v3359 = vrot.slane %v3225, 3
        %v3360 = vsel %vm2119, %v3359, %v3358
        %v3361 = vrot.slane %v3226, 2
        %v3362 = vsel %vm2122, %v3361, %v3360
        %v3363 = vpack.c.b16 %v3362, %v3362
        %v3381 = vunpack.c.l.b16 %v3333
        %v3382 = vunpack.c.l.b16 %v3334
        %v3383 = vunpack.c.l.b16 %v3335
        %v3384 = vunpack.c.l.b16 %v3336
        %v3385 = vunpack.c.l.b16 %v3337
        %v3386 = vunpack.c.l.b16 %v3338
        %v3387 = vunpack.c.l.b16 %v3339
        %v3388 = vunpack.c.l.b16 %v3340
        %v3389 = vunpack.c.l.b16 %v3341
        %v3390 = vunpack.c.l.b16 %v3342
        %v3391 = vunpack.c.l.b16 %v3343
        %v3392 = vunpack.c.l.b16 %v3344
        %v3393 = vunpack.c.l.b16 %v3345
        %v3394 = vunpack.c.l.b16 %v3346
        %v3395 = vunpack.c.l.b16 %v3347
        %v3396 = vunpack.c.l.b16 %v3348
        %v3397 = vpack.c.b16 %v3382, %v3381
        %v3398 = vpack.c.b16 %v3384, %v3383
        %v3399 = vpack.c.b16 %v3386, %v3385
        %v3400 = vpack.c.b16 %v3388, %v3387
        %v3401 = vpack.c.b16 %v3390, %v3389
        %v3402 = vpack.c.b16 %v3392, %v3391
        %v3403 = vpack.c.b16 %v3394, %v3393
        %v3404 = vpack.c.b16 %v3396, %v3395
        %3413 = vmatprep.subr.bf16.mxu0 0
        %3414 = vmatpush1.bf16.msra.mxu0 %v3404
        %3415 = vmatprep.subr.bf16.mxu0 0
        %3416 = vmatpush1.bf16.msra.mxu0 %v3403
        %3417 = vmatprep.subr.bf16.mxu0 0
        %3418 = vmatpush1.bf16.msra.mxu0 %v3402
        %3419 = vmatprep.subr.bf16.mxu0 0
        %3420 = vmatpush1.bf16.msra.mxu0 %v3401
        %3421 = vmatprep.subr.bf16.mxu0 0
        %3422 = vmatpush1.bf16.msra.mxu0 %v3400
        %3423 = vmatprep.subr.bf16.mxu0 0
        %3424 = vmatpush1.bf16.msra.mxu0 %v3399
        %3425 = vmatprep.subr.bf16.mxu0 0
        %3426 = vmatpush1.bf16.msra.mxu0 %v3398
        %3427 = vmatprep.subr.bf16.mxu0 0
        %3428 = vmatpush1.bf16.msra.mxu0 %v3397
        %3429 = vmatprep.subr.bf16.mxu0 0
        %3430 = vmatpush2.bf16.msra.mxu0 0
        %3431 = vmatprep.subr.bf16.mxu0 0
        %3432 = vmatpush2.bf16.msra.mxu0 0
        %3433 = vmatprep.subr.bf16.mxu0 0
        %3434 = vmatpush2.bf16.msra.mxu0 0
        %3435 = vmatprep.subr.bf16.mxu0 0
        %3436 = vmatpush2.bf16.msra.mxu0 0
        %3437 = vmatprep.subr.bf16.mxu0 0
        %3438 = vmatpush2.bf16.msra.mxu0 0
        %3439 = vmatprep.subr.bf16.mxu0 0
        %3440 = vmatpush2.bf16.msra.mxu0 0
        %3441 = vmatprep.subr.bf16.mxu0 0
        %3442 = vmatpush2.bf16.msra.mxu0 0
        %3443 = vmatprep.subr.bf16.mxu0 0
        %3444 = vmatpush2.bf16.msra.mxu0 0
        %3445 = vmatprep.mubr.bf16.mxu0 0
        %3446 = vmatmul.mubr.bf16.gmra.mxu0 %v3363
        %v3447 = vpop.f32.mrf.mxu0
        %v3448 = vadd.f32 0.0, %v3447
        %v3449 = vpop.f32.mrf.mxu0
        %v3450 = vpop.f32.mrf.mxu0
        %v3451 = vpop.f32.mrf.mxu0
        %3452 = vdwg.mxu0
        %v3453 = vadd.f32 %v3331, %v3448
        %v3454 = vld [vmem:[#allocation2 + $0x4] sm:$0x2]
        %v3455 = vld [vmem:[#allocation2 + $0x24] sm:$0x2]
        %v3456 = vld [vmem:[#allocation2 + $0x44] sm:$0x2]
        %v3457 = vld [vmem:[#allocation2 + $0x64] sm:$0x2]
        %v3458 = vld [vmem:[#allocation2 + $0x84] sm:$0x2]
        %v3459 = vld [vmem:[#allocation2 + $0xa4] sm:$0x2]
        %v3460 = vld [vmem:[#allocation2 + $0xc4] sm:$0x2]
        %v3461 = vld [vmem:[#allocation2 + $0xe4] sm:$0x2]
        %s3462 = scalar_lea.vmem %s3, 640
        %v3463 = vld [vmem:[%s3462] sm:$0xf]
        %v3464 = vld [vmem:[%s3462 + $0x4] sm:$0xf]
        %v3465 = vld [vmem:[%s3462 + $0x8] sm:$0xf]
        %v3466 = vld [vmem:[%s3462 + $0xc] sm:$0xf]
        %v3467 = vld [vmem:[%s3462 + $0x10] sm:$0xf]
        %v3468 = vld [vmem:[%s3462 + $0x14] sm:$0xf]
        %v3469 = vld [vmem:[%s3462 + $0x18] sm:$0xf]
        %v3470 = vld [vmem:[%s3462 + $0x1c] sm:$0xf]
        %v3471 = vld [vmem:[%s3462 + $0x20] sm:$0xf]
        %v3472 = vld [vmem:[%s3462 + $0x24] sm:$0xf]
        %v3473 = vld [vmem:[%s3462 + $0x28] sm:$0xf]
        %v3474 = vld [vmem:[%s3462 + $0x2c] sm:$0xf]
        %v3475 = vld [vmem:[%s3462 + $0x30] sm:$0xf]
        %v3476 = vld [vmem:[%s3462 + $0x34] sm:$0xf]
        %v3477 = vld [vmem:[%s3462 + $0x38] sm:$0xf]
        %v3478 = vld [vmem:[%s3462 + $0x3c] sm:$0xf]
        %v3487 = vunpack.c.l.b16 %v3454
        %v3488 = vunpack.c.l.b16 %v3455
        %v3489 = vunpack.c.l.b16 %v3456
        %v3490 = vunpack.c.l.b16 %v3457
        %v3491 = vunpack.c.l.b16 %v3458
        %v3492 = vunpack.c.l.b16 %v3459
        %v3493 = vunpack.c.l.b16 %v3460
        %v3494 = vunpack.c.l.b16 %v3461
        %v3495 = vpack.c.b16 %v3487, %v3487
        %v3496 = vpack.c.b16 %v3488, %v3488
        %v3497 = vpack.c.b16 %v3489, %v3489
        %v3498 = vpack.c.b16 %v3490, %v3490
        %v3499 = vpack.c.b16 %v3491, %v3491
        %v3500 = vpack.c.b16 %v3492, %v3492
        %v3501 = vpack.c.b16 %v3493, %v3493
        %v3502 = vpack.c.b16 %v3494, %v3494
        %v3503 = vunpack.c.l.b16 %v3495
        %v3504 = vunpack.c.l.b16 %v3496
        %v3505 = vunpack.c.l.b16 %v3497
        %v3506 = vunpack.c.l.b16 %v3498
        %v3507 = vunpack.c.l.b16 %v3499
        %v3508 = vunpack.c.l.b16 %v3500
        %v3509 = vunpack.c.l.b16 %v3501
        %v3510 = vunpack.c.l.b16 %v3502
        %v3511 = vrot.slane %v3503, 2
        %v3512 = vrot.slane %v3504, 1
        %v3513 = vsel %vm2104, %v3512, %v3511
        %v3514 = vsel %vm2107, %v3505, %v3513
        %v3515 = vrot.slane %v3506, 7
        %v3516 = vsel %vm2110, %v3515, %v3514
        %v3517 = vrot.slane %v3507, 6
        %v3518 = vsel %vm2113, %v3517, %v3516
        %v3519 = vrot.slane %v3508, 5
        %v3520 = vsel %vm2116, %v3519, %v3518
        %v3521 = vrot.slane %v3509, 4
        %v3522 = vsel %vm2119, %v3521, %v3520
        %v3523 = vrot.slane %v3510, 3
        %v3524 = vsel %vm2122, %v3523, %v3522
        %v3525 = vpack.c.b16 %v3524, %v3524
        %v3543 = vunpack.c.l.b16 %v3463
        %v3544 = vunpack.c.l.b16 %v3464
        %v3545 = vunpack.c.l.b16 %v3465
        %v3546 = vunpack.c.l.b16 %v3466
        %v3547 = vunpack.c.l.b16 %v3467
        %v3548 = vunpack.c.l.b16 %v3468
        %v3549 = vunpack.c.l.b16 %v3469
        %v3550 = vunpack.c.l.b16 %v3470
        %v3551 = vunpack.c.l.b16 %v3471
        %v3552 = vunpack.c.l.b16 %v3472
        %v3553 = vunpack.c.l.b16 %v3473
        %v3554 = vunpack.c.l.b16 %v3474
        %v3555 = vunpack.c.l.b16 %v3475
        %v3556 = vunpack.c.l.b16 %v3476
        %v3557 = vunpack.c.l.b16 %v3477
        %v3558 = vunpack.c.l.b16 %v3478
        %v3559 = vpack.c.b16 %v3544, %v3543
        %v3560 = vpack.c.b16 %v3546, %v3545
        %v3561 = vpack.c.b16 %v3548, %v3547
        %v3562 = vpack.c.b16 %v3550, %v3549
        %v3563 = vpack.c.b16 %v3552, %v3551
        %v3564 = vpack.c.b16 %v3554, %v3553
        %v3565 = vpack.c.b16 %v3556, %v3555
        %v3566 = vpack.c.b16 %v3558, %v3557
        %3575 = vmatprep.subr.bf16.mxu0 0
        %3576 = vmatpush1.bf16.msra.mxu0 %v3566
        %3577 = vmatprep.subr.bf16.mxu0 0
        %3578 = vmatpush1.bf16.msra.mxu0 %v3565
        %3579 = vmatprep.subr.bf16.mxu0 0
        %3580 = vmatpush1.bf16.msra.mxu0 %v3564
        %3581 = vmatprep.subr.bf16.mxu0 0
        %3582 = vmatpush1.bf16.msra.mxu0 %v3563
        %3583 = vmatprep.subr.bf16.mxu0 0
        %3584 = vmatpush1.bf16.msra.mxu0 %v3562
        %3585 = vmatprep.subr.bf16.mxu0 0
        %3586 = vmatpush1.bf16.msra.mxu0 %v3561
        %3587 = vmatprep.subr.bf16.mxu0 0
        %3588 = vmatpush1.bf16.msra.mxu0 %v3560
        %3589 = vmatprep.subr.bf16.mxu0 0
        %3590 = vmatpush1.bf16.msra.mxu0 %v3559
        %3591 = vmatprep.subr.bf16.mxu0 0
        %3592 = vmatpush2.bf16.msra.mxu0 0
        %3593 = vmatprep.subr.bf16.mxu0 0
        %3594 = vmatpush2.bf16.msra.mxu0 0
        %3595 = vmatprep.subr.bf16.mxu0 0
        %3596 = vmatpush2.bf16.msra.mxu0 0
        %3597 = vmatprep.subr.bf16.mxu0 0
        %3598 = vmatpush2.bf16.msra.mxu0 0
        %3599 = vmatprep.subr.bf16.mxu0 0
        %3600 = vmatpush2.bf16.msra.mxu0 0
        %3601 = vmatprep.subr.bf16.mxu0 0
        %3602 = vmatpush2.bf16.msra.mxu0 0
        %3603 = vmatprep.subr.bf16.mxu0 0
        %3604 = vmatpush2.bf16.msra.mxu0 0
        %3605 = vmatprep.subr.bf16.mxu0 0
        %3606 = vmatpush2.bf16.msra.mxu0 0
        %3607 = vmatprep.mubr.bf16.mxu0 0
        %3608 = vmatmul.mubr.bf16.gmra.mxu0 %v3525
        %v3609 = vpop.f32.mrf.mxu0
        %v3610 = vadd.f32 0.0, %v3609
        %v3611 = vpop.f32.mrf.mxu0
        %v3612 = vpop.f32.mrf.mxu0
        %v3613 = vpop.f32.mrf.mxu0
        %3614 = vdwg.mxu0
        %v3615 = vadd.f32 %v3453, %v3610
        %s3616 = scalar_lea.vmem %s3, 704
        %v3617 = vld [vmem:[%s3616] sm:$0xf]
        %v3618 = vld [vmem:[%s3616 + $0x4] sm:$0xf]
        %v3619 = vld [vmem:[%s3616 + $0x8] sm:$0xf]
        %v3620 = vld [vmem:[%s3616 + $0xc] sm:$0xf]
        %v3621 = vld [vmem:[%s3616 + $0x10] sm:$0xf]
        %v3622 = vld [vmem:[%s3616 + $0x14] sm:$0xf]
        %v3623 = vld [vmem:[%s3616 + $0x18] sm:$0xf]
        %v3624 = vld [vmem:[%s3616 + $0x1c] sm:$0xf]
        %v3625 = vld [vmem:[%s3616 + $0x20] sm:$0xf]
        %v3626 = vld [vmem:[%s3616 + $0x24] sm:$0xf]
        %v3627 = vld [vmem:[%s3616 + $0x28] sm:$0xf]
        %v3628 = vld [vmem:[%s3616 + $0x2c] sm:$0xf]
        %v3629 = vld [vmem:[%s3616 + $0x30] sm:$0xf]
        %v3630 = vld [vmem:[%s3616 + $0x34] sm:$0xf]
        %v3631 = vld [vmem:[%s3616 + $0x38] sm:$0xf]
        %v3632 = vld [vmem:[%s3616 + $0x3c] sm:$0xf]
        %v3633 = vrot.slane %v3503, 3
        %v3634 = vrot.slane %v3504, 2
        %v3635 = vsel %vm2104, %v3634, %v3633
        %v3636 = vrot.slane %v3505, 1
        %v3637 = vsel %vm2107, %v3636, %v3635
        %v3638 = vsel %vm2110, %v3506, %v3637
        %v3639 = vrot.slane %v3507, 7
        %v3640 = vsel %vm2113, %v3639, %v3638
        %v3641 = vrot.slane %v3508, 6
        %v3642 = vsel %vm2116, %v3641, %v3640
        %v3643 = vrot.slane %v3509, 5
        %v3644 = vsel %vm2119, %v3643, %v3642
        %v3645 = vrot.slane %v3510, 4
        %v3646 = vsel %vm2122, %v3645, %v3644
        %v3647 = vpack.c.b16 %v3646, %v3646
        %v3665 = vunpack.c.l.b16 %v3617
        %v3666 = vunpack.c.l.b16 %v3618
        %v3667 = vunpack.c.l.b16 %v3619
        %v3668 = vunpack.c.l.b16 %v3620
        %v3669 = vunpack.c.l.b16 %v3621
        %v3670 = vunpack.c.l.b16 %v3622
        %v3671 = vunpack.c.l.b16 %v3623
        %v3672 = vunpack.c.l.b16 %v3624
        %v3673 = vunpack.c.l.b16 %v3625
        %v3674 = vunpack.c.l.b16 %v3626
        %v3675 = vunpack.c.l.b16 %v3627
        %v3676 = vunpack.c.l.b16 %v3628
        %v3677 = vunpack.c.l.b16 %v3629
        %v3678 = vunpack.c.l.b16 %v3630
        %v3679 = vunpack.c.l.b16 %v3631
        %v3680 = vunpack.c.l.b16 %v3632
        %v3681 = vpack.c.b16 %v3666, %v3665
        %v3682 = vpack.c.b16 %v3668, %v3667
        %v3683 = vpack.c.b16 %v3670, %v3669
        %v3684 = vpack.c.b16 %v3672, %v3671
        %v3685 = vpack.c.b16 %v3674, %v3673
        %v3686 = vpack.c.b16 %v3676, %v3675
        %v3687 = vpack.c.b16 %v3678, %v3677
        %v3688 = vpack.c.b16 %v3680, %v3679
        %3697 = vmatprep.subr.bf16.mxu0 0
        %3698 = vmatpush1.bf16.msra.mxu0 %v3688
        %3699 = vmatprep.subr.bf16.mxu0 0
        %3700 = vmatpush1.bf16.msra.mxu0 %v3687
        %3701 = vmatprep.subr.bf16.mxu0 0
        %3702 = vmatpush1.bf16.msra.mxu0 %v3686
        %3703 = vmatprep.subr.bf16.mxu0 0
        %3704 = vmatpush1.bf16.msra.mxu0 %v3685
        %3705 = vmatprep.subr.bf16.mxu0 0
        %3706 = vmatpush1.bf16.msra.mxu0 %v3684
        %3707 = vmatprep.subr.bf16.mxu0 0
        %3708 = vmatpush1.bf16.msra.mxu0 %v3683
        %3709 = vmatprep.subr.bf16.mxu0 0
        %3710 = vmatpush1.bf16.msra.mxu0 %v3682
        %3711 = vmatprep.subr.bf16.mxu0 0
        %3712 = vmatpush1.bf16.msra.mxu0 %v3681
        %3713 = vmatprep.subr.bf16.mxu0 0
        %3714 = vmatpush2.bf16.msra.mxu0 0
        %3715 = vmatprep.subr.bf16.mxu0 0
        %3716 = vmatpush2.bf16.msra.mxu0 0
        %3717 = vmatprep.subr.bf16.mxu0 0
        %3718 = vmatpush2.bf16.msra.mxu0 0
        %3719 = vmatprep.subr.bf16.mxu0 0
        %3720 = vmatpush2.bf16.msra.mxu0 0
        %3721 = vmatprep.subr.bf16.mxu0 0
        %3722 = vmatpush2.bf16.msra.mxu0 0
        %3723 = vmatprep.subr.bf16.mxu0 0
        %3724 = vmatpush2.bf16.msra.mxu0 0
        %3725 = vmatprep.subr.bf16.mxu0 0
        %3726 = vmatpush2.bf16.msra.mxu0 0
        %3727 = vmatprep.subr.bf16.mxu0 0
        %3728 = vmatpush2.bf16.msra.mxu0 0
        %3729 = vmatprep.mubr.bf16.mxu0 0
        %3730 = vmatmul.mubr.bf16.gmra.mxu0 %v3647
        %v3731 = vpop.f32.mrf.mxu0
        %v3732 = vadd.f32 0.0, %v3731
        %v3733 = vpop.f32.mrf.mxu0
        %v3734 = vpop.f32.mrf.mxu0
        %v3735 = vpop.f32.mrf.mxu0
        %3736 = vdwg.mxu0
        %v3737 = vadd.f32 %v3615, %v3732
        %v3738 = vld [vmem:[#allocation2 + $0x4] sm:$0x4]
        %v3739 = vld [vmem:[#allocation2 + $0x24] sm:$0x4]
        %v3740 = vld [vmem:[#allocation2 + $0x44] sm:$0x4]
        %v3741 = vld [vmem:[#allocation2 + $0x64] sm:$0x4]
        %v3742 = vld [vmem:[#allocation2 + $0x84] sm:$0x4]
        %v3743 = vld [vmem:[#allocation2 + $0xa4] sm:$0x4]
        %v3744 = vld [vmem:[#allocation2 + $0xc4] sm:$0x4]
        %v3745 = vld [vmem:[#allocation2 + $0xe4] sm:$0x4]
        %s3746 = scalar_lea.vmem %s3, 768
        %v3747 = vld [vmem:[%s3746] sm:$0xf]
        %v3748 = vld [vmem:[%s3746 + $0x4] sm:$0xf]
        %v3749 = vld [vmem:[%s3746 + $0x8] sm:$0xf]
        %v3750 = vld [vmem:[%s3746 + $0xc] sm:$0xf]
        %v3751 = vld [vmem:[%s3746 + $0x10] sm:$0xf]
        %v3752 = vld [vmem:[%s3746 + $0x14] sm:$0xf]
        %v3753 = vld [vmem:[%s3746 + $0x18] sm:$0xf]
        %v3754 = vld [vmem:[%s3746 + $0x1c] sm:$0xf]
        %v3755 = vld [vmem:[%s3746 + $0x20] sm:$0xf]
        %v3756 = vld [vmem:[%s3746 + $0x24] sm:$0xf]
        %v3757 = vld [vmem:[%s3746 + $0x28] sm:$0xf]
        %v3758 = vld [vmem:[%s3746 + $0x2c] sm:$0xf]
        %v3759 = vld [vmem:[%s3746 + $0x30] sm:$0xf]
        %v3760 = vld [vmem:[%s3746 + $0x34] sm:$0xf]
        %v3761 = vld [vmem:[%s3746 + $0x38] sm:$0xf]
        %v3762 = vld [vmem:[%s3746 + $0x3c] sm:$0xf]
        %v3771 = vunpack.c.l.b16 %v3738
        %v3772 = vunpack.c.l.b16 %v3739
        %v3773 = vunpack.c.l.b16 %v3740
        %v3774 = vunpack.c.l.b16 %v3741
        %v3775 = vunpack.c.l.b16 %v3742
        %v3776 = vunpack.c.l.b16 %v3743
        %v3777 = vunpack.c.l.b16 %v3744
        %v3778 = vunpack.c.l.b16 %v3745
        %v3779 = vpack.c.b16 %v3771, %v3771
        %v3780 = vpack.c.b16 %v3772, %v3772
        %v3781 = vpack.c.b16 %v3773, %v3773
        %v3782 = vpack.c.b16 %v3774, %v3774
        %v3783 = vpack.c.b16 %v3775, %v3775
        %v3784 = vpack.c.b16 %v3776, %v3776
        %v3785 = vpack.c.b16 %v3777, %v3777
        %v3786 = vpack.c.b16 %v3778, %v3778
        %v3787 = vunpack.c.l.b16 %v3779
        %v3788 = vunpack.c.l.b16 %v3780
        %v3789 = vunpack.c.l.b16 %v3781
        %v3790 = vunpack.c.l.b16 %v3782
        %v3791 = vunpack.c.l.b16 %v3783
        %v3792 = vunpack.c.l.b16 %v3784
        %v3793 = vunpack.c.l.b16 %v3785
        %v3794 = vunpack.c.l.b16 %v3786
        %v3795 = vrot.slane %v3787, 4
        %v3796 = vrot.slane %v3788, 3
        %v3797 = vsel %vm2104, %v3796, %v3795
        %v3798 = vrot.slane %v3789, 2
        %v3799 = vsel %vm2107, %v3798, %v3797
        %v3800 = vrot.slane %v3790, 1
        %v3801 = vsel %vm2110, %v3800, %v3799
        %v3802 = vsel %vm2113, %v3791, %v3801
        %v3803 = vrot.slane %v3792, 7
        %v3804 = vsel %vm2116, %v3803, %v3802
        %v3805 = vrot.slane %v3793, 6
        %v3806 = vsel %vm2119, %v3805, %v3804
        %v3807 = vrot.slane %v3794, 5
        %v3808 = vsel %vm2122, %v3807, %v3806
        %v3809 = vpack.c.b16 %v3808, %v3808
        %v3827 = vunpack.c.l.b16 %v3747
        %v3828 = vunpack.c.l.b16 %v3748
        %v3829 = vunpack.c.l.b16 %v3749
        %v3830 = vunpack.c.l.b16 %v3750
        %v3831 = vunpack.c.l.b16 %v3751
        %v3832 = vunpack.c.l.b16 %v3752
        %v3833 = vunpack.c.l.b16 %v3753
        %v3834 = vunpack.c.l.b16 %v3754
        %v3835 = vunpack.c.l.b16 %v3755
        %v3836 = vunpack.c.l.b16 %v3756
        %v3837 = vunpack.c.l.b16 %v3757
        %v3838 = vunpack.c.l.b16 %v3758
        %v3839 = vunpack.c.l.b16 %v3759
        %v3840 = vunpack.c.l.b16 %v3760
        %v3841 = vunpack.c.l.b16 %v3761
        %v3842 = vunpack.c.l.b16 %v3762
        %v3843 = vpack.c.b16 %v3828, %v3827
        %v3844 = vpack.c.b16 %v3830, %v3829
        %v3845 = vpack.c.b16 %v3832, %v3831
        %v3846 = vpack.c.b16 %v3834, %v3833
        %v3847 = vpack.c.b16 %v3836, %v3835
        %v3848 = vpack.c.b16 %v3838, %v3837
        %v3849 = vpack.c.b16 %v3840, %v3839
        %v3850 = vpack.c.b16 %v3842, %v3841
        %3859 = vmatprep.subr.bf16.mxu0 0
        %3860 = vmatpush1.bf16.msra.mxu0 %v3850
        %3861 = vmatprep.subr.bf16.mxu0 0
        %3862 = vmatpush1.bf16.msra.mxu0 %v3849
        %3863 = vmatprep.subr.bf16.mxu0 0
        %3864 = vmatpush1.bf16.msra.mxu0 %v3848
        %3865 = vmatprep.subr.bf16.mxu0 0
        %3866 = vmatpush1.bf16.msra.mxu0 %v3847
        %3867 = vmatprep.subr.bf16.mxu0 0
        %3868 = vmatpush1.bf16.msra.mxu0 %v3846
        %3869 = vmatprep.subr.bf16.mxu0 0
        %3870 = vmatpush1.bf16.msra.mxu0 %v3845
        %3871 = vmatprep.subr.bf16.mxu0 0
        %3872 = vmatpush1.bf16.msra.mxu0 %v3844
        %3873 = vmatprep.subr.bf16.mxu0 0
        %3874 = vmatpush1.bf16.msra.mxu0 %v3843
        %3875 = vmatprep.subr.bf16.mxu0 0
        %3876 = vmatpush2.bf16.msra.mxu0 0
        %3877 = vmatprep.subr.bf16.mxu0 0
        %3878 = vmatpush2.bf16.msra.mxu0 0
        %3879 = vmatprep.subr.bf16.mxu0 0
        %3880 = vmatpush2.bf16.msra.mxu0 0
        %3881 = vmatprep.subr.bf16.mxu0 0
        %3882 = vmatpush2.bf16.msra.mxu0 0
        %3883 = vmatprep.subr.bf16.mxu0 0
        %3884 = vmatpush2.bf16.msra.mxu0 0
        %3885 = vmatprep.subr.bf16.mxu0 0
        %3886 = vmatpush2.bf16.msra.mxu0 0
        %3887 = vmatprep.subr.bf16.mxu0 0
        %3888 = vmatpush2.bf16.msra.mxu0 0
        %3889 = vmatprep.subr.bf16.mxu0 0
        %3890 = vmatpush2.bf16.msra.mxu0 0
        %3891 = vmatprep.mubr.bf16.mxu0 0
        %3892 = vmatmul.mubr.bf16.gmra.mxu0 %v3809
        %v3893 = vpop.f32.mrf.mxu0
        %v3894 = vadd.f32 0.0, %v3893
        %v3895 = vpop.f32.mrf.mxu0
        %v3896 = vpop.f32.mrf.mxu0
        %v3897 = vpop.f32.mrf.mxu0
        %3898 = vdwg.mxu0
        %v3899 = vadd.f32 %v3737, %v3894
        %s3900 = scalar_lea.vmem %s3, 832
        %v3901 = vld [vmem:[%s3900] sm:$0xf]
        %v3902 = vld [vmem:[%s3900 + $0x4] sm:$0xf]
        %v3903 = vld [vmem:[%s3900 + $0x8] sm:$0xf]
        %v3904 = vld [vmem:[%s3900 + $0xc] sm:$0xf]
        %v3905 = vld [vmem:[%s3900 + $0x10] sm:$0xf]
        %v3906 = vld [vmem:[%s3900 + $0x14] sm:$0xf]
        %v3907 = vld [vmem:[%s3900 + $0x18] sm:$0xf]
        %v3908 = vld [vmem:[%s3900 + $0x1c] sm:$0xf]
        %v3909 = vld [vmem:[%s3900 + $0x20] sm:$0xf]
        %v3910 = vld [vmem:[%s3900 + $0x24] sm:$0xf]
        %v3911 = vld [vmem:[%s3900 + $0x28] sm:$0xf]
        %v3912 = vld [vmem:[%s3900 + $0x2c] sm:$0xf]
        %v3913 = vld [vmem:[%s3900 + $0x30] sm:$0xf]
        %v3914 = vld [vmem:[%s3900 + $0x34] sm:$0xf]
        %v3915 = vld [vmem:[%s3900 + $0x38] sm:$0xf]
        %v3916 = vld [vmem:[%s3900 + $0x3c] sm:$0xf]
        %v3917 = vrot.slane %v3787, 5
        %v3918 = vrot.slane %v3788, 4
        %v3919 = vsel %vm2104, %v3918, %v3917
        %v3920 = vrot.slane %v3789, 3
        %v3921 = vsel %vm2107, %v3920, %v3919
        %v3922 = vrot.slane %v3790, 2
        %v3923 = vsel %vm2110, %v3922, %v3921
        %v3924 = vrot.slane %v3791, 1
        %v3925 = vsel %vm2113, %v3924, %v3923
        %v3926 = vsel %vm2116, %v3792, %v3925
        %v3927 = vrot.slane %v3793, 7
        %v3928 = vsel %vm2119, %v3927, %v3926
        %v3929 = vrot.slane %v3794, 6
        %v3930 = vsel %vm2122, %v3929, %v3928
        %v3931 = vpack.c.b16 %v3930, %v3930
        %v3949 = vunpack.c.l.b16 %v3901
        %v3950 = vunpack.c.l.b16 %v3902
        %v3951 = vunpack.c.l.b16 %v3903
        %v3952 = vunpack.c.l.b16 %v3904
        %v3953 = vunpack.c.l.b16 %v3905
        %v3954 = vunpack.c.l.b16 %v3906
        %v3955 = vunpack.c.l.b16 %v3907
        %v3956 = vunpack.c.l.b16 %v3908
        %v3957 = vunpack.c.l.b16 %v3909
        %v3958 = vunpack.c.l.b16 %v3910
        %v3959 = vunpack.c.l.b16 %v3911
        %v3960 = vunpack.c.l.b16 %v3912
        %v3961 = vunpack.c.l.b16 %v3913
        %v3962 = vunpack.c.l.b16 %v3914
        %v3963 = vunpack.c.l.b16 %v3915
        %v3964 = vunpack.c.l.b16 %v3916
        %v3965 = vpack.c.b16 %v3950, %v3949
        %v3966 = vpack.c.b16 %v3952, %v3951
        %v3967 = vpack.c.b16 %v3954, %v3953
        %v3968 = vpack.c.b16 %v3956, %v3955
        %v3969 = vpack.c.b16 %v3958, %v3957
        %v3970 = vpack.c.b16 %v3960, %v3959
        %v3971 = vpack.c.b16 %v3962, %v3961
        %v3972 = vpack.c.b16 %v3964, %v3963
        %3981 = vmatprep.subr.bf16.mxu0 0
        %3982 = vmatpush1.bf16.msra.mxu0 %v3972
        %3983 = vmatprep.subr.bf16.mxu0 0
        %3984 = vmatpush1.bf16.msra.mxu0 %v3971
        %3985 = vmatprep.subr.bf16.mxu0 0
        %3986 = vmatpush1.bf16.msra.mxu0 %v3970
        %3987 = vmatprep.subr.bf16.mxu0 0
        %3988 = vmatpush1.bf16.msra.mxu0 %v3969
        %3989 = vmatprep.subr.bf16.mxu0 0
        %3990 = vmatpush1.bf16.msra.mxu0 %v3968
        %3991 = vmatprep.subr.bf16.mxu0 0
        %3992 = vmatpush1.bf16.msra.mxu0 %v3967
        %3993 = vmatprep.subr.bf16.mxu0 0
        %3994 = vmatpush1.bf16.msra.mxu0 %v3966
        %3995 = vmatprep.subr.bf16.mxu0 0
        %3996 = vmatpush1.bf16.msra.mxu0 %v3965
        %3997 = vmatprep.subr.bf16.mxu0 0
        %3998 = vmatpush2.bf16.msra.mxu0 0
        %3999 = vmatprep.subr.bf16.mxu0 0
        %4000 = vmatpush2.bf16.msra.mxu0 0
        %4001 = vmatprep.subr.bf16.mxu0 0
        %4002 = vmatpush2.bf16.msra.mxu0 0
        %4003 = vmatprep.subr.bf16.mxu0 0
        %4004 = vmatpush2.bf16.msra.mxu0 0
        %4005 = vmatprep.subr.bf16.mxu0 0
        %4006 = vmatpush2.bf16.msra.mxu0 0
        %4007 = vmatprep.subr.bf16.mxu0 0
        %4008 = vmatpush2.bf16.msra.mxu0 0
        %4009 = vmatprep.subr.bf16.mxu0 0
        %4010 = vmatpush2.bf16.msra.mxu0 0
        %4011 = vmatprep.subr.bf16.mxu0 0
        %4012 = vmatpush2.bf16.msra.mxu0 0
        %4013 = vmatprep.mubr.bf16.mxu0 0
        %4014 = vmatmul.mubr.bf16.gmra.mxu0 %v3931
        %v4015 = vpop.f32.mrf.mxu0
        %v4016 = vadd.f32 0.0, %v4015
        %v4017 = vpop.f32.mrf.mxu0
        %v4018 = vpop.f32.mrf.mxu0
        %v4019 = vpop.f32.mrf.mxu0
        %4020 = vdwg.mxu0
        %v4021 = vadd.f32 %v3899, %v4016
        %v4022 = vld [vmem:[#allocation2 + $0x4] sm:$0x8]
        %v4023 = vld [vmem:[#allocation2 + $0x24] sm:$0x8]
        %v4024 = vld [vmem:[#allocation2 + $0x44] sm:$0x8]
        %v4025 = vld [vmem:[#allocation2 + $0x64] sm:$0x8]
        %v4026 = vld [vmem:[#allocation2 + $0x84] sm:$0x8]
        %v4027 = vld [vmem:[#allocation2 + $0xa4] sm:$0x8]
        %v4028 = vld [vmem:[#allocation2 + $0xc4] sm:$0x8]
        %v4029 = vld [vmem:[#allocation2 + $0xe4] sm:$0x8]
        %s4030 = scalar_lea.vmem %s3, 896
        %v4031 = vld [vmem:[%s4030] sm:$0xf]
        %v4032 = vld [vmem:[%s4030 + $0x4] sm:$0xf]
        %v4033 = vld [vmem:[%s4030 + $0x8] sm:$0xf]
        %v4034 = vld [vmem:[%s4030 + $0xc] sm:$0xf]
        %v4035 = vld [vmem:[%s4030 + $0x10] sm:$0xf]
        %v4036 = vld [vmem:[%s4030 + $0x14] sm:$0xf]
        %v4037 = vld [vmem:[%s4030 + $0x18] sm:$0xf]
        %v4038 = vld [vmem:[%s4030 + $0x1c] sm:$0xf]
        %v4039 = vld [vmem:[%s4030 + $0x20] sm:$0xf]
        %v4040 = vld [vmem:[%s4030 + $0x24] sm:$0xf]
        %v4041 = vld [vmem:[%s4030 + $0x28] sm:$0xf]
        %v4042 = vld [vmem:[%s4030 + $0x2c] sm:$0xf]
        %v4043 = vld [vmem:[%s4030 + $0x30] sm:$0xf]
        %v4044 = vld [vmem:[%s4030 + $0x34] sm:$0xf]
        %v4045 = vld [vmem:[%s4030 + $0x38] sm:$0xf]
        %v4046 = vld [vmem:[%s4030 + $0x3c] sm:$0xf]
        %v4055 = vunpack.c.l.b16 %v4022
        %v4056 = vunpack.c.l.b16 %v4023
        %v4057 = vunpack.c.l.b16 %v4024
        %v4058 = vunpack.c.l.b16 %v4025
        %v4059 = vunpack.c.l.b16 %v4026
        %v4060 = vunpack.c.l.b16 %v4027
        %v4061 = vunpack.c.l.b16 %v4028
        %v4062 = vunpack.c.l.b16 %v4029
        %v4063 = vpack.c.b16 %v4055, %v4055
        %v4064 = vpack.c.b16 %v4056, %v4056
        %v4065 = vpack.c.b16 %v4057, %v4057
        %v4066 = vpack.c.b16 %v4058, %v4058
        %v4067 = vpack.c.b16 %v4059, %v4059
        %v4068 = vpack.c.b16 %v4060, %v4060
        %v4069 = vpack.c.b16 %v4061, %v4061
        %v4070 = vpack.c.b16 %v4062, %v4062
        %v4071 = vunpack.c.l.b16 %v4063
        %v4072 = vunpack.c.l.b16 %v4064
        %v4073 = vunpack.c.l.b16 %v4065
        %v4074 = vunpack.c.l.b16 %v4066
        %v4075 = vunpack.c.l.b16 %v4067
        %v4076 = vunpack.c.l.b16 %v4068
        %v4077 = vunpack.c.l.b16 %v4069
        %v4078 = vunpack.c.l.b16 %v4070
        %v4079 = vrot.slane %v4071, 6
        %v4080 = vrot.slane %v4072, 5
        %v4081 = vsel %vm2104, %v4080, %v4079
        %v4082 = vrot.slane %v4073, 4
        %v4083 = vsel %vm2107, %v4082, %v4081
        %v4084 = vrot.slane %v4074, 3
        %v4085 = vsel %vm2110, %v4084, %v4083
        %v4086 = vrot.slane %v4075, 2
        %v4087 = vsel %vm2113, %v4086, %v4085
        %v4088 = vrot.slane %v4076, 1
        %v4089 = vsel %vm2116, %v4088, %v4087
        %v4090 = vsel %vm2119, %v4077, %v4089
        %v4091 = vrot.slane %v4078, 7
        %v4092 = vsel %vm2122, %v4091, %v4090
        %v4093 = vpack.c.b16 %v4092, %v4092
        %v4111 = vunpack.c.l.b16 %v4031
        %v4112 = vunpack.c.l.b16 %v4032
        %v4113 = vunpack.c.l.b16 %v4033
        %v4114 = vunpack.c.l.b16 %v4034
        %v4115 = vunpack.c.l.b16 %v4035
        %v4116 = vunpack.c.l.b16 %v4036
        %v4117 = vunpack.c.l.b16 %v4037
        %v4118 = vunpack.c.l.b16 %v4038
        %v4119 = vunpack.c.l.b16 %v4039
        %v4120 = vunpack.c.l.b16 %v4040
        %v4121 = vunpack.c.l.b16 %v4041
        %v4122 = vunpack.c.l.b16 %v4042
        %v4123 = vunpack.c.l.b16 %v4043
        %v4124 = vunpack.c.l.b16 %v4044
        %v4125 = vunpack.c.l.b16 %v4045
        %v4126 = vunpack.c.l.b16 %v4046
        %v4127 = vpack.c.b16 %v4112, %v4111
        %v4128 = vpack.c.b16 %v4114, %v4113
        %v4129 = vpack.c.b16 %v4116, %v4115
        %v4130 = vpack.c.b16 %v4118, %v4117
        %v4131 = vpack.c.b16 %v4120, %v4119
        %v4132 = vpack.c.b16 %v4122, %v4121
        %v4133 = vpack.c.b16 %v4124, %v4123
        %v4134 = vpack.c.b16 %v4126, %v4125
        %4143 = vmatprep.subr.bf16.mxu0 0
        %4144 = vmatpush1.bf16.msra.mxu0 %v4134
        %4145 = vmatprep.subr.bf16.mxu0 0
        %4146 = vmatpush1.bf16.msra.mxu0 %v4133
        %4147 = vmatprep.subr.bf16.mxu0 0
        %4148 = vmatpush1.bf16.msra.mxu0 %v4132
        %4149 = vmatprep.subr.bf16.mxu0 0
        %4150 = vmatpush1.bf16.msra.mxu0 %v4131
        %4151 = vmatprep.subr.bf16.mxu0 0
        %4152 = vmatpush1.bf16.msra.mxu0 %v4130
        %4153 = vmatprep.subr.bf16.mxu0 0
        %4154 = vmatpush1.bf16.msra.mxu0 %v4129
        %4155 = vmatprep.subr.bf16.mxu0 0
        %4156 = vmatpush1.bf16.msra.mxu0 %v4128
        %4157 = vmatprep.subr.bf16.mxu0 0
        %4158 = vmatpush1.bf16.msra.mxu0 %v4127
        %4159 = vmatprep.subr.bf16.mxu0 0
        %4160 = vmatpush2.bf16.msra.mxu0 0
        %4161 = vmatprep.subr.bf16.mxu0 0
        %4162 = vmatpush2.bf16.msra.mxu0 0
        %4163 = vmatprep.subr.bf16.mxu0 0
        %4164 = vmatpush2.bf16.msra.mxu0 0
        %4165 = vmatprep.subr.bf16.mxu0 0
        %4166 = vmatpush2.bf16.msra.mxu0 0
        %4167 = vmatprep.subr.bf16.mxu0 0
        %4168 = vmatpush2.bf16.msra.mxu0 0
        %4169 = vmatprep.subr.bf16.mxu0 0
        %4170 = vmatpush2.bf16.msra.mxu0 0
        %4171 = vmatprep.subr.bf16.mxu0 0
        %4172 = vmatpush2.bf16.msra.mxu0 0
        %4173 = vmatprep.subr.bf16.mxu0 0
        %4174 = vmatpush2.bf16.msra.mxu0 0
        %4175 = vmatprep.mubr.bf16.mxu0 0
        %4176 = vmatmul.mubr.bf16.gmra.mxu0 %v4093
        %v4177 = vpop.f32.mrf.mxu0
        %v4178 = vadd.f32 0.0, %v4177
        %v4179 = vpop.f32.mrf.mxu0
        %v4180 = vpop.f32.mrf.mxu0
        %v4181 = vpop.f32.mrf.mxu0
        %4182 = vdwg.mxu0
        %v4183 = vadd.f32 %v4021, %v4178
        %s4184 = scalar_lea.vmem %s3, 960
        %v4185 = vld [vmem:[%s4184] sm:$0xf]
        %v4186 = vld [vmem:[%s4184 + $0x4] sm:$0xf]
        %v4187 = vld [vmem:[%s4184 + $0x8] sm:$0xf]
        %v4188 = vld [vmem:[%s4184 + $0xc] sm:$0xf]
        %v4189 = vld [vmem:[%s4184 + $0x10] sm:$0xf]
        %v4190 = vld [vmem:[%s4184 + $0x14] sm:$0xf]
        %v4191 = vld [vmem:[%s4184 + $0x18] sm:$0xf]
        %v4192 = vld [vmem:[%s4184 + $0x1c] sm:$0xf]
        %v4193 = vld [vmem:[%s4184 + $0x20] sm:$0xf]
        %v4194 = vld [vmem:[%s4184 + $0x24] sm:$0xf]
        %v4195 = vld [vmem:[%s4184 + $0x28] sm:$0xf]
        %v4196 = vld [vmem:[%s4184 + $0x2c] sm:$0xf]
        %v4197 = vld [vmem:[%s4184 + $0x30] sm:$0xf]
        %v4198 = vld [vmem:[%s4184 + $0x34] sm:$0xf]
        %v4199 = vld [vmem:[%s4184 + $0x38] sm:$0xf]
        %v4200 = vld [vmem:[%s4184 + $0x3c] sm:$0xf]
        %v4201 = vrot.slane %v4071, 7
        %v4202 = vrot.slane %v4072, 6
        %v4203 = vsel %vm2104, %v4202, %v4201
        %v4204 = vrot.slane %v4073, 5
        %v4205 = vsel %vm2107, %v4204, %v4203
        %v4206 = vrot.slane %v4074, 4
        %v4207 = vsel %vm2110, %v4206, %v4205
        %v4208 = vrot.slane %v4075, 3
        %v4209 = vsel %vm2113, %v4208, %v4207
        %v4210 = vrot.slane %v4076, 2
        %v4211 = vsel %vm2116, %v4210, %v4209
        %v4212 = vrot.slane %v4077, 1
        %v4213 = vsel %vm2119, %v4212, %v4211
        %v4214 = vsel %vm2122, %v4078, %v4213
        %v4215 = vpack.c.b16 %v4214, %v4214
        %v4233 = vunpack.c.l.b16 %v4185
        %v4234 = vunpack.c.l.b16 %v4186
        %v4235 = vunpack.c.l.b16 %v4187
        %v4236 = vunpack.c.l.b16 %v4188
        %v4237 = vunpack.c.l.b16 %v4189
        %v4238 = vunpack.c.l.b16 %v4190
        %v4239 = vunpack.c.l.b16 %v4191
        %v4240 = vunpack.c.l.b16 %v4192
        %v4241 = vunpack.c.l.b16 %v4193
        %v4242 = vunpack.c.l.b16 %v4194
        %v4243 = vunpack.c.l.b16 %v4195
        %v4244 = vunpack.c.l.b16 %v4196
        %v4245 = vunpack.c.l.b16 %v4197
        %v4246 = vunpack.c.l.b16 %v4198
        %v4247 = vunpack.c.l.b16 %v4199
        %v4248 = vunpack.c.l.b16 %v4200
        %v4249 = vpack.c.b16 %v4234, %v4233
        %v4250 = vpack.c.b16 %v4236, %v4235
        %v4251 = vpack.c.b16 %v4238, %v4237
        %v4252 = vpack.c.b16 %v4240, %v4239
        %v4253 = vpack.c.b16 %v4242, %v4241
        %v4254 = vpack.c.b16 %v4244, %v4243
        %v4255 = vpack.c.b16 %v4246, %v4245
        %v4256 = vpack.c.b16 %v4248, %v4247
        %4265 = vmatprep.subr.bf16.mxu0 0
        %4266 = vmatpush1.bf16.msra.mxu0 %v4256
        %4267 = vmatprep.subr.bf16.mxu0 0
        %4268 = vmatpush1.bf16.msra.mxu0 %v4255
        %4269 = vmatprep.subr.bf16.mxu0 0
        %4270 = vmatpush1.bf16.msra.mxu0 %v4254
        %4271 = vmatprep.subr.bf16.mxu0 0
        %4272 = vmatpush1.bf16.msra.mxu0 %v4253
        %4273 = vmatprep.subr.bf16.mxu0 0
        %4274 = vmatpush1.bf16.msra.mxu0 %v4252
        %4275 = vmatprep.subr.bf16.mxu0 0
        %4276 = vmatpush1.bf16.msra.mxu0 %v4251
        %4277 = vmatprep.subr.bf16.mxu0 0
        %4278 = vmatpush1.bf16.msra.mxu0 %v4250
        %4279 = vmatprep.subr.bf16.mxu0 0
        %4280 = vmatpush1.bf16.msra.mxu0 %v4249
        %4281 = vmatprep.subr.bf16.mxu0 0
        %4282 = vmatpush2.bf16.msra.mxu0 0
        %4283 = vmatprep.subr.bf16.mxu0 0
        %4284 = vmatpush2.bf16.msra.mxu0 0
        %4285 = vmatprep.subr.bf16.mxu0 0
        %4286 = vmatpush2.bf16.msra.mxu0 0
        %4287 = vmatprep.subr.bf16.mxu0 0
        %4288 = vmatpush2.bf16.msra.mxu0 0
        %4289 = vmatprep.subr.bf16.mxu0 0
        %4290 = vmatpush2.bf16.msra.mxu0 0
        %4291 = vmatprep.subr.bf16.mxu0 0
        %4292 = vmatpush2.bf16.msra.mxu0 0
        %4293 = vmatprep.subr.bf16.mxu0 0
        %4294 = vmatpush2.bf16.msra.mxu0 0
        %4295 = vmatprep.subr.bf16.mxu0 0
        %4296 = vmatpush2.bf16.msra.mxu0 0
        %4297 = vmatprep.mubr.bf16.mxu0 0
        %4298 = vmatmul.mubr.bf16.gmra.mxu0 %v4215
        %v4299 = vpop.f32.mrf.mxu0
        %v4300 = vadd.f32 0.0, %v4299
        %v4301 = vpop.f32.mrf.mxu0
        %v4302 = vpop.f32.mrf.mxu0
        %v4303 = vpop.f32.mrf.mxu0
        %4304 = vdwg.mxu0
        %v4305 = vadd.f32 %v4183, %v4300
        %v4306 = vld [vmem:[#allocation2 + $0x8] sm:$0x1]
        %v4307 = vld [vmem:[#allocation2 + $0x28] sm:$0x1]
        %v4308 = vld [vmem:[#allocation2 + $0x48] sm:$0x1]
        %v4309 = vld [vmem:[#allocation2 + $0x68] sm:$0x1]
        %v4310 = vld [vmem:[#allocation2 + $0x88] sm:$0x1]
        %v4311 = vld [vmem:[#allocation2 + $0xa8] sm:$0x1]
        %v4312 = vld [vmem:[#allocation2 + $0xc8] sm:$0x1]
        %v4313 = vld [vmem:[#allocation2 + $0xe8] sm:$0x1]
        %s4314 = scalar_lea.vmem %s3, 1024
        %v4315 = vld [vmem:[%s4314] sm:$0xf]
        %v4316 = vld [vmem:[%s4314 + $0x4] sm:$0xf]
        %v4317 = vld [vmem:[%s4314 + $0x8] sm:$0xf]
        %v4318 = vld [vmem:[%s4314 + $0xc] sm:$0xf]
        %v4319 = vld [vmem:[%s4314 + $0x10] sm:$0xf]
        %v4320 = vld [vmem:[%s4314 + $0x14] sm:$0xf]
        %v4321 = vld [vmem:[%s4314 + $0x18] sm:$0xf]
        %v4322 = vld [vmem:[%s4314 + $0x1c] sm:$0xf]
        %v4323 = vld [vmem:[%s4314 + $0x20] sm:$0xf]
        %v4324 = vld [vmem:[%s4314 + $0x24] sm:$0xf]
        %v4325 = vld [vmem:[%s4314 + $0x28] sm:$0xf]
        %v4326 = vld [vmem:[%s4314 + $0x2c] sm:$0xf]
        %v4327 = vld [vmem:[%s4314 + $0x30] sm:$0xf]
        %v4328 = vld [vmem:[%s4314 + $0x34] sm:$0xf]
        %v4329 = vld [vmem:[%s4314 + $0x38] sm:$0xf]
        %v4330 = vld [vmem:[%s4314 + $0x3c] sm:$0xf]
        %v4339 = vunpack.c.l.b16 %v4306
        %v4340 = vunpack.c.l.b16 %v4307
        %v4341 = vunpack.c.l.b16 %v4308
        %v4342 = vunpack.c.l.b16 %v4309
        %v4343 = vunpack.c.l.b16 %v4310
        %v4344 = vunpack.c.l.b16 %v4311
        %v4345 = vunpack.c.l.b16 %v4312
        %v4346 = vunpack.c.l.b16 %v4313
        %v4347 = vpack.c.b16 %v4339, %v4339
        %v4348 = vpack.c.b16 %v4340, %v4340
        %v4349 = vpack.c.b16 %v4341, %v4341
        %v4350 = vpack.c.b16 %v4342, %v4342
        %v4351 = vpack.c.b16 %v4343, %v4343
        %v4352 = vpack.c.b16 %v4344, %v4344
        %v4353 = vpack.c.b16 %v4345, %v4345
        %v4354 = vpack.c.b16 %v4346, %v4346
        %v4355 = vunpack.c.l.b16 %v4347
        %v4356 = vunpack.c.l.b16 %v4348
        %v4357 = vunpack.c.l.b16 %v4349
        %v4358 = vunpack.c.l.b16 %v4350
        %v4359 = vunpack.c.l.b16 %v4351
        %v4360 = vunpack.c.l.b16 %v4352
        %v4361 = vunpack.c.l.b16 %v4353
        %v4362 = vunpack.c.l.b16 %v4354
        %v4363 = vrot.slane %v4356, 7
        %v4364 = vsel %vm2104, %v4363, %v4355
        %v4365 = vrot.slane %v4357, 6
        %v4366 = vsel %vm2107, %v4365, %v4364
        %v4367 = vrot.slane %v4358, 5
        %v4368 = vsel %vm2110, %v4367, %v4366
        %v4369 = vrot.slane %v4359, 4
        %v4370 = vsel %vm2113, %v4369, %v4368
        %v4371 = vrot.slane %v4360, 3
        %v4372 = vsel %vm2116, %v4371, %v4370
        %v4373 = vrot.slane %v4361, 2
        %v4374 = vsel %vm2119, %v4373, %v4372
        %v4375 = vrot.slane %v4362, 1
        %v4376 = vsel %vm2122, %v4375, %v4374
        %v4377 = vpack.c.b16 %v4376, %v4376
        %v4395 = vunpack.c.l.b16 %v4315
        %v4396 = vunpack.c.l.b16 %v4316
        %v4397 = vunpack.c.l.b16 %v4317
        %v4398 = vunpack.c.l.b16 %v4318
        %v4399 = vunpack.c.l.b16 %v4319
        %v4400 = vunpack.c.l.b16 %v4320
        %v4401 = vunpack.c.l.b16 %v4321
        %v4402 = vunpack.c.l.b16 %v4322
        %v4403 = vunpack.c.l.b16 %v4323
        %v4404 = vunpack.c.l.b16 %v4324
        %v4405 = vunpack.c.l.b16 %v4325
        %v4406 = vunpack.c.l.b16 %v4326
        %v4407 = vunpack.c.l.b16 %v4327
        %v4408 = vunpack.c.l.b16 %v4328
        %v4409 = vunpack.c.l.b16 %v4329
        %v4410 = vunpack.c.l.b16 %v4330
        %v4411 = vpack.c.b16 %v4396, %v4395
        %v4412 = vpack.c.b16 %v4398, %v4397
        %v4413 = vpack.c.b16 %v4400, %v4399
        %v4414 = vpack.c.b16 %v4402, %v4401
        %v4415 = vpack.c.b16 %v4404, %v4403
        %v4416 = vpack.c.b16 %v4406, %v4405
        %v4417 = vpack.c.b16 %v4408, %v4407
        %v4418 = vpack.c.b16 %v4410, %v4409
        %4427 = vmatprep.subr.bf16.mxu0 0
        %4428 = vmatpush1.bf16.msra.mxu0 %v4418
        %4429 = vmatprep.subr.bf16.mxu0 0
        %4430 = vmatpush1.bf16.msra.mxu0 %v4417
        %4431 = vmatprep.subr.bf16.mxu0 0
        %4432 = vmatpush1.bf16.msra.mxu0 %v4416
        %4433 = vmatprep.subr.bf16.mxu0 0
        %4434 = vmatpush1.bf16.msra.mxu0 %v4415
        %4435 = vmatprep.subr.bf16.mxu0 0
        %4436 = vmatpush1.bf16.msra.mxu0 %v4414
        %4437 = vmatprep.subr.bf16.mxu0 0
        %4438 = vmatpush1.bf16.msra.mxu0 %v4413
        %4439 = vmatprep.subr.bf16.mxu0 0
        %4440 = vmatpush1.bf16.msra.mxu0 %v4412
        %4441 = vmatprep.subr.bf16.mxu0 0
        %4442 = vmatpush1.bf16.msra.mxu0 %v4411
        %4443 = vmatprep.subr.bf16.mxu0 0
        %4444 = vmatpush2.bf16.msra.mxu0 0
        %4445 = vmatprep.subr.bf16.mxu0 0
        %4446 = vmatpush2.bf16.msra.mxu0 0
        %4447 = vmatprep.subr.bf16.mxu0 0
        %4448 = vmatpush2.bf16.msra.mxu0 0
        %4449 = vmatprep.subr.bf16.mxu0 0
        %4450 = vmatpush2.bf16.msra.mxu0 0
        %4451 = vmatprep.subr.bf16.mxu0 0
        %4452 = vmatpush2.bf16.msra.mxu0 0
        %4453 = vmatprep.subr.bf16.mxu0 0
        %4454 = vmatpush2.bf16.msra.mxu0 0
        %4455 = vmatprep.subr.bf16.mxu0 0
        %4456 = vmatpush2.bf16.msra.mxu0 0
        %4457 = vmatprep.subr.bf16.mxu0 0
        %4458 = vmatpush2.bf16.msra.mxu0 0
        %4459 = vmatprep.mubr.bf16.mxu0 0
        %4460 = vmatmul.mubr.bf16.gmra.mxu0 %v4377
        %v4461 = vpop.f32.mrf.mxu0
        %v4462 = vadd.f32 0.0, %v4461
        %v4463 = vpop.f32.mrf.mxu0
        %v4464 = vpop.f32.mrf.mxu0
        %v4465 = vpop.f32.mrf.mxu0
        %4466 = vdwg.mxu0
        %v4467 = vadd.f32 %v4305, %v4462
        %s4468 = scalar_lea.vmem %s3, 1088
        %v4469 = vld [vmem:[%s4468] sm:$0xf]
        %v4470 = vld [vmem:[%s4468 + $0x4] sm:$0xf]
        %v4471 = vld [vmem:[%s4468 + $0x8] sm:$0xf]
        %v4472 = vld [vmem:[%s4468 + $0xc] sm:$0xf]
        %v4473 = vld [vmem:[%s4468 + $0x10] sm:$0xf]
        %v4474 = vld [vmem:[%s4468 + $0x14] sm:$0xf]
        %v4475 = vld [vmem:[%s4468 + $0x18] sm:$0xf]
        %v4476 = vld [vmem:[%s4468 + $0x1c] sm:$0xf]
        %v4477 = vld [vmem:[%s4468 + $0x20] sm:$0xf]
        %v4478 = vld [vmem:[%s4468 + $0x24] sm:$0xf]
        %v4479 = vld [vmem:[%s4468 + $0x28] sm:$0xf]
        %v4480 = vld [vmem:[%s4468 + $0x2c] sm:$0xf]
        %v4481 = vld [vmem:[%s4468 + $0x30] sm:$0xf]
        %v4482 = vld [vmem:[%s4468 + $0x34] sm:$0xf]
        %v4483 = vld [vmem:[%s4468 + $0x38] sm:$0xf]
        %v4484 = vld [vmem:[%s4468 + $0x3c] sm:$0xf]
        %v4485 = vrot.slane %v4355, 1
        %v4486 = vsel %vm2104, %v4356, %v4485
        %v4487 = vrot.slane %v4357, 7
        %v4488 = vsel %vm2107, %v4487, %v4486
        %v4489 = vrot.slane %v4358, 6
        %v4490 = vsel %vm2110, %v4489, %v4488
        %v4491 = vrot.slane %v4359, 5
        %v4492 = vsel %vm2113, %v4491, %v4490
        %v4493 = vrot.slane %v4360, 4
        %v4494 = vsel %vm2116, %v4493, %v4492
        %v4495 = vrot.slane %v4361, 3
        %v4496 = vsel %vm2119, %v4495, %v4494
        %v4497 = vrot.slane %v4362, 2
        %v4498 = vsel %vm2122, %v4497, %v4496
        %v4499 = vpack.c.b16 %v4498, %v4498
        %v4517 = vunpack.c.l.b16 %v4469
        %v4518 = vunpack.c.l.b16 %v4470
        %v4519 = vunpack.c.l.b16 %v4471
        %v4520 = vunpack.c.l.b16 %v4472
        %v4521 = vunpack.c.l.b16 %v4473
        %v4522 = vunpack.c.l.b16 %v4474
        %v4523 = vunpack.c.l.b16 %v4475
        %v4524 = vunpack.c.l.b16 %v4476
        %v4525 = vunpack.c.l.b16 %v4477
        %v4526 = vunpack.c.l.b16 %v4478
        %v4527 = vunpack.c.l.b16 %v4479
        %v4528 = vunpack.c.l.b16 %v4480
        %v4529 = vunpack.c.l.b16 %v4481
        %v4530 = vunpack.c.l.b16 %v4482
        %v4531 = vunpack.c.l.b16 %v4483
        %v4532 = vunpack.c.l.b16 %v4484
        %v4533 = vpack.c.b16 %v4518, %v4517
        %v4534 = vpack.c.b16 %v4520, %v4519
        %v4535 = vpack.c.b16 %v4522, %v4521
        %v4536 = vpack.c.b16 %v4524, %v4523
        %v4537 = vpack.c.b16 %v4526, %v4525
        %v4538 = vpack.c.b16 %v4528, %v4527
        %v4539 = vpack.c.b16 %v4530, %v4529
        %v4540 = vpack.c.b16 %v4532, %v4531
        %4549 = vmatprep.subr.bf16.mxu0 0
        %4550 = vmatpush1.bf16.msra.mxu0 %v4540
        %4551 = vmatprep.subr.bf16.mxu0 0
        %4552 = vmatpush1.bf16.msra.mxu0 %v4539
        %4553 = vmatprep.subr.bf16.mxu0 0
        %4554 = vmatpush1.bf16.msra.mxu0 %v4538
        %4555 = vmatprep.subr.bf16.mxu0 0
        %4556 = vmatpush1.bf16.msra.mxu0 %v4537
        %4557 = vmatprep.subr.bf16.mxu0 0
        %4558 = vmatpush1.bf16.msra.mxu0 %v4536
        %4559 = vmatprep.subr.bf16.mxu0 0
        %4560 = vmatpush1.bf16.msra.mxu0 %v4535
        %4561 = vmatprep.subr.bf16.mxu0 0
        %4562 = vmatpush1.bf16.msra.mxu0 %v4534
        %4563 = vmatprep.subr.bf16.mxu0 0
        %4564 = vmatpush1.bf16.msra.mxu0 %v4533
        %4565 = vmatprep.subr.bf16.mxu0 0
        %4566 = vmatpush2.bf16.msra.mxu0 0
        %4567 = vmatprep.subr.bf16.mxu0 0
        %4568 = vmatpush2.bf16.msra.mxu0 0
        %4569 = vmatprep.subr.bf16.mxu0 0
        %4570 = vmatpush2.bf16.msra.mxu0 0
        %4571 = vmatprep.subr.bf16.mxu0 0
        %4572 = vmatpush2.bf16.msra.mxu0 0
        %4573 = vmatprep.subr.bf16.mxu0 0
        %4574 = vmatpush2.bf16.msra.mxu0 0
        %4575 = vmatprep.subr.bf16.mxu0 0
        %4576 = vmatpush2.bf16.msra.mxu0 0
        %4577 = vmatprep.subr.bf16.mxu0 0
        %4578 = vmatpush2.bf16.msra.mxu0 0
        %4579 = vmatprep.subr.bf16.mxu0 0
        %4580 = vmatpush2.bf16.msra.mxu0 0
        %4581 = vmatprep.mubr.bf16.mxu0 0
        %4582 = vmatmul.mubr.bf16.gmra.mxu0 %v4499
        %v4583 = vpop.f32.mrf.mxu0
        %v4584 = vadd.f32 0.0, %v4583
        %v4585 = vpop.f32.mrf.mxu0
        %v4586 = vpop.f32.mrf.mxu0
        %v4587 = vpop.f32.mrf.mxu0
        %4588 = vdwg.mxu0
        %v4589 = vadd.f32 %v4467, %v4584
        %v4590 = vld [vmem:[#allocation2 + $0x8] sm:$0x2]
        %v4591 = vld [vmem:[#allocation2 + $0x28] sm:$0x2]
        %v4592 = vld [vmem:[#allocation2 + $0x48] sm:$0x2]
        %v4593 = vld [vmem:[#allocation2 + $0x68] sm:$0x2]
        %v4594 = vld [vmem:[#allocation2 + $0x88] sm:$0x2]
        %v4595 = vld [vmem:[#allocation2 + $0xa8] sm:$0x2]
        %v4596 = vld [vmem:[#allocation2 + $0xc8] sm:$0x2]
        %v4597 = vld [vmem:[#allocation2 + $0xe8] sm:$0x2]
        %s4598 = scalar_lea.vmem %s3, 1152
        %v4599 = vld [vmem:[%s4598] sm:$0xf]
        %v4600 = vld [vmem:[%s4598 + $0x4] sm:$0xf]
        %v4601 = vld [vmem:[%s4598 + $0x8] sm:$0xf]
        %v4602 = vld [vmem:[%s4598 + $0xc] sm:$0xf]
        %v4603 = vld [vmem:[%s4598 + $0x10] sm:$0xf]
        %v4604 = vld [vmem:[%s4598 + $0x14] sm:$0xf]
        %v4605 = vld [vmem:[%s4598 + $0x18] sm:$0xf]
        %v4606 = vld [vmem:[%s4598 + $0x1c] sm:$0xf]
        %v4607 = vld [vmem:[%s4598 + $0x20] sm:$0xf]
        %v4608 = vld [vmem:[%s4598 + $0x24] sm:$0xf]
        %v4609 = vld [vmem:[%s4598 + $0x28] sm:$0xf]
        %v4610 = vld [vmem:[%s4598 + $0x2c] sm:$0xf]
        %v4611 = vld [vmem:[%s4598 + $0x30] sm:$0xf]
        %v4612 = vld [vmem:[%s4598 + $0x34] sm:$0xf]
        %v4613 = vld [vmem:[%s4598 + $0x38] sm:$0xf]
        %v4614 = vld [vmem:[%s4598 + $0x3c] sm:$0xf]
        %v4623 = vunpack.c.l.b16 %v4590
        %v4624 = vunpack.c.l.b16 %v4591
        %v4625 = vunpack.c.l.b16 %v4592
        %v4626 = vunpack.c.l.b16 %v4593
        %v4627 = vunpack.c.l.b16 %v4594
        %v4628 = vunpack.c.l.b16 %v4595
        %v4629 = vunpack.c.l.b16 %v4596
        %v4630 = vunpack.c.l.b16 %v4597
        %v4631 = vpack.c.b16 %v4623, %v4623
        %v4632 = vpack.c.b16 %v4624, %v4624
        %v4633 = vpack.c.b16 %v4625, %v4625
        %v4634 = vpack.c.b16 %v4626, %v4626
        %v4635 = vpack.c.b16 %v4627, %v4627
        %v4636 = vpack.c.b16 %v4628, %v4628
        %v4637 = vpack.c.b16 %v4629, %v4629
        %v4638 = vpack.c.b16 %v4630, %v4630
        %v4639 = vunpack.c.l.b16 %v4631
        %v4640 = vunpack.c.l.b16 %v4632
        %v4641 = vunpack.c.l.b16 %v4633
        %v4642 = vunpack.c.l.b16 %v4634
        %v4643 = vunpack.c.l.b16 %v4635
        %v4644 = vunpack.c.l.b16 %v4636
        %v4645 = vunpack.c.l.b16 %v4637
        %v4646 = vunpack.c.l.b16 %v4638
        %v4647 = vrot.slane %v4639, 2
        %v4648 = vrot.slane %v4640, 1
        %v4649 = vsel %vm2104, %v4648, %v4647
        %v4650 = vsel %vm2107, %v4641, %v4649
        %v4651 = vrot.slane %v4642, 7
        %v4652 = vsel %vm2110, %v4651, %v4650
        %v4653 = vrot.slane %v4643, 6
        %v4654 = vsel %vm2113, %v4653, %v4652
        %v4655 = vrot.slane %v4644, 5
        %v4656 = vsel %vm2116, %v4655, %v4654
        %v4657 = vrot.slane %v4645, 4
        %v4658 = vsel %vm2119, %v4657, %v4656
        %v4659 = vrot.slane %v4646, 3
        %v4660 = vsel %vm2122, %v4659, %v4658
        %v4661 = vpack.c.b16 %v4660, %v4660
        %v4679 = vunpack.c.l.b16 %v4599
        %v4680 = vunpack.c.l.b16 %v4600
        %v4681 = vunpack.c.l.b16 %v4601
        %v4682 = vunpack.c.l.b16 %v4602
        %v4683 = vunpack.c.l.b16 %v4603
        %v4684 = vunpack.c.l.b16 %v4604
        %v4685 = vunpack.c.l.b16 %v4605
        %v4686 = vunpack.c.l.b16 %v4606
        %v4687 = vunpack.c.l.b16 %v4607
        %v4688 = vunpack.c.l.b16 %v4608
        %v4689 = vunpack.c.l.b16 %v4609
        %v4690 = vunpack.c.l.b16 %v4610
        %v4691 = vunpack.c.l.b16 %v4611
        %v4692 = vunpack.c.l.b16 %v4612
        %v4693 = vunpack.c.l.b16 %v4613
        %v4694 = vunpack.c.l.b16 %v4614
        %v4695 = vpack.c.b16 %v4680, %v4679
        %v4696 = vpack.c.b16 %v4682, %v4681
        %v4697 = vpack.c.b16 %v4684, %v4683
        %v4698 = vpack.c.b16 %v4686, %v4685
        %v4699 = vpack.c.b16 %v4688, %v4687
        %v4700 = vpack.c.b16 %v4690, %v4689
        %v4701 = vpack.c.b16 %v4692, %v4691
        %v4702 = vpack.c.b16 %v4694, %v4693
        %4711 = vmatprep.subr.bf16.mxu0 0
        %4712 = vmatpush1.bf16.msra.mxu0 %v4702
        %4713 = vmatprep.subr.bf16.mxu0 0
        %4714 = vmatpush1.bf16.msra.mxu0 %v4701
        %4715 = vmatprep.subr.bf16.mxu0 0
        %4716 = vmatpush1.bf16.msra.mxu0 %v4700
        %4717 = vmatprep.subr.bf16.mxu0 0
        %4718 = vmatpush1.bf16.msra.mxu0 %v4699
        %4719 = vmatprep.subr.bf16.mxu0 0
        %4720 = vmatpush1.bf16.msra.mxu0 %v4698
        %4721 = vmatprep.subr.bf16.mxu0 0
        %4722 = vmatpush1.bf16.msra.mxu0 %v4697
        %4723 = vmatprep.subr.bf16.mxu0 0
        %4724 = vmatpush1.bf16.msra.mxu0 %v4696
        %4725 = vmatprep.subr.bf16.mxu0 0
        %4726 = vmatpush1.bf16.msra.mxu0 %v4695
        %4727 = vmatprep.subr.bf16.mxu0 0
        %4728 = vmatpush2.bf16.msra.mxu0 0
        %4729 = vmatprep.subr.bf16.mxu0 0
        %4730 = vmatpush2.bf16.msra.mxu0 0
        %4731 = vmatprep.subr.bf16.mxu0 0
        %4732 = vmatpush2.bf16.msra.mxu0 0
        %4733 = vmatprep.subr.bf16.mxu0 0
        %4734 = vmatpush2.bf16.msra.mxu0 0
        %4735 = vmatprep.subr.bf16.mxu0 0
        %4736 = vmatpush2.bf16.msra.mxu0 0
        %4737 = vmatprep.subr.bf16.mxu0 0
        %4738 = vmatpush2.bf16.msra.mxu0 0
        %4739 = vmatprep.subr.bf16.mxu0 0
        %4740 = vmatpush2.bf16.msra.mxu0 0
        %4741 = vmatprep.subr.bf16.mxu0 0
        %4742 = vmatpush2.bf16.msra.mxu0 0
        %4743 = vmatprep.mubr.bf16.mxu0 0
        %4744 = vmatmul.mubr.bf16.gmra.mxu0 %v4661
        %v4745 = vpop.f32.mrf.mxu0
        %v4746 = vadd.f32 0.0, %v4745
        %v4747 = vpop.f32.mrf.mxu0
        %v4748 = vpop.f32.mrf.mxu0
        %v4749 = vpop.f32.mrf.mxu0
        %4750 = vdwg.mxu0
        %v4751 = vadd.f32 %v4589, %v4746
        %s4752 = scalar_lea.vmem %s3, 1216
        %v4753 = vld [vmem:[%s4752] sm:$0xf]
        %v4754 = vld [vmem:[%s4752 + $0x4] sm:$0xf]
        %v4755 = vld [vmem:[%s4752 + $0x8] sm:$0xf]
        %v4756 = vld [vmem:[%s4752 + $0xc] sm:$0xf]
        %v4757 = vld [vmem:[%s4752 + $0x10] sm:$0xf]
        %v4758 = vld [vmem:[%s4752 + $0x14] sm:$0xf]
        %v4759 = vld [vmem:[%s4752 + $0x18] sm:$0xf]
        %v4760 = vld [vmem:[%s4752 + $0x1c] sm:$0xf]
        %v4761 = vld [vmem:[%s4752 + $0x20] sm:$0xf]
        %v4762 = vld [vmem:[%s4752 + $0x24] sm:$0xf]
        %v4763 = vld [vmem:[%s4752 + $0x28] sm:$0xf]
        %v4764 = vld [vmem:[%s4752 + $0x2c] sm:$0xf]
        %v4765 = vld [vmem:[%s4752 + $0x30] sm:$0xf]
        %v4766 = vld [vmem:[%s4752 + $0x34] sm:$0xf]
        %v4767 = vld [vmem:[%s4752 + $0x38] sm:$0xf]
        %v4768 = vld [vmem:[%s4752 + $0x3c] sm:$0xf]
        %v4769 = vrot.slane %v4639, 3
        %v4770 = vrot.slane %v4640, 2
        %v4771 = vsel %vm2104, %v4770, %v4769
        %v4772 = vrot.slane %v4641, 1
        %v4773 = vsel %vm2107, %v4772, %v4771
        %v4774 = vsel %vm2110, %v4642, %v4773
        %v4775 = vrot.slane %v4643, 7
        %v4776 = vsel %vm2113, %v4775, %v4774
        %v4777 = vrot.slane %v4644, 6
        %v4778 = vsel %vm2116, %v4777, %v4776
        %v4779 = vrot.slane %v4645, 5
        %v4780 = vsel %vm2119, %v4779, %v4778
        %v4781 = vrot.slane %v4646, 4
        %v4782 = vsel %vm2122, %v4781, %v4780
        %v4783 = vpack.c.b16 %v4782, %v4782
        %v4801 = vunpack.c.l.b16 %v4753
        %v4802 = vunpack.c.l.b16 %v4754
        %v4803 = vunpack.c.l.b16 %v4755
        %v4804 = vunpack.c.l.b16 %v4756
        %v4805 = vunpack.c.l.b16 %v4757
        %v4806 = vunpack.c.l.b16 %v4758
        %v4807 = vunpack.c.l.b16 %v4759
        %v4808 = vunpack.c.l.b16 %v4760
        %v4809 = vunpack.c.l.b16 %v4761
        %v4810 = vunpack.c.l.b16 %v4762
        %v4811 = vunpack.c.l.b16 %v4763
        %v4812 = vunpack.c.l.b16 %v4764
        %v4813 = vunpack.c.l.b16 %v4765
        %v4814 = vunpack.c.l.b16 %v4766
        %v4815 = vunpack.c.l.b16 %v4767
        %v4816 = vunpack.c.l.b16 %v4768
        %v4817 = vpack.c.b16 %v4802, %v4801
        %v4818 = vpack.c.b16 %v4804, %v4803
        %v4819 = vpack.c.b16 %v4806, %v4805
        %v4820 = vpack.c.b16 %v4808, %v4807
        %v4821 = vpack.c.b16 %v4810, %v4809
        %v4822 = vpack.c.b16 %v4812, %v4811
        %v4823 = vpack.c.b16 %v4814, %v4813
        %v4824 = vpack.c.b16 %v4816, %v4815
        %4833 = vmatprep.subr.bf16.mxu0 0
        %4834 = vmatpush1.bf16.msra.mxu0 %v4824
        %4835 = vmatprep.subr.bf16.mxu0 0
        %4836 = vmatpush1.bf16.msra.mxu0 %v4823
        %4837 = vmatprep.subr.bf16.mxu0 0
        %4838 = vmatpush1.bf16.msra.mxu0 %v4822
        %4839 = vmatprep.subr.bf16.mxu0 0
        %4840 = vmatpush1.bf16.msra.mxu0 %v4821
        %4841 = vmatprep.subr.bf16.mxu0 0
        %4842 = vmatpush1.bf16.msra.mxu0 %v4820
        %4843 = vmatprep.subr.bf16.mxu0 0
        %4844 = vmatpush1.bf16.msra.mxu0 %v4819
        %4845 = vmatprep.subr.bf16.mxu0 0
        %4846 = vmatpush1.bf16.msra.mxu0 %v4818
        %4847 = vmatprep.subr.bf16.mxu0 0
        %4848 = vmatpush1.bf16.msra.mxu0 %v4817
        %4849 = vmatprep.subr.bf16.mxu0 0
        %4850 = vmatpush2.bf16.msra.mxu0 0
        %4851 = vmatprep.subr.bf16.mxu0 0
        %4852 = vmatpush2.bf16.msra.mxu0 0
        %4853 = vmatprep.subr.bf16.mxu0 0
        %4854 = vmatpush2.bf16.msra.mxu0 0
        %4855 = vmatprep.subr.bf16.mxu0 0
        %4856 = vmatpush2.bf16.msra.mxu0 0
        %4857 = vmatprep.subr.bf16.mxu0 0
        %4858 = vmatpush2.bf16.msra.mxu0 0
        %4859 = vmatprep.subr.bf16.mxu0 0
        %4860 = vmatpush2.bf16.msra.mxu0 0
        %4861 = vmatprep.subr.bf16.mxu0 0
        %4862 = vmatpush2.bf16.msra.mxu0 0
        %4863 = vmatprep.subr.bf16.mxu0 0
        %4864 = vmatpush2.bf16.msra.mxu0 0
        %4865 = vmatprep.mubr.bf16.mxu0 0
        %4866 = vmatmul.mubr.bf16.gmra.mxu0 %v4783
        %v4867 = vpop.f32.mrf.mxu0
        %v4868 = vadd.f32 0.0, %v4867
        %v4869 = vpop.f32.mrf.mxu0
        %v4870 = vpop.f32.mrf.mxu0
        %v4871 = vpop.f32.mrf.mxu0
        %4872 = vdwg.mxu0
        %v4873 = vadd.f32 %v4751, %v4868
        %v4874 = vld [vmem:[#allocation2 + $0x8] sm:$0x4]
        %v4875 = vld [vmem:[#allocation2 + $0x28] sm:$0x4]
        %v4876 = vld [vmem:[#allocation2 + $0x48] sm:$0x4]
        %v4877 = vld [vmem:[#allocation2 + $0x68] sm:$0x4]
        %v4878 = vld [vmem:[#allocation2 + $0x88] sm:$0x4]
        %v4879 = vld [vmem:[#allocation2 + $0xa8] sm:$0x4]
        %v4880 = vld [vmem:[#allocation2 + $0xc8] sm:$0x4]
        %v4881 = vld [vmem:[#allocation2 + $0xe8] sm:$0x4]
        %s4882 = scalar_lea.vmem %s3, 1280
        %v4883 = vld [vmem:[%s4882] sm:$0xf]
        %v4884 = vld [vmem:[%s4882 + $0x4] sm:$0xf]
        %v4885 = vld [vmem:[%s4882 + $0x8] sm:$0xf]
        %v4886 = vld [vmem:[%s4882 + $0xc] sm:$0xf]
        %v4887 = vld [vmem:[%s4882 + $0x10] sm:$0xf]
        %v4888 = vld [vmem:[%s4882 + $0x14] sm:$0xf]
        %v4889 = vld [vmem:[%s4882 + $0x18] sm:$0xf]
        %v4890 = vld [vmem:[%s4882 + $0x1c] sm:$0xf]
        %v4891 = vld [vmem:[%s4882 + $0x20] sm:$0xf]
        %v4892 = vld [vmem:[%s4882 + $0x24] sm:$0xf]
        %v4893 = vld [vmem:[%s4882 + $0x28] sm:$0xf]
        %v4894 = vld [vmem:[%s4882 + $0x2c] sm:$0xf]
        %v4895 = vld [vmem:[%s4882 + $0x30] sm:$0xf]
        %v4896 = vld [vmem:[%s4882 + $0x34] sm:$0xf]
        %v4897 = vld [vmem:[%s4882 + $0x38] sm:$0xf]
        %v4898 = vld [vmem:[%s4882 + $0x3c] sm:$0xf]
        %v4907 = vunpack.c.l.b16 %v4874
        %v4908 = vunpack.c.l.b16 %v4875
        %v4909 = vunpack.c.l.b16 %v4876
        %v4910 = vunpack.c.l.b16 %v4877
        %v4911 = vunpack.c.l.b16 %v4878
        %v4912 = vunpack.c.l.b16 %v4879
        %v4913 = vunpack.c.l.b16 %v4880
        %v4914 = vunpack.c.l.b16 %v4881
        %v4915 = vpack.c.b16 %v4907, %v4907
        %v4916 = vpack.c.b16 %v4908, %v4908
        %v4917 = vpack.c.b16 %v4909, %v4909
        %v4918 = vpack.c.b16 %v4910, %v4910
        %v4919 = vpack.c.b16 %v4911, %v4911
        %v4920 = vpack.c.b16 %v4912, %v4912
        %v4921 = vpack.c.b16 %v4913, %v4913
        %v4922 = vpack.c.b16 %v4914, %v4914
        %v4923 = vunpack.c.l.b16 %v4915
        %v4924 = vunpack.c.l.b16 %v4916
        %v4925 = vunpack.c.l.b16 %v4917
        %v4926 = vunpack.c.l.b16 %v4918
        %v4927 = vunpack.c.l.b16 %v4919
        %v4928 = vunpack.c.l.b16 %v4920
        %v4929 = vunpack.c.l.b16 %v4921
        %v4930 = vunpack.c.l.b16 %v4922
        %v4931 = vrot.slane %v4923, 4
        %v4932 = vrot.slane %v4924, 3
        %v4933 = vsel %vm2104, %v4932, %v4931
        %v4934 = vrot.slane %v4925, 2
        %v4935 = vsel %vm2107, %v4934, %v4933
        %v4936 = vrot.slane %v4926, 1
        %v4937 = vsel %vm2110, %v4936, %v4935
        %v4938 = vsel %vm2113, %v4927, %v4937
        %v4939 = vrot.slane %v4928, 7
        %v4940 = vsel %vm2116, %v4939, %v4938
        %v4941 = vrot.slane %v4929, 6
        %v4942 = vsel %vm2119, %v4941, %v4940
        %v4943 = vrot.slane %v4930, 5
        %v4944 = vsel %vm2122, %v4943, %v4942
        %v4945 = vpack.c.b16 %v4944, %v4944
        %v4963 = vunpack.c.l.b16 %v4883
        %v4964 = vunpack.c.l.b16 %v4884
        %v4965 = vunpack.c.l.b16 %v4885
        %v4966 = vunpack.c.l.b16 %v4886
        %v4967 = vunpack.c.l.b16 %v4887
        %v4968 = vunpack.c.l.b16 %v4888
        %v4969 = vunpack.c.l.b16 %v4889
        %v4970 = vunpack.c.l.b16 %v4890
        %v4971 = vunpack.c.l.b16 %v4891
        %v4972 = vunpack.c.l.b16 %v4892
        %v4973 = vunpack.c.l.b16 %v4893
        %v4974 = vunpack.c.l.b16 %v4894
        %v4975 = vunpack.c.l.b16 %v4895
        %v4976 = vunpack.c.l.b16 %v4896
        %v4977 = vunpack.c.l.b16 %v4897
        %v4978 = vunpack.c.l.b16 %v4898
        %v4979 = vpack.c.b16 %v4964, %v4963
        %v4980 = vpack.c.b16 %v4966, %v4965
        %v4981 = vpack.c.b16 %v4968, %v4967
        %v4982 = vpack.c.b16 %v4970, %v4969
        %v4983 = vpack.c.b16 %v4972, %v4971
        %v4984 = vpack.c.b16 %v4974, %v4973
        %v4985 = vpack.c.b16 %v4976, %v4975
        %v4986 = vpack.c.b16 %v4978, %v4977
        %4995 = vmatprep.subr.bf16.mxu0 0
        %4996 = vmatpush1.bf16.msra.mxu0 %v4986
        %4997 = vmatprep.subr.bf16.mxu0 0
        %4998 = vmatpush1.bf16.msra.mxu0 %v4985
        %4999 = vmatprep.subr.bf16.mxu0 0
        %5000 = vmatpush1.bf16.msra.mxu0 %v4984
        %5001 = vmatprep.subr.bf16.mxu0 0
        %5002 = vmatpush1.bf16.msra.mxu0 %v4983
        %5003 = vmatprep.subr.bf16.mxu0 0
        %5004 = vmatpush1.bf16.msra.mxu0 %v4982
        %5005 = vmatprep.subr.bf16.mxu0 0
        %5006 = vmatpush1.bf16.msra.mxu0 %v4981
        %5007 = vmatprep.subr.bf16.mxu0 0
        %5008 = vmatpush1.bf16.msra.mxu0 %v4980
        %5009 = vmatprep.subr.bf16.mxu0 0
        %5010 = vmatpush1.bf16.msra.mxu0 %v4979
        %5011 = vmatprep.subr.bf16.mxu0 0
        %5012 = vmatpush2.bf16.msra.mxu0 0
        %5013 = vmatprep.subr.bf16.mxu0 0
        %5014 = vmatpush2.bf16.msra.mxu0 0
        %5015 = vmatprep.subr.bf16.mxu0 0
        %5016 = vmatpush2.bf16.msra.mxu0 0
        %5017 = vmatprep.subr.bf16.mxu0 0
        %5018 = vmatpush2.bf16.msra.mxu0 0
        %5019 = vmatprep.subr.bf16.mxu0 0
        %5020 = vmatpush2.bf16.msra.mxu0 0
        %5021 = vmatprep.subr.bf16.mxu0 0
        %5022 = vmatpush2.bf16.msra.mxu0 0
        %5023 = vmatprep.subr.bf16.mxu0 0
        %5024 = vmatpush2.bf16.msra.mxu0 0
        %5025 = vmatprep.subr.bf16.mxu0 0
        %5026 = vmatpush2.bf16.msra.mxu0 0
        %5027 = vmatprep.mubr.bf16.mxu0 0
        %5028 = vmatmul.mubr.bf16.gmra.mxu0 %v4945
        %v5029 = vpop.f32.mrf.mxu0
        %v5030 = vadd.f32 0.0, %v5029
        %v5031 = vpop.f32.mrf.mxu0
        %v5032 = vpop.f32.mrf.mxu0
        %v5033 = vpop.f32.mrf.mxu0
        %5034 = vdwg.mxu0
        %v5035 = vadd.f32 %v4873, %v5030
        %s5036 = scalar_lea.vmem %s3, 1344
        %v5037 = vld [vmem:[%s5036] sm:$0xf]
        %v5038 = vld [vmem:[%s5036 + $0x4] sm:$0xf]
        %v5039 = vld [vmem:[%s5036 + $0x8] sm:$0xf]
        %v5040 = vld [vmem:[%s5036 + $0xc] sm:$0xf]
        %v5041 = vld [vmem:[%s5036 + $0x10] sm:$0xf]
        %v5042 = vld [vmem:[%s5036 + $0x14] sm:$0xf]
        %v5043 = vld [vmem:[%s5036 + $0x18] sm:$0xf]
        %v5044 = vld [vmem:[%s5036 + $0x1c] sm:$0xf]
        %v5045 = vld [vmem:[%s5036 + $0x20] sm:$0xf]
        %v5046 = vld [vmem:[%s5036 + $0x24] sm:$0xf]
        %v5047 = vld [vmem:[%s5036 + $0x28] sm:$0xf]
        %v5048 = vld [vmem:[%s5036 + $0x2c] sm:$0xf]
        %v5049 = vld [vmem:[%s5036 + $0x30] sm:$0xf]
        %v5050 = vld [vmem:[%s5036 + $0x34] sm:$0xf]
        %v5051 = vld [vmem:[%s5036 + $0x38] sm:$0xf]
        %v5052 = vld [vmem:[%s5036 + $0x3c] sm:$0xf]
        %v5053 = vrot.slane %v4923, 5
        %v5054 = vrot.slane %v4924, 4
        %v5055 = vsel %vm2104, %v5054, %v5053
        %v5056 = vrot.slane %v4925, 3
        %v5057 = vsel %vm2107, %v5056, %v5055
        %v5058 = vrot.slane %v4926, 2
        %v5059 = vsel %vm2110, %v5058, %v5057
        %v5060 = vrot.slane %v4927, 1
        %v5061 = vsel %vm2113, %v5060, %v5059
        %v5062 = vsel %vm2116, %v4928, %v5061
        %v5063 = vrot.slane %v4929, 7
        %v5064 = vsel %vm2119, %v5063, %v5062
        %v5065 = vrot.slane %v4930, 6
        %v5066 = vsel %vm2122, %v5065, %v5064
        %v5067 = vpack.c.b16 %v5066, %v5066
        %v5085 = vunpack.c.l.b16 %v5037
        %v5086 = vunpack.c.l.b16 %v5038
        %v5087 = vunpack.c.l.b16 %v5039
        %v5088 = vunpack.c.l.b16 %v5040
        %v5089 = vunpack.c.l.b16 %v5041
        %v5090 = vunpack.c.l.b16 %v5042
        %v5091 = vunpack.c.l.b16 %v5043
        %v5092 = vunpack.c.l.b16 %v5044
        %v5093 = vunpack.c.l.b16 %v5045
        %v5094 = vunpack.c.l.b16 %v5046
        %v5095 = vunpack.c.l.b16 %v5047
        %v5096 = vunpack.c.l.b16 %v5048
        %v5097 = vunpack.c.l.b16 %v5049
        %v5098 = vunpack.c.l.b16 %v5050
        %v5099 = vunpack.c.l.b16 %v5051
        %v5100 = vunpack.c.l.b16 %v5052
        %v5101 = vpack.c.b16 %v5086, %v5085
        %v5102 = vpack.c.b16 %v5088, %v5087
        %v5103 = vpack.c.b16 %v5090, %v5089
        %v5104 = vpack.c.b16 %v5092, %v5091
        %v5105 = vpack.c.b16 %v5094, %v5093
        %v5106 = vpack.c.b16 %v5096, %v5095
        %v5107 = vpack.c.b16 %v5098, %v5097
        %v5108 = vpack.c.b16 %v5100, %v5099
        %5117 = vmatprep.subr.bf16.mxu0 0
        %5118 = vmatpush1.bf16.msra.mxu0 %v5108
        %5119 = vmatprep.subr.bf16.mxu0 0
        %5120 = vmatpush1.bf16.msra.mxu0 %v5107
        %5121 = vmatprep.subr.bf16.mxu0 0
        %5122 = vmatpush1.bf16.msra.mxu0 %v5106
        %5123 = vmatprep.subr.bf16.mxu0 0
        %5124 = vmatpush1.bf16.msra.mxu0 %v5105
        %5125 = vmatprep.subr.bf16.mxu0 0
        %5126 = vmatpush1.bf16.msra.mxu0 %v5104
        %5127 = vmatprep.subr.bf16.mxu0 0
        %5128 = vmatpush1.bf16.msra.mxu0 %v5103
        %5129 = vmatprep.subr.bf16.mxu0 0
        %5130 = vmatpush1.bf16.msra.mxu0 %v5102
        %5131 = vmatprep.subr.bf16.mxu0 0
        %5132 = vmatpush1.bf16.msra.mxu0 %v5101
        %5133 = vmatprep.subr.bf16.mxu0 0
        %5134 = vmatpush2.bf16.msra.mxu0 0
        %5135 = vmatprep.subr.bf16.mxu0 0
        %5136 = vmatpush2.bf16.msra.mxu0 0
        %5137 = vmatprep.subr.bf16.mxu0 0
        %5138 = vmatpush2.bf16.msra.mxu0 0
        %5139 = vmatprep.subr.bf16.mxu0 0
        %5140 = vmatpush2.bf16.msra.mxu0 0
        %5141 = vmatprep.subr.bf16.mxu0 0
        %5142 = vmatpush2.bf16.msra.mxu0 0
        %5143 = vmatprep.subr.bf16.mxu0 0
        %5144 = vmatpush2.bf16.msra.mxu0 0
        %5145 = vmatprep.subr.bf16.mxu0 0
        %5146 = vmatpush2.bf16.msra.mxu0 0
        %5147 = vmatprep.subr.bf16.mxu0 0
        %5148 = vmatpush2.bf16.msra.mxu0 0
        %5149 = vmatprep.mubr.bf16.mxu0 0
        %5150 = vmatmul.mubr.bf16.gmra.mxu0 %v5067
        %v5151 = vpop.f32.mrf.mxu0
        %v5152 = vadd.f32 0.0, %v5151
        %v5153 = vpop.f32.mrf.mxu0
        %v5154 = vpop.f32.mrf.mxu0
        %v5155 = vpop.f32.mrf.mxu0
        %5156 = vdwg.mxu0
        %v5157 = vadd.f32 %v5035, %v5152
        %v5158 = vld [vmem:[#allocation2 + $0x8] sm:$0x8]
        %v5159 = vld [vmem:[#allocation2 + $0x28] sm:$0x8]
        %v5160 = vld [vmem:[#allocation2 + $0x48] sm:$0x8]
        %v5161 = vld [vmem:[#allocation2 + $0x68] sm:$0x8]
        %v5162 = vld [vmem:[#allocation2 + $0x88] sm:$0x8]
        %v5163 = vld [vmem:[#allocation2 + $0xa8] sm:$0x8]
        %v5164 = vld [vmem:[#allocation2 + $0xc8] sm:$0x8]
        %v5165 = vld [vmem:[#allocation2 + $0xe8] sm:$0x8]
        %s5166 = scalar_lea.vmem %s3, 1408
        %v5167 = vld [vmem:[%s5166] sm:$0xf]
        %v5168 = vld [vmem:[%s5166 + $0x4] sm:$0xf]
        %v5169 = vld [vmem:[%s5166 + $0x8] sm:$0xf]
        %v5170 = vld [vmem:[%s5166 + $0xc] sm:$0xf]
        %v5171 = vld [vmem:[%s5166 + $0x10] sm:$0xf]
        %v5172 = vld [vmem:[%s5166 + $0x14] sm:$0xf]
        %v5173 = vld [vmem:[%s5166 + $0x18] sm:$0xf]
        %v5174 = vld [vmem:[%s5166 + $0x1c] sm:$0xf]
        %v5175 = vld [vmem:[%s5166 + $0x20] sm:$0xf]
        %v5176 = vld [vmem:[%s5166 + $0x24] sm:$0xf]
        %v5177 = vld [vmem:[%s5166 + $0x28] sm:$0xf]
        %v5178 = vld [vmem:[%s5166 + $0x2c] sm:$0xf]
        %v5179 = vld [vmem:[%s5166 + $0x30] sm:$0xf]
        %v5180 = vld [vmem:[%s5166 + $0x34] sm:$0xf]
        %v5181 = vld [vmem:[%s5166 + $0x38] sm:$0xf]
        %v5182 = vld [vmem:[%s5166 + $0x3c] sm:$0xf]
        %v5191 = vunpack.c.l.b16 %v5158
        %v5192 = vunpack.c.l.b16 %v5159
        %v5193 = vunpack.c.l.b16 %v5160
        %v5194 = vunpack.c.l.b16 %v5161
        %v5195 = vunpack.c.l.b16 %v5162
        %v5196 = vunpack.c.l.b16 %v5163
        %v5197 = vunpack.c.l.b16 %v5164
        %v5198 = vunpack.c.l.b16 %v5165
        %v5199 = vpack.c.b16 %v5191, %v5191
        %v5200 = vpack.c.b16 %v5192, %v5192
        %v5201 = vpack.c.b16 %v5193, %v5193
        %v5202 = vpack.c.b16 %v5194, %v5194
        %v5203 = vpack.c.b16 %v5195, %v5195
        %v5204 = vpack.c.b16 %v5196, %v5196
        %v5205 = vpack.c.b16 %v5197, %v5197
        %v5206 = vpack.c.b16 %v5198, %v5198
        %v5207 = vunpack.c.l.b16 %v5199
        %v5208 = vunpack.c.l.b16 %v5200
        %v5209 = vunpack.c.l.b16 %v5201
        %v5210 = vunpack.c.l.b16 %v5202
        %v5211 = vunpack.c.l.b16 %v5203
        %v5212 = vunpack.c.l.b16 %v5204
        %v5213 = vunpack.c.l.b16 %v5205
        %v5214 = vunpack.c.l.b16 %v5206
        %v5215 = vrot.slane %v5207, 6
        %v5216 = vrot.slane %v5208, 5
        %v5217 = vsel %vm2104, %v5216, %v5215
        %v5218 = vrot.slane %v5209, 4
        %v5219 = vsel %vm2107, %v5218, %v5217
        %v5220 = vrot.slane %v5210, 3
        %v5221 = vsel %vm2110, %v5220, %v5219
        %v5222 = vrot.slane %v5211, 2
        %v5223 = vsel %vm2113, %v5222, %v5221
        %v5224 = vrot.slane %v5212, 1
        %v5225 = vsel %vm2116, %v5224, %v5223
        %v5226 = vsel %vm2119, %v5213, %v5225
        %v5227 = vrot.slane %v5214, 7
        %v5228 = vsel %vm2122, %v5227, %v5226
        %v5229 = vpack.c.b16 %v5228, %v5228
        %v5247 = vunpack.c.l.b16 %v5167
        %v5248 = vunpack.c.l.b16 %v5168
        %v5249 = vunpack.c.l.b16 %v5169
        %v5250 = vunpack.c.l.b16 %v5170
        %v5251 = vunpack.c.l.b16 %v5171
        %v5252 = vunpack.c.l.b16 %v5172
        %v5253 = vunpack.c.l.b16 %v5173
        %v5254 = vunpack.c.l.b16 %v5174
        %v5255 = vunpack.c.l.b16 %v5175
        %v5256 = vunpack.c.l.b16 %v5176
        %v5257 = vunpack.c.l.b16 %v5177
        %v5258 = vunpack.c.l.b16 %v5178
        %v5259 = vunpack.c.l.b16 %v5179
        %v5260 = vunpack.c.l.b16 %v5180
        %v5261 = vunpack.c.l.b16 %v5181
        %v5262 = vunpack.c.l.b16 %v5182
        %v5263 = vpack.c.b16 %v5248, %v5247
        %v5264 = vpack.c.b16 %v5250, %v5249
        %v5265 = vpack.c.b16 %v5252, %v5251
        %v5266 = vpack.c.b16 %v5254, %v5253
        %v5267 = vpack.c.b16 %v5256, %v5255
        %v5268 = vpack.c.b16 %v5258, %v5257
        %v5269 = vpack.c.b16 %v5260, %v5259
        %v5270 = vpack.c.b16 %v5262, %v5261
        %5279 = vmatprep.subr.bf16.mxu0 0
        %5280 = vmatpush1.bf16.msra.mxu0 %v5270
        %5281 = vmatprep.subr.bf16.mxu0 0
        %5282 = vmatpush1.bf16.msra.mxu0 %v5269
        %5283 = vmatprep.subr.bf16.mxu0 0
        %5284 = vmatpush1.bf16.msra.mxu0 %v5268
        %5285 = vmatprep.subr.bf16.mxu0 0
        %5286 = vmatpush1.bf16.msra.mxu0 %v5267
        %5287 = vmatprep.subr.bf16.mxu0 0
        %5288 = vmatpush1.bf16.msra.mxu0 %v5266
        %5289 = vmatprep.subr.bf16.mxu0 0
        %5290 = vmatpush1.bf16.msra.mxu0 %v5265
        %5291 = vmatprep.subr.bf16.mxu0 0
        %5292 = vmatpush1.bf16.msra.mxu0 %v5264
        %5293 = vmatprep.subr.bf16.mxu0 0
        %5294 = vmatpush1.bf16.msra.mxu0 %v5263
        %5295 = vmatprep.subr.bf16.mxu0 0
        %5296 = vmatpush2.bf16.msra.mxu0 0
        %5297 = vmatprep.subr.bf16.mxu0 0
        %5298 = vmatpush2.bf16.msra.mxu0 0
        %5299 = vmatprep.subr.bf16.mxu0 0
        %5300 = vmatpush2.bf16.msra.mxu0 0
        %5301 = vmatprep.subr.bf16.mxu0 0
        %5302 = vmatpush2.bf16.msra.mxu0 0
        %5303 = vmatprep.subr.bf16.mxu0 0
        %5304 = vmatpush2.bf16.msra.mxu0 0
        %5305 = vmatprep.subr.bf16.mxu0 0
        %5306 = vmatpush2.bf16.msra.mxu0 0
        %5307 = vmatprep.subr.bf16.mxu0 0
        %5308 = vmatpush2.bf16.msra.mxu0 0
        %5309 = vmatprep.subr.bf16.mxu0 0
        %5310 = vmatpush2.bf16.msra.mxu0 0
        %5311 = vmatprep.mubr.bf16.mxu0 0
        %5312 = vmatmul.mubr.bf16.gmra.mxu0 %v5229
        %v5313 = vpop.f32.mrf.mxu0
        %v5314 = vadd.f32 0.0, %v5313
        %v5315 = vpop.f32.mrf.mxu0
        %v5316 = vpop.f32.mrf.mxu0
        %v5317 = vpop.f32.mrf.mxu0
        %5318 = vdwg.mxu0
        %v5319 = vadd.f32 %v5157, %v5314
        %s5320 = scalar_lea.vmem %s3, 1472
        %v5321 = vld [vmem:[%s5320] sm:$0xf]
        %v5322 = vld [vmem:[%s5320 + $0x4] sm:$0xf]
        %v5323 = vld [vmem:[%s5320 + $0x8] sm:$0xf]
        %v5324 = vld [vmem:[%s5320 + $0xc] sm:$0xf]
        %v5325 = vld [vmem:[%s5320 + $0x10] sm:$0xf]
        %v5326 = vld [vmem:[%s5320 + $0x14] sm:$0xf]
        %v5327 = vld [vmem:[%s5320 + $0x18] sm:$0xf]
        %v5328 = vld [vmem:[%s5320 + $0x1c] sm:$0xf]
        %v5329 = vld [vmem:[%s5320 + $0x20] sm:$0xf]
        %v5330 = vld [vmem:[%s5320 + $0x24] sm:$0xf]
        %v5331 = vld [vmem:[%s5320 + $0x28] sm:$0xf]
        %v5332 = vld [vmem:[%s5320 + $0x2c] sm:$0xf]
        %v5333 = vld [vmem:[%s5320 + $0x30] sm:$0xf]
        %v5334 = vld [vmem:[%s5320 + $0x34] sm:$0xf]
        %v5335 = vld [vmem:[%s5320 + $0x38] sm:$0xf]
        %v5336 = vld [vmem:[%s5320 + $0x3c] sm:$0xf]
        %v5337 = vrot.slane %v5207, 7
        %v5338 = vrot.slane %v5208, 6
        %v5339 = vsel %vm2104, %v5338, %v5337
        %v5340 = vrot.slane %v5209, 5
        %v5341 = vsel %vm2107, %v5340, %v5339
        %v5342 = vrot.slane %v5210, 4
        %v5343 = vsel %vm2110, %v5342, %v5341
        %v5344 = vrot.slane %v5211, 3
        %v5345 = vsel %vm2113, %v5344, %v5343
        %v5346 = vrot.slane %v5212, 2
        %v5347 = vsel %vm2116, %v5346, %v5345
        %v5348 = vrot.slane %v5213, 1
        %v5349 = vsel %vm2119, %v5348, %v5347
        %v5350 = vsel %vm2122, %v5214, %v5349
        %v5351 = vpack.c.b16 %v5350, %v5350
        %v5369 = vunpack.c.l.b16 %v5321
        %v5370 = vunpack.c.l.b16 %v5322
        %v5371 = vunpack.c.l.b16 %v5323
        %v5372 = vunpack.c.l.b16 %v5324
        %v5373 = vunpack.c.l.b16 %v5325
        %v5374 = vunpack.c.l.b16 %v5326
        %v5375 = vunpack.c.l.b16 %v5327
        %v5376 = vunpack.c.l.b16 %v5328
        %v5377 = vunpack.c.l.b16 %v5329
        %v5378 = vunpack.c.l.b16 %v5330
        %v5379 = vunpack.c.l.b16 %v5331
        %v5380 = vunpack.c.l.b16 %v5332
        %v5381 = vunpack.c.l.b16 %v5333
        %v5382 = vunpack.c.l.b16 %v5334
        %v5383 = vunpack.c.l.b16 %v5335
        %v5384 = vunpack.c.l.b16 %v5336
        %v5385 = vpack.c.b16 %v5370, %v5369
        %v5386 = vpack.c.b16 %v5372, %v5371
        %v5387 = vpack.c.b16 %v5374, %v5373
        %v5388 = vpack.c.b16 %v5376, %v5375
        %v5389 = vpack.c.b16 %v5378, %v5377
        %v5390 = vpack.c.b16 %v5380, %v5379
        %v5391 = vpack.c.b16 %v5382, %v5381
        %v5392 = vpack.c.b16 %v5384, %v5383
        %5401 = vmatprep.subr.bf16.mxu0 0
        %5402 = vmatpush1.bf16.msra.mxu0 %v5392
        %5403 = vmatprep.subr.bf16.mxu0 0
        %5404 = vmatpush1.bf16.msra.mxu0 %v5391
        %5405 = vmatprep.subr.bf16.mxu0 0
        %5406 = vmatpush1.bf16.msra.mxu0 %v5390
        %5407 = vmatprep.subr.bf16.mxu0 0
        %5408 = vmatpush1.bf16.msra.mxu0 %v5389
        %5409 = vmatprep.subr.bf16.mxu0 0
        %5410 = vmatpush1.bf16.msra.mxu0 %v5388
        %5411 = vmatprep.subr.bf16.mxu0 0
        %5412 = vmatpush1.bf16.msra.mxu0 %v5387
        %5413 = vmatprep.subr.bf16.mxu0 0
        %5414 = vmatpush1.bf16.msra.mxu0 %v5386
        %5415 = vmatprep.subr.bf16.mxu0 0
        %5416 = vmatpush1.bf16.msra.mxu0 %v5385
        %5417 = vmatprep.subr.bf16.mxu0 0
        %5418 = vmatpush2.bf16.msra.mxu0 0
        %5419 = vmatprep.subr.bf16.mxu0 0
        %5420 = vmatpush2.bf16.msra.mxu0 0
        %5421 = vmatprep.subr.bf16.mxu0 0
        %5422 = vmatpush2.bf16.msra.mxu0 0
        %5423 = vmatprep.subr.bf16.mxu0 0
        %5424 = vmatpush2.bf16.msra.mxu0 0
        %5425 = vmatprep.subr.bf16.mxu0 0
        %5426 = vmatpush2.bf16.msra.mxu0 0
        %5427 = vmatprep.subr.bf16.mxu0 0
        %5428 = vmatpush2.bf16.msra.mxu0 0
        %5429 = vmatprep.subr.bf16.mxu0 0
        %5430 = vmatpush2.bf16.msra.mxu0 0
        %5431 = vmatprep.subr.bf16.mxu0 0
        %5432 = vmatpush2.bf16.msra.mxu0 0
        %5433 = vmatprep.mubr.bf16.mxu0 0
        %5434 = vmatmul.mubr.bf16.gmra.mxu0 %v5351
        %v5435 = vpop.f32.mrf.mxu0
        %v5436 = vadd.f32 0.0, %v5435
        %v5437 = vpop.f32.mrf.mxu0
        %v5438 = vpop.f32.mrf.mxu0
        %v5439 = vpop.f32.mrf.mxu0
        %5440 = vdwg.mxu0
        %v5441 = vadd.f32 %v5319, %v5436
        %v5442 = vld [vmem:[#allocation2 + $0xc] sm:$0x1]
        %v5443 = vld [vmem:[#allocation2 + $0x2c] sm:$0x1]
        %v5444 = vld [vmem:[#allocation2 + $0x4c] sm:$0x1]
        %v5445 = vld [vmem:[#allocation2 + $0x6c] sm:$0x1]
        %v5446 = vld [vmem:[#allocation2 + $0x8c] sm:$0x1]
        %v5447 = vld [vmem:[#allocation2 + $0xac] sm:$0x1]
        %v5448 = vld [vmem:[#allocation2 + $0xcc] sm:$0x1]
        %v5449 = vld [vmem:[#allocation2 + $0xec] sm:$0x1]
        %s5450 = scalar_lea.vmem %s3, 1536
        %v5451 = vld [vmem:[%s5450] sm:$0xf]
        %v5452 = vld [vmem:[%s5450 + $0x4] sm:$0xf]
        %v5453 = vld [vmem:[%s5450 + $0x8] sm:$0xf]
        %v5454 = vld [vmem:[%s5450 + $0xc] sm:$0xf]
        %v5455 = vld [vmem:[%s5450 + $0x10] sm:$0xf]
        %v5456 = vld [vmem:[%s5450 + $0x14] sm:$0xf]
        %v5457 = vld [vmem:[%s5450 + $0x18] sm:$0xf]
        %v5458 = vld [vmem:[%s5450 + $0x1c] sm:$0xf]
        %v5459 = vld [vmem:[%s5450 + $0x20] sm:$0xf]
        %v5460 = vld [vmem:[%s5450 + $0x24] sm:$0xf]
        %v5461 = vld [vmem:[%s5450 + $0x28] sm:$0xf]
        %v5462 = vld [vmem:[%s5450 + $0x2c] sm:$0xf]
        %v5463 = vld [vmem:[%s5450 + $0x30] sm:$0xf]
        %v5464 = vld [vmem:[%s5450 + $0x34] sm:$0xf]
        %v5465 = vld [vmem:[%s5450 + $0x38] sm:$0xf]
        %v5466 = vld [vmem:[%s5450 + $0x3c] sm:$0xf]
        %v5475 = vunpack.c.l.b16 %v5442
        %v5476 = vunpack.c.l.b16 %v5443
        %v5477 = vunpack.c.l.b16 %v5444
        %v5478 = vunpack.c.l.b16 %v5445
        %v5479 = vunpack.c.l.b16 %v5446
        %v5480 = vunpack.c.l.b16 %v5447
        %v5481 = vunpack.c.l.b16 %v5448
        %v5482 = vunpack.c.l.b16 %v5449
        %v5483 = vpack.c.b16 %v5475, %v5475
        %v5484 = vpack.c.b16 %v5476, %v5476
        %v5485 = vpack.c.b16 %v5477, %v5477
        %v5486 = vpack.c.b16 %v5478, %v5478
        %v5487 = vpack.c.b16 %v5479, %v5479
        %v5488 = vpack.c.b16 %v5480, %v5480
        %v5489 = vpack.c.b16 %v5481, %v5481
        %v5490 = vpack.c.b16 %v5482, %v5482
        %v5491 = vunpack.c.l.b16 %v5483
        %v5492 = vunpack.c.l.b16 %v5484
        %v5493 = vunpack.c.l.b16 %v5485
        %v5494 = vunpack.c.l.b16 %v5486
        %v5495 = vunpack.c.l.b16 %v5487
        %v5496 = vunpack.c.l.b16 %v5488
        %v5497 = vunpack.c.l.b16 %v5489
        %v5498 = vunpack.c.l.b16 %v5490
        %v5499 = vrot.slane %v5492, 7
        %v5500 = vsel %vm2104, %v5499, %v5491
        %v5501 = vrot.slane %v5493, 6
        %v5502 = vsel %vm2107, %v5501, %v5500
        %v5503 = vrot.slane %v5494, 5
        %v5504 = vsel %vm2110, %v5503, %v5502
        %v5505 = vrot.slane %v5495, 4
        %v5506 = vsel %vm2113, %v5505, %v5504
        %v5507 = vrot.slane %v5496, 3
        %v5508 = vsel %vm2116, %v5507, %v5506
        %v5509 = vrot.slane %v5497, 2
        %v5510 = vsel %vm2119, %v5509, %v5508
        %v5511 = vrot.slane %v5498, 1
        %v5512 = vsel %vm2122, %v5511, %v5510
        %v5513 = vpack.c.b16 %v5512, %v5512
        %v5531 = vunpack.c.l.b16 %v5451
        %v5532 = vunpack.c.l.b16 %v5452
        %v5533 = vunpack.c.l.b16 %v5453
        %v5534 = vunpack.c.l.b16 %v5454
        %v5535 = vunpack.c.l.b16 %v5455
        %v5536 = vunpack.c.l.b16 %v5456
        %v5537 = vunpack.c.l.b16 %v5457
        %v5538 = vunpack.c.l.b16 %v5458
        %v5539 = vunpack.c.l.b16 %v5459
        %v5540 = vunpack.c.l.b16 %v5460
        %v5541 = vunpack.c.l.b16 %v5461
        %v5542 = vunpack.c.l.b16 %v5462
        %v5543 = vunpack.c.l.b16 %v5463
        %v5544 = vunpack.c.l.b16 %v5464
        %v5545 = vunpack.c.l.b16 %v5465
        %v5546 = vunpack.c.l.b16 %v5466
        %v5547 = vpack.c.b16 %v5532, %v5531
        %v5548 = vpack.c.b16 %v5534, %v5533
        %v5549 = vpack.c.b16 %v5536, %v5535
        %v5550 = vpack.c.b16 %v5538, %v5537
        %v5551 = vpack.c.b16 %v5540, %v5539
        %v5552 = vpack.c.b16 %v5542, %v5541
        %v5553 = vpack.c.b16 %v5544, %v5543
        %v5554 = vpack.c.b16 %v5546, %v5545
        %5563 = vmatprep.subr.bf16.mxu0 0
        %5564 = vmatpush1.bf16.msra.mxu0 %v5554
        %5565 = vmatprep.subr.bf16.mxu0 0
        %5566 = vmatpush1.bf16.msra.mxu0 %v5553
        %5567 = vmatprep.subr.bf16.mxu0 0
        %5568 = vmatpush1.bf16.msra.mxu0 %v5552
        %5569 = vmatprep.subr.bf16.mxu0 0
        %5570 = vmatpush1.bf16.msra.mxu0 %v5551
        %5571 = vmatprep.subr.bf16.mxu0 0
        %5572 = vmatpush1.bf16.msra.mxu0 %v5550
        %5573 = vmatprep.subr.bf16.mxu0 0
        %5574 = vmatpush1.bf16.msra.mxu0 %v5549
        %5575 = vmatprep.subr.bf16.mxu0 0
        %5576 = vmatpush1.bf16.msra.mxu0 %v5548
        %5577 = vmatprep.subr.bf16.mxu0 0
        %5578 = vmatpush1.bf16.msra.mxu0 %v5547
        %5579 = vmatprep.subr.bf16.mxu0 0
        %5580 = vmatpush2.bf16.msra.mxu0 0
        %5581 = vmatprep.subr.bf16.mxu0 0
        %5582 = vmatpush2.bf16.msra.mxu0 0
        %5583 = vmatprep.subr.bf16.mxu0 0
        %5584 = vmatpush2.bf16.msra.mxu0 0
        %5585 = vmatprep.subr.bf16.mxu0 0
        %5586 = vmatpush2.bf16.msra.mxu0 0
        %5587 = vmatprep.subr.bf16.mxu0 0
        %5588 = vmatpush2.bf16.msra.mxu0 0
        %5589 = vmatprep.subr.bf16.mxu0 0
        %5590 = vmatpush2.bf16.msra.mxu0 0
        %5591 = vmatprep.subr.bf16.mxu0 0
        %5592 = vmatpush2.bf16.msra.mxu0 0
        %5593 = vmatprep.subr.bf16.mxu0 0
        %5594 = vmatpush2.bf16.msra.mxu0 0
        %5595 = vmatprep.mubr.bf16.mxu0 0
        %5596 = vmatmul.mubr.bf16.gmra.mxu0 %v5513
        %v5597 = vpop.f32.mrf.mxu0
        %v5598 = vadd.f32 0.0, %v5597
        %v5599 = vpop.f32.mrf.mxu0
        %v5600 = vpop.f32.mrf.mxu0
        %v5601 = vpop.f32.mrf.mxu0
        %5602 = vdwg.mxu0
        %v5603 = vadd.f32 %v5441, %v5598
        %s5604 = scalar_lea.vmem %s3, 1600
        %v5605 = vld [vmem:[%s5604] sm:$0xf]
        %v5606 = vld [vmem:[%s5604 + $0x4] sm:$0xf]
        %v5607 = vld [vmem:[%s5604 + $0x8] sm:$0xf]
        %v5608 = vld [vmem:[%s5604 + $0xc] sm:$0xf]
        %v5609 = vld [vmem:[%s5604 + $0x10] sm:$0xf]
        %v5610 = vld [vmem:[%s5604 + $0x14] sm:$0xf]
        %v5611 = vld [vmem:[%s5604 + $0x18] sm:$0xf]
        %v5612 = vld [vmem:[%s5604 + $0x1c] sm:$0xf]
        %v5613 = vld [vmem:[%s5604 + $0x20] sm:$0xf]
        %v5614 = vld [vmem:[%s5604 + $0x24] sm:$0xf]
        %v5615 = vld [vmem:[%s5604 + $0x28] sm:$0xf]
        %v5616 = vld [vmem:[%s5604 + $0x2c] sm:$0xf]
        %v5617 = vld [vmem:[%s5604 + $0x30] sm:$0xf]
        %v5618 = vld [vmem:[%s5604 + $0x34] sm:$0xf]
        %v5619 = vld [vmem:[%s5604 + $0x38] sm:$0xf]
        %v5620 = vld [vmem:[%s5604 + $0x3c] sm:$0xf]
        %v5621 = vrot.slane %v5491, 1
        %v5622 = vsel %vm2104, %v5492, %v5621
        %v5623 = vrot.slane %v5493, 7
        %v5624 = vsel %vm2107, %v5623, %v5622
        %v5625 = vrot.slane %v5494, 6
        %v5626 = vsel %vm2110, %v5625, %v5624
        %v5627 = vrot.slane %v5495, 5
        %v5628 = vsel %vm2113, %v5627, %v5626
        %v5629 = vrot.slane %v5496, 4
        %v5630 = vsel %vm2116, %v5629, %v5628
        %v5631 = vrot.slane %v5497, 3
        %v5632 = vsel %vm2119, %v5631, %v5630
        %v5633 = vrot.slane %v5498, 2
        %v5634 = vsel %vm2122, %v5633, %v5632
        %v5635 = vpack.c.b16 %v5634, %v5634
        %v5653 = vunpack.c.l.b16 %v5605
        %v5654 = vunpack.c.l.b16 %v5606
        %v5655 = vunpack.c.l.b16 %v5607
        %v5656 = vunpack.c.l.b16 %v5608
        %v5657 = vunpack.c.l.b16 %v5609
        %v5658 = vunpack.c.l.b16 %v5610
        %v5659 = vunpack.c.l.b16 %v5611
        %v5660 = vunpack.c.l.b16 %v5612
        %v5661 = vunpack.c.l.b16 %v5613
        %v5662 = vunpack.c.l.b16 %v5614
        %v5663 = vunpack.c.l.b16 %v5615
        %v5664 = vunpack.c.l.b16 %v5616
        %v5665 = vunpack.c.l.b16 %v5617
        %v5666 = vunpack.c.l.b16 %v5618
        %v5667 = vunpack.c.l.b16 %v5619
        %v5668 = vunpack.c.l.b16 %v5620
        %v5669 = vpack.c.b16 %v5654, %v5653
        %v5670 = vpack.c.b16 %v5656, %v5655
        %v5671 = vpack.c.b16 %v5658, %v5657
        %v5672 = vpack.c.b16 %v5660, %v5659
        %v5673 = vpack.c.b16 %v5662, %v5661
        %v5674 = vpack.c.b16 %v5664, %v5663
        %v5675 = vpack.c.b16 %v5666, %v5665
        %v5676 = vpack.c.b16 %v5668, %v5667
        %5685 = vmatprep.subr.bf16.mxu0 0
        %5686 = vmatpush1.bf16.msra.mxu0 %v5676
        %5687 = vmatprep.subr.bf16.mxu0 0
        %5688 = vmatpush1.bf16.msra.mxu0 %v5675
        %5689 = vmatprep.subr.bf16.mxu0 0
        %5690 = vmatpush1.bf16.msra.mxu0 %v5674
        %5691 = vmatprep.subr.bf16.mxu0 0
        %5692 = vmatpush1.bf16.msra.mxu0 %v5673
        %5693 = vmatprep.subr.bf16.mxu0 0
        %5694 = vmatpush1.bf16.msra.mxu0 %v5672
        %5695 = vmatprep.subr.bf16.mxu0 0
        %5696 = vmatpush1.bf16.msra.mxu0 %v5671
        %5697 = vmatprep.subr.bf16.mxu0 0
        %5698 = vmatpush1.bf16.msra.mxu0 %v5670
        %5699 = vmatprep.subr.bf16.mxu0 0
        %5700 = vmatpush1.bf16.msra.mxu0 %v5669
        %5701 = vmatprep.subr.bf16.mxu0 0
        %5702 = vmatpush2.bf16.msra.mxu0 0
        %5703 = vmatprep.subr.bf16.mxu0 0
        %5704 = vmatpush2.bf16.msra.mxu0 0
        %5705 = vmatprep.subr.bf16.mxu0 0
        %5706 = vmatpush2.bf16.msra.mxu0 0
        %5707 = vmatprep.subr.bf16.mxu0 0
        %5708 = vmatpush2.bf16.msra.mxu0 0
        %5709 = vmatprep.subr.bf16.mxu0 0
        %5710 = vmatpush2.bf16.msra.mxu0 0
        %5711 = vmatprep.subr.bf16.mxu0 0
        %5712 = vmatpush2.bf16.msra.mxu0 0
        %5713 = vmatprep.subr.bf16.mxu0 0
        %5714 = vmatpush2.bf16.msra.mxu0 0
        %5715 = vmatprep.subr.bf16.mxu0 0
        %5716 = vmatpush2.bf16.msra.mxu0 0
        %5717 = vmatprep.mubr.bf16.mxu0 0
        %5718 = vmatmul.mubr.bf16.gmra.mxu0 %v5635
        %v5719 = vpop.f32.mrf.mxu0
        %v5720 = vadd.f32 0.0, %v5719
        %v5721 = vpop.f32.mrf.mxu0
        %v5722 = vpop.f32.mrf.mxu0
        %v5723 = vpop.f32.mrf.mxu0
        %5724 = vdwg.mxu0
        %v5725 = vadd.f32 %v5603, %v5720
        %v5726 = vld [vmem:[#allocation2 + $0xc] sm:$0x2]
        %v5727 = vld [vmem:[#allocation2 + $0x2c] sm:$0x2]
        %v5728 = vld [vmem:[#allocation2 + $0x4c] sm:$0x2]
        %v5729 = vld [vmem:[#allocation2 + $0x6c] sm:$0x2]
        %v5730 = vld [vmem:[#allocation2 + $0x8c] sm:$0x2]
        %v5731 = vld [vmem:[#allocation2 + $0xac] sm:$0x2]
        %v5732 = vld [vmem:[#allocation2 + $0xcc] sm:$0x2]
        %v5733 = vld [vmem:[#allocation2 + $0xec] sm:$0x2]
        %s5734 = scalar_lea.vmem %s3, 1664
        %v5735 = vld [vmem:[%s5734] sm:$0xf]
        %v5736 = vld [vmem:[%s5734 + $0x4] sm:$0xf]
        %v5737 = vld [vmem:[%s5734 + $0x8] sm:$0xf]
        %v5738 = vld [vmem:[%s5734 + $0xc] sm:$0xf]
        %v5739 = vld [vmem:[%s5734 + $0x10] sm:$0xf]
        %v5740 = vld [vmem:[%s5734 + $0x14] sm:$0xf]
        %v5741 = vld [vmem:[%s5734 + $0x18] sm:$0xf]
        %v5742 = vld [vmem:[%s5734 + $0x1c] sm:$0xf]
        %v5743 = vld [vmem:[%s5734 + $0x20] sm:$0xf]
        %v5744 = vld [vmem:[%s5734 + $0x24] sm:$0xf]
        %v5745 = vld [vmem:[%s5734 + $0x28] sm:$0xf]
        %v5746 = vld [vmem:[%s5734 + $0x2c] sm:$0xf]
        %v5747 = vld [vmem:[%s5734 + $0x30] sm:$0xf]
        %v5748 = vld [vmem:[%s5734 + $0x34] sm:$0xf]
        %v5749 = vld [vmem:[%s5734 + $0x38] sm:$0xf]
        %v5750 = vld [vmem:[%s5734 + $0x3c] sm:$0xf]
        %v5759 = vunpack.c.l.b16 %v5726
        %v5760 = vunpack.c.l.b16 %v5727
        %v5761 = vunpack.c.l.b16 %v5728
        %v5762 = vunpack.c.l.b16 %v5729
        %v5763 = vunpack.c.l.b16 %v5730
        %v5764 = vunpack.c.l.b16 %v5731
        %v5765 = vunpack.c.l.b16 %v5732
        %v5766 = vunpack.c.l.b16 %v5733
        %v5767 = vpack.c.b16 %v5759, %v5759
        %v5768 = vpack.c.b16 %v5760, %v5760
        %v5769 = vpack.c.b16 %v5761, %v5761
        %v5770 = vpack.c.b16 %v5762, %v5762
        %v5771 = vpack.c.b16 %v5763, %v5763
        %v5772 = vpack.c.b16 %v5764, %v5764
        %v5773 = vpack.c.b16 %v5765, %v5765
        %v5774 = vpack.c.b16 %v5766, %v5766
        %v5775 = vunpack.c.l.b16 %v5767
        %v5776 = vunpack.c.l.b16 %v5768
        %v5777 = vunpack.c.l.b16 %v5769
        %v5778 = vunpack.c.l.b16 %v5770
        %v5779 = vunpack.c.l.b16 %v5771
        %v5780 = vunpack.c.l.b16 %v5772
        %v5781 = vunpack.c.l.b16 %v5773
        %v5782 = vunpack.c.l.b16 %v5774
        %v5783 = vrot.slane %v5775, 2
        %v5784 = vrot.slane %v5776, 1
        %v5785 = vsel %vm2104, %v5784, %v5783
        %v5786 = vsel %vm2107, %v5777, %v5785
        %v5787 = vrot.slane %v5778, 7
        %v5788 = vsel %vm2110, %v5787, %v5786
        %v5789 = vrot.slane %v5779, 6
        %v5790 = vsel %vm2113, %v5789, %v5788
        %v5791 = vrot.slane %v5780, 5
        %v5792 = vsel %vm2116, %v5791, %v5790
        %v5793 = vrot.slane %v5781, 4
        %v5794 = vsel %vm2119, %v5793, %v5792
        %v5795 = vrot.slane %v5782, 3
        %v5796 = vsel %vm2122, %v5795, %v5794
        %v5797 = vpack.c.b16 %v5796, %v5796
        %v5815 = vunpack.c.l.b16 %v5735
        %v5816 = vunpack.c.l.b16 %v5736
        %v5817 = vunpack.c.l.b16 %v5737
        %v5818 = vunpack.c.l.b16 %v5738
        %v5819 = vunpack.c.l.b16 %v5739
        %v5820 = vunpack.c.l.b16 %v5740
        %v5821 = vunpack.c.l.b16 %v5741
        %v5822 = vunpack.c.l.b16 %v5742
        %v5823 = vunpack.c.l.b16 %v5743
        %v5824 = vunpack.c.l.b16 %v5744
        %v5825 = vunpack.c.l.b16 %v5745
        %v5826 = vunpack.c.l.b16 %v5746
        %v5827 = vunpack.c.l.b16 %v5747
        %v5828 = vunpack.c.l.b16 %v5748
        %v5829 = vunpack.c.l.b16 %v5749
        %v5830 = vunpack.c.l.b16 %v5750
        %v5831 = vpack.c.b16 %v5816, %v5815
        %v5832 = vpack.c.b16 %v5818, %v5817
        %v5833 = vpack.c.b16 %v5820, %v5819
        %v5834 = vpack.c.b16 %v5822, %v5821
        %v5835 = vpack.c.b16 %v5824, %v5823
        %v5836 = vpack.c.b16 %v5826, %v5825
        %v5837 = vpack.c.b16 %v5828, %v5827
        %v5838 = vpack.c.b16 %v5830, %v5829
        %5847 = vmatprep.subr.bf16.mxu0 0
        %5848 = vmatpush1.bf16.msra.mxu0 %v5838
        %5849 = vmatprep.subr.bf16.mxu0 0
        %5850 = vmatpush1.bf16.msra.mxu0 %v5837
        %5851 = vmatprep.subr.bf16.mxu0 0
        %5852 = vmatpush1.bf16.msra.mxu0 %v5836
        %5853 = vmatprep.subr.bf16.mxu0 0
        %5854 = vmatpush1.bf16.msra.mxu0 %v5835
        %5855 = vmatprep.subr.bf16.mxu0 0
        %5856 = vmatpush1.bf16.msra.mxu0 %v5834
        %5857 = vmatprep.subr.bf16.mxu0 0
        %5858 = vmatpush1.bf16.msra.mxu0 %v5833
        %5859 = vmatprep.subr.bf16.mxu0 0
        %5860 = vmatpush1.bf16.msra.mxu0 %v5832
        %5861 = vmatprep.subr.bf16.mxu0 0
        %5862 = vmatpush1.bf16.msra.mxu0 %v5831
        %5863 = vmatprep.subr.bf16.mxu0 0
        %5864 = vmatpush2.bf16.msra.mxu0 0
        %5865 = vmatprep.subr.bf16.mxu0 0
        %5866 = vmatpush2.bf16.msra.mxu0 0
        %5867 = vmatprep.subr.bf16.mxu0 0
        %5868 = vmatpush2.bf16.msra.mxu0 0
        %5869 = vmatprep.subr.bf16.mxu0 0
        %5870 = vmatpush2.bf16.msra.mxu0 0
        %5871 = vmatprep.subr.bf16.mxu0 0
        %5872 = vmatpush2.bf16.msra.mxu0 0
        %5873 = vmatprep.subr.bf16.mxu0 0
        %5874 = vmatpush2.bf16.msra.mxu0 0
        %5875 = vmatprep.subr.bf16.mxu0 0
        %5876 = vmatpush2.bf16.msra.mxu0 0
        %5877 = vmatprep.subr.bf16.mxu0 0
        %5878 = vmatpush2.bf16.msra.mxu0 0
        %5879 = vmatprep.mubr.bf16.mxu0 0
        %5880 = vmatmul.mubr.bf16.gmra.mxu0 %v5797
        %v5881 = vpop.f32.mrf.mxu0
        %v5882 = vadd.f32 0.0, %v5881
        %v5883 = vpop.f32.mrf.mxu0
        %v5884 = vpop.f32.mrf.mxu0
        %v5885 = vpop.f32.mrf.mxu0
        %5886 = vdwg.mxu0
        %v5887 = vadd.f32 %v5725, %v5882
        %s5888 = scalar_lea.vmem %s3, 1728
        %v5889 = vld [vmem:[%s5888] sm:$0xf]
        %v5890 = vld [vmem:[%s5888 + $0x4] sm:$0xf]
        %v5891 = vld [vmem:[%s5888 + $0x8] sm:$0xf]
        %v5892 = vld [vmem:[%s5888 + $0xc] sm:$0xf]
        %v5893 = vld [vmem:[%s5888 + $0x10] sm:$0xf]
        %v5894 = vld [vmem:[%s5888 + $0x14] sm:$0xf]
        %v5895 = vld [vmem:[%s5888 + $0x18] sm:$0xf]
        %v5896 = vld [vmem:[%s5888 + $0x1c] sm:$0xf]
        %v5897 = vld [vmem:[%s5888 + $0x20] sm:$0xf]
        %v5898 = vld [vmem:[%s5888 + $0x24] sm:$0xf]
        %v5899 = vld [vmem:[%s5888 + $0x28] sm:$0xf]
        %v5900 = vld [vmem:[%s5888 + $0x2c] sm:$0xf]
        %v5901 = vld [vmem:[%s5888 + $0x30] sm:$0xf]
        %v5902 = vld [vmem:[%s5888 + $0x34] sm:$0xf]
        %v5903 = vld [vmem:[%s5888 + $0x38] sm:$0xf]
        %v5904 = vld [vmem:[%s5888 + $0x3c] sm:$0xf]
        %v5905 = vrot.slane %v5775, 3
        %v5906 = vrot.slane %v5776, 2
        %v5907 = vsel %vm2104, %v5906, %v5905
        %v5908 = vrot.slane %v5777, 1
        %v5909 = vsel %vm2107, %v5908, %v5907
        %v5910 = vsel %vm2110, %v5778, %v5909
        %v5911 = vrot.slane %v5779, 7
        %v5912 = vsel %vm2113, %v5911, %v5910
        %v5913 = vrot.slane %v5780, 6
        %v5914 = vsel %vm2116, %v5913, %v5912
        %v5915 = vrot.slane %v5781, 5
        %v5916 = vsel %vm2119, %v5915, %v5914
        %v5917 = vrot.slane %v5782, 4
        %v5918 = vsel %vm2122, %v5917, %v5916
        %v5919 = vpack.c.b16 %v5918, %v5918
        %v5937 = vunpack.c.l.b16 %v5889
        %v5938 = vunpack.c.l.b16 %v5890
        %v5939 = vunpack.c.l.b16 %v5891
        %v5940 = vunpack.c.l.b16 %v5892
        %v5941 = vunpack.c.l.b16 %v5893
        %v5942 = vunpack.c.l.b16 %v5894
        %v5943 = vunpack.c.l.b16 %v5895
        %v5944 = vunpack.c.l.b16 %v5896
        %v5945 = vunpack.c.l.b16 %v5897
        %v5946 = vunpack.c.l.b16 %v5898
        %v5947 = vunpack.c.l.b16 %v5899
        %v5948 = vunpack.c.l.b16 %v5900
        %v5949 = vunpack.c.l.b16 %v5901
        %v5950 = vunpack.c.l.b16 %v5902
        %v5951 = vunpack.c.l.b16 %v5903
        %v5952 = vunpack.c.l.b16 %v5904
        %v5953 = vpack.c.b16 %v5938, %v5937
        %v5954 = vpack.c.b16 %v5940, %v5939
        %v5955 = vpack.c.b16 %v5942, %v5941
        %v5956 = vpack.c.b16 %v5944, %v5943
        %v5957 = vpack.c.b16 %v5946, %v5945
        %v5958 = vpack.c.b16 %v5948, %v5947
        %v5959 = vpack.c.b16 %v5950, %v5949
        %v5960 = vpack.c.b16 %v5952, %v5951
        %5969 = vmatprep.subr.bf16.mxu0 0
        %5970 = vmatpush1.bf16.msra.mxu0 %v5960
        %5971 = vmatprep.subr.bf16.mxu0 0
        %5972 = vmatpush1.bf16.msra.mxu0 %v5959
        %5973 = vmatprep.subr.bf16.mxu0 0
        %5974 = vmatpush1.bf16.msra.mxu0 %v5958
        %5975 = vmatprep.subr.bf16.mxu0 0
        %5976 = vmatpush1.bf16.msra.mxu0 %v5957
        %5977 = vmatprep.subr.bf16.mxu0 0
        %5978 = vmatpush1.bf16.msra.mxu0 %v5956
        %5979 = vmatprep.subr.bf16.mxu0 0
        %5980 = vmatpush1.bf16.msra.mxu0 %v5955
        %5981 = vmatprep.subr.bf16.mxu0 0
        %5982 = vmatpush1.bf16.msra.mxu0 %v5954
        %5983 = vmatprep.subr.bf16.mxu0 0
        %5984 = vmatpush1.bf16.msra.mxu0 %v5953
        %5985 = vmatprep.subr.bf16.mxu0 0
        %5986 = vmatpush2.bf16.msra.mxu0 0
        %5987 = vmatprep.subr.bf16.mxu0 0
        %5988 = vmatpush2.bf16.msra.mxu0 0
        %5989 = vmatprep.subr.bf16.mxu0 0
        %5990 = vmatpush2.bf16.msra.mxu0 0
        %5991 = vmatprep.subr.bf16.mxu0 0
        %5992 = vmatpush2.bf16.msra.mxu0 0
        %5993 = vmatprep.subr.bf16.mxu0 0
        %5994 = vmatpush2.bf16.msra.mxu0 0
        %5995 = vmatprep.subr.bf16.mxu0 0
        %5996 = vmatpush2.bf16.msra.mxu0 0
        %5997 = vmatprep.subr.bf16.mxu0 0
        %5998 = vmatpush2.bf16.msra.mxu0 0
        %5999 = vmatprep.subr.bf16.mxu0 0
        %6000 = vmatpush2.bf16.msra.mxu0 0
        %6001 = vmatprep.mubr.bf16.mxu0 0
        %6002 = vmatmul.mubr.bf16.gmra.mxu0 %v5919
        %v6003 = vpop.f32.mrf.mxu0
        %v6004 = vadd.f32 0.0, %v6003
        %v6005 = vpop.f32.mrf.mxu0
        %v6006 = vpop.f32.mrf.mxu0
        %v6007 = vpop.f32.mrf.mxu0
        %6008 = vdwg.mxu0
        %v6009 = vadd.f32 %v5887, %v6004
        %v6010 = vld [vmem:[#allocation2 + $0xc] sm:$0x4]
        %v6011 = vld [vmem:[#allocation2 + $0x2c] sm:$0x4]
        %v6012 = vld [vmem:[#allocation2 + $0x4c] sm:$0x4]
        %v6013 = vld [vmem:[#allocation2 + $0x6c] sm:$0x4]
        %v6014 = vld [vmem:[#allocation2 + $0x8c] sm:$0x4]
        %v6015 = vld [vmem:[#allocation2 + $0xac] sm:$0x4]
        %v6016 = vld [vmem:[#allocation2 + $0xcc] sm:$0x4]
        %v6017 = vld [vmem:[#allocation2 + $0xec] sm:$0x4]
        %s6018 = scalar_lea.vmem %s3, 1792
        %v6019 = vld [vmem:[%s6018] sm:$0xf]
        %v6020 = vld [vmem:[%s6018 + $0x4] sm:$0xf]
        %v6021 = vld [vmem:[%s6018 + $0x8] sm:$0xf]
        %v6022 = vld [vmem:[%s6018 + $0xc] sm:$0xf]
        %v6023 = vld [vmem:[%s6018 + $0x10] sm:$0xf]
        %v6024 = vld [vmem:[%s6018 + $0x14] sm:$0xf]
        %v6025 = vld [vmem:[%s6018 + $0x18] sm:$0xf]
        %v6026 = vld [vmem:[%s6018 + $0x1c] sm:$0xf]
        %v6027 = vld [vmem:[%s6018 + $0x20] sm:$0xf]
        %v6028 = vld [vmem:[%s6018 + $0x24] sm:$0xf]
        %v6029 = vld [vmem:[%s6018 + $0x28] sm:$0xf]
        %v6030 = vld [vmem:[%s6018 + $0x2c] sm:$0xf]
        %v6031 = vld [vmem:[%s6018 + $0x30] sm:$0xf]
        %v6032 = vld [vmem:[%s6018 + $0x34] sm:$0xf]
        %v6033 = vld [vmem:[%s6018 + $0x38] sm:$0xf]
        %v6034 = vld [vmem:[%s6018 + $0x3c] sm:$0xf]
        %v6043 = vunpack.c.l.b16 %v6010
        %v6044 = vunpack.c.l.b16 %v6011
        %v6045 = vunpack.c.l.b16 %v6012
        %v6046 = vunpack.c.l.b16 %v6013
        %v6047 = vunpack.c.l.b16 %v6014
        %v6048 = vunpack.c.l.b16 %v6015
        %v6049 = vunpack.c.l.b16 %v6016
        %v6050 = vunpack.c.l.b16 %v6017
        %v6051 = vpack.c.b16 %v6043, %v6043
        %v6052 = vpack.c.b16 %v6044, %v6044
        %v6053 = vpack.c.b16 %v6045, %v6045
        %v6054 = vpack.c.b16 %v6046, %v6046
        %v6055 = vpack.c.b16 %v6047, %v6047
        %v6056 = vpack.c.b16 %v6048, %v6048
        %v6057 = vpack.c.b16 %v6049, %v6049
        %v6058 = vpack.c.b16 %v6050, %v6050
        %v6059 = vunpack.c.l.b16 %v6051
        %v6060 = vunpack.c.l.b16 %v6052
        %v6061 = vunpack.c.l.b16 %v6053
        %v6062 = vunpack.c.l.b16 %v6054
        %v6063 = vunpack.c.l.b16 %v6055
        %v6064 = vunpack.c.l.b16 %v6056
        %v6065 = vunpack.c.l.b16 %v6057
        %v6066 = vunpack.c.l.b16 %v6058
        %v6067 = vrot.slane %v6059, 4
        %v6068 = vrot.slane %v6060, 3
        %v6069 = vsel %vm2104, %v6068, %v6067
        %v6070 = vrot.slane %v6061, 2
        %v6071 = vsel %vm2107, %v6070, %v6069
        %v6072 = vrot.slane %v6062, 1
        %v6073 = vsel %vm2110, %v6072, %v6071
        %v6074 = vsel %vm2113, %v6063, %v6073
        %v6075 = vrot.slane %v6064, 7
        %v6076 = vsel %vm2116, %v6075, %v6074
        %v6077 = vrot.slane %v6065, 6
        %v6078 = vsel %vm2119, %v6077, %v6076
        %v6079 = vrot.slane %v6066, 5
        %v6080 = vsel %vm2122, %v6079, %v6078
        %v6081 = vpack.c.b16 %v6080, %v6080
        %v6099 = vunpack.c.l.b16 %v6019
        %v6100 = vunpack.c.l.b16 %v6020
        %v6101 = vunpack.c.l.b16 %v6021
        %v6102 = vunpack.c.l.b16 %v6022
        %v6103 = vunpack.c.l.b16 %v6023
        %v6104 = vunpack.c.l.b16 %v6024
        %v6105 = vunpack.c.l.b16 %v6025
        %v6106 = vunpack.c.l.b16 %v6026
        %v6107 = vunpack.c.l.b16 %v6027
        %v6108 = vunpack.c.l.b16 %v6028
        %v6109 = vunpack.c.l.b16 %v6029
        %v6110 = vunpack.c.l.b16 %v6030
        %v6111 = vunpack.c.l.b16 %v6031
        %v6112 = vunpack.c.l.b16 %v6032
        %v6113 = vunpack.c.l.b16 %v6033
        %v6114 = vunpack.c.l.b16 %v6034
        %v6115 = vpack.c.b16 %v6100, %v6099
        %v6116 = vpack.c.b16 %v6102, %v6101
        %v6117 = vpack.c.b16 %v6104, %v6103
        %v6118 = vpack.c.b16 %v6106, %v6105
        %v6119 = vpack.c.b16 %v6108, %v6107
        %v6120 = vpack.c.b16 %v6110, %v6109
        %v6121 = vpack.c.b16 %v6112, %v6111
        %v6122 = vpack.c.b16 %v6114, %v6113
        %6131 = vmatprep.subr.bf16.mxu0 0
        %6132 = vmatpush1.bf16.msra.mxu0 %v6122
        %6133 = vmatprep.subr.bf16.mxu0 0
        %6134 = vmatpush1.bf16.msra.mxu0 %v6121
        %6135 = vmatprep.subr.bf16.mxu0 0
        %6136 = vmatpush1.bf16.msra.mxu0 %v6120
        %6137 = vmatprep.subr.bf16.mxu0 0
        %6138 = vmatpush1.bf16.msra.mxu0 %v6119
        %6139 = vmatprep.subr.bf16.mxu0 0
        %6140 = vmatpush1.bf16.msra.mxu0 %v6118
        %6141 = vmatprep.subr.bf16.mxu0 0
        %6142 = vmatpush1.bf16.msra.mxu0 %v6117
        %6143 = vmatprep.subr.bf16.mxu0 0
        %6144 = vmatpush1.bf16.msra.mxu0 %v6116
        %6145 = vmatprep.subr.bf16.mxu0 0
        %6146 = vmatpush1.bf16.msra.mxu0 %v6115
        %6147 = vmatprep.subr.bf16.mxu0 0
        %6148 = vmatpush2.bf16.msra.mxu0 0
        %6149 = vmatprep.subr.bf16.mxu0 0
        %6150 = vmatpush2.bf16.msra.mxu0 0
        %6151 = vmatprep.subr.bf16.mxu0 0
        %6152 = vmatpush2.bf16.msra.mxu0 0
        %6153 = vmatprep.subr.bf16.mxu0 0
        %6154 = vmatpush2.bf16.msra.mxu0 0
        %6155 = vmatprep.subr.bf16.mxu0 0
        %6156 = vmatpush2.bf16.msra.mxu0 0
        %6157 = vmatprep.subr.bf16.mxu0 0
        %6158 = vmatpush2.bf16.msra.mxu0 0
        %6159 = vmatprep.subr.bf16.mxu0 0
        %6160 = vmatpush2.bf16.msra.mxu0 0
        %6161 = vmatprep.subr.bf16.mxu0 0
        %6162 = vmatpush2.bf16.msra.mxu0 0
        %6163 = vmatprep.mubr.bf16.mxu0 0
        %6164 = vmatmul.mubr.bf16.gmra.mxu0 %v6081
        %v6165 = vpop.f32.mrf.mxu0
        %v6166 = vadd.f32 0.0, %v6165
        %v6167 = vpop.f32.mrf.mxu0
        %v6168 = vpop.f32.mrf.mxu0
        %v6169 = vpop.f32.mrf.mxu0
        %6170 = vdwg.mxu0
        %v6171 = vadd.f32 %v6009, %v6166
        %s6172 = scalar_lea.vmem %s3, 1856
        %v6173 = vld [vmem:[%s6172] sm:$0xf]
        %v6174 = vld [vmem:[%s6172 + $0x4] sm:$0xf]
        %v6175 = vld [vmem:[%s6172 + $0x8] sm:$0xf]
        %v6176 = vld [vmem:[%s6172 + $0xc] sm:$0xf]
        %v6177 = vld [vmem:[%s6172 + $0x10] sm:$0xf]
        %v6178 = vld [vmem:[%s6172 + $0x14] sm:$0xf]
        %v6179 = vld [vmem:[%s6172 + $0x18] sm:$0xf]
        %v6180 = vld [vmem:[%s6172 + $0x1c] sm:$0xf]
        %v6181 = vld [vmem:[%s6172 + $0x20] sm:$0xf]
        %v6182 = vld [vmem:[%s6172 + $0x24] sm:$0xf]
        %v6183 = vld [vmem:[%s6172 + $0x28] sm:$0xf]
        %v6184 = vld [vmem:[%s6172 + $0x2c] sm:$0xf]
        %v6185 = vld [vmem:[%s6172 + $0x30] sm:$0xf]
        %v6186 = vld [vmem:[%s6172 + $0x34] sm:$0xf]
        %v6187 = vld [vmem:[%s6172 + $0x38] sm:$0xf]
        %v6188 = vld [vmem:[%s6172 + $0x3c] sm:$0xf]
        %v6189 = vrot.slane %v6059, 5
        %v6190 = vrot.slane %v6060, 4
        %v6191 = vsel %vm2104, %v6190, %v6189
        %v6192 = vrot.slane %v6061, 3
        %v6193 = vsel %vm2107, %v6192, %v6191
        %v6194 = vrot.slane %v6062, 2
        %v6195 = vsel %vm2110, %v6194, %v6193
        %v6196 = vrot.slane %v6063, 1
        %v6197 = vsel %vm2113, %v6196, %v6195
        %v6198 = vsel %vm2116, %v6064, %v6197
        %v6199 = vrot.slane %v6065, 7
        %v6200 = vsel %vm2119, %v6199, %v6198
        %v6201 = vrot.slane %v6066, 6
        %v6202 = vsel %vm2122, %v6201, %v6200
        %v6203 = vpack.c.b16 %v6202, %v6202
        %v6221 = vunpack.c.l.b16 %v6173
        %v6222 = vunpack.c.l.b16 %v6174
        %v6223 = vunpack.c.l.b16 %v6175
        %v6224 = vunpack.c.l.b16 %v6176
        %v6225 = vunpack.c.l.b16 %v6177
        %v6226 = vunpack.c.l.b16 %v6178
        %v6227 = vunpack.c.l.b16 %v6179
        %v6228 = vunpack.c.l.b16 %v6180
        %v6229 = vunpack.c.l.b16 %v6181
        %v6230 = vunpack.c.l.b16 %v6182
        %v6231 = vunpack.c.l.b16 %v6183
        %v6232 = vunpack.c.l.b16 %v6184
        %v6233 = vunpack.c.l.b16 %v6185
        %v6234 = vunpack.c.l.b16 %v6186
        %v6235 = vunpack.c.l.b16 %v6187
        %v6236 = vunpack.c.l.b16 %v6188
        %v6237 = vpack.c.b16 %v6222, %v6221
        %v6238 = vpack.c.b16 %v6224, %v6223
        %v6239 = vpack.c.b16 %v6226, %v6225
        %v6240 = vpack.c.b16 %v6228, %v6227
        %v6241 = vpack.c.b16 %v6230, %v6229
        %v6242 = vpack.c.b16 %v6232, %v6231
        %v6243 = vpack.c.b16 %v6234, %v6233
        %v6244 = vpack.c.b16 %v6236, %v6235
        %6253 = vmatprep.subr.bf16.mxu0 0
        %6254 = vmatpush1.bf16.msra.mxu0 %v6244
        %6255 = vmatprep.subr.bf16.mxu0 0
        %6256 = vmatpush1.bf16.msra.mxu0 %v6243
        %6257 = vmatprep.subr.bf16.mxu0 0
        %6258 = vmatpush1.bf16.msra.mxu0 %v6242
        %6259 = vmatprep.subr.bf16.mxu0 0
        %6260 = vmatpush1.bf16.msra.mxu0 %v6241
        %6261 = vmatprep.subr.bf16.mxu0 0
        %6262 = vmatpush1.bf16.msra.mxu0 %v6240
        %6263 = vmatprep.subr.bf16.mxu0 0
        %6264 = vmatpush1.bf16.msra.mxu0 %v6239
        %6265 = vmatprep.subr.bf16.mxu0 0
        %6266 = vmatpush1.bf16.msra.mxu0 %v6238
        %6267 = vmatprep.subr.bf16.mxu0 0
        %6268 = vmatpush1.bf16.msra.mxu0 %v6237
        %6269 = vmatprep.subr.bf16.mxu0 0
        %6270 = vmatpush2.bf16.msra.mxu0 0
        %6271 = vmatprep.subr.bf16.mxu0 0
        %6272 = vmatpush2.bf16.msra.mxu0 0
        %6273 = vmatprep.subr.bf16.mxu0 0
        %6274 = vmatpush2.bf16.msra.mxu0 0
        %6275 = vmatprep.subr.bf16.mxu0 0
        %6276 = vmatpush2.bf16.msra.mxu0 0
        %6277 = vmatprep.subr.bf16.mxu0 0
        %6278 = vmatpush2.bf16.msra.mxu0 0
        %6279 = vmatprep.subr.bf16.mxu0 0
        %6280 = vmatpush2.bf16.msra.mxu0 0
        %6281 = vmatprep.subr.bf16.mxu0 0
        %6282 = vmatpush2.bf16.msra.mxu0 0
        %6283 = vmatprep.subr.bf16.mxu0 0
        %6284 = vmatpush2.bf16.msra.mxu0 0
        %6285 = vmatprep.mubr.bf16.mxu0 0
        %6286 = vmatmul.mubr.bf16.gmra.mxu0 %v6203
        %v6287 = vpop.f32.mrf.mxu0
        %v6288 = vadd.f32 0.0, %v6287
        %v6289 = vpop.f32.mrf.mxu0
        %v6290 = vpop.f32.mrf.mxu0
        %v6291 = vpop.f32.mrf.mxu0
        %6292 = vdwg.mxu0
        %v6293 = vadd.f32 %v6171, %v6288
        %v6294 = vld [vmem:[#allocation2 + $0xc] sm:$0x8]
        %v6295 = vld [vmem:[#allocation2 + $0x2c] sm:$0x8]
        %v6296 = vld [vmem:[#allocation2 + $0x4c] sm:$0x8]
        %v6297 = vld [vmem:[#allocation2 + $0x6c] sm:$0x8]
        %v6298 = vld [vmem:[#allocation2 + $0x8c] sm:$0x8]
        %v6299 = vld [vmem:[#allocation2 + $0xac] sm:$0x8]
        %v6300 = vld [vmem:[#allocation2 + $0xcc] sm:$0x8]
        %v6301 = vld [vmem:[#allocation2 + $0xec] sm:$0x8]
        %s6302 = scalar_lea.vmem %s3, 1920
        %v6303 = vld [vmem:[%s6302] sm:$0xf]
        %v6304 = vld [vmem:[%s6302 + $0x4] sm:$0xf]
        %v6305 = vld [vmem:[%s6302 + $0x8] sm:$0xf]
        %v6306 = vld [vmem:[%s6302 + $0xc] sm:$0xf]
        %v6307 = vld [vmem:[%s6302 + $0x10] sm:$0xf]
        %v6308 = vld [vmem:[%s6302 + $0x14] sm:$0xf]
        %v6309 = vld [vmem:[%s6302 + $0x18] sm:$0xf]
        %v6310 = vld [vmem:[%s6302 + $0x1c] sm:$0xf]
        %v6311 = vld [vmem:[%s6302 + $0x20] sm:$0xf]
        %v6312 = vld [vmem:[%s6302 + $0x24] sm:$0xf]
        %v6313 = vld [vmem:[%s6302 + $0x28] sm:$0xf]
        %v6314 = vld [vmem:[%s6302 + $0x2c] sm:$0xf]
        %v6315 = vld [vmem:[%s6302 + $0x30] sm:$0xf]
        %v6316 = vld [vmem:[%s6302 + $0x34] sm:$0xf]
        %v6317 = vld [vmem:[%s6302 + $0x38] sm:$0xf]
        %v6318 = vld [vmem:[%s6302 + $0x3c] sm:$0xf]
        %v6327 = vunpack.c.l.b16 %v6294
        %v6328 = vunpack.c.l.b16 %v6295
        %v6329 = vunpack.c.l.b16 %v6296
        %v6330 = vunpack.c.l.b16 %v6297
        %v6331 = vunpack.c.l.b16 %v6298
        %v6332 = vunpack.c.l.b16 %v6299
        %v6333 = vunpack.c.l.b16 %v6300
        %v6334 = vunpack.c.l.b16 %v6301
        %v6335 = vpack.c.b16 %v6327, %v6327
        %v6336 = vpack.c.b16 %v6328, %v6328
        %v6337 = vpack.c.b16 %v6329, %v6329
        %v6338 = vpack.c.b16 %v6330, %v6330
        %v6339 = vpack.c.b16 %v6331, %v6331
        %v6340 = vpack.c.b16 %v6332, %v6332
        %v6341 = vpack.c.b16 %v6333, %v6333
        %v6342 = vpack.c.b16 %v6334, %v6334
        %v6343 = vunpack.c.l.b16 %v6335
        %v6344 = vunpack.c.l.b16 %v6336
        %v6345 = vunpack.c.l.b16 %v6337
        %v6346 = vunpack.c.l.b16 %v6338
        %v6347 = vunpack.c.l.b16 %v6339
        %v6348 = vunpack.c.l.b16 %v6340
        %v6349 = vunpack.c.l.b16 %v6341
        %v6350 = vunpack.c.l.b16 %v6342
        %v6351 = vrot.slane %v6343, 6
        %v6352 = vrot.slane %v6344, 5
        %v6353 = vsel %vm2104, %v6352, %v6351
        %v6354 = vrot.slane %v6345, 4
        %v6355 = vsel %vm2107, %v6354, %v6353
        %v6356 = vrot.slane %v6346, 3
        %v6357 = vsel %vm2110, %v6356, %v6355
        %v6358 = vrot.slane %v6347, 2
        %v6359 = vsel %vm2113, %v6358, %v6357
        %v6360 = vrot.slane %v6348, 1
        %v6361 = vsel %vm2116, %v6360, %v6359
        %v6362 = vsel %vm2119, %v6349, %v6361
        %v6363 = vrot.slane %v6350, 7
        %v6364 = vsel %vm2122, %v6363, %v6362
        %v6365 = vpack.c.b16 %v6364, %v6364
        %v6383 = vunpack.c.l.b16 %v6303
        %v6384 = vunpack.c.l.b16 %v6304
        %v6385 = vunpack.c.l.b16 %v6305
        %v6386 = vunpack.c.l.b16 %v6306
        %v6387 = vunpack.c.l.b16 %v6307
        %v6388 = vunpack.c.l.b16 %v6308
        %v6389 = vunpack.c.l.b16 %v6309
        %v6390 = vunpack.c.l.b16 %v6310
        %v6391 = vunpack.c.l.b16 %v6311
        %v6392 = vunpack.c.l.b16 %v6312
        %v6393 = vunpack.c.l.b16 %v6313
        %v6394 = vunpack.c.l.b16 %v6314
        %v6395 = vunpack.c.l.b16 %v6315
        %v6396 = vunpack.c.l.b16 %v6316
        %v6397 = vunpack.c.l.b16 %v6317
        %v6398 = vunpack.c.l.b16 %v6318
        %v6399 = vpack.c.b16 %v6384, %v6383
        %v6400 = vpack.c.b16 %v6386, %v6385
        %v6401 = vpack.c.b16 %v6388, %v6387
        %v6402 = vpack.c.b16 %v6390, %v6389
        %v6403 = vpack.c.b16 %v6392, %v6391
        %v6404 = vpack.c.b16 %v6394, %v6393
        %v6405 = vpack.c.b16 %v6396, %v6395
        %v6406 = vpack.c.b16 %v6398, %v6397
        %6415 = vmatprep.subr.bf16.mxu0 0
        %6416 = vmatpush1.bf16.msra.mxu0 %v6406
        %6417 = vmatprep.subr.bf16.mxu0 0
        %6418 = vmatpush1.bf16.msra.mxu0 %v6405
        %6419 = vmatprep.subr.bf16.mxu0 0
        %6420 = vmatpush1.bf16.msra.mxu0 %v6404
        %6421 = vmatprep.subr.bf16.mxu0 0
        %6422 = vmatpush1.bf16.msra.mxu0 %v6403
        %6423 = vmatprep.subr.bf16.mxu0 0
        %6424 = vmatpush1.bf16.msra.mxu0 %v6402
        %6425 = vmatprep.subr.bf16.mxu0 0
        %6426 = vmatpush1.bf16.msra.mxu0 %v6401
        %6427 = vmatprep.subr.bf16.mxu0 0
        %6428 = vmatpush1.bf16.msra.mxu0 %v6400
        %6429 = vmatprep.subr.bf16.mxu0 0
        %6430 = vmatpush1.bf16.msra.mxu0 %v6399
        %6431 = vmatprep.subr.bf16.mxu0 0
        %6432 = vmatpush2.bf16.msra.mxu0 0
        %6433 = vmatprep.subr.bf16.mxu0 0
        %6434 = vmatpush2.bf16.msra.mxu0 0
        %6435 = vmatprep.subr.bf16.mxu0 0
        %6436 = vmatpush2.bf16.msra.mxu0 0
        %6437 = vmatprep.subr.bf16.mxu0 0
        %6438 = vmatpush2.bf16.msra.mxu0 0
        %6439 = vmatprep.subr.bf16.mxu0 0
        %6440 = vmatpush2.bf16.msra.mxu0 0
        %6441 = vmatprep.subr.bf16.mxu0 0
        %6442 = vmatpush2.bf16.msra.mxu0 0
        %6443 = vmatprep.subr.bf16.mxu0 0
        %6444 = vmatpush2.bf16.msra.mxu0 0
        %6445 = vmatprep.subr.bf16.mxu0 0
        %6446 = vmatpush2.bf16.msra.mxu0 0
        %6447 = vmatprep.mubr.bf16.mxu0 0
        %6448 = vmatmul.mubr.bf16.gmra.mxu0 %v6365
        %v6449 = vpop.f32.mrf.mxu0
        %v6450 = vadd.f32 0.0, %v6449
        %v6451 = vpop.f32.mrf.mxu0
        %v6452 = vpop.f32.mrf.mxu0
        %v6453 = vpop.f32.mrf.mxu0
        %6454 = vdwg.mxu0
        %v6455 = vadd.f32 %v6293, %v6450
        %s6456 = scalar_lea.vmem %s3, 1984
        %v6457 = vld [vmem:[%s6456] sm:$0xf]
        %v6458 = vld [vmem:[%s6456 + $0x4] sm:$0xf]
        %v6459 = vld [vmem:[%s6456 + $0x8] sm:$0xf]
        %v6460 = vld [vmem:[%s6456 + $0xc] sm:$0xf]
        %v6461 = vld [vmem:[%s6456 + $0x10] sm:$0xf]
        %v6462 = vld [vmem:[%s6456 + $0x14] sm:$0xf]
        %v6463 = vld [vmem:[%s6456 + $0x18] sm:$0xf]
        %v6464 = vld [vmem:[%s6456 + $0x1c] sm:$0xf]
        %v6465 = vld [vmem:[%s6456 + $0x20] sm:$0xf]
        %v6466 = vld [vmem:[%s6456 + $0x24] sm:$0xf]
        %v6467 = vld [vmem:[%s6456 + $0x28] sm:$0xf]
        %v6468 = vld [vmem:[%s6456 + $0x2c] sm:$0xf]
        %v6469 = vld [vmem:[%s6456 + $0x30] sm:$0xf]
        %v6470 = vld [vmem:[%s6456 + $0x34] sm:$0xf]
        %v6471 = vld [vmem:[%s6456 + $0x38] sm:$0xf]
        %v6472 = vld [vmem:[%s6456 + $0x3c] sm:$0xf]
        %v6473 = vrot.slane %v6343, 7
        %v6474 = vrot.slane %v6344, 6
        %v6475 = vsel %vm2104, %v6474, %v6473
        %v6476 = vrot.slane %v6345, 5
        %v6477 = vsel %vm2107, %v6476, %v6475
        %v6478 = vrot.slane %v6346, 4
        %v6479 = vsel %vm2110, %v6478, %v6477
        %v6480 = vrot.slane %v6347, 3
        %v6481 = vsel %vm2113, %v6480, %v6479
        %v6482 = vrot.slane %v6348, 2
        %v6483 = vsel %vm2116, %v6482, %v6481
        %v6484 = vrot.slane %v6349, 1
        %v6485 = vsel %vm2119, %v6484, %v6483
        %v6486 = vsel %vm2122, %v6350, %v6485
        %v6487 = vpack.c.b16 %v6486, %v6486
        %v6505 = vunpack.c.l.b16 %v6457
        %v6506 = vunpack.c.l.b16 %v6458
        %v6507 = vunpack.c.l.b16 %v6459
        %v6508 = vunpack.c.l.b16 %v6460
        %v6509 = vunpack.c.l.b16 %v6461
        %v6510 = vunpack.c.l.b16 %v6462
        %v6511 = vunpack.c.l.b16 %v6463
        %v6512 = vunpack.c.l.b16 %v6464
        %v6513 = vunpack.c.l.b16 %v6465
        %v6514 = vunpack.c.l.b16 %v6466
        %v6515 = vunpack.c.l.b16 %v6467
        %v6516 = vunpack.c.l.b16 %v6468
        %v6517 = vunpack.c.l.b16 %v6469
        %v6518 = vunpack.c.l.b16 %v6470
        %v6519 = vunpack.c.l.b16 %v6471
        %v6520 = vunpack.c.l.b16 %v6472
        %v6521 = vpack.c.b16 %v6506, %v6505
        %v6522 = vpack.c.b16 %v6508, %v6507
        %v6523 = vpack.c.b16 %v6510, %v6509
        %v6524 = vpack.c.b16 %v6512, %v6511
        %v6525 = vpack.c.b16 %v6514, %v6513
        %v6526 = vpack.c.b16 %v6516, %v6515
        %v6527 = vpack.c.b16 %v6518, %v6517
        %v6528 = vpack.c.b16 %v6520, %v6519
        %6537 = vmatprep.subr.bf16.mxu0 0
        %6538 = vmatpush1.bf16.msra.mxu0 %v6528
        %6539 = vmatprep.subr.bf16.mxu0 0
        %6540 = vmatpush1.bf16.msra.mxu0 %v6527
        %6541 = vmatprep.subr.bf16.mxu0 0
        %6542 = vmatpush1.bf16.msra.mxu0 %v6526
        %6543 = vmatprep.subr.bf16.mxu0 0
        %6544 = vmatpush1.bf16.msra.mxu0 %v6525
        %6545 = vmatprep.subr.bf16.mxu0 0
        %6546 = vmatpush1.bf16.msra.mxu0 %v6524
        %6547 = vmatprep.subr.bf16.mxu0 0
        %6548 = vmatpush1.bf16.msra.mxu0 %v6523
        %6549 = vmatprep.subr.bf16.mxu0 0
        %6550 = vmatpush1.bf16.msra.mxu0 %v6522
        %6551 = vmatprep.subr.bf16.mxu0 0
        %6552 = vmatpush1.bf16.msra.mxu0 %v6521
        %6553 = vmatprep.subr.bf16.mxu0 0
        %6554 = vmatpush2.bf16.msra.mxu0 0
        %6555 = vmatprep.subr.bf16.mxu0 0
        %6556 = vmatpush2.bf16.msra.mxu0 0
        %6557 = vmatprep.subr.bf16.mxu0 0
        %6558 = vmatpush2.bf16.msra.mxu0 0
        %6559 = vmatprep.subr.bf16.mxu0 0
        %6560 = vmatpush2.bf16.msra.mxu0 0
        %6561 = vmatprep.subr.bf16.mxu0 0
        %6562 = vmatpush2.bf16.msra.mxu0 0
        %6563 = vmatprep.subr.bf16.mxu0 0
        %6564 = vmatpush2.bf16.msra.mxu0 0
        %6565 = vmatprep.subr.bf16.mxu0 0
        %6566 = vmatpush2.bf16.msra.mxu0 0
        %6567 = vmatprep.subr.bf16.mxu0 0
        %6568 = vmatpush2.bf16.msra.mxu0 0
        %6569 = vmatprep.mubr.bf16.mxu0 0
        %6570 = vmatmul.mubr.bf16.gmra.mxu0 %v6487
        %v6571 = vpop.f32.mrf.mxu0
        %v6572 = vadd.f32 0.0, %v6571
        %v6573 = vpop.f32.mrf.mxu0
        %v6574 = vpop.f32.mrf.mxu0
        %v6575 = vpop.f32.mrf.mxu0
        %6576 = vdwg.mxu0
        %v6577 = vadd.f32 %v6455, %v6572
        %v6578 = vld [vmem:[#allocation2 + $0x10] sm:$0x1]
        %v6579 = vld [vmem:[#allocation2 + $0x30] sm:$0x1]
        %v6580 = vld [vmem:[#allocation2 + $0x50] sm:$0x1]
        %v6581 = vld [vmem:[#allocation2 + $0x70] sm:$0x1]
        %v6582 = vld [vmem:[#allocation2 + $0x90] sm:$0x1]
        %v6583 = vld [vmem:[#allocation2 + $0xb0] sm:$0x1]
        %v6584 = vld [vmem:[#allocation2 + $0xd0] sm:$0x1]
        %v6585 = vld [vmem:[#allocation2 + $0xf0] sm:$0x1]
        %s6586 = scalar_lea.vmem %s3, 2048
        %v6587 = vld [vmem:[%s6586] sm:$0xf]
        %v6588 = vld [vmem:[%s6586 + $0x4] sm:$0xf]
        %v6589 = vld [vmem:[%s6586 + $0x8] sm:$0xf]
        %v6590 = vld [vmem:[%s6586 + $0xc] sm:$0xf]
        %v6591 = vld [vmem:[%s6586 + $0x10] sm:$0xf]
        %v6592 = vld [vmem:[%s6586 + $0x14] sm:$0xf]
        %v6593 = vld [vmem:[%s6586 + $0x18] sm:$0xf]
        %v6594 = vld [vmem:[%s6586 + $0x1c] sm:$0xf]
        %v6595 = vld [vmem:[%s6586 + $0x20] sm:$0xf]
        %v6596 = vld [vmem:[%s6586 + $0x24] sm:$0xf]
        %v6597 = vld [vmem:[%s6586 + $0x28] sm:$0xf]
        %v6598 = vld [vmem:[%s6586 + $0x2c] sm:$0xf]
        %v6599 = vld [vmem:[%s6586 + $0x30] sm:$0xf]
        %v6600 = vld [vmem:[%s6586 + $0x34] sm:$0xf]
        %v6601 = vld [vmem:[%s6586 + $0x38] sm:$0xf]
        %v6602 = vld [vmem:[%s6586 + $0x3c] sm:$0xf]
        %v6611 = vunpack.c.l.b16 %v6578
        %v6612 = vunpack.c.l.b16 %v6579
        %v6613 = vunpack.c.l.b16 %v6580
        %v6614 = vunpack.c.l.b16 %v6581
        %v6615 = vunpack.c.l.b16 %v6582
        %v6616 = vunpack.c.l.b16 %v6583
        %v6617 = vunpack.c.l.b16 %v6584
        %v6618 = vunpack.c.l.b16 %v6585
        %v6619 = vpack.c.b16 %v6611, %v6611
        %v6620 = vpack.c.b16 %v6612, %v6612
        %v6621 = vpack.c.b16 %v6613, %v6613
        %v6622 = vpack.c.b16 %v6614, %v6614
        %v6623 = vpack.c.b16 %v6615, %v6615
        %v6624 = vpack.c.b16 %v6616, %v6616
        %v6625 = vpack.c.b16 %v6617, %v6617
        %v6626 = vpack.c.b16 %v6618, %v6618
        %v6627 = vunpack.c.l.b16 %v6619
        %v6628 = vunpack.c.l.b16 %v6620
        %v6629 = vunpack.c.l.b16 %v6621
        %v6630 = vunpack.c.l.b16 %v6622
        %v6631 = vunpack.c.l.b16 %v6623
        %v6632 = vunpack.c.l.b16 %v6624
        %v6633 = vunpack.c.l.b16 %v6625
        %v6634 = vunpack.c.l.b16 %v6626
        %v6635 = vrot.slane %v6628, 7
        %v6636 = vsel %vm2104, %v6635, %v6627
        %v6637 = vrot.slane %v6629, 6
        %v6638 = vsel %vm2107, %v6637, %v6636
        %v6639 = vrot.slane %v6630, 5
        %v6640 = vsel %vm2110, %v6639, %v6638
        %v6641 = vrot.slane %v6631, 4
        %v6642 = vsel %vm2113, %v6641, %v6640
        %v6643 = vrot.slane %v6632, 3
        %v6644 = vsel %vm2116, %v6643, %v6642
        %v6645 = vrot.slane %v6633, 2
        %v6646 = vsel %vm2119, %v6645, %v6644
        %v6647 = vrot.slane %v6634, 1
        %v6648 = vsel %vm2122, %v6647, %v6646
        %v6649 = vpack.c.b16 %v6648, %v6648
        %v6667 = vunpack.c.l.b16 %v6587
        %v6668 = vunpack.c.l.b16 %v6588
        %v6669 = vunpack.c.l.b16 %v6589
        %v6670 = vunpack.c.l.b16 %v6590
        %v6671 = vunpack.c.l.b16 %v6591
        %v6672 = vunpack.c.l.b16 %v6592
        %v6673 = vunpack.c.l.b16 %v6593
        %v6674 = vunpack.c.l.b16 %v6594
        %v6675 = vunpack.c.l.b16 %v6595
        %v6676 = vunpack.c.l.b16 %v6596
        %v6677 = vunpack.c.l.b16 %v6597
        %v6678 = vunpack.c.l.b16 %v6598
        %v6679 = vunpack.c.l.b16 %v6599
        %v6680 = vunpack.c.l.b16 %v6600
        %v6681 = vunpack.c.l.b16 %v6601
        %v6682 = vunpack.c.l.b16 %v6602
        %v6683 = vpack.c.b16 %v6668, %v6667
        %v6684 = vpack.c.b16 %v6670, %v6669
        %v6685 = vpack.c.b16 %v6672, %v6671
        %v6686 = vpack.c.b16 %v6674, %v6673
        %v6687 = vpack.c.b16 %v6676, %v6675
        %v6688 = vpack.c.b16 %v6678, %v6677
        %v6689 = vpack.c.b16 %v6680, %v6679
        %v6690 = vpack.c.b16 %v6682, %v6681
        %6699 = vmatprep.subr.bf16.mxu0 0
        %6700 = vmatpush1.bf16.msra.mxu0 %v6690
        %6701 = vmatprep.subr.bf16.mxu0 0
        %6702 = vmatpush1.bf16.msra.mxu0 %v6689
        %6703 = vmatprep.subr.bf16.mxu0 0
        %6704 = vmatpush1.bf16.msra.mxu0 %v6688
        %6705 = vmatprep.subr.bf16.mxu0 0
        %6706 = vmatpush1.bf16.msra.mxu0 %v6687
        %6707 = vmatprep.subr.bf16.mxu0 0
        %6708 = vmatpush1.bf16.msra.mxu0 %v6686
        %6709 = vmatprep.subr.bf16.mxu0 0
        %6710 = vmatpush1.bf16.msra.mxu0 %v6685
        %6711 = vmatprep.subr.bf16.mxu0 0
        %6712 = vmatpush1.bf16.msra.mxu0 %v6684
        %6713 = vmatprep.subr.bf16.mxu0 0
        %6714 = vmatpush1.bf16.msra.mxu0 %v6683
        %6715 = vmatprep.subr.bf16.mxu0 0
        %6716 = vmatpush2.bf16.msra.mxu0 0
        %6717 = vmatprep.subr.bf16.mxu0 0
        %6718 = vmatpush2.bf16.msra.mxu0 0
        %6719 = vmatprep.subr.bf16.mxu0 0
        %6720 = vmatpush2.bf16.msra.mxu0 0
        %6721 = vmatprep.subr.bf16.mxu0 0
        %6722 = vmatpush2.bf16.msra.mxu0 0
        %6723 = vmatprep.subr.bf16.mxu0 0
        %6724 = vmatpush2.bf16.msra.mxu0 0
        %6725 = vmatprep.subr.bf16.mxu0 0
        %6726 = vmatpush2.bf16.msra.mxu0 0
        %6727 = vmatprep.subr.bf16.mxu0 0
        %6728 = vmatpush2.bf16.msra.mxu0 0
        %6729 = vmatprep.subr.bf16.mxu0 0
        %6730 = vmatpush2.bf16.msra.mxu0 0
        %6731 = vmatprep.mubr.bf16.mxu0 0
        %6732 = vmatmul.mubr.bf16.gmra.mxu0 %v6649
        %v6733 = vpop.f32.mrf.mxu0
        %v6734 = vadd.f32 0.0, %v6733
        %v6735 = vpop.f32.mrf.mxu0
        %v6736 = vpop.f32.mrf.mxu0
        %v6737 = vpop.f32.mrf.mxu0
        %6738 = vdwg.mxu0
        %v6739 = vadd.f32 %v6577, %v6734
        %s6740 = scalar_lea.vmem %s3, 2112
        %v6741 = vld [vmem:[%s6740] sm:$0xf]
        %v6742 = vld [vmem:[%s6740 + $0x4] sm:$0xf]
        %v6743 = vld [vmem:[%s6740 + $0x8] sm:$0xf]
        %v6744 = vld [vmem:[%s6740 + $0xc] sm:$0xf]
        %v6745 = vld [vmem:[%s6740 + $0x10] sm:$0xf]
        %v6746 = vld [vmem:[%s6740 + $0x14] sm:$0xf]
        %v6747 = vld [vmem:[%s6740 + $0x18] sm:$0xf]
        %v6748 = vld [vmem:[%s6740 + $0x1c] sm:$0xf]
        %v6749 = vld [vmem:[%s6740 + $0x20] sm:$0xf]
        %v6750 = vld [vmem:[%s6740 + $0x24] sm:$0xf]
        %v6751 = vld [vmem:[%s6740 + $0x28] sm:$0xf]
        %v6752 = vld [vmem:[%s6740 + $0x2c] sm:$0xf]
        %v6753 = vld [vmem:[%s6740 + $0x30] sm:$0xf]
        %v6754 = vld [vmem:[%s6740 + $0x34] sm:$0xf]
        %v6755 = vld [vmem:[%s6740 + $0x38] sm:$0xf]
        %v6756 = vld [vmem:[%s6740 + $0x3c] sm:$0xf]
        %v6757 = vrot.slane %v6627, 1
        %v6758 = vsel %vm2104, %v6628, %v6757
        %v6759 = vrot.slane %v6629, 7
        %v6760 = vsel %vm2107, %v6759, %v6758
        %v6761 = vrot.slane %v6630, 6
        %v6762 = vsel %vm2110, %v6761, %v6760
        %v6763 = vrot.slane %v6631, 5
        %v6764 = vsel %vm2113, %v6763, %v6762
        %v6765 = vrot.slane %v6632, 4
        %v6766 = vsel %vm2116, %v6765, %v6764
        %v6767 = vrot.slane %v6633, 3
        %v6768 = vsel %vm2119, %v6767, %v6766
        %v6769 = vrot.slane %v6634, 2
        %v6770 = vsel %vm2122, %v6769, %v6768
        %v6771 = vpack.c.b16 %v6770, %v6770
        %v6789 = vunpack.c.l.b16 %v6741
        %v6790 = vunpack.c.l.b16 %v6742
        %v6791 = vunpack.c.l.b16 %v6743
        %v6792 = vunpack.c.l.b16 %v6744
        %v6793 = vunpack.c.l.b16 %v6745
        %v6794 = vunpack.c.l.b16 %v6746
        %v6795 = vunpack.c.l.b16 %v6747
        %v6796 = vunpack.c.l.b16 %v6748
        %v6797 = vunpack.c.l.b16 %v6749
        %v6798 = vunpack.c.l.b16 %v6750
        %v6799 = vunpack.c.l.b16 %v6751
        %v6800 = vunpack.c.l.b16 %v6752
        %v6801 = vunpack.c.l.b16 %v6753
        %v6802 = vunpack.c.l.b16 %v6754
        %v6803 = vunpack.c.l.b16 %v6755
        %v6804 = vunpack.c.l.b16 %v6756
        %v6805 = vpack.c.b16 %v6790, %v6789
        %v6806 = vpack.c.b16 %v6792, %v6791
        %v6807 = vpack.c.b16 %v6794, %v6793
        %v6808 = vpack.c.b16 %v6796, %v6795
        %v6809 = vpack.c.b16 %v6798, %v6797
        %v6810 = vpack.c.b16 %v6800, %v6799
        %v6811 = vpack.c.b16 %v6802, %v6801
        %v6812 = vpack.c.b16 %v6804, %v6803
        %6821 = vmatprep.subr.bf16.mxu0 0
        %6822 = vmatpush1.bf16.msra.mxu0 %v6812
        %6823 = vmatprep.subr.bf16.mxu0 0
        %6824 = vmatpush1.bf16.msra.mxu0 %v6811
        %6825 = vmatprep.subr.bf16.mxu0 0
        %6826 = vmatpush1.bf16.msra.mxu0 %v6810
        %6827 = vmatprep.subr.bf16.mxu0 0
        %6828 = vmatpush1.bf16.msra.mxu0 %v6809
        %6829 = vmatprep.subr.bf16.mxu0 0
        %6830 = vmatpush1.bf16.msra.mxu0 %v6808
        %6831 = vmatprep.subr.bf16.mxu0 0
        %6832 = vmatpush1.bf16.msra.mxu0 %v6807
        %6833 = vmatprep.subr.bf16.mxu0 0
        %6834 = vmatpush1.bf16.msra.mxu0 %v6806
        %6835 = vmatprep.subr.bf16.mxu0 0
        %6836 = vmatpush1.bf16.msra.mxu0 %v6805
        %6837 = vmatprep.subr.bf16.mxu0 0
        %6838 = vmatpush2.bf16.msra.mxu0 0
        %6839 = vmatprep.subr.bf16.mxu0 0
        %6840 = vmatpush2.bf16.msra.mxu0 0
        %6841 = vmatprep.subr.bf16.mxu0 0
        %6842 = vmatpush2.bf16.msra.mxu0 0
        %6843 = vmatprep.subr.bf16.mxu0 0
        %6844 = vmatpush2.bf16.msra.mxu0 0
        %6845 = vmatprep.subr.bf16.mxu0 0
        %6846 = vmatpush2.bf16.msra.mxu0 0
        %6847 = vmatprep.subr.bf16.mxu0 0
        %6848 = vmatpush2.bf16.msra.mxu0 0
        %6849 = vmatprep.subr.bf16.mxu0 0
        %6850 = vmatpush2.bf16.msra.mxu0 0
        %6851 = vmatprep.subr.bf16.mxu0 0
        %6852 = vmatpush2.bf16.msra.mxu0 0
        %6853 = vmatprep.mubr.bf16.mxu0 0
        %6854 = vmatmul.mubr.bf16.gmra.mxu0 %v6771
        %v6855 = vpop.f32.mrf.mxu0
        %v6856 = vadd.f32 0.0, %v6855
        %v6857 = vpop.f32.mrf.mxu0
        %v6858 = vpop.f32.mrf.mxu0
        %v6859 = vpop.f32.mrf.mxu0
        %6860 = vdwg.mxu0
        %v6861 = vadd.f32 %v6739, %v6856
        %v6862 = vld [vmem:[#allocation2 + $0x10] sm:$0x2]
        %v6863 = vld [vmem:[#allocation2 + $0x30] sm:$0x2]
        %v6864 = vld [vmem:[#allocation2 + $0x50] sm:$0x2]
        %v6865 = vld [vmem:[#allocation2 + $0x70] sm:$0x2]
        %v6866 = vld [vmem:[#allocation2 + $0x90] sm:$0x2]
        %v6867 = vld [vmem:[#allocation2 + $0xb0] sm:$0x2]
        %v6868 = vld [vmem:[#allocation2 + $0xd0] sm:$0x2]
        %v6869 = vld [vmem:[#allocation2 + $0xf0] sm:$0x2]
        %s6870 = scalar_lea.vmem %s3, 2176
        %v6871 = vld [vmem:[%s6870] sm:$0xf]
        %v6872 = vld [vmem:[%s6870 + $0x4] sm:$0xf]
        %v6873 = vld [vmem:[%s6870 + $0x8] sm:$0xf]
        %v6874 = vld [vmem:[%s6870 + $0xc] sm:$0xf]
        %v6875 = vld [vmem:[%s6870 + $0x10] sm:$0xf]
        %v6876 = vld [vmem:[%s6870 + $0x14] sm:$0xf]
        %v6877 = vld [vmem:[%s6870 + $0x18] sm:$0xf]
        %v6878 = vld [vmem:[%s6870 + $0x1c] sm:$0xf]
        %v6879 = vld [vmem:[%s6870 + $0x20] sm:$0xf]
        %v6880 = vld [vmem:[%s6870 + $0x24] sm:$0xf]
        %v6881 = vld [vmem:[%s6870 + $0x28] sm:$0xf]
        %v6882 = vld [vmem:[%s6870 + $0x2c] sm:$0xf]
        %v6883 = vld [vmem:[%s6870 + $0x30] sm:$0xf]
        %v6884 = vld [vmem:[%s6870 + $0x34] sm:$0xf]
        %v6885 = vld [vmem:[%s6870 + $0x38] sm:$0xf]
        %v6886 = vld [vmem:[%s6870 + $0x3c] sm:$0xf]
        %v6895 = vunpack.c.l.b16 %v6862
        %v6896 = vunpack.c.l.b16 %v6863
        %v6897 = vunpack.c.l.b16 %v6864
        %v6898 = vunpack.c.l.b16 %v6865
        %v6899 = vunpack.c.l.b16 %v6866
        %v6900 = vunpack.c.l.b16 %v6867
        %v6901 = vunpack.c.l.b16 %v6868
        %v6902 = vunpack.c.l.b16 %v6869
        %v6903 = vpack.c.b16 %v6895, %v6895
        %v6904 = vpack.c.b16 %v6896, %v6896
        %v6905 = vpack.c.b16 %v6897, %v6897
        %v6906 = vpack.c.b16 %v6898, %v6898
        %v6907 = vpack.c.b16 %v6899, %v6899
        %v6908 = vpack.c.b16 %v6900, %v6900
        %v6909 = vpack.c.b16 %v6901, %v6901
        %v6910 = vpack.c.b16 %v6902, %v6902
        %v6911 = vunpack.c.l.b16 %v6903
        %v6912 = vunpack.c.l.b16 %v6904
        %v6913 = vunpack.c.l.b16 %v6905
        %v6914 = vunpack.c.l.b16 %v6906
        %v6915 = vunpack.c.l.b16 %v6907
        %v6916 = vunpack.c.l.b16 %v6908
        %v6917 = vunpack.c.l.b16 %v6909
        %v6918 = vunpack.c.l.b16 %v6910
        %v6919 = vrot.slane %v6911, 2
        %v6920 = vrot.slane %v6912, 1
        %v6921 = vsel %vm2104, %v6920, %v6919
        %v6922 = vsel %vm2107, %v6913, %v6921
        %v6923 = vrot.slane %v6914, 7
        %v6924 = vsel %vm2110, %v6923, %v6922
        %v6925 = vrot.slane %v6915, 6
        %v6926 = vsel %vm2113, %v6925, %v6924
        %v6927 = vrot.slane %v6916, 5
        %v6928 = vsel %vm2116, %v6927, %v6926
        %v6929 = vrot.slane %v6917, 4
        %v6930 = vsel %vm2119, %v6929, %v6928
        %v6931 = vrot.slane %v6918, 3
        %v6932 = vsel %vm2122, %v6931, %v6930
        %v6933 = vpack.c.b16 %v6932, %v6932
        %v6951 = vunpack.c.l.b16 %v6871
        %v6952 = vunpack.c.l.b16 %v6872
        %v6953 = vunpack.c.l.b16 %v6873
        %v6954 = vunpack.c.l.b16 %v6874
        %v6955 = vunpack.c.l.b16 %v6875
        %v6956 = vunpack.c.l.b16 %v6876
        %v6957 = vunpack.c.l.b16 %v6877
        %v6958 = vunpack.c.l.b16 %v6878
        %v6959 = vunpack.c.l.b16 %v6879
        %v6960 = vunpack.c.l.b16 %v6880
        %v6961 = vunpack.c.l.b16 %v6881
        %v6962 = vunpack.c.l.b16 %v6882
        %v6963 = vunpack.c.l.b16 %v6883
        %v6964 = vunpack.c.l.b16 %v6884
        %v6965 = vunpack.c.l.b16 %v6885
        %v6966 = vunpack.c.l.b16 %v6886
        %v6967 = vpack.c.b16 %v6952, %v6951
        %v6968 = vpack.c.b16 %v6954, %v6953
        %v6969 = vpack.c.b16 %v6956, %v6955
        %v6970 = vpack.c.b16 %v6958, %v6957
        %v6971 = vpack.c.b16 %v6960, %v6959
        %v6972 = vpack.c.b16 %v6962, %v6961
        %v6973 = vpack.c.b16 %v6964, %v6963
        %v6974 = vpack.c.b16 %v6966, %v6965
        %6983 = vmatprep.subr.bf16.mxu0 0
        %6984 = vmatpush1.bf16.msra.mxu0 %v6974
        %6985 = vmatprep.subr.bf16.mxu0 0
        %6986 = vmatpush1.bf16.msra.mxu0 %v6973
        %6987 = vmatprep.subr.bf16.mxu0 0
        %6988 = vmatpush1.bf16.msra.mxu0 %v6972
        %6989 = vmatprep.subr.bf16.mxu0 0
        %6990 = vmatpush1.bf16.msra.mxu0 %v6971
        %6991 = vmatprep.subr.bf16.mxu0 0
        %6992 = vmatpush1.bf16.msra.mxu0 %v6970
        %6993 = vmatprep.subr.bf16.mxu0 0
        %6994 = vmatpush1.bf16.msra.mxu0 %v6969
        %6995 = vmatprep.subr.bf16.mxu0 0
        %6996 = vmatpush1.bf16.msra.mxu0 %v6968
        %6997 = vmatprep.subr.bf16.mxu0 0
        %6998 = vmatpush1.bf16.msra.mxu0 %v6967
        %6999 = vmatprep.subr.bf16.mxu0 0
        %7000 = vmatpush2.bf16.msra.mxu0 0
        %7001 = vmatprep.subr.bf16.mxu0 0
        %7002 = vmatpush2.bf16.msra.mxu0 0
        %7003 = vmatprep.subr.bf16.mxu0 0
        %7004 = vmatpush2.bf16.msra.mxu0 0
        %7005 = vmatprep.subr.bf16.mxu0 0
        %7006 = vmatpush2.bf16.msra.mxu0 0
        %7007 = vmatprep.subr.bf16.mxu0 0
        %7008 = vmatpush2.bf16.msra.mxu0 0
        %7009 = vmatprep.subr.bf16.mxu0 0
        %7010 = vmatpush2.bf16.msra.mxu0 0
        %7011 = vmatprep.subr.bf16.mxu0 0
        %7012 = vmatpush2.bf16.msra.mxu0 0
        %7013 = vmatprep.subr.bf16.mxu0 0
        %7014 = vmatpush2.bf16.msra.mxu0 0
        %7015 = vmatprep.mubr.bf16.mxu0 0
        %7016 = vmatmul.mubr.bf16.gmra.mxu0 %v6933
        %v7017 = vpop.f32.mrf.mxu0
        %v7018 = vadd.f32 0.0, %v7017
        %v7019 = vpop.f32.mrf.mxu0
        %v7020 = vpop.f32.mrf.mxu0
        %v7021 = vpop.f32.mrf.mxu0
        %7022 = vdwg.mxu0
        %v7023 = vadd.f32 %v6861, %v7018
        %s7024 = scalar_lea.vmem %s3, 2240
        %v7025 = vld [vmem:[%s7024] sm:$0xf]
        %v7026 = vld [vmem:[%s7024 + $0x4] sm:$0xf]
        %v7027 = vld [vmem:[%s7024 + $0x8] sm:$0xf]
        %v7028 = vld [vmem:[%s7024 + $0xc] sm:$0xf]
        %v7029 = vld [vmem:[%s7024 + $0x10] sm:$0xf]
        %v7030 = vld [vmem:[%s7024 + $0x14] sm:$0xf]
        %v7031 = vld [vmem:[%s7024 + $0x18] sm:$0xf]
        %v7032 = vld [vmem:[%s7024 + $0x1c] sm:$0xf]
        %v7033 = vld [vmem:[%s7024 + $0x20] sm:$0xf]
        %v7034 = vld [vmem:[%s7024 + $0x24] sm:$0xf]
        %v7035 = vld [vmem:[%s7024 + $0x28] sm:$0xf]
        %v7036 = vld [vmem:[%s7024 + $0x2c] sm:$0xf]
        %v7037 = vld [vmem:[%s7024 + $0x30] sm:$0xf]
        %v7038 = vld [vmem:[%s7024 + $0x34] sm:$0xf]
        %v7039 = vld [vmem:[%s7024 + $0x38] sm:$0xf]
        %v7040 = vld [vmem:[%s7024 + $0x3c] sm:$0xf]
        %v7041 = vrot.slane %v6911, 3
        %v7042 = vrot.slane %v6912, 2
        %v7043 = vsel %vm2104, %v7042, %v7041
        %v7044 = vrot.slane %v6913, 1
        %v7045 = vsel %vm2107, %v7044, %v7043
        %v7046 = vsel %vm2110, %v6914, %v7045
        %v7047 = vrot.slane %v6915, 7
        %v7048 = vsel %vm2113, %v7047, %v7046
        %v7049 = vrot.slane %v6916, 6
        %v7050 = vsel %vm2116, %v7049, %v7048
        %v7051 = vrot.slane %v6917, 5
        %v7052 = vsel %vm2119, %v7051, %v7050
        %v7053 = vrot.slane %v6918, 4
        %v7054 = vsel %vm2122, %v7053, %v7052
        %v7055 = vpack.c.b16 %v7054, %v7054
        %v7073 = vunpack.c.l.b16 %v7025
        %v7074 = vunpack.c.l.b16 %v7026
        %v7075 = vunpack.c.l.b16 %v7027
        %v7076 = vunpack.c.l.b16 %v7028
        %v7077 = vunpack.c.l.b16 %v7029
        %v7078 = vunpack.c.l.b16 %v7030
        %v7079 = vunpack.c.l.b16 %v7031
        %v7080 = vunpack.c.l.b16 %v7032
        %v7081 = vunpack.c.l.b16 %v7033
        %v7082 = vunpack.c.l.b16 %v7034
        %v7083 = vunpack.c.l.b16 %v7035
        %v7084 = vunpack.c.l.b16 %v7036
        %v7085 = vunpack.c.l.b16 %v7037
        %v7086 = vunpack.c.l.b16 %v7038
        %v7087 = vunpack.c.l.b16 %v7039
        %v7088 = vunpack.c.l.b16 %v7040
        %v7089 = vpack.c.b16 %v7074, %v7073
        %v7090 = vpack.c.b16 %v7076, %v7075
        %v7091 = vpack.c.b16 %v7078, %v7077
        %v7092 = vpack.c.b16 %v7080, %v7079
        %v7093 = vpack.c.b16 %v7082, %v7081
        %v7094 = vpack.c.b16 %v7084, %v7083
        %v7095 = vpack.c.b16 %v7086, %v7085
        %v7096 = vpack.c.b16 %v7088, %v7087
        %7105 = vmatprep.subr.bf16.mxu0 0
        %7106 = vmatpush1.bf16.msra.mxu0 %v7096
        %7107 = vmatprep.subr.bf16.mxu0 0
        %7108 = vmatpush1.bf16.msra.mxu0 %v7095
        %7109 = vmatprep.subr.bf16.mxu0 0
        %7110 = vmatpush1.bf16.msra.mxu0 %v7094
        %7111 = vmatprep.subr.bf16.mxu0 0
        %7112 = vmatpush1.bf16.msra.mxu0 %v7093
        %7113 = vmatprep.subr.bf16.mxu0 0
        %7114 = vmatpush1.bf16.msra.mxu0 %v7092
        %7115 = vmatprep.subr.bf16.mxu0 0
        %7116 = vmatpush1.bf16.msra.mxu0 %v7091
        %7117 = vmatprep.subr.bf16.mxu0 0
        %7118 = vmatpush1.bf16.msra.mxu0 %v7090
        %7119 = vmatprep.subr.bf16.mxu0 0
        %7120 = vmatpush1.bf16.msra.mxu0 %v7089
        %7121 = vmatprep.subr.bf16.mxu0 0
        %7122 = vmatpush2.bf16.msra.mxu0 0
        %7123 = vmatprep.subr.bf16.mxu0 0
        %7124 = vmatpush2.bf16.msra.mxu0 0
        %7125 = vmatprep.subr.bf16.mxu0 0
        %7126 = vmatpush2.bf16.msra.mxu0 0
        %7127 = vmatprep.subr.bf16.mxu0 0
        %7128 = vmatpush2.bf16.msra.mxu0 0
        %7129 = vmatprep.subr.bf16.mxu0 0
        %7130 = vmatpush2.bf16.msra.mxu0 0
        %7131 = vmatprep.subr.bf16.mxu0 0
        %7132 = vmatpush2.bf16.msra.mxu0 0
        %7133 = vmatprep.subr.bf16.mxu0 0
        %7134 = vmatpush2.bf16.msra.mxu0 0
        %7135 = vmatprep.subr.bf16.mxu0 0
        %7136 = vmatpush2.bf16.msra.mxu0 0
        %7137 = vmatprep.mubr.bf16.mxu0 0
        %7138 = vmatmul.mubr.bf16.gmra.mxu0 %v7055
        %v7139 = vpop.f32.mrf.mxu0
        %v7140 = vadd.f32 0.0, %v7139
        %v7141 = vpop.f32.mrf.mxu0
        %v7142 = vpop.f32.mrf.mxu0
        %v7143 = vpop.f32.mrf.mxu0
        %7144 = vdwg.mxu0
        %v7145 = vadd.f32 %v7023, %v7140
        %v7146 = vld [vmem:[#allocation2 + $0x10] sm:$0x4]
        %v7147 = vld [vmem:[#allocation2 + $0x30] sm:$0x4]
        %v7148 = vld [vmem:[#allocation2 + $0x50] sm:$0x4]
        %v7149 = vld [vmem:[#allocation2 + $0x70] sm:$0x4]
        %v7150 = vld [vmem:[#allocation2 + $0x90] sm:$0x4]
        %v7151 = vld [vmem:[#allocation2 + $0xb0] sm:$0x4]
        %v7152 = vld [vmem:[#allocation2 + $0xd0] sm:$0x4]
        %v7153 = vld [vmem:[#allocation2 + $0xf0] sm:$0x4]
        %s7154 = scalar_lea.vmem %s3, 2304
        %v7155 = vld [vmem:[%s7154] sm:$0xf]
        %v7156 = vld [vmem:[%s7154 + $0x4] sm:$0xf]
        %v7157 = vld [vmem:[%s7154 + $0x8] sm:$0xf]
        %v7158 = vld [vmem:[%s7154 + $0xc] sm:$0xf]
        %v7159 = vld [vmem:[%s7154 + $0x10] sm:$0xf]
        %v7160 = vld [vmem:[%s7154 + $0x14] sm:$0xf]
        %v7161 = vld [vmem:[%s7154 + $0x18] sm:$0xf]
        %v7162 = vld [vmem:[%s7154 + $0x1c] sm:$0xf]
        %v7163 = vld [vmem:[%s7154 + $0x20] sm:$0xf]
        %v7164 = vld [vmem:[%s7154 + $0x24] sm:$0xf]
        %v7165 = vld [vmem:[%s7154 + $0x28] sm:$0xf]
        %v7166 = vld [vmem:[%s7154 + $0x2c] sm:$0xf]
        %v7167 = vld [vmem:[%s7154 + $0x30] sm:$0xf]
        %v7168 = vld [vmem:[%s7154 + $0x34] sm:$0xf]
        %v7169 = vld [vmem:[%s7154 + $0x38] sm:$0xf]
        %v7170 = vld [vmem:[%s7154 + $0x3c] sm:$0xf]
        %v7179 = vunpack.c.l.b16 %v7146
        %v7180 = vunpack.c.l.b16 %v7147
        %v7181 = vunpack.c.l.b16 %v7148
        %v7182 = vunpack.c.l.b16 %v7149
        %v7183 = vunpack.c.l.b16 %v7150
        %v7184 = vunpack.c.l.b16 %v7151
        %v7185 = vunpack.c.l.b16 %v7152
        %v7186 = vunpack.c.l.b16 %v7153
        %v7187 = vpack.c.b16 %v7179, %v7179
        %v7188 = vpack.c.b16 %v7180, %v7180
        %v7189 = vpack.c.b16 %v7181, %v7181
        %v7190 = vpack.c.b16 %v7182, %v7182
        %v7191 = vpack.c.b16 %v7183, %v7183
        %v7192 = vpack.c.b16 %v7184, %v7184
        %v7193 = vpack.c.b16 %v7185, %v7185
        %v7194 = vpack.c.b16 %v7186, %v7186
        %v7195 = vunpack.c.l.b16 %v7187
        %v7196 = vunpack.c.l.b16 %v7188
        %v7197 = vunpack.c.l.b16 %v7189
        %v7198 = vunpack.c.l.b16 %v7190
        %v7199 = vunpack.c.l.b16 %v7191
        %v7200 = vunpack.c.l.b16 %v7192
        %v7201 = vunpack.c.l.b16 %v7193
        %v7202 = vunpack.c.l.b16 %v7194
        %v7203 = vrot.slane %v7195, 4
        %v7204 = vrot.slane %v7196, 3
        %v7205 = vsel %vm2104, %v7204, %v7203
        %v7206 = vrot.slane %v7197, 2
        %v7207 = vsel %vm2107, %v7206, %v7205
        %v7208 = vrot.slane %v7198, 1
        %v7209 = vsel %vm2110, %v7208, %v7207
        %v7210 = vsel %vm2113, %v7199, %v7209
        %v7211 = vrot.slane %v7200, 7
        %v7212 = vsel %vm2116, %v7211, %v7210
        %v7213 = vrot.slane %v7201, 6
        %v7214 = vsel %vm2119, %v7213, %v7212
        %v7215 = vrot.slane %v7202, 5
        %v7216 = vsel %vm2122, %v7215, %v7214
        %v7217 = vpack.c.b16 %v7216, %v7216
        %v7235 = vunpack.c.l.b16 %v7155
        %v7236 = vunpack.c.l.b16 %v7156
        %v7237 = vunpack.c.l.b16 %v7157
        %v7238 = vunpack.c.l.b16 %v7158
        %v7239 = vunpack.c.l.b16 %v7159
        %v7240 = vunpack.c.l.b16 %v7160
        %v7241 = vunpack.c.l.b16 %v7161
        %v7242 = vunpack.c.l.b16 %v7162
        %v7243 = vunpack.c.l.b16 %v7163
        %v7244 = vunpack.c.l.b16 %v7164
        %v7245 = vunpack.c.l.b16 %v7165
        %v7246 = vunpack.c.l.b16 %v7166
        %v7247 = vunpack.c.l.b16 %v7167
        %v7248 = vunpack.c.l.b16 %v7168
        %v7249 = vunpack.c.l.b16 %v7169
        %v7250 = vunpack.c.l.b16 %v7170
        %v7251 = vpack.c.b16 %v7236, %v7235
        %v7252 = vpack.c.b16 %v7238, %v7237
        %v7253 = vpack.c.b16 %v7240, %v7239
        %v7254 = vpack.c.b16 %v7242, %v7241
        %v7255 = vpack.c.b16 %v7244, %v7243
        %v7256 = vpack.c.b16 %v7246, %v7245
        %v7257 = vpack.c.b16 %v7248, %v7247
        %v7258 = vpack.c.b16 %v7250, %v7249
        %7267 = vmatprep.subr.bf16.mxu0 0
        %7268 = vmatpush1.bf16.msra.mxu0 %v7258
        %7269 = vmatprep.subr.bf16.mxu0 0
        %7270 = vmatpush1.bf16.msra.mxu0 %v7257
        %7271 = vmatprep.subr.bf16.mxu0 0
        %7272 = vmatpush1.bf16.msra.mxu0 %v7256
        %7273 = vmatprep.subr.bf16.mxu0 0
        %7274 = vmatpush1.bf16.msra.mxu0 %v7255
        %7275 = vmatprep.subr.bf16.mxu0 0
        %7276 = vmatpush1.bf16.msra.mxu0 %v7254
        %7277 = vmatprep.subr.bf16.mxu0 0
        %7278 = vmatpush1.bf16.msra.mxu0 %v7253
        %7279 = vmatprep.subr.bf16.mxu0 0
        %7280 = vmatpush1.bf16.msra.mxu0 %v7252
        %7281 = vmatprep.subr.bf16.mxu0 0
        %7282 = vmatpush1.bf16.msra.mxu0 %v7251
        %7283 = vmatprep.subr.bf16.mxu0 0
        %7284 = vmatpush2.bf16.msra.mxu0 0
        %7285 = vmatprep.subr.bf16.mxu0 0
        %7286 = vmatpush2.bf16.msra.mxu0 0
        %7287 = vmatprep.subr.bf16.mxu0 0
        %7288 = vmatpush2.bf16.msra.mxu0 0
        %7289 = vmatprep.subr.bf16.mxu0 0
        %7290 = vmatpush2.bf16.msra.mxu0 0
        %7291 = vmatprep.subr.bf16.mxu0 0
        %7292 = vmatpush2.bf16.msra.mxu0 0
        %7293 = vmatprep.subr.bf16.mxu0 0
        %7294 = vmatpush2.bf16.msra.mxu0 0
        %7295 = vmatprep.subr.bf16.mxu0 0
        %7296 = vmatpush2.bf16.msra.mxu0 0
        %7297 = vmatprep.subr.bf16.mxu0 0
        %7298 = vmatpush2.bf16.msra.mxu0 0
        %7299 = vmatprep.mubr.bf16.mxu0 0
        %7300 = vmatmul.mubr.bf16.gmra.mxu0 %v7217
        %v7301 = vpop.f32.mrf.mxu0
        %v7302 = vadd.f32 0.0, %v7301
        %v7303 = vpop.f32.mrf.mxu0
        %v7304 = vpop.f32.mrf.mxu0
        %v7305 = vpop.f32.mrf.mxu0
        %7306 = vdwg.mxu0
        %v7307 = vadd.f32 %v7145, %v7302
        %s7308 = scalar_lea.vmem %s3, 2368
        %v7309 = vld [vmem:[%s7308] sm:$0xf]
        %v7310 = vld [vmem:[%s7308 + $0x4] sm:$0xf]
        %v7311 = vld [vmem:[%s7308 + $0x8] sm:$0xf]
        %v7312 = vld [vmem:[%s7308 + $0xc] sm:$0xf]
        %v7313 = vld [vmem:[%s7308 + $0x10] sm:$0xf]
        %v7314 = vld [vmem:[%s7308 + $0x14] sm:$0xf]
        %v7315 = vld [vmem:[%s7308 + $0x18] sm:$0xf]
        %v7316 = vld [vmem:[%s7308 + $0x1c] sm:$0xf]
        %v7317 = vld [vmem:[%s7308 + $0x20] sm:$0xf]
        %v7318 = vld [vmem:[%s7308 + $0x24] sm:$0xf]
        %v7319 = vld [vmem:[%s7308 + $0x28] sm:$0xf]
        %v7320 = vld [vmem:[%s7308 + $0x2c] sm:$0xf]
        %v7321 = vld [vmem:[%s7308 + $0x30] sm:$0xf]
        %v7322 = vld [vmem:[%s7308 + $0x34] sm:$0xf]
        %v7323 = vld [vmem:[%s7308 + $0x38] sm:$0xf]
        %v7324 = vld [vmem:[%s7308 + $0x3c] sm:$0xf]
        %v7325 = vrot.slane %v7195, 5
        %v7326 = vrot.slane %v7196, 4
        %v7327 = vsel %vm2104, %v7326, %v7325
        %v7328 = vrot.slane %v7197, 3
        %v7329 = vsel %vm2107, %v7328, %v7327
        %v7330 = vrot.slane %v7198, 2
        %v7331 = vsel %vm2110, %v7330, %v7329
        %v7332 = vrot.slane %v7199, 1
        %v7333 = vsel %vm2113, %v7332, %v7331
        %v7334 = vsel %vm2116, %v7200, %v7333
        %v7335 = vrot.slane %v7201, 7
        %v7336 = vsel %vm2119, %v7335, %v7334
        %v7337 = vrot.slane %v7202, 6
        %v7338 = vsel %vm2122, %v7337, %v7336
        %v7339 = vpack.c.b16 %v7338, %v7338
        %v7357 = vunpack.c.l.b16 %v7309
        %v7358 = vunpack.c.l.b16 %v7310
        %v7359 = vunpack.c.l.b16 %v7311
        %v7360 = vunpack.c.l.b16 %v7312
        %v7361 = vunpack.c.l.b16 %v7313
        %v7362 = vunpack.c.l.b16 %v7314
        %v7363 = vunpack.c.l.b16 %v7315
        %v7364 = vunpack.c.l.b16 %v7316
        %v7365 = vunpack.c.l.b16 %v7317
        %v7366 = vunpack.c.l.b16 %v7318
        %v7367 = vunpack.c.l.b16 %v7319
        %v7368 = vunpack.c.l.b16 %v7320
        %v7369 = vunpack.c.l.b16 %v7321
        %v7370 = vunpack.c.l.b16 %v7322
        %v7371 = vunpack.c.l.b16 %v7323
        %v7372 = vunpack.c.l.b16 %v7324
        %v7373 = vpack.c.b16 %v7358, %v7357
        %v7374 = vpack.c.b16 %v7360, %v7359
        %v7375 = vpack.c.b16 %v7362, %v7361
        %v7376 = vpack.c.b16 %v7364, %v7363
        %v7377 = vpack.c.b16 %v7366, %v7365
        %v7378 = vpack.c.b16 %v7368, %v7367
        %v7379 = vpack.c.b16 %v7370, %v7369
        %v7380 = vpack.c.b16 %v7372, %v7371
        %7389 = vmatprep.subr.bf16.mxu0 0
        %7390 = vmatpush1.bf16.msra.mxu0 %v7380
        %7391 = vmatprep.subr.bf16.mxu0 0
        %7392 = vmatpush1.bf16.msra.mxu0 %v7379
        %7393 = vmatprep.subr.bf16.mxu0 0
        %7394 = vmatpush1.bf16.msra.mxu0 %v7378
        %7395 = vmatprep.subr.bf16.mxu0 0
        %7396 = vmatpush1.bf16.msra.mxu0 %v7377
        %7397 = vmatprep.subr.bf16.mxu0 0
        %7398 = vmatpush1.bf16.msra.mxu0 %v7376
        %7399 = vmatprep.subr.bf16.mxu0 0
        %7400 = vmatpush1.bf16.msra.mxu0 %v7375
        %7401 = vmatprep.subr.bf16.mxu0 0
        %7402 = vmatpush1.bf16.msra.mxu0 %v7374
        %7403 = vmatprep.subr.bf16.mxu0 0
        %7404 = vmatpush1.bf16.msra.mxu0 %v7373
        %7405 = vmatprep.subr.bf16.mxu0 0
        %7406 = vmatpush2.bf16.msra.mxu0 0
        %7407 = vmatprep.subr.bf16.mxu0 0
        %7408 = vmatpush2.bf16.msra.mxu0 0
        %7409 = vmatprep.subr.bf16.mxu0 0
        %7410 = vmatpush2.bf16.msra.mxu0 0
        %7411 = vmatprep.subr.bf16.mxu0 0
        %7412 = vmatpush2.bf16.msra.mxu0 0
        %7413 = vmatprep.subr.bf16.mxu0 0
        %7414 = vmatpush2.bf16.msra.mxu0 0
        %7415 = vmatprep.subr.bf16.mxu0 0
        %7416 = vmatpush2.bf16.msra.mxu0 0
        %7417 = vmatprep.subr.bf16.mxu0 0
        %7418 = vmatpush2.bf16.msra.mxu0 0
        %7419 = vmatprep.subr.bf16.mxu0 0
        %7420 = vmatpush2.bf16.msra.mxu0 0
        %7421 = vmatprep.mubr.bf16.mxu0 0
        %7422 = vmatmul.mubr.bf16.gmra.mxu0 %v7339
        %v7423 = vpop.f32.mrf.mxu0
        %v7424 = vadd.f32 0.0, %v7423
        %v7425 = vpop.f32.mrf.mxu0
        %v7426 = vpop.f32.mrf.mxu0
        %v7427 = vpop.f32.mrf.mxu0
        %7428 = vdwg.mxu0
        %v7429 = vadd.f32 %v7307, %v7424
        %v7430 = vld [vmem:[#allocation2 + $0x10] sm:$0x8]
        %v7431 = vld [vmem:[#allocation2 + $0x30] sm:$0x8]
        %v7432 = vld [vmem:[#allocation2 + $0x50] sm:$0x8]
        %v7433 = vld [vmem:[#allocation2 + $0x70] sm:$0x8]
        %v7434 = vld [vmem:[#allocation2 + $0x90] sm:$0x8]
        %v7435 = vld [vmem:[#allocation2 + $0xb0] sm:$0x8]
        %v7436 = vld [vmem:[#allocation2 + $0xd0] sm:$0x8]
        %v7437 = vld [vmem:[#allocation2 + $0xf0] sm:$0x8]
        %s7438 = scalar_lea.vmem %s3, 2432
        %v7439 = vld [vmem:[%s7438] sm:$0xf]
        %v7440 = vld [vmem:[%s7438 + $0x4] sm:$0xf]
        %v7441 = vld [vmem:[%s7438 + $0x8] sm:$0xf]
        %v7442 = vld [vmem:[%s7438 + $0xc] sm:$0xf]
        %v7443 = vld [vmem:[%s7438 + $0x10] sm:$0xf]
        %v7444 = vld [vmem:[%s7438 + $0x14] sm:$0xf]
        %v7445 = vld [vmem:[%s7438 + $0x18] sm:$0xf]
        %v7446 = vld [vmem:[%s7438 + $0x1c] sm:$0xf]
        %v7447 = vld [vmem:[%s7438 + $0x20] sm:$0xf]
        %v7448 = vld [vmem:[%s7438 + $0x24] sm:$0xf]
        %v7449 = vld [vmem:[%s7438 + $0x28] sm:$0xf]
        %v7450 = vld [vmem:[%s7438 + $0x2c] sm:$0xf]
        %v7451 = vld [vmem:[%s7438 + $0x30] sm:$0xf]
        %v7452 = vld [vmem:[%s7438 + $0x34] sm:$0xf]
        %v7453 = vld [vmem:[%s7438 + $0x38] sm:$0xf]
        %v7454 = vld [vmem:[%s7438 + $0x3c] sm:$0xf]
        %v7463 = vunpack.c.l.b16 %v7430
        %v7464 = vunpack.c.l.b16 %v7431
        %v7465 = vunpack.c.l.b16 %v7432
        %v7466 = vunpack.c.l.b16 %v7433
        %v7467 = vunpack.c.l.b16 %v7434
        %v7468 = vunpack.c.l.b16 %v7435
        %v7469 = vunpack.c.l.b16 %v7436
        %v7470 = vunpack.c.l.b16 %v7437
        %v7471 = vpack.c.b16 %v7463, %v7463
        %v7472 = vpack.c.b16 %v7464, %v7464
        %v7473 = vpack.c.b16 %v7465, %v7465
        %v7474 = vpack.c.b16 %v7466, %v7466
        %v7475 = vpack.c.b16 %v7467, %v7467
        %v7476 = vpack.c.b16 %v7468, %v7468
        %v7477 = vpack.c.b16 %v7469, %v7469
        %v7478 = vpack.c.b16 %v7470, %v7470
        %v7479 = vunpack.c.l.b16 %v7471
        %v7480 = vunpack.c.l.b16 %v7472
        %v7481 = vunpack.c.l.b16 %v7473
        %v7482 = vunpack.c.l.b16 %v7474
        %v7483 = vunpack.c.l.b16 %v7475
        %v7484 = vunpack.c.l.b16 %v7476
        %v7485 = vunpack.c.l.b16 %v7477
        %v7486 = vunpack.c.l.b16 %v7478
        %v7487 = vrot.slane %v7479, 6
        %v7488 = vrot.slane %v7480, 5
        %v7489 = vsel %vm2104, %v7488, %v7487
        %v7490 = vrot.slane %v7481, 4
        %v7491 = vsel %vm2107, %v7490, %v7489
        %v7492 = vrot.slane %v7482, 3
        %v7493 = vsel %vm2110, %v7492, %v7491
        %v7494 = vrot.slane %v7483, 2
        %v7495 = vsel %vm2113, %v7494, %v7493
        %v7496 = vrot.slane %v7484, 1
        %v7497 = vsel %vm2116, %v7496, %v7495
        %v7498 = vsel %vm2119, %v7485, %v7497
        %v7499 = vrot.slane %v7486, 7
        %v7500 = vsel %vm2122, %v7499, %v7498
        %v7501 = vpack.c.b16 %v7500, %v7500
        %v7519 = vunpack.c.l.b16 %v7439
        %v7520 = vunpack.c.l.b16 %v7440
        %v7521 = vunpack.c.l.b16 %v7441
        %v7522 = vunpack.c.l.b16 %v7442
        %v7523 = vunpack.c.l.b16 %v7443
        %v7524 = vunpack.c.l.b16 %v7444
        %v7525 = vunpack.c.l.b16 %v7445
        %v7526 = vunpack.c.l.b16 %v7446
        %v7527 = vunpack.c.l.b16 %v7447
        %v7528 = vunpack.c.l.b16 %v7448
        %v7529 = vunpack.c.l.b16 %v7449
        %v7530 = vunpack.c.l.b16 %v7450
        %v7531 = vunpack.c.l.b16 %v7451
        %v7532 = vunpack.c.l.b16 %v7452
        %v7533 = vunpack.c.l.b16 %v7453
        %v7534 = vunpack.c.l.b16 %v7454
        %v7535 = vpack.c.b16 %v7520, %v7519
        %v7536 = vpack.c.b16 %v7522, %v7521
        %v7537 = vpack.c.b16 %v7524, %v7523
        %v7538 = vpack.c.b16 %v7526, %v7525
        %v7539 = vpack.c.b16 %v7528, %v7527
        %v7540 = vpack.c.b16 %v7530, %v7529
        %v7541 = vpack.c.b16 %v7532, %v7531
        %v7542 = vpack.c.b16 %v7534, %v7533
        %7551 = vmatprep.subr.bf16.mxu0 0
        %7552 = vmatpush1.bf16.msra.mxu0 %v7542
        %7553 = vmatprep.subr.bf16.mxu0 0
        %7554 = vmatpush1.bf16.msra.mxu0 %v7541
        %7555 = vmatprep.subr.bf16.mxu0 0
        %7556 = vmatpush1.bf16.msra.mxu0 %v7540
        %7557 = vmatprep.subr.bf16.mxu0 0
        %7558 = vmatpush1.bf16.msra.mxu0 %v7539
        %7559 = vmatprep.subr.bf16.mxu0 0
        %7560 = vmatpush1.bf16.msra.mxu0 %v7538
        %7561 = vmatprep.subr.bf16.mxu0 0
        %7562 = vmatpush1.bf16.msra.mxu0 %v7537
        %7563 = vmatprep.subr.bf16.mxu0 0
        %7564 = vmatpush1.bf16.msra.mxu0 %v7536
        %7565 = vmatprep.subr.bf16.mxu0 0
        %7566 = vmatpush1.bf16.msra.mxu0 %v7535
        %7567 = vmatprep.subr.bf16.mxu0 0
        %7568 = vmatpush2.bf16.msra.mxu0 0
        %7569 = vmatprep.subr.bf16.mxu0 0
        %7570 = vmatpush2.bf16.msra.mxu0 0
        %7571 = vmatprep.subr.bf16.mxu0 0
        %7572 = vmatpush2.bf16.msra.mxu0 0
        %7573 = vmatprep.subr.bf16.mxu0 0
        %7574 = vmatpush2.bf16.msra.mxu0 0
        %7575 = vmatprep.subr.bf16.mxu0 0
        %7576 = vmatpush2.bf16.msra.mxu0 0
        %7577 = vmatprep.subr.bf16.mxu0 0
        %7578 = vmatpush2.bf16.msra.mxu0 0
        %7579 = vmatprep.subr.bf16.mxu0 0
        %7580 = vmatpush2.bf16.msra.mxu0 0
        %7581 = vmatprep.subr.bf16.mxu0 0
        %7582 = vmatpush2.bf16.msra.mxu0 0
        %7583 = vmatprep.mubr.bf16.mxu0 0
        %7584 = vmatmul.mubr.bf16.gmra.mxu0 %v7501
        %v7585 = vpop.f32.mrf.mxu0
        %v7586 = vadd.f32 0.0, %v7585
        %v7587 = vpop.f32.mrf.mxu0
        %v7588 = vpop.f32.mrf.mxu0
        %v7589 = vpop.f32.mrf.mxu0
        %7590 = vdwg.mxu0
        %v7591 = vadd.f32 %v7429, %v7586
        %s7592 = scalar_lea.vmem %s3, 2496
        %v7593 = vld [vmem:[%s7592] sm:$0xf]
        %v7594 = vld [vmem:[%s7592 + $0x4] sm:$0xf]
        %v7595 = vld [vmem:[%s7592 + $0x8] sm:$0xf]
        %v7596 = vld [vmem:[%s7592 + $0xc] sm:$0xf]
        %v7597 = vld [vmem:[%s7592 + $0x10] sm:$0xf]
        %v7598 = vld [vmem:[%s7592 + $0x14] sm:$0xf]
        %v7599 = vld [vmem:[%s7592 + $0x18] sm:$0xf]
        %v7600 = vld [vmem:[%s7592 + $0x1c] sm:$0xf]
        %v7601 = vld [vmem:[%s7592 + $0x20] sm:$0xf]
        %v7602 = vld [vmem:[%s7592 + $0x24] sm:$0xf]
        %v7603 = vld [vmem:[%s7592 + $0x28] sm:$0xf]
        %v7604 = vld [vmem:[%s7592 + $0x2c] sm:$0xf]
        %v7605 = vld [vmem:[%s7592 + $0x30] sm:$0xf]
        %v7606 = vld [vmem:[%s7592 + $0x34] sm:$0xf]
        %v7607 = vld [vmem:[%s7592 + $0x38] sm:$0xf]
        %v7608 = vld [vmem:[%s7592 + $0x3c] sm:$0xf]
        %v7609 = vrot.slane %v7479, 7
        %v7610 = vrot.slane %v7480, 6
        %v7611 = vsel %vm2104, %v7610, %v7609
        %v7612 = vrot.slane %v7481, 5
        %v7613 = vsel %vm2107, %v7612, %v7611
        %v7614 = vrot.slane %v7482, 4
        %v7615 = vsel %vm2110, %v7614, %v7613
        %v7616 = vrot.slane %v7483, 3
        %v7617 = vsel %vm2113, %v7616, %v7615
        %v7618 = vrot.slane %v7484, 2
        %v7619 = vsel %vm2116, %v7618, %v7617
        %v7620 = vrot.slane %v7485, 1
        %v7621 = vsel %vm2119, %v7620, %v7619
        %v7622 = vsel %vm2122, %v7486, %v7621
        %v7623 = vpack.c.b16 %v7622, %v7622
        %v7641 = vunpack.c.l.b16 %v7593
        %v7642 = vunpack.c.l.b16 %v7594
        %v7643 = vunpack.c.l.b16 %v7595
        %v7644 = vunpack.c.l.b16 %v7596
        %v7645 = vunpack.c.l.b16 %v7597
        %v7646 = vunpack.c.l.b16 %v7598
        %v7647 = vunpack.c.l.b16 %v7599
        %v7648 = vunpack.c.l.b16 %v7600
        %v7649 = vunpack.c.l.b16 %v7601
        %v7650 = vunpack.c.l.b16 %v7602
        %v7651 = vunpack.c.l.b16 %v7603
        %v7652 = vunpack.c.l.b16 %v7604
        %v7653 = vunpack.c.l.b16 %v7605
        %v7654 = vunpack.c.l.b16 %v7606
        %v7655 = vunpack.c.l.b16 %v7607
        %v7656 = vunpack.c.l.b16 %v7608
        %v7657 = vpack.c.b16 %v7642, %v7641
        %v7658 = vpack.c.b16 %v7644, %v7643
        %v7659 = vpack.c.b16 %v7646, %v7645
        %v7660 = vpack.c.b16 %v7648, %v7647
        %v7661 = vpack.c.b16 %v7650, %v7649
        %v7662 = vpack.c.b16 %v7652, %v7651
        %v7663 = vpack.c.b16 %v7654, %v7653
        %v7664 = vpack.c.b16 %v7656, %v7655
        %7673 = vmatprep.subr.bf16.mxu0 0
        %7674 = vmatpush1.bf16.msra.mxu0 %v7664
        %7675 = vmatprep.subr.bf16.mxu0 0
        %7676 = vmatpush1.bf16.msra.mxu0 %v7663
        %7677 = vmatprep.subr.bf16.mxu0 0
        %7678 = vmatpush1.bf16.msra.mxu0 %v7662
        %7679 = vmatprep.subr.bf16.mxu0 0
        %7680 = vmatpush1.bf16.msra.mxu0 %v7661
        %7681 = vmatprep.subr.bf16.mxu0 0
        %7682 = vmatpush1.bf16.msra.mxu0 %v7660
        %7683 = vmatprep.subr.bf16.mxu0 0
        %7684 = vmatpush1.bf16.msra.mxu0 %v7659
        %7685 = vmatprep.subr.bf16.mxu0 0
        %7686 = vmatpush1.bf16.msra.mxu0 %v7658
        %7687 = vmatprep.subr.bf16.mxu0 0
        %7688 = vmatpush1.bf16.msra.mxu0 %v7657
        %7689 = vmatprep.subr.bf16.mxu0 0
        %7690 = vmatpush2.bf16.msra.mxu0 0
        %7691 = vmatprep.subr.bf16.mxu0 0
        %7692 = vmatpush2.bf16.msra.mxu0 0
        %7693 = vmatprep.subr.bf16.mxu0 0
        %7694 = vmatpush2.bf16.msra.mxu0 0
        %7695 = vmatprep.subr.bf16.mxu0 0
        %7696 = vmatpush2.bf16.msra.mxu0 0
        %7697 = vmatprep.subr.bf16.mxu0 0
        %7698 = vmatpush2.bf16.msra.mxu0 0
        %7699 = vmatprep.subr.bf16.mxu0 0
        %7700 = vmatpush2.bf16.msra.mxu0 0
        %7701 = vmatprep.subr.bf16.mxu0 0
        %7702 = vmatpush2.bf16.msra.mxu0 0
        %7703 = vmatprep.subr.bf16.mxu0 0
        %7704 = vmatpush2.bf16.msra.mxu0 0
        %7705 = vmatprep.mubr.bf16.mxu0 0
        %7706 = vmatmul.mubr.bf16.gmra.mxu0 %v7623
        %v7707 = vpop.f32.mrf.mxu0
        %v7708 = vadd.f32 0.0, %v7707
        %v7709 = vpop.f32.mrf.mxu0
        %v7710 = vpop.f32.mrf.mxu0
        %v7711 = vpop.f32.mrf.mxu0
        %7712 = vdwg.mxu0
        %v7713 = vadd.f32 %v7591, %v7708
        %v7714 = vld [vmem:[#allocation2 + $0x14] sm:$0x1]
        %v7715 = vld [vmem:[#allocation2 + $0x34] sm:$0x1]
        %v7716 = vld [vmem:[#allocation2 + $0x54] sm:$0x1]
        %v7717 = vld [vmem:[#allocation2 + $0x74] sm:$0x1]
        %v7718 = vld [vmem:[#allocation2 + $0x94] sm:$0x1]
        %v7719 = vld [vmem:[#allocation2 + $0xb4] sm:$0x1]
        %v7720 = vld [vmem:[#allocation2 + $0xd4] sm:$0x1]
        %v7721 = vld [vmem:[#allocation2 + $0xf4] sm:$0x1]
        %s7722 = scalar_lea.vmem %s3, 2560
        %v7723 = vld [vmem:[%s7722] sm:$0xf]
        %v7724 = vld [vmem:[%s7722 + $0x4] sm:$0xf]
        %v7725 = vld [vmem:[%s7722 + $0x8] sm:$0xf]
        %v7726 = vld [vmem:[%s7722 + $0xc] sm:$0xf]
        %v7727 = vld [vmem:[%s7722 + $0x10] sm:$0xf]
        %v7728 = vld [vmem:[%s7722 + $0x14] sm:$0xf]
        %v7729 = vld [vmem:[%s7722 + $0x18] sm:$0xf]
        %v7730 = vld [vmem:[%s7722 + $0x1c] sm:$0xf]
        %v7731 = vld [vmem:[%s7722 + $0x20] sm:$0xf]
        %v7732 = vld [vmem:[%s7722 + $0x24] sm:$0xf]
        %v7733 = vld [vmem:[%s7722 + $0x28] sm:$0xf]
        %v7734 = vld [vmem:[%s7722 + $0x2c] sm:$0xf]
        %v7735 = vld [vmem:[%s7722 + $0x30] sm:$0xf]
        %v7736 = vld [vmem:[%s7722 + $0x34] sm:$0xf]
        %v7737 = vld [vmem:[%s7722 + $0x38] sm:$0xf]
        %v7738 = vld [vmem:[%s7722 + $0x3c] sm:$0xf]
        %v7747 = vunpack.c.l.b16 %v7714
        %v7748 = vunpack.c.l.b16 %v7715
        %v7749 = vunpack.c.l.b16 %v7716
        %v7750 = vunpack.c.l.b16 %v7717
        %v7751 = vunpack.c.l.b16 %v7718
        %v7752 = vunpack.c.l.b16 %v7719
        %v7753 = vunpack.c.l.b16 %v7720
        %v7754 = vunpack.c.l.b16 %v7721
        %v7755 = vpack.c.b16 %v7747, %v7747
        %v7756 = vpack.c.b16 %v7748, %v7748
        %v7757 = vpack.c.b16 %v7749, %v7749
        %v7758 = vpack.c.b16 %v7750, %v7750
        %v7759 = vpack.c.b16 %v7751, %v7751
        %v7760 = vpack.c.b16 %v7752, %v7752
        %v7761 = vpack.c.b16 %v7753, %v7753
        %v7762 = vpack.c.b16 %v7754, %v7754
        %v7763 = vunpack.c.l.b16 %v7755
        %v7764 = vunpack.c.l.b16 %v7756
        %v7765 = vunpack.c.l.b16 %v7757
        %v7766 = vunpack.c.l.b16 %v7758
        %v7767 = vunpack.c.l.b16 %v7759
        %v7768 = vunpack.c.l.b16 %v7760
        %v7769 = vunpack.c.l.b16 %v7761
        %v7770 = vunpack.c.l.b16 %v7762
        %v7771 = vrot.slane %v7764, 7
        %v7772 = vsel %vm2104, %v7771, %v7763
        %v7773 = vrot.slane %v7765, 6
        %v7774 = vsel %vm2107, %v7773, %v7772
        %v7775 = vrot.slane %v7766, 5
        %v7776 = vsel %vm2110, %v7775, %v7774
        %v7777 = vrot.slane %v7767, 4
        %v7778 = vsel %vm2113, %v7777, %v7776
        %v7779 = vrot.slane %v7768, 3
        %v7780 = vsel %vm2116, %v7779, %v7778
        %v7781 = vrot.slane %v7769, 2
        %v7782 = vsel %vm2119, %v7781, %v7780
        %v7783 = vrot.slane %v7770, 1
        %v7784 = vsel %vm2122, %v7783, %v7782
        %v7785 = vpack.c.b16 %v7784, %v7784
        %v7803 = vunpack.c.l.b16 %v7723
        %v7804 = vunpack.c.l.b16 %v7724
        %v7805 = vunpack.c.l.b16 %v7725
        %v7806 = vunpack.c.l.b16 %v7726
        %v7807 = vunpack.c.l.b16 %v7727
        %v7808 = vunpack.c.l.b16 %v7728
        %v7809 = vunpack.c.l.b16 %v7729
        %v7810 = vunpack.c.l.b16 %v7730
        %v7811 = vunpack.c.l.b16 %v7731
        %v7812 = vunpack.c.l.b16 %v7732
        %v7813 = vunpack.c.l.b16 %v7733
        %v7814 = vunpack.c.l.b16 %v7734
        %v7815 = vunpack.c.l.b16 %v7735
        %v7816 = vunpack.c.l.b16 %v7736
        %v7817 = vunpack.c.l.b16 %v7737
        %v7818 = vunpack.c.l.b16 %v7738
        %v7819 = vpack.c.b16 %v7804, %v7803
        %v7820 = vpack.c.b16 %v7806, %v7805
        %v7821 = vpack.c.b16 %v7808, %v7807
        %v7822 = vpack.c.b16 %v7810, %v7809
        %v7823 = vpack.c.b16 %v7812, %v7811
        %v7824 = vpack.c.b16 %v7814, %v7813
        %v7825 = vpack.c.b16 %v7816, %v7815
        %v7826 = vpack.c.b16 %v7818, %v7817
        %7835 = vmatprep.subr.bf16.mxu0 0
        %7836 = vmatpush1.bf16.msra.mxu0 %v7826
        %7837 = vmatprep.subr.bf16.mxu0 0
        %7838 = vmatpush1.bf16.msra.mxu0 %v7825
        %7839 = vmatprep.subr.bf16.mxu0 0
        %7840 = vmatpush1.bf16.msra.mxu0 %v7824
        %7841 = vmatprep.subr.bf16.mxu0 0
        %7842 = vmatpush1.bf16.msra.mxu0 %v7823
        %7843 = vmatprep.subr.bf16.mxu0 0
        %7844 = vmatpush1.bf16.msra.mxu0 %v7822
        %7845 = vmatprep.subr.bf16.mxu0 0
        %7846 = vmatpush1.bf16.msra.mxu0 %v7821
        %7847 = vmatprep.subr.bf16.mxu0 0
        %7848 = vmatpush1.bf16.msra.mxu0 %v7820
        %7849 = vmatprep.subr.bf16.mxu0 0
        %7850 = vmatpush1.bf16.msra.mxu0 %v7819
        %7851 = vmatprep.subr.bf16.mxu0 0
        %7852 = vmatpush2.bf16.msra.mxu0 0
        %7853 = vmatprep.subr.bf16.mxu0 0
        %7854 = vmatpush2.bf16.msra.mxu0 0
        %7855 = vmatprep.subr.bf16.mxu0 0
        %7856 = vmatpush2.bf16.msra.mxu0 0
        %7857 = vmatprep.subr.bf16.mxu0 0
        %7858 = vmatpush2.bf16.msra.mxu0 0
        %7859 = vmatprep.subr.bf16.mxu0 0
        %7860 = vmatpush2.bf16.msra.mxu0 0
        %7861 = vmatprep.subr.bf16.mxu0 0
        %7862 = vmatpush2.bf16.msra.mxu0 0
        %7863 = vmatprep.subr.bf16.mxu0 0
        %7864 = vmatpush2.bf16.msra.mxu0 0
        %7865 = vmatprep.subr.bf16.mxu0 0
        %7866 = vmatpush2.bf16.msra.mxu0 0
        %7867 = vmatprep.mubr.bf16.mxu0 0
        %7868 = vmatmul.mubr.bf16.gmra.mxu0 %v7785
        %v7869 = vpop.f32.mrf.mxu0
        %v7870 = vadd.f32 0.0, %v7869
        %v7871 = vpop.f32.mrf.mxu0
        %v7872 = vpop.f32.mrf.mxu0
        %v7873 = vpop.f32.mrf.mxu0
        %7874 = vdwg.mxu0
        %v7875 = vadd.f32 %v7713, %v7870
        %s7876 = scalar_lea.vmem %s3, 2624
        %v7877 = vld [vmem:[%s7876] sm:$0xf]
        %v7878 = vld [vmem:[%s7876 + $0x4] sm:$0xf]
        %v7879 = vld [vmem:[%s7876 + $0x8] sm:$0xf]
        %v7880 = vld [vmem:[%s7876 + $0xc] sm:$0xf]
        %v7881 = vld [vmem:[%s7876 + $0x10] sm:$0xf]
        %v7882 = vld [vmem:[%s7876 + $0x14] sm:$0xf]
        %v7883 = vld [vmem:[%s7876 + $0x18] sm:$0xf]
        %v7884 = vld [vmem:[%s7876 + $0x1c] sm:$0xf]
        %v7885 = vld [vmem:[%s7876 + $0x20] sm:$0xf]
        %v7886 = vld [vmem:[%s7876 + $0x24] sm:$0xf]
        %v7887 = vld [vmem:[%s7876 + $0x28] sm:$0xf]
        %v7888 = vld [vmem:[%s7876 + $0x2c] sm:$0xf]
        %v7889 = vld [vmem:[%s7876 + $0x30] sm:$0xf]
        %v7890 = vld [vmem:[%s7876 + $0x34] sm:$0xf]
        %v7891 = vld [vmem:[%s7876 + $0x38] sm:$0xf]
        %v7892 = vld [vmem:[%s7876 + $0x3c] sm:$0xf]
        %v7893 = vrot.slane %v7763, 1
        %v7894 = vsel %vm2104, %v7764, %v7893
        %v7895 = vrot.slane %v7765, 7
        %v7896 = vsel %vm2107, %v7895, %v7894
        %v7897 = vrot.slane %v7766, 6
        %v7898 = vsel %vm2110, %v7897, %v7896
        %v7899 = vrot.slane %v7767, 5
        %v7900 = vsel %vm2113, %v7899, %v7898
        %v7901 = vrot.slane %v7768, 4
        %v7902 = vsel %vm2116, %v7901, %v7900
        %v7903 = vrot.slane %v7769, 3
        %v7904 = vsel %vm2119, %v7903, %v7902
        %v7905 = vrot.slane %v7770, 2
        %v7906 = vsel %vm2122, %v7905, %v7904
        %v7907 = vpack.c.b16 %v7906, %v7906
        %v7925 = vunpack.c.l.b16 %v7877
        %v7926 = vunpack.c.l.b16 %v7878
        %v7927 = vunpack.c.l.b16 %v7879
        %v7928 = vunpack.c.l.b16 %v7880
        %v7929 = vunpack.c.l.b16 %v7881
        %v7930 = vunpack.c.l.b16 %v7882
        %v7931 = vunpack.c.l.b16 %v7883
        %v7932 = vunpack.c.l.b16 %v7884
        %v7933 = vunpack.c.l.b16 %v7885
        %v7934 = vunpack.c.l.b16 %v7886
        %v7935 = vunpack.c.l.b16 %v7887
        %v7936 = vunpack.c.l.b16 %v7888
        %v7937 = vunpack.c.l.b16 %v7889
        %v7938 = vunpack.c.l.b16 %v7890
        %v7939 = vunpack.c.l.b16 %v7891
        %v7940 = vunpack.c.l.b16 %v7892
        %v7941 = vpack.c.b16 %v7926, %v7925
        %v7942 = vpack.c.b16 %v7928, %v7927
        %v7943 = vpack.c.b16 %v7930, %v7929
        %v7944 = vpack.c.b16 %v7932, %v7931
        %v7945 = vpack.c.b16 %v7934, %v7933
        %v7946 = vpack.c.b16 %v7936, %v7935
        %v7947 = vpack.c.b16 %v7938, %v7937
        %v7948 = vpack.c.b16 %v7940, %v7939
        %7957 = vmatprep.subr.bf16.mxu0 0
        %7958 = vmatpush1.bf16.msra.mxu0 %v7948
        %7959 = vmatprep.subr.bf16.mxu0 0
        %7960 = vmatpush1.bf16.msra.mxu0 %v7947
        %7961 = vmatprep.subr.bf16.mxu0 0
        %7962 = vmatpush1.bf16.msra.mxu0 %v7946
        %7963 = vmatprep.subr.bf16.mxu0 0
        %7964 = vmatpush1.bf16.msra.mxu0 %v7945
        %7965 = vmatprep.subr.bf16.mxu0 0
        %7966 = vmatpush1.bf16.msra.mxu0 %v7944
        %7967 = vmatprep.subr.bf16.mxu0 0
        %7968 = vmatpush1.bf16.msra.mxu0 %v7943
        %7969 = vmatprep.subr.bf16.mxu0 0
        %7970 = vmatpush1.bf16.msra.mxu0 %v7942
        %7971 = vmatprep.subr.bf16.mxu0 0
        %7972 = vmatpush1.bf16.msra.mxu0 %v7941
        %7973 = vmatprep.subr.bf16.mxu0 0
        %7974 = vmatpush2.bf16.msra.mxu0 0
        %7975 = vmatprep.subr.bf16.mxu0 0
        %7976 = vmatpush2.bf16.msra.mxu0 0
        %7977 = vmatprep.subr.bf16.mxu0 0
        %7978 = vmatpush2.bf16.msra.mxu0 0
        %7979 = vmatprep.subr.bf16.mxu0 0
        %7980 = vmatpush2.bf16.msra.mxu0 0
        %7981 = vmatprep.subr.bf16.mxu0 0
        %7982 = vmatpush2.bf16.msra.mxu0 0
        %7983 = vmatprep.subr.bf16.mxu0 0
        %7984 = vmatpush2.bf16.msra.mxu0 0
        %7985 = vmatprep.subr.bf16.mxu0 0
        %7986 = vmatpush2.bf16.msra.mxu0 0
        %7987 = vmatprep.subr.bf16.mxu0 0
        %7988 = vmatpush2.bf16.msra.mxu0 0
        %7989 = vmatprep.mubr.bf16.mxu0 0
        %7990 = vmatmul.mubr.bf16.gmra.mxu0 %v7907
        %v7991 = vpop.f32.mrf.mxu0
        %v7992 = vadd.f32 0.0, %v7991
        %v7993 = vpop.f32.mrf.mxu0
        %v7994 = vpop.f32.mrf.mxu0
        %v7995 = vpop.f32.mrf.mxu0
        %7996 = vdwg.mxu0
        %v7997 = vadd.f32 %v7875, %v7992
        %v7998 = vld [vmem:[#allocation2 + $0x14] sm:$0x2]
        %v7999 = vld [vmem:[#allocation2 + $0x34] sm:$0x2]
        %v8000 = vld [vmem:[#allocation2 + $0x54] sm:$0x2]
        %v8001 = vld [vmem:[#allocation2 + $0x74] sm:$0x2]
        %v8002 = vld [vmem:[#allocation2 + $0x94] sm:$0x2]
        %v8003 = vld [vmem:[#allocation2 + $0xb4] sm:$0x2]
        %v8004 = vld [vmem:[#allocation2 + $0xd4] sm:$0x2]
        %v8005 = vld [vmem:[#allocation2 + $0xf4] sm:$0x2]
        %s8006 = scalar_lea.vmem %s3, 2688
        %v8007 = vld [vmem:[%s8006] sm:$0xf]
        %v8008 = vld [vmem:[%s8006 + $0x4] sm:$0xf]
        %v8009 = vld [vmem:[%s8006 + $0x8] sm:$0xf]
        %v8010 = vld [vmem:[%s8006 + $0xc] sm:$0xf]
        %v8011 = vld [vmem:[%s8006 + $0x10] sm:$0xf]
        %v8012 = vld [vmem:[%s8006 + $0x14] sm:$0xf]
        %v8013 = vld [vmem:[%s8006 + $0x18] sm:$0xf]
        %v8014 = vld [vmem:[%s8006 + $0x1c] sm:$0xf]
        %v8015 = vld [vmem:[%s8006 + $0x20] sm:$0xf]
        %v8016 = vld [vmem:[%s8006 + $0x24] sm:$0xf]
        %v8017 = vld [vmem:[%s8006 + $0x28] sm:$0xf]
        %v8018 = vld [vmem:[%s8006 + $0x2c] sm:$0xf]
        %v8019 = vld [vmem:[%s8006 + $0x30] sm:$0xf]
        %v8020 = vld [vmem:[%s8006 + $0x34] sm:$0xf]
        %v8021 = vld [vmem:[%s8006 + $0x38] sm:$0xf]
        %v8022 = vld [vmem:[%s8006 + $0x3c] sm:$0xf]
        %v8031 = vunpack.c.l.b16 %v7998
        %v8032 = vunpack.c.l.b16 %v7999
        %v8033 = vunpack.c.l.b16 %v8000
        %v8034 = vunpack.c.l.b16 %v8001
        %v8035 = vunpack.c.l.b16 %v8002
        %v8036 = vunpack.c.l.b16 %v8003
        %v8037 = vunpack.c.l.b16 %v8004
        %v8038 = vunpack.c.l.b16 %v8005
        %v8039 = vpack.c.b16 %v8031, %v8031
        %v8040 = vpack.c.b16 %v8032, %v8032
        %v8041 = vpack.c.b16 %v8033, %v8033
        %v8042 = vpack.c.b16 %v8034, %v8034
        %v8043 = vpack.c.b16 %v8035, %v8035
        %v8044 = vpack.c.b16 %v8036, %v8036
        %v8045 = vpack.c.b16 %v8037, %v8037
        %v8046 = vpack.c.b16 %v8038, %v8038
        %v8047 = vunpack.c.l.b16 %v8039
        %v8048 = vunpack.c.l.b16 %v8040
        %v8049 = vunpack.c.l.b16 %v8041
        %v8050 = vunpack.c.l.b16 %v8042
        %v8051 = vunpack.c.l.b16 %v8043
        %v8052 = vunpack.c.l.b16 %v8044
        %v8053 = vunpack.c.l.b16 %v8045
        %v8054 = vunpack.c.l.b16 %v8046
        %v8055 = vrot.slane %v8047, 2
        %v8056 = vrot.slane %v8048, 1
        %v8057 = vsel %vm2104, %v8056, %v8055
        %v8058 = vsel %vm2107, %v8049, %v8057
        %v8059 = vrot.slane %v8050, 7
        %v8060 = vsel %vm2110, %v8059, %v8058
        %v8061 = vrot.slane %v8051, 6
        %v8062 = vsel %vm2113, %v8061, %v8060
        %v8063 = vrot.slane %v8052, 5
        %v8064 = vsel %vm2116, %v8063, %v8062
        %v8065 = vrot.slane %v8053, 4
        %v8066 = vsel %vm2119, %v8065, %v8064
        %v8067 = vrot.slane %v8054, 3
        %v8068 = vsel %vm2122, %v8067, %v8066
        %v8069 = vpack.c.b16 %v8068, %v8068
        %v8087 = vunpack.c.l.b16 %v8007
        %v8088 = vunpack.c.l.b16 %v8008
        %v8089 = vunpack.c.l.b16 %v8009
        %v8090 = vunpack.c.l.b16 %v8010
        %v8091 = vunpack.c.l.b16 %v8011
        %v8092 = vunpack.c.l.b16 %v8012
        %v8093 = vunpack.c.l.b16 %v8013
        %v8094 = vunpack.c.l.b16 %v8014
        %v8095 = vunpack.c.l.b16 %v8015
        %v8096 = vunpack.c.l.b16 %v8016
        %v8097 = vunpack.c.l.b16 %v8017
        %v8098 = vunpack.c.l.b16 %v8018
        %v8099 = vunpack.c.l.b16 %v8019
        %v8100 = vunpack.c.l.b16 %v8020
        %v8101 = vunpack.c.l.b16 %v8021
        %v8102 = vunpack.c.l.b16 %v8022
        %v8103 = vpack.c.b16 %v8088, %v8087
        %v8104 = vpack.c.b16 %v8090, %v8089
        %v8105 = vpack.c.b16 %v8092, %v8091
        %v8106 = vpack.c.b16 %v8094, %v8093
        %v8107 = vpack.c.b16 %v8096, %v8095
        %v8108 = vpack.c.b16 %v8098, %v8097
        %v8109 = vpack.c.b16 %v8100, %v8099
        %v8110 = vpack.c.b16 %v8102, %v8101
        %8119 = vmatprep.subr.bf16.mxu0 0
        %8120 = vmatpush1.bf16.msra.mxu0 %v8110
        %8121 = vmatprep.subr.bf16.mxu0 0
        %8122 = vmatpush1.bf16.msra.mxu0 %v8109
        %8123 = vmatprep.subr.bf16.mxu0 0
        %8124 = vmatpush1.bf16.msra.mxu0 %v8108
        %8125 = vmatprep.subr.bf16.mxu0 0
        %8126 = vmatpush1.bf16.msra.mxu0 %v8107
        %8127 = vmatprep.subr.bf16.mxu0 0
        %8128 = vmatpush1.bf16.msra.mxu0 %v8106
        %8129 = vmatprep.subr.bf16.mxu0 0
        %8130 = vmatpush1.bf16.msra.mxu0 %v8105
        %8131 = vmatprep.subr.bf16.mxu0 0
        %8132 = vmatpush1.bf16.msra.mxu0 %v8104
        %8133 = vmatprep.subr.bf16.mxu0 0
        %8134 = vmatpush1.bf16.msra.mxu0 %v8103
        %8135 = vmatprep.subr.bf16.mxu0 0
        %8136 = vmatpush2.bf16.msra.mxu0 0
        %8137 = vmatprep.subr.bf16.mxu0 0
        %8138 = vmatpush2.bf16.msra.mxu0 0
        %8139 = vmatprep.subr.bf16.mxu0 0
        %8140 = vmatpush2.bf16.msra.mxu0 0
        %8141 = vmatprep.subr.bf16.mxu0 0
        %8142 = vmatpush2.bf16.msra.mxu0 0
        %8143 = vmatprep.subr.bf16.mxu0 0
        %8144 = vmatpush2.bf16.msra.mxu0 0
        %8145 = vmatprep.subr.bf16.mxu0 0
        %8146 = vmatpush2.bf16.msra.mxu0 0
        %8147 = vmatprep.subr.bf16.mxu0 0
        %8148 = vmatpush2.bf16.msra.mxu0 0
        %8149 = vmatprep.subr.bf16.mxu0 0
        %8150 = vmatpush2.bf16.msra.mxu0 0
        %8151 = vmatprep.mubr.bf16.mxu0 0
        %8152 = vmatmul.mubr.bf16.gmra.mxu0 %v8069
        %v8153 = vpop.f32.mrf.mxu0
        %v8154 = vadd.f32 0.0, %v8153
        %v8155 = vpop.f32.mrf.mxu0
        %v8156 = vpop.f32.mrf.mxu0
        %v8157 = vpop.f32.mrf.mxu0
        %8158 = vdwg.mxu0
        %v8159 = vadd.f32 %v7997, %v8154
        %s8160 = scalar_lea.vmem %s3, 2752
        %v8161 = vld [vmem:[%s8160] sm:$0xf]
        %v8162 = vld [vmem:[%s8160 + $0x4] sm:$0xf]
        %v8163 = vld [vmem:[%s8160 + $0x8] sm:$0xf]
        %v8164 = vld [vmem:[%s8160 + $0xc] sm:$0xf]
        %v8165 = vld [vmem:[%s8160 + $0x10] sm:$0xf]
        %v8166 = vld [vmem:[%s8160 + $0x14] sm:$0xf]
        %v8167 = vld [vmem:[%s8160 + $0x18] sm:$0xf]
        %v8168 = vld [vmem:[%s8160 + $0x1c] sm:$0xf]
        %v8169 = vld [vmem:[%s8160 + $0x20] sm:$0xf]
        %v8170 = vld [vmem:[%s8160 + $0x24] sm:$0xf]
        %v8171 = vld [vmem:[%s8160 + $0x28] sm:$0xf]
        %v8172 = vld [vmem:[%s8160 + $0x2c] sm:$0xf]
        %v8173 = vld [vmem:[%s8160 + $0x30] sm:$0xf]
        %v8174 = vld [vmem:[%s8160 + $0x34] sm:$0xf]
        %v8175 = vld [vmem:[%s8160 + $0x38] sm:$0xf]
        %v8176 = vld [vmem:[%s8160 + $0x3c] sm:$0xf]
        %v8177 = vrot.slane %v8047, 3
        %v8178 = vrot.slane %v8048, 2
        %v8179 = vsel %vm2104, %v8178, %v8177
        %v8180 = vrot.slane %v8049, 1
        %v8181 = vsel %vm2107, %v8180, %v8179
        %v8182 = vsel %vm2110, %v8050, %v8181
        %v8183 = vrot.slane %v8051, 7
        %v8184 = vsel %vm2113, %v8183, %v8182
        %v8185 = vrot.slane %v8052, 6
        %v8186 = vsel %vm2116, %v8185, %v8184
        %v8187 = vrot.slane %v8053, 5
        %v8188 = vsel %vm2119, %v8187, %v8186
        %v8189 = vrot.slane %v8054, 4
        %v8190 = vsel %vm2122, %v8189, %v8188
        %v8191 = vpack.c.b16 %v8190, %v8190
        %v8209 = vunpack.c.l.b16 %v8161
        %v8210 = vunpack.c.l.b16 %v8162
        %v8211 = vunpack.c.l.b16 %v8163
        %v8212 = vunpack.c.l.b16 %v8164
        %v8213 = vunpack.c.l.b16 %v8165
        %v8214 = vunpack.c.l.b16 %v8166
        %v8215 = vunpack.c.l.b16 %v8167
        %v8216 = vunpack.c.l.b16 %v8168
        %v8217 = vunpack.c.l.b16 %v8169
        %v8218 = vunpack.c.l.b16 %v8170
        %v8219 = vunpack.c.l.b16 %v8171
        %v8220 = vunpack.c.l.b16 %v8172
        %v8221 = vunpack.c.l.b16 %v8173
        %v8222 = vunpack.c.l.b16 %v8174
        %v8223 = vunpack.c.l.b16 %v8175
        %v8224 = vunpack.c.l.b16 %v8176
        %v8225 = vpack.c.b16 %v8210, %v8209
        %v8226 = vpack.c.b16 %v8212, %v8211
        %v8227 = vpack.c.b16 %v8214, %v8213
        %v8228 = vpack.c.b16 %v8216, %v8215
        %v8229 = vpack.c.b16 %v8218, %v8217
        %v8230 = vpack.c.b16 %v8220, %v8219
        %v8231 = vpack.c.b16 %v8222, %v8221
        %v8232 = vpack.c.b16 %v8224, %v8223
        %8241 = vmatprep.subr.bf16.mxu0 0
        %8242 = vmatpush1.bf16.msra.mxu0 %v8232
        %8243 = vmatprep.subr.bf16.mxu0 0
        %8244 = vmatpush1.bf16.msra.mxu0 %v8231
        %8245 = vmatprep.subr.bf16.mxu0 0
        %8246 = vmatpush1.bf16.msra.mxu0 %v8230
        %8247 = vmatprep.subr.bf16.mxu0 0
        %8248 = vmatpush1.bf16.msra.mxu0 %v8229
        %8249 = vmatprep.subr.bf16.mxu0 0
        %8250 = vmatpush1.bf16.msra.mxu0 %v8228
        %8251 = vmatprep.subr.bf16.mxu0 0
        %8252 = vmatpush1.bf16.msra.mxu0 %v8227
        %8253 = vmatprep.subr.bf16.mxu0 0
        %8254 = vmatpush1.bf16.msra.mxu0 %v8226
        %8255 = vmatprep.subr.bf16.mxu0 0
        %8256 = vmatpush1.bf16.msra.mxu0 %v8225
        %8257 = vmatprep.subr.bf16.mxu0 0
        %8258 = vmatpush2.bf16.msra.mxu0 0
        %8259 = vmatprep.subr.bf16.mxu0 0
        %8260 = vmatpush2.bf16.msra.mxu0 0
        %8261 = vmatprep.subr.bf16.mxu0 0
        %8262 = vmatpush2.bf16.msra.mxu0 0
        %8263 = vmatprep.subr.bf16.mxu0 0
        %8264 = vmatpush2.bf16.msra.mxu0 0
        %8265 = vmatprep.subr.bf16.mxu0 0
        %8266 = vmatpush2.bf16.msra.mxu0 0
        %8267 = vmatprep.subr.bf16.mxu0 0
        %8268 = vmatpush2.bf16.msra.mxu0 0
        %8269 = vmatprep.subr.bf16.mxu0 0
        %8270 = vmatpush2.bf16.msra.mxu0 0
        %8271 = vmatprep.subr.bf16.mxu0 0
        %8272 = vmatpush2.bf16.msra.mxu0 0
        %8273 = vmatprep.mubr.bf16.mxu0 0
        %8274 = vmatmul.mubr.bf16.gmra.mxu0 %v8191
        %v8275 = vpop.f32.mrf.mxu0
        %v8276 = vadd.f32 0.0, %v8275
        %v8277 = vpop.f32.mrf.mxu0
        %v8278 = vpop.f32.mrf.mxu0
        %v8279 = vpop.f32.mrf.mxu0
        %8280 = vdwg.mxu0
        %v8281 = vadd.f32 %v8159, %v8276
        %v8282 = vld [vmem:[#allocation2 + $0x14] sm:$0x4]
        %v8283 = vld [vmem:[#allocation2 + $0x34] sm:$0x4]
        %v8284 = vld [vmem:[#allocation2 + $0x54] sm:$0x4]
        %v8285 = vld [vmem:[#allocation2 + $0x74] sm:$0x4]
        %v8286 = vld [vmem:[#allocation2 + $0x94] sm:$0x4]
        %v8287 = vld [vmem:[#allocation2 + $0xb4] sm:$0x4]
        %v8288 = vld [vmem:[#allocation2 + $0xd4] sm:$0x4]
        %v8289 = vld [vmem:[#allocation2 + $0xf4] sm:$0x4]
        %s8290 = scalar_lea.vmem %s3, 2816
        %v8291 = vld [vmem:[%s8290] sm:$0xf]
        %v8292 = vld [vmem:[%s8290 + $0x4] sm:$0xf]
        %v8293 = vld [vmem:[%s8290 + $0x8] sm:$0xf]
        %v8294 = vld [vmem:[%s8290 + $0xc] sm:$0xf]
        %v8295 = vld [vmem:[%s8290 + $0x10] sm:$0xf]
        %v8296 = vld [vmem:[%s8290 + $0x14] sm:$0xf]
        %v8297 = vld [vmem:[%s8290 + $0x18] sm:$0xf]
        %v8298 = vld [vmem:[%s8290 + $0x1c] sm:$0xf]
        %v8299 = vld [vmem:[%s8290 + $0x20] sm:$0xf]
        %v8300 = vld [vmem:[%s8290 + $0x24] sm:$0xf]
        %v8301 = vld [vmem:[%s8290 + $0x28] sm:$0xf]
        %v8302 = vld [vmem:[%s8290 + $0x2c] sm:$0xf]
        %v8303 = vld [vmem:[%s8290 + $0x30] sm:$0xf]
        %v8304 = vld [vmem:[%s8290 + $0x34] sm:$0xf]
        %v8305 = vld [vmem:[%s8290 + $0x38] sm:$0xf]
        %v8306 = vld [vmem:[%s8290 + $0x3c] sm:$0xf]
        %v8315 = vunpack.c.l.b16 %v8282
        %v8316 = vunpack.c.l.b16 %v8283
        %v8317 = vunpack.c.l.b16 %v8284
        %v8318 = vunpack.c.l.b16 %v8285
        %v8319 = vunpack.c.l.b16 %v8286
        %v8320 = vunpack.c.l.b16 %v8287
        %v8321 = vunpack.c.l.b16 %v8288
        %v8322 = vunpack.c.l.b16 %v8289
        %v8323 = vpack.c.b16 %v8315, %v8315
        %v8324 = vpack.c.b16 %v8316, %v8316
        %v8325 = vpack.c.b16 %v8317, %v8317
        %v8326 = vpack.c.b16 %v8318, %v8318
        %v8327 = vpack.c.b16 %v8319, %v8319
        %v8328 = vpack.c.b16 %v8320, %v8320
        %v8329 = vpack.c.b16 %v8321, %v8321
        %v8330 = vpack.c.b16 %v8322, %v8322
        %v8331 = vunpack.c.l.b16 %v8323
        %v8332 = vunpack.c.l.b16 %v8324
        %v8333 = vunpack.c.l.b16 %v8325
        %v8334 = vunpack.c.l.b16 %v8326
        %v8335 = vunpack.c.l.b16 %v8327
        %v8336 = vunpack.c.l.b16 %v8328
        %v8337 = vunpack.c.l.b16 %v8329
        %v8338 = vunpack.c.l.b16 %v8330
        %v8339 = vrot.slane %v8331, 4
        %v8340 = vrot.slane %v8332, 3
        %v8341 = vsel %vm2104, %v8340, %v8339
        %v8342 = vrot.slane %v8333, 2
        %v8343 = vsel %vm2107, %v8342, %v8341
        %v8344 = vrot.slane %v8334, 1
        %v8345 = vsel %vm2110, %v8344, %v8343
        %v8346 = vsel %vm2113, %v8335, %v8345
        %v8347 = vrot.slane %v8336, 7
        %v8348 = vsel %vm2116, %v8347, %v8346
        %v8349 = vrot.slane %v8337, 6
        %v8350 = vsel %vm2119, %v8349, %v8348
        %v8351 = vrot.slane %v8338, 5
        %v8352 = vsel %vm2122, %v8351, %v8350
        %v8353 = vpack.c.b16 %v8352, %v8352
        %v8371 = vunpack.c.l.b16 %v8291
        %v8372 = vunpack.c.l.b16 %v8292
        %v8373 = vunpack.c.l.b16 %v8293
        %v8374 = vunpack.c.l.b16 %v8294
        %v8375 = vunpack.c.l.b16 %v8295
        %v8376 = vunpack.c.l.b16 %v8296
        %v8377 = vunpack.c.l.b16 %v8297
        %v8378 = vunpack.c.l.b16 %v8298
        %v8379 = vunpack.c.l.b16 %v8299
        %v8380 = vunpack.c.l.b16 %v8300
        %v8381 = vunpack.c.l.b16 %v8301
        %v8382 = vunpack.c.l.b16 %v8302
        %v8383 = vunpack.c.l.b16 %v8303
        %v8384 = vunpack.c.l.b16 %v8304
        %v8385 = vunpack.c.l.b16 %v8305
        %v8386 = vunpack.c.l.b16 %v8306
        %v8387 = vpack.c.b16 %v8372, %v8371
        %v8388 = vpack.c.b16 %v8374, %v8373
        %v8389 = vpack.c.b16 %v8376, %v8375
        %v8390 = vpack.c.b16 %v8378, %v8377
        %v8391 = vpack.c.b16 %v8380, %v8379
        %v8392 = vpack.c.b16 %v8382, %v8381
        %v8393 = vpack.c.b16 %v8384, %v8383
        %v8394 = vpack.c.b16 %v8386, %v8385
        %8403 = vmatprep.subr.bf16.mxu0 0
        %8404 = vmatpush1.bf16.msra.mxu0 %v8394
        %8405 = vmatprep.subr.bf16.mxu0 0
        %8406 = vmatpush1.bf16.msra.mxu0 %v8393
        %8407 = vmatprep.subr.bf16.mxu0 0
        %8408 = vmatpush1.bf16.msra.mxu0 %v8392
        %8409 = vmatprep.subr.bf16.mxu0 0
        %8410 = vmatpush1.bf16.msra.mxu0 %v8391
        %8411 = vmatprep.subr.bf16.mxu0 0
        %8412 = vmatpush1.bf16.msra.mxu0 %v8390
        %8413 = vmatprep.subr.bf16.mxu0 0
        %8414 = vmatpush1.bf16.msra.mxu0 %v8389
        %8415 = vmatprep.subr.bf16.mxu0 0
        %8416 = vmatpush1.bf16.msra.mxu0 %v8388
        %8417 = vmatprep.subr.bf16.mxu0 0
        %8418 = vmatpush1.bf16.msra.mxu0 %v8387
        %8419 = vmatprep.subr.bf16.mxu0 0
        %8420 = vmatpush2.bf16.msra.mxu0 0
        %8421 = vmatprep.subr.bf16.mxu0 0
        %8422 = vmatpush2.bf16.msra.mxu0 0
        %8423 = vmatprep.subr.bf16.mxu0 0
        %8424 = vmatpush2.bf16.msra.mxu0 0
        %8425 = vmatprep.subr.bf16.mxu0 0
        %8426 = vmatpush2.bf16.msra.mxu0 0
        %8427 = vmatprep.subr.bf16.mxu0 0
        %8428 = vmatpush2.bf16.msra.mxu0 0
        %8429 = vmatprep.subr.bf16.mxu0 0
        %8430 = vmatpush2.bf16.msra.mxu0 0
        %8431 = vmatprep.subr.bf16.mxu0 0
        %8432 = vmatpush2.bf16.msra.mxu0 0
        %8433 = vmatprep.subr.bf16.mxu0 0
        %8434 = vmatpush2.bf16.msra.mxu0 0
        %8435 = vmatprep.mubr.bf16.mxu0 0
        %8436 = vmatmul.mubr.bf16.gmra.mxu0 %v8353
        %v8437 = vpop.f32.mrf.mxu0
        %v8438 = vadd.f32 0.0, %v8437
        %v8439 = vpop.f32.mrf.mxu0
        %v8440 = vpop.f32.mrf.mxu0
        %v8441 = vpop.f32.mrf.mxu0
        %8442 = vdwg.mxu0
        %v8443 = vadd.f32 %v8281, %v8438
        %s8444 = scalar_lea.vmem %s3, 2880
        %v8445 = vld [vmem:[%s8444] sm:$0xf]
        %v8446 = vld [vmem:[%s8444 + $0x4] sm:$0xf]
        %v8447 = vld [vmem:[%s8444 + $0x8] sm:$0xf]
        %v8448 = vld [vmem:[%s8444 + $0xc] sm:$0xf]
        %v8449 = vld [vmem:[%s8444 + $0x10] sm:$0xf]
        %v8450 = vld [vmem:[%s8444 + $0x14] sm:$0xf]
        %v8451 = vld [vmem:[%s8444 + $0x18] sm:$0xf]
        %v8452 = vld [vmem:[%s8444 + $0x1c] sm:$0xf]
        %v8453 = vld [vmem:[%s8444 + $0x20] sm:$0xf]
        %v8454 = vld [vmem:[%s8444 + $0x24] sm:$0xf]
        %v8455 = vld [vmem:[%s8444 + $0x28] sm:$0xf]
        %v8456 = vld [vmem:[%s8444 + $0x2c] sm:$0xf]
        %v8457 = vld [vmem:[%s8444 + $0x30] sm:$0xf]
        %v8458 = vld [vmem:[%s8444 + $0x34] sm:$0xf]
        %v8459 = vld [vmem:[%s8444 + $0x38] sm:$0xf]
        %v8460 = vld [vmem:[%s8444 + $0x3c] sm:$0xf]
        %v8461 = vrot.slane %v8331, 5
        %v8462 = vrot.slane %v8332, 4
        %v8463 = vsel %vm2104, %v8462, %v8461
        %v8464 = vrot.slane %v8333, 3
        %v8465 = vsel %vm2107, %v8464, %v8463
        %v8466 = vrot.slane %v8334, 2
        %v8467 = vsel %vm2110, %v8466, %v8465
        %v8468 = vrot.slane %v8335, 1
        %v8469 = vsel %vm2113, %v8468, %v8467
        %v8470 = vsel %vm2116, %v8336, %v8469
        %v8471 = vrot.slane %v8337, 7
        %v8472 = vsel %vm2119, %v8471, %v8470
        %v8473 = vrot.slane %v8338, 6
        %v8474 = vsel %vm2122, %v8473, %v8472
        %v8475 = vpack.c.b16 %v8474, %v8474
        %v8493 = vunpack.c.l.b16 %v8445
        %v8494 = vunpack.c.l.b16 %v8446
        %v8495 = vunpack.c.l.b16 %v8447
        %v8496 = vunpack.c.l.b16 %v8448
        %v8497 = vunpack.c.l.b16 %v8449
        %v8498 = vunpack.c.l.b16 %v8450
        %v8499 = vunpack.c.l.b16 %v8451
        %v8500 = vunpack.c.l.b16 %v8452
        %v8501 = vunpack.c.l.b16 %v8453
        %v8502 = vunpack.c.l.b16 %v8454
        %v8503 = vunpack.c.l.b16 %v8455
        %v8504 = vunpack.c.l.b16 %v8456
        %v8505 = vunpack.c.l.b16 %v8457
        %v8506 = vunpack.c.l.b16 %v8458
        %v8507 = vunpack.c.l.b16 %v8459
        %v8508 = vunpack.c.l.b16 %v8460
        %v8509 = vpack.c.b16 %v8494, %v8493
        %v8510 = vpack.c.b16 %v8496, %v8495
        %v8511 = vpack.c.b16 %v8498, %v8497
        %v8512 = vpack.c.b16 %v8500, %v8499
        %v8513 = vpack.c.b16 %v8502, %v8501
        %v8514 = vpack.c.b16 %v8504, %v8503
        %v8515 = vpack.c.b16 %v8506, %v8505
        %v8516 = vpack.c.b16 %v8508, %v8507
        %8525 = vmatprep.subr.bf16.mxu0 0
        %8526 = vmatpush1.bf16.msra.mxu0 %v8516
        %8527 = vmatprep.subr.bf16.mxu0 0
        %8528 = vmatpush1.bf16.msra.mxu0 %v8515
        %8529 = vmatprep.subr.bf16.mxu0 0
        %8530 = vmatpush1.bf16.msra.mxu0 %v8514
        %8531 = vmatprep.subr.bf16.mxu0 0
        %8532 = vmatpush1.bf16.msra.mxu0 %v8513
        %8533 = vmatprep.subr.bf16.mxu0 0
        %8534 = vmatpush1.bf16.msra.mxu0 %v8512
        %8535 = vmatprep.subr.bf16.mxu0 0
        %8536 = vmatpush1.bf16.msra.mxu0 %v8511
        %8537 = vmatprep.subr.bf16.mxu0 0
        %8538 = vmatpush1.bf16.msra.mxu0 %v8510
        %8539 = vmatprep.subr.bf16.mxu0 0
        %8540 = vmatpush1.bf16.msra.mxu0 %v8509
        %8541 = vmatprep.subr.bf16.mxu0 0
        %8542 = vmatpush2.bf16.msra.mxu0 0
        %8543 = vmatprep.subr.bf16.mxu0 0
        %8544 = vmatpush2.bf16.msra.mxu0 0
        %8545 = vmatprep.subr.bf16.mxu0 0
        %8546 = vmatpush2.bf16.msra.mxu0 0
        %8547 = vmatprep.subr.bf16.mxu0 0
        %8548 = vmatpush2.bf16.msra.mxu0 0
        %8549 = vmatprep.subr.bf16.mxu0 0
        %8550 = vmatpush2.bf16.msra.mxu0 0
        %8551 = vmatprep.subr.bf16.mxu0 0
        %8552 = vmatpush2.bf16.msra.mxu0 0
        %8553 = vmatprep.subr.bf16.mxu0 0
        %8554 = vmatpush2.bf16.msra.mxu0 0
        %8555 = vmatprep.subr.bf16.mxu0 0
        %8556 = vmatpush2.bf16.msra.mxu0 0
        %8557 = vmatprep.mubr.bf16.mxu0 0
        %8558 = vmatmul.mubr.bf16.gmra.mxu0 %v8475
        %v8559 = vpop.f32.mrf.mxu0
        %v8560 = vadd.f32 0.0, %v8559
        %v8561 = vpop.f32.mrf.mxu0
        %v8562 = vpop.f32.mrf.mxu0
        %v8563 = vpop.f32.mrf.mxu0
        %8564 = vdwg.mxu0
        %v8565 = vadd.f32 %v8443, %v8560
        %v8566 = vld [vmem:[#allocation2 + $0x14] sm:$0x8]
        %v8567 = vld [vmem:[#allocation2 + $0x34] sm:$0x8]
        %v8568 = vld [vmem:[#allocation2 + $0x54] sm:$0x8]
        %v8569 = vld [vmem:[#allocation2 + $0x74] sm:$0x8]
        %v8570 = vld [vmem:[#allocation2 + $0x94] sm:$0x8]
        %v8571 = vld [vmem:[#allocation2 + $0xb4] sm:$0x8]
        %v8572 = vld [vmem:[#allocation2 + $0xd4] sm:$0x8]
        %v8573 = vld [vmem:[#allocation2 + $0xf4] sm:$0x8]
        %s8574 = scalar_lea.vmem %s3, 2944
        %v8575 = vld [vmem:[%s8574] sm:$0xf]
        %v8576 = vld [vmem:[%s8574 + $0x4] sm:$0xf]
        %v8577 = vld [vmem:[%s8574 + $0x8] sm:$0xf]
        %v8578 = vld [vmem:[%s8574 + $0xc] sm:$0xf]
        %v8579 = vld [vmem:[%s8574 + $0x10] sm:$0xf]
        %v8580 = vld [vmem:[%s8574 + $0x14] sm:$0xf]
        %v8581 = vld [vmem:[%s8574 + $0x18] sm:$0xf]
        %v8582 = vld [vmem:[%s8574 + $0x1c] sm:$0xf]
        %v8583 = vld [vmem:[%s8574 + $0x20] sm:$0xf]
        %v8584 = vld [vmem:[%s8574 + $0x24] sm:$0xf]
        %v8585 = vld [vmem:[%s8574 + $0x28] sm:$0xf]
        %v8586 = vld [vmem:[%s8574 + $0x2c] sm:$0xf]
        %v8587 = vld [vmem:[%s8574 + $0x30] sm:$0xf]
        %v8588 = vld [vmem:[%s8574 + $0x34] sm:$0xf]
        %v8589 = vld [vmem:[%s8574 + $0x38] sm:$0xf]
        %v8590 = vld [vmem:[%s8574 + $0x3c] sm:$0xf]
        %v8599 = vunpack.c.l.b16 %v8566
        %v8600 = vunpack.c.l.b16 %v8567
        %v8601 = vunpack.c.l.b16 %v8568
        %v8602 = vunpack.c.l.b16 %v8569
        %v8603 = vunpack.c.l.b16 %v8570
        %v8604 = vunpack.c.l.b16 %v8571
        %v8605 = vunpack.c.l.b16 %v8572
        %v8606 = vunpack.c.l.b16 %v8573
        %v8607 = vpack.c.b16 %v8599, %v8599
        %v8608 = vpack.c.b16 %v8600, %v8600
        %v8609 = vpack.c.b16 %v8601, %v8601
        %v8610 = vpack.c.b16 %v8602, %v8602
        %v8611 = vpack.c.b16 %v8603, %v8603
        %v8612 = vpack.c.b16 %v8604, %v8604
        %v8613 = vpack.c.b16 %v8605, %v8605
        %v8614 = vpack.c.b16 %v8606, %v8606
        %v8615 = vunpack.c.l.b16 %v8607
        %v8616 = vunpack.c.l.b16 %v8608
        %v8617 = vunpack.c.l.b16 %v8609
        %v8618 = vunpack.c.l.b16 %v8610
        %v8619 = vunpack.c.l.b16 %v8611
        %v8620 = vunpack.c.l.b16 %v8612
        %v8621 = vunpack.c.l.b16 %v8613
        %v8622 = vunpack.c.l.b16 %v8614
        %v8623 = vrot.slane %v8615, 6
        %v8624 = vrot.slane %v8616, 5
        %v8625 = vsel %vm2104, %v8624, %v8623
        %v8626 = vrot.slane %v8617, 4
        %v8627 = vsel %vm2107, %v8626, %v8625
        %v8628 = vrot.slane %v8618, 3
        %v8629 = vsel %vm2110, %v8628, %v8627
        %v8630 = vrot.slane %v8619, 2
        %v8631 = vsel %vm2113, %v8630, %v8629
        %v8632 = vrot.slane %v8620, 1
        %v8633 = vsel %vm2116, %v8632, %v8631
        %v8634 = vsel %vm2119, %v8621, %v8633
        %v8635 = vrot.slane %v8622, 7
        %v8636 = vsel %vm2122, %v8635, %v8634
        %v8637 = vpack.c.b16 %v8636, %v8636
        %v8655 = vunpack.c.l.b16 %v8575
        %v8656 = vunpack.c.l.b16 %v8576
        %v8657 = vunpack.c.l.b16 %v8577
        %v8658 = vunpack.c.l.b16 %v8578
        %v8659 = vunpack.c.l.b16 %v8579
        %v8660 = vunpack.c.l.b16 %v8580
        %v8661 = vunpack.c.l.b16 %v8581
        %v8662 = vunpack.c.l.b16 %v8582
        %v8663 = vunpack.c.l.b16 %v8583
        %v8664 = vunpack.c.l.b16 %v8584
        %v8665 = vunpack.c.l.b16 %v8585
        %v8666 = vunpack.c.l.b16 %v8586
        %v8667 = vunpack.c.l.b16 %v8587
        %v8668 = vunpack.c.l.b16 %v8588
        %v8669 = vunpack.c.l.b16 %v8589
        %v8670 = vunpack.c.l.b16 %v8590
        %v8671 = vpack.c.b16 %v8656, %v8655
        %v8672 = vpack.c.b16 %v8658, %v8657
        %v8673 = vpack.c.b16 %v8660, %v8659
        %v8674 = vpack.c.b16 %v8662, %v8661
        %v8675 = vpack.c.b16 %v8664, %v8663
        %v8676 = vpack.c.b16 %v8666, %v8665
        %v8677 = vpack.c.b16 %v8668, %v8667
        %v8678 = vpack.c.b16 %v8670, %v8669
        %8687 = vmatprep.subr.bf16.mxu0 0
        %8688 = vmatpush1.bf16.msra.mxu0 %v8678
        %8689 = vmatprep.subr.bf16.mxu0 0
        %8690 = vmatpush1.bf16.msra.mxu0 %v8677
        %8691 = vmatprep.subr.bf16.mxu0 0
        %8692 = vmatpush1.bf16.msra.mxu0 %v8676
        %8693 = vmatprep.subr.bf16.mxu0 0
        %8694 = vmatpush1.bf16.msra.mxu0 %v8675
        %8695 = vmatprep.subr.bf16.mxu0 0
        %8696 = vmatpush1.bf16.msra.mxu0 %v8674
        %8697 = vmatprep.subr.bf16.mxu0 0
        %8698 = vmatpush1.bf16.msra.mxu0 %v8673
        %8699 = vmatprep.subr.bf16.mxu0 0
        %8700 = vmatpush1.bf16.msra.mxu0 %v8672
        %8701 = vmatprep.subr.bf16.mxu0 0
        %8702 = vmatpush1.bf16.msra.mxu0 %v8671
        %8703 = vmatprep.subr.bf16.mxu0 0
        %8704 = vmatpush2.bf16.msra.mxu0 0
        %8705 = vmatprep.subr.bf16.mxu0 0
        %8706 = vmatpush2.bf16.msra.mxu0 0
        %8707 = vmatprep.subr.bf16.mxu0 0
        %8708 = vmatpush2.bf16.msra.mxu0 0
        %8709 = vmatprep.subr.bf16.mxu0 0
        %8710 = vmatpush2.bf16.msra.mxu0 0
        %8711 = vmatprep.subr.bf16.mxu0 0
        %8712 = vmatpush2.bf16.msra.mxu0 0
        %8713 = vmatprep.subr.bf16.mxu0 0
        %8714 = vmatpush2.bf16.msra.mxu0 0
        %8715 = vmatprep.subr.bf16.mxu0 0
        %8716 = vmatpush2.bf16.msra.mxu0 0
        %8717 = vmatprep.subr.bf16.mxu0 0
        %8718 = vmatpush2.bf16.msra.mxu0 0
        %8719 = vmatprep.mubr.bf16.mxu0 0
        %8720 = vmatmul.mubr.bf16.gmra.mxu0 %v8637
        %v8721 = vpop.f32.mrf.mxu0
        %v8722 = vadd.f32 0.0, %v8721
        %v8723 = vpop.f32.mrf.mxu0
        %v8724 = vpop.f32.mrf.mxu0
        %v8725 = vpop.f32.mrf.mxu0
        %8726 = vdwg.mxu0
        %v8727 = vadd.f32 %v8565, %v8722
        %s8728 = scalar_lea.vmem %s3, 3008
        %v8729 = vld [vmem:[%s8728] sm:$0xf]
        %v8730 = vld [vmem:[%s8728 + $0x4] sm:$0xf]
        %v8731 = vld [vmem:[%s8728 + $0x8] sm:$0xf]
        %v8732 = vld [vmem:[%s8728 + $0xc] sm:$0xf]
        %v8733 = vld [vmem:[%s8728 + $0x10] sm:$0xf]
        %v8734 = vld [vmem:[%s8728 + $0x14] sm:$0xf]
        %v8735 = vld [vmem:[%s8728 + $0x18] sm:$0xf]
        %v8736 = vld [vmem:[%s8728 + $0x1c] sm:$0xf]
        %v8737 = vld [vmem:[%s8728 + $0x20] sm:$0xf]
        %v8738 = vld [vmem:[%s8728 + $0x24] sm:$0xf]
        %v8739 = vld [vmem:[%s8728 + $0x28] sm:$0xf]
        %v8740 = vld [vmem:[%s8728 + $0x2c] sm:$0xf]
        %v8741 = vld [vmem:[%s8728 + $0x30] sm:$0xf]
        %v8742 = vld [vmem:[%s8728 + $0x34] sm:$0xf]
        %v8743 = vld [vmem:[%s8728 + $0x38] sm:$0xf]
        %v8744 = vld [vmem:[%s8728 + $0x3c] sm:$0xf]
        %v8745 = vrot.slane %v8615, 7
        %v8746 = vrot.slane %v8616, 6
        %v8747 = vsel %vm2104, %v8746, %v8745
        %v8748 = vrot.slane %v8617, 5
        %v8749 = vsel %vm2107, %v8748, %v8747
        %v8750 = vrot.slane %v8618, 4
        %v8751 = vsel %vm2110, %v8750, %v8749
        %v8752 = vrot.slane %v8619, 3
        %v8753 = vsel %vm2113, %v8752, %v8751
        %v8754 = vrot.slane %v8620, 2
        %v8755 = vsel %vm2116, %v8754, %v8753
        %v8756 = vrot.slane %v8621, 1
        %v8757 = vsel %vm2119, %v8756, %v8755
        %v8758 = vsel %vm2122, %v8622, %v8757
        %v8759 = vpack.c.b16 %v8758, %v8758
        %v8777 = vunpack.c.l.b16 %v8729
        %v8778 = vunpack.c.l.b16 %v8730
        %v8779 = vunpack.c.l.b16 %v8731
        %v8780 = vunpack.c.l.b16 %v8732
        %v8781 = vunpack.c.l.b16 %v8733
        %v8782 = vunpack.c.l.b16 %v8734
        %v8783 = vunpack.c.l.b16 %v8735
        %v8784 = vunpack.c.l.b16 %v8736
        %v8785 = vunpack.c.l.b16 %v8737
        %v8786 = vunpack.c.l.b16 %v8738
        %v8787 = vunpack.c.l.b16 %v8739
        %v8788 = vunpack.c.l.b16 %v8740
        %v8789 = vunpack.c.l.b16 %v8741
        %v8790 = vunpack.c.l.b16 %v8742
        %v8791 = vunpack.c.l.b16 %v8743
        %v8792 = vunpack.c.l.b16 %v8744
        %v8793 = vpack.c.b16 %v8778, %v8777
        %v8794 = vpack.c.b16 %v8780, %v8779
        %v8795 = vpack.c.b16 %v8782, %v8781
        %v8796 = vpack.c.b16 %v8784, %v8783
        %v8797 = vpack.c.b16 %v8786, %v8785
        %v8798 = vpack.c.b16 %v8788, %v8787
        %v8799 = vpack.c.b16 %v8790, %v8789
        %v8800 = vpack.c.b16 %v8792, %v8791
        %8809 = vmatprep.subr.bf16.mxu0 0
        %8810 = vmatpush1.bf16.msra.mxu0 %v8800
        %8811 = vmatprep.subr.bf16.mxu0 0
        %8812 = vmatpush1.bf16.msra.mxu0 %v8799
        %8813 = vmatprep.subr.bf16.mxu0 0
        %8814 = vmatpush1.bf16.msra.mxu0 %v8798
        %8815 = vmatprep.subr.bf16.mxu0 0
        %8816 = vmatpush1.bf16.msra.mxu0 %v8797
        %8817 = vmatprep.subr.bf16.mxu0 0
        %8818 = vmatpush1.bf16.msra.mxu0 %v8796
        %8819 = vmatprep.subr.bf16.mxu0 0
        %8820 = vmatpush1.bf16.msra.mxu0 %v8795
        %8821 = vmatprep.subr.bf16.mxu0 0
        %8822 = vmatpush1.bf16.msra.mxu0 %v8794
        %8823 = vmatprep.subr.bf16.mxu0 0
        %8824 = vmatpush1.bf16.msra.mxu0 %v8793
        %8825 = vmatprep.subr.bf16.mxu0 0
        %8826 = vmatpush2.bf16.msra.mxu0 0
        %8827 = vmatprep.subr.bf16.mxu0 0
        %8828 = vmatpush2.bf16.msra.mxu0 0
        %8829 = vmatprep.subr.bf16.mxu0 0
        %8830 = vmatpush2.bf16.msra.mxu0 0
        %8831 = vmatprep.subr.bf16.mxu0 0
        %8832 = vmatpush2.bf16.msra.mxu0 0
        %8833 = vmatprep.subr.bf16.mxu0 0
        %8834 = vmatpush2.bf16.msra.mxu0 0
        %8835 = vmatprep.subr.bf16.mxu0 0
        %8836 = vmatpush2.bf16.msra.mxu0 0
        %8837 = vmatprep.subr.bf16.mxu0 0
        %8838 = vmatpush2.bf16.msra.mxu0 0
        %8839 = vmatprep.subr.bf16.mxu0 0
        %8840 = vmatpush2.bf16.msra.mxu0 0
        %8841 = vmatprep.mubr.bf16.mxu0 0
        %8842 = vmatmul.mubr.bf16.gmra.mxu0 %v8759
        %v8843 = vpop.f32.mrf.mxu0
        %v8844 = vadd.f32 0.0, %v8843
        %v8845 = vpop.f32.mrf.mxu0
        %v8846 = vpop.f32.mrf.mxu0
        %v8847 = vpop.f32.mrf.mxu0
        %8848 = vdwg.mxu0
        %v8849 = vadd.f32 %v8727, %v8844
        %v8850 = vld [vmem:[#allocation2 + $0x18] sm:$0x1]
        %v8851 = vld [vmem:[#allocation2 + $0x38] sm:$0x1]
        %v8852 = vld [vmem:[#allocation2 + $0x58] sm:$0x1]
        %v8853 = vld [vmem:[#allocation2 + $0x78] sm:$0x1]
        %v8854 = vld [vmem:[#allocation2 + $0x98] sm:$0x1]
        %v8855 = vld [vmem:[#allocation2 + $0xb8] sm:$0x1]
        %v8856 = vld [vmem:[#allocation2 + $0xd8] sm:$0x1]
        %v8857 = vld [vmem:[#allocation2 + $0xf8] sm:$0x1]
        %s8858 = scalar_lea.vmem %s3, 3072
        %v8859 = vld [vmem:[%s8858] sm:$0xf]
        %v8860 = vld [vmem:[%s8858 + $0x4] sm:$0xf]
        %v8861 = vld [vmem:[%s8858 + $0x8] sm:$0xf]
        %v8862 = vld [vmem:[%s8858 + $0xc] sm:$0xf]
        %v8863 = vld [vmem:[%s8858 + $0x10] sm:$0xf]
        %v8864 = vld [vmem:[%s8858 + $0x14] sm:$0xf]
        %v8865 = vld [vmem:[%s8858 + $0x18] sm:$0xf]
        %v8866 = vld [vmem:[%s8858 + $0x1c] sm:$0xf]
        %v8867 = vld [vmem:[%s8858 + $0x20] sm:$0xf]
        %v8868 = vld [vmem:[%s8858 + $0x24] sm:$0xf]
        %v8869 = vld [vmem:[%s8858 + $0x28] sm:$0xf]
        %v8870 = vld [vmem:[%s8858 + $0x2c] sm:$0xf]
        %v8871 = vld [vmem:[%s8858 + $0x30] sm:$0xf]
        %v8872 = vld [vmem:[%s8858 + $0x34] sm:$0xf]
        %v8873 = vld [vmem:[%s8858 + $0x38] sm:$0xf]
        %v8874 = vld [vmem:[%s8858 + $0x3c] sm:$0xf]
        %v8883 = vunpack.c.l.b16 %v8850
        %v8884 = vunpack.c.l.b16 %v8851
        %v8885 = vunpack.c.l.b16 %v8852
        %v8886 = vunpack.c.l.b16 %v8853
        %v8887 = vunpack.c.l.b16 %v8854
        %v8888 = vunpack.c.l.b16 %v8855
        %v8889 = vunpack.c.l.b16 %v8856
        %v8890 = vunpack.c.l.b16 %v8857
        %v8891 = vpack.c.b16 %v8883, %v8883
        %v8892 = vpack.c.b16 %v8884, %v8884
        %v8893 = vpack.c.b16 %v8885, %v8885
        %v8894 = vpack.c.b16 %v8886, %v8886
        %v8895 = vpack.c.b16 %v8887, %v8887
        %v8896 = vpack.c.b16 %v8888, %v8888
        %v8897 = vpack.c.b16 %v8889, %v8889
        %v8898 = vpack.c.b16 %v8890, %v8890
        %v8899 = vunpack.c.l.b16 %v8891
        %v8900 = vunpack.c.l.b16 %v8892
        %v8901 = vunpack.c.l.b16 %v8893
        %v8902 = vunpack.c.l.b16 %v8894
        %v8903 = vunpack.c.l.b16 %v8895
        %v8904 = vunpack.c.l.b16 %v8896
        %v8905 = vunpack.c.l.b16 %v8897
        %v8906 = vunpack.c.l.b16 %v8898
        %v8907 = vrot.slane %v8900, 7
        %v8908 = vsel %vm2104, %v8907, %v8899
        %v8909 = vrot.slane %v8901, 6
        %v8910 = vsel %vm2107, %v8909, %v8908
        %v8911 = vrot.slane %v8902, 5
        %v8912 = vsel %vm2110, %v8911, %v8910
        %v8913 = vrot.slane %v8903, 4
        %v8914 = vsel %vm2113, %v8913, %v8912
        %v8915 = vrot.slane %v8904, 3
        %v8916 = vsel %vm2116, %v8915, %v8914
        %v8917 = vrot.slane %v8905, 2
        %v8918 = vsel %vm2119, %v8917, %v8916
        %v8919 = vrot.slane %v8906, 1
        %v8920 = vsel %vm2122, %v8919, %v8918
        %v8921 = vpack.c.b16 %v8920, %v8920
        %v8939 = vunpack.c.l.b16 %v8859
        %v8940 = vunpack.c.l.b16 %v8860
        %v8941 = vunpack.c.l.b16 %v8861
        %v8942 = vunpack.c.l.b16 %v8862
        %v8943 = vunpack.c.l.b16 %v8863
        %v8944 = vunpack.c.l.b16 %v8864
        %v8945 = vunpack.c.l.b16 %v8865
        %v8946 = vunpack.c.l.b16 %v8866
        %v8947 = vunpack.c.l.b16 %v8867
        %v8948 = vunpack.c.l.b16 %v8868
        %v8949 = vunpack.c.l.b16 %v8869
        %v8950 = vunpack.c.l.b16 %v8870
        %v8951 = vunpack.c.l.b16 %v8871
        %v8952 = vunpack.c.l.b16 %v8872
        %v8953 = vunpack.c.l.b16 %v8873
        %v8954 = vunpack.c.l.b16 %v8874
        %v8955 = vpack.c.b16 %v8940, %v8939
        %v8956 = vpack.c.b16 %v8942, %v8941
        %v8957 = vpack.c.b16 %v8944, %v8943
        %v8958 = vpack.c.b16 %v8946, %v8945
        %v8959 = vpack.c.b16 %v8948, %v8947
        %v8960 = vpack.c.b16 %v8950, %v8949
        %v8961 = vpack.c.b16 %v8952, %v8951
        %v8962 = vpack.c.b16 %v8954, %v8953
        %8971 = vmatprep.subr.bf16.mxu0 0
        %8972 = vmatpush1.bf16.msra.mxu0 %v8962
        %8973 = vmatprep.subr.bf16.mxu0 0
        %8974 = vmatpush1.bf16.msra.mxu0 %v8961
        %8975 = vmatprep.subr.bf16.mxu0 0
        %8976 = vmatpush1.bf16.msra.mxu0 %v8960
        %8977 = vmatprep.subr.bf16.mxu0 0
        %8978 = vmatpush1.bf16.msra.mxu0 %v8959
        %8979 = vmatprep.subr.bf16.mxu0 0
        %8980 = vmatpush1.bf16.msra.mxu0 %v8958
        %8981 = vmatprep.subr.bf16.mxu0 0
        %8982 = vmatpush1.bf16.msra.mxu0 %v8957
        %8983 = vmatprep.subr.bf16.mxu0 0
        %8984 = vmatpush1.bf16.msra.mxu0 %v8956
        %8985 = vmatprep.subr.bf16.mxu0 0
        %8986 = vmatpush1.bf16.msra.mxu0 %v8955
        %8987 = vmatprep.subr.bf16.mxu0 0
        %8988 = vmatpush2.bf16.msra.mxu0 0
        %8989 = vmatprep.subr.bf16.mxu0 0
        %8990 = vmatpush2.bf16.msra.mxu0 0
        %8991 = vmatprep.subr.bf16.mxu0 0
        %8992 = vmatpush2.bf16.msra.mxu0 0
        %8993 = vmatprep.subr.bf16.mxu0 0
        %8994 = vmatpush2.bf16.msra.mxu0 0
        %8995 = vmatprep.subr.bf16.mxu0 0
        %8996 = vmatpush2.bf16.msra.mxu0 0
        %8997 = vmatprep.subr.bf16.mxu0 0
        %8998 = vmatpush2.bf16.msra.mxu0 0
        %8999 = vmatprep.subr.bf16.mxu0 0
        %9000 = vmatpush2.bf16.msra.mxu0 0
        %9001 = vmatprep.subr.bf16.mxu0 0
        %9002 = vmatpush2.bf16.msra.mxu0 0
        %9003 = vmatprep.mubr.bf16.mxu0 0
        %9004 = vmatmul.mubr.bf16.gmra.mxu0 %v8921
        %v9005 = vpop.f32.mrf.mxu0
        %v9006 = vadd.f32 0.0, %v9005
        %v9007 = vpop.f32.mrf.mxu0
        %v9008 = vpop.f32.mrf.mxu0
        %v9009 = vpop.f32.mrf.mxu0
        %9010 = vdwg.mxu0
        %v9011 = vadd.f32 %v8849, %v9006
        %s9012 = scalar_lea.vmem %s3, 3136
        %v9013 = vld [vmem:[%s9012] sm:$0xf]
        %v9014 = vld [vmem:[%s9012 + $0x4] sm:$0xf]
        %v9015 = vld [vmem:[%s9012 + $0x8] sm:$0xf]
        %v9016 = vld [vmem:[%s9012 + $0xc] sm:$0xf]
        %v9017 = vld [vmem:[%s9012 + $0x10] sm:$0xf]
        %v9018 = vld [vmem:[%s9012 + $0x14] sm:$0xf]
        %v9019 = vld [vmem:[%s9012 + $0x18] sm:$0xf]
        %v9020 = vld [vmem:[%s9012 + $0x1c] sm:$0xf]
        %v9021 = vld [vmem:[%s9012 + $0x20] sm:$0xf]
        %v9022 = vld [vmem:[%s9012 + $0x24] sm:$0xf]
        %v9023 = vld [vmem:[%s9012 + $0x28] sm:$0xf]
        %v9024 = vld [vmem:[%s9012 + $0x2c] sm:$0xf]
        %v9025 = vld [vmem:[%s9012 + $0x30] sm:$0xf]
        %v9026 = vld [vmem:[%s9012 + $0x34] sm:$0xf]
        %v9027 = vld [vmem:[%s9012 + $0x38] sm:$0xf]
        %v9028 = vld [vmem:[%s9012 + $0x3c] sm:$0xf]
        %v9029 = vrot.slane %v8899, 1
        %v9030 = vsel %vm2104, %v8900, %v9029
        %v9031 = vrot.slane %v8901, 7
        %v9032 = vsel %vm2107, %v9031, %v9030
        %v9033 = vrot.slane %v8902, 6
        %v9034 = vsel %vm2110, %v9033, %v9032
        %v9035 = vrot.slane %v8903, 5
        %v9036 = vsel %vm2113, %v9035, %v9034
        %v9037 = vrot.slane %v8904, 4
        %v9038 = vsel %vm2116, %v9037, %v9036
        %v9039 = vrot.slane %v8905, 3
        %v9040 = vsel %vm2119, %v9039, %v9038
        %v9041 = vrot.slane %v8906, 2
        %v9042 = vsel %vm2122, %v9041, %v9040
        %v9043 = vpack.c.b16 %v9042, %v9042
        %v9061 = vunpack.c.l.b16 %v9013
        %v9062 = vunpack.c.l.b16 %v9014
        %v9063 = vunpack.c.l.b16 %v9015
        %v9064 = vunpack.c.l.b16 %v9016
        %v9065 = vunpack.c.l.b16 %v9017
        %v9066 = vunpack.c.l.b16 %v9018
        %v9067 = vunpack.c.l.b16 %v9019
        %v9068 = vunpack.c.l.b16 %v9020
        %v9069 = vunpack.c.l.b16 %v9021
        %v9070 = vunpack.c.l.b16 %v9022
        %v9071 = vunpack.c.l.b16 %v9023
        %v9072 = vunpack.c.l.b16 %v9024
        %v9073 = vunpack.c.l.b16 %v9025
        %v9074 = vunpack.c.l.b16 %v9026
        %v9075 = vunpack.c.l.b16 %v9027
        %v9076 = vunpack.c.l.b16 %v9028
        %v9077 = vpack.c.b16 %v9062, %v9061
        %v9078 = vpack.c.b16 %v9064, %v9063
        %v9079 = vpack.c.b16 %v9066, %v9065
        %v9080 = vpack.c.b16 %v9068, %v9067
        %v9081 = vpack.c.b16 %v9070, %v9069
        %v9082 = vpack.c.b16 %v9072, %v9071
        %v9083 = vpack.c.b16 %v9074, %v9073
        %v9084 = vpack.c.b16 %v9076, %v9075
        %9093 = vmatprep.subr.bf16.mxu0 0
        %9094 = vmatpush1.bf16.msra.mxu0 %v9084
        %9095 = vmatprep.subr.bf16.mxu0 0
        %9096 = vmatpush1.bf16.msra.mxu0 %v9083
        %9097 = vmatprep.subr.bf16.mxu0 0
        %9098 = vmatpush1.bf16.msra.mxu0 %v9082
        %9099 = vmatprep.subr.bf16.mxu0 0
        %9100 = vmatpush1.bf16.msra.mxu0 %v9081
        %9101 = vmatprep.subr.bf16.mxu0 0
        %9102 = vmatpush1.bf16.msra.mxu0 %v9080
        %9103 = vmatprep.subr.bf16.mxu0 0
        %9104 = vmatpush1.bf16.msra.mxu0 %v9079
        %9105 = vmatprep.subr.bf16.mxu0 0
        %9106 = vmatpush1.bf16.msra.mxu0 %v9078
        %9107 = vmatprep.subr.bf16.mxu0 0
        %9108 = vmatpush1.bf16.msra.mxu0 %v9077
        %9109 = vmatprep.subr.bf16.mxu0 0
        %9110 = vmatpush2.bf16.msra.mxu0 0
        %9111 = vmatprep.subr.bf16.mxu0 0
        %9112 = vmatpush2.bf16.msra.mxu0 0
        %9113 = vmatprep.subr.bf16.mxu0 0
        %9114 = vmatpush2.bf16.msra.mxu0 0
        %9115 = vmatprep.subr.bf16.mxu0 0
        %9116 = vmatpush2.bf16.msra.mxu0 0
        %9117 = vmatprep.subr.bf16.mxu0 0
        %9118 = vmatpush2.bf16.msra.mxu0 0
        %9119 = vmatprep.subr.bf16.mxu0 0
        %9120 = vmatpush2.bf16.msra.mxu0 0
        %9121 = vmatprep.subr.bf16.mxu0 0
        %9122 = vmatpush2.bf16.msra.mxu0 0
        %9123 = vmatprep.subr.bf16.mxu0 0
        %9124 = vmatpush2.bf16.msra.mxu0 0
        %9125 = vmatprep.mubr.bf16.mxu0 0
        %9126 = vmatmul.mubr.bf16.gmra.mxu0 %v9043
        %v9127 = vpop.f32.mrf.mxu0
        %v9128 = vadd.f32 0.0, %v9127
        %v9129 = vpop.f32.mrf.mxu0
        %v9130 = vpop.f32.mrf.mxu0
        %v9131 = vpop.f32.mrf.mxu0
        %9132 = vdwg.mxu0
        %v9133 = vadd.f32 %v9011, %v9128
        %v9134 = vld [vmem:[#allocation2 + $0x18] sm:$0x2]
        %v9135 = vld [vmem:[#allocation2 + $0x38] sm:$0x2]
        %v9136 = vld [vmem:[#allocation2 + $0x58] sm:$0x2]
        %v9137 = vld [vmem:[#allocation2 + $0x78] sm:$0x2]
        %v9138 = vld [vmem:[#allocation2 + $0x98] sm:$0x2]
        %v9139 = vld [vmem:[#allocation2 + $0xb8] sm:$0x2]
        %v9140 = vld [vmem:[#allocation2 + $0xd8] sm:$0x2]
        %v9141 = vld [vmem:[#allocation2 + $0xf8] sm:$0x2]
        %s9142 = scalar_lea.vmem %s3, 3200
        %v9143 = vld [vmem:[%s9142] sm:$0xf]
        %v9144 = vld [vmem:[%s9142 + $0x4] sm:$0xf]
        %v9145 = vld [vmem:[%s9142 + $0x8] sm:$0xf]
        %v9146 = vld [vmem:[%s9142 + $0xc] sm:$0xf]
        %v9147 = vld [vmem:[%s9142 + $0x10] sm:$0xf]
        %v9148 = vld [vmem:[%s9142 + $0x14] sm:$0xf]
        %v9149 = vld [vmem:[%s9142 + $0x18] sm:$0xf]
        %v9150 = vld [vmem:[%s9142 + $0x1c] sm:$0xf]
        %v9151 = vld [vmem:[%s9142 + $0x20] sm:$0xf]
        %v9152 = vld [vmem:[%s9142 + $0x24] sm:$0xf]
        %v9153 = vld [vmem:[%s9142 + $0x28] sm:$0xf]
        %v9154 = vld [vmem:[%s9142 + $0x2c] sm:$0xf]
        %v9155 = vld [vmem:[%s9142 + $0x30] sm:$0xf]
        %v9156 = vld [vmem:[%s9142 + $0x34] sm:$0xf]
        %v9157 = vld [vmem:[%s9142 + $0x38] sm:$0xf]
        %v9158 = vld [vmem:[%s9142 + $0x3c] sm:$0xf]
        %v9167 = vunpack.c.l.b16 %v9134
        %v9168 = vunpack.c.l.b16 %v9135
        %v9169 = vunpack.c.l.b16 %v9136
        %v9170 = vunpack.c.l.b16 %v9137
        %v9171 = vunpack.c.l.b16 %v9138
        %v9172 = vunpack.c.l.b16 %v9139
        %v9173 = vunpack.c.l.b16 %v9140
        %v9174 = vunpack.c.l.b16 %v9141
        %v9175 = vpack.c.b16 %v9167, %v9167
        %v9176 = vpack.c.b16 %v9168, %v9168
        %v9177 = vpack.c.b16 %v9169, %v9169
        %v9178 = vpack.c.b16 %v9170, %v9170
        %v9179 = vpack.c.b16 %v9171, %v9171
        %v9180 = vpack.c.b16 %v9172, %v9172
        %v9181 = vpack.c.b16 %v9173, %v9173
        %v9182 = vpack.c.b16 %v9174, %v9174
        %v9183 = vunpack.c.l.b16 %v9175
        %v9184 = vunpack.c.l.b16 %v9176
        %v9185 = vunpack.c.l.b16 %v9177
        %v9186 = vunpack.c.l.b16 %v9178
        %v9187 = vunpack.c.l.b16 %v9179
        %v9188 = vunpack.c.l.b16 %v9180
        %v9189 = vunpack.c.l.b16 %v9181
        %v9190 = vunpack.c.l.b16 %v9182
        %v9191 = vrot.slane %v9183, 2
        %v9192 = vrot.slane %v9184, 1
        %v9193 = vsel %vm2104, %v9192, %v9191
        %v9194 = vsel %vm2107, %v9185, %v9193
        %v9195 = vrot.slane %v9186, 7
        %v9196 = vsel %vm2110, %v9195, %v9194
        %v9197 = vrot.slane %v9187, 6
        %v9198 = vsel %vm2113, %v9197, %v9196
        %v9199 = vrot.slane %v9188, 5
        %v9200 = vsel %vm2116, %v9199, %v9198
        %v9201 = vrot.slane %v9189, 4
        %v9202 = vsel %vm2119, %v9201, %v9200
        %v9203 = vrot.slane %v9190, 3
        %v9204 = vsel %vm2122, %v9203, %v9202
        %v9205 = vpack.c.b16 %v9204, %v9204
        %v9223 = vunpack.c.l.b16 %v9143
        %v9224 = vunpack.c.l.b16 %v9144
        %v9225 = vunpack.c.l.b16 %v9145
        %v9226 = vunpack.c.l.b16 %v9146
        %v9227 = vunpack.c.l.b16 %v9147
        %v9228 = vunpack.c.l.b16 %v9148
        %v9229 = vunpack.c.l.b16 %v9149
        %v9230 = vunpack.c.l.b16 %v9150
        %v9231 = vunpack.c.l.b16 %v9151
        %v9232 = vunpack.c.l.b16 %v9152
        %v9233 = vunpack.c.l.b16 %v9153
        %v9234 = vunpack.c.l.b16 %v9154
        %v9235 = vunpack.c.l.b16 %v9155
        %v9236 = vunpack.c.l.b16 %v9156
        %v9237 = vunpack.c.l.b16 %v9157
        %v9238 = vunpack.c.l.b16 %v9158
        %v9239 = vpack.c.b16 %v9224, %v9223
        %v9240 = vpack.c.b16 %v9226, %v9225
        %v9241 = vpack.c.b16 %v9228, %v9227
        %v9242 = vpack.c.b16 %v9230, %v9229
        %v9243 = vpack.c.b16 %v9232, %v9231
        %v9244 = vpack.c.b16 %v9234, %v9233
        %v9245 = vpack.c.b16 %v9236, %v9235
        %v9246 = vpack.c.b16 %v9238, %v9237
        %9255 = vmatprep.subr.bf16.mxu0 0
        %9256 = vmatpush1.bf16.msra.mxu0 %v9246
        %9257 = vmatprep.subr.bf16.mxu0 0
        %9258 = vmatpush1.bf16.msra.mxu0 %v9245
        %9259 = vmatprep.subr.bf16.mxu0 0
        %9260 = vmatpush1.bf16.msra.mxu0 %v9244
        %9261 = vmatprep.subr.bf16.mxu0 0
        %9262 = vmatpush1.bf16.msra.mxu0 %v9243
        %9263 = vmatprep.subr.bf16.mxu0 0
        %9264 = vmatpush1.bf16.msra.mxu0 %v9242
        %9265 = vmatprep.subr.bf16.mxu0 0
        %9266 = vmatpush1.bf16.msra.mxu0 %v9241
        %9267 = vmatprep.subr.bf16.mxu0 0
        %9268 = vmatpush1.bf16.msra.mxu0 %v9240
        %9269 = vmatprep.subr.bf16.mxu0 0
        %9270 = vmatpush1.bf16.msra.mxu0 %v9239
        %9271 = vmatprep.subr.bf16.mxu0 0
        %9272 = vmatpush2.bf16.msra.mxu0 0
        %9273 = vmatprep.subr.bf16.mxu0 0
        %9274 = vmatpush2.bf16.msra.mxu0 0
        %9275 = vmatprep.subr.bf16.mxu0 0
        %9276 = vmatpush2.bf16.msra.mxu0 0
        %9277 = vmatprep.subr.bf16.mxu0 0
        %9278 = vmatpush2.bf16.msra.mxu0 0
        %9279 = vmatprep.subr.bf16.mxu0 0
        %9280 = vmatpush2.bf16.msra.mxu0 0
        %9281 = vmatprep.subr.bf16.mxu0 0
        %9282 = vmatpush2.bf16.msra.mxu0 0
        %9283 = vmatprep.subr.bf16.mxu0 0
        %9284 = vmatpush2.bf16.msra.mxu0 0
        %9285 = vmatprep.subr.bf16.mxu0 0
        %9286 = vmatpush2.bf16.msra.mxu0 0
        %9287 = vmatprep.mubr.bf16.mxu0 0
        %9288 = vmatmul.mubr.bf16.gmra.mxu0 %v9205
        %v9289 = vpop.f32.mrf.mxu0
        %v9290 = vadd.f32 0.0, %v9289
        %v9291 = vpop.f32.mrf.mxu0
        %v9292 = vpop.f32.mrf.mxu0
        %v9293 = vpop.f32.mrf.mxu0
        %9294 = vdwg.mxu0
        %v9295 = vadd.f32 %v9133, %v9290
        %s9296 = scalar_lea.vmem %s3, 3264
        %v9297 = vld [vmem:[%s9296] sm:$0xf]
        %v9298 = vld [vmem:[%s9296 + $0x4] sm:$0xf]
        %v9299 = vld [vmem:[%s9296 + $0x8] sm:$0xf]
        %v9300 = vld [vmem:[%s9296 + $0xc] sm:$0xf]
        %v9301 = vld [vmem:[%s9296 + $0x10] sm:$0xf]
        %v9302 = vld [vmem:[%s9296 + $0x14] sm:$0xf]
        %v9303 = vld [vmem:[%s9296 + $0x18] sm:$0xf]
        %v9304 = vld [vmem:[%s9296 + $0x1c] sm:$0xf]
        %v9305 = vld [vmem:[%s9296 + $0x20] sm:$0xf]
        %v9306 = vld [vmem:[%s9296 + $0x24] sm:$0xf]
        %v9307 = vld [vmem:[%s9296 + $0x28] sm:$0xf]
        %v9308 = vld [vmem:[%s9296 + $0x2c] sm:$0xf]
        %v9309 = vld [vmem:[%s9296 + $0x30] sm:$0xf]
        %v9310 = vld [vmem:[%s9296 + $0x34] sm:$0xf]
        %v9311 = vld [vmem:[%s9296 + $0x38] sm:$0xf]
        %v9312 = vld [vmem:[%s9296 + $0x3c] sm:$0xf]
        %v9313 = vrot.slane %v9183, 3
        %v9314 = vrot.slane %v9184, 2
        %v9315 = vsel %vm2104, %v9314, %v9313
        %v9316 = vrot.slane %v9185, 1
        %v9317 = vsel %vm2107, %v9316, %v9315
        %v9318 = vsel %vm2110, %v9186, %v9317
        %v9319 = vrot.slane %v9187, 7
        %v9320 = vsel %vm2113, %v9319, %v9318
        %v9321 = vrot.slane %v9188, 6
        %v9322 = vsel %vm2116, %v9321, %v9320
        %v9323 = vrot.slane %v9189, 5
        %v9324 = vsel %vm2119, %v9323, %v9322
        %v9325 = vrot.slane %v9190, 4
        %v9326 = vsel %vm2122, %v9325, %v9324
        %v9327 = vpack.c.b16 %v9326, %v9326
        %v9345 = vunpack.c.l.b16 %v9297
        %v9346 = vunpack.c.l.b16 %v9298
        %v9347 = vunpack.c.l.b16 %v9299
        %v9348 = vunpack.c.l.b16 %v9300
        %v9349 = vunpack.c.l.b16 %v9301
        %v9350 = vunpack.c.l.b16 %v9302
        %v9351 = vunpack.c.l.b16 %v9303
        %v9352 = vunpack.c.l.b16 %v9304
        %v9353 = vunpack.c.l.b16 %v9305
        %v9354 = vunpack.c.l.b16 %v9306
        %v9355 = vunpack.c.l.b16 %v9307
        %v9356 = vunpack.c.l.b16 %v9308
        %v9357 = vunpack.c.l.b16 %v9309
        %v9358 = vunpack.c.l.b16 %v9310
        %v9359 = vunpack.c.l.b16 %v9311
        %v9360 = vunpack.c.l.b16 %v9312
        %v9361 = vpack.c.b16 %v9346, %v9345
        %v9362 = vpack.c.b16 %v9348, %v9347
        %v9363 = vpack.c.b16 %v9350, %v9349
        %v9364 = vpack.c.b16 %v9352, %v9351
        %v9365 = vpack.c.b16 %v9354, %v9353
        %v9366 = vpack.c.b16 %v9356, %v9355
        %v9367 = vpack.c.b16 %v9358, %v9357
        %v9368 = vpack.c.b16 %v9360, %v9359
        %9377 = vmatprep.subr.bf16.mxu0 0
        %9378 = vmatpush1.bf16.msra.mxu0 %v9368
        %9379 = vmatprep.subr.bf16.mxu0 0
        %9380 = vmatpush1.bf16.msra.mxu0 %v9367
        %9381 = vmatprep.subr.bf16.mxu0 0
        %9382 = vmatpush1.bf16.msra.mxu0 %v9366
        %9383 = vmatprep.subr.bf16.mxu0 0
        %9384 = vmatpush1.bf16.msra.mxu0 %v9365
        %9385 = vmatprep.subr.bf16.mxu0 0
        %9386 = vmatpush1.bf16.msra.mxu0 %v9364
        %9387 = vmatprep.subr.bf16.mxu0 0
        %9388 = vmatpush1.bf16.msra.mxu0 %v9363
        %9389 = vmatprep.subr.bf16.mxu0 0
        %9390 = vmatpush1.bf16.msra.mxu0 %v9362
        %9391 = vmatprep.subr.bf16.mxu0 0
        %9392 = vmatpush1.bf16.msra.mxu0 %v9361
        %9393 = vmatprep.subr.bf16.mxu0 0
        %9394 = vmatpush2.bf16.msra.mxu0 0
        %9395 = vmatprep.subr.bf16.mxu0 0
        %9396 = vmatpush2.bf16.msra.mxu0 0
        %9397 = vmatprep.subr.bf16.mxu0 0
        %9398 = vmatpush2.bf16.msra.mxu0 0
        %9399 = vmatprep.subr.bf16.mxu0 0
        %9400 = vmatpush2.bf16.msra.mxu0 0
        %9401 = vmatprep.subr.bf16.mxu0 0
        %9402 = vmatpush2.bf16.msra.mxu0 0
        %9403 = vmatprep.subr.bf16.mxu0 0
        %9404 = vmatpush2.bf16.msra.mxu0 0
        %9405 = vmatprep.subr.bf16.mxu0 0
        %9406 = vmatpush2.bf16.msra.mxu0 0
        %9407 = vmatprep.subr.bf16.mxu0 0
        %9408 = vmatpush2.bf16.msra.mxu0 0
        %9409 = vmatprep.mubr.bf16.mxu0 0
        %9410 = vmatmul.mubr.bf16.gmra.mxu0 %v9327
        %v9411 = vpop.f32.mrf.mxu0
        %v9412 = vadd.f32 0.0, %v9411
        %v9413 = vpop.f32.mrf.mxu0
        %v9414 = vpop.f32.mrf.mxu0
        %v9415 = vpop.f32.mrf.mxu0
        %9416 = vdwg.mxu0
        %v9417 = vadd.f32 %v9295, %v9412
        %v9418 = vld [vmem:[#allocation2 + $0x18] sm:$0x4]
        %v9419 = vld [vmem:[#allocation2 + $0x38] sm:$0x4]
        %v9420 = vld [vmem:[#allocation2 + $0x58] sm:$0x4]
        %v9421 = vld [vmem:[#allocation2 + $0x78] sm:$0x4]
        %v9422 = vld [vmem:[#allocation2 + $0x98] sm:$0x4]
        %v9423 = vld [vmem:[#allocation2 + $0xb8] sm:$0x4]
        %v9424 = vld [vmem:[#allocation2 + $0xd8] sm:$0x4]
        %v9425 = vld [vmem:[#allocation2 + $0xf8] sm:$0x4]
        %s9426 = scalar_lea.vmem %s3, 3328
        %v9427 = vld [vmem:[%s9426] sm:$0xf]
        %v9428 = vld [vmem:[%s9426 + $0x4] sm:$0xf]
        %v9429 = vld [vmem:[%s9426 + $0x8] sm:$0xf]
        %v9430 = vld [vmem:[%s9426 + $0xc] sm:$0xf]
        %v9431 = vld [vmem:[%s9426 + $0x10] sm:$0xf]
        %v9432 = vld [vmem:[%s9426 + $0x14] sm:$0xf]
        %v9433 = vld [vmem:[%s9426 + $0x18] sm:$0xf]
        %v9434 = vld [vmem:[%s9426 + $0x1c] sm:$0xf]
        %v9435 = vld [vmem:[%s9426 + $0x20] sm:$0xf]
        %v9436 = vld [vmem:[%s9426 + $0x24] sm:$0xf]
        %v9437 = vld [vmem:[%s9426 + $0x28] sm:$0xf]
        %v9438 = vld [vmem:[%s9426 + $0x2c] sm:$0xf]
        %v9439 = vld [vmem:[%s9426 + $0x30] sm:$0xf]
        %v9440 = vld [vmem:[%s9426 + $0x34] sm:$0xf]
        %v9441 = vld [vmem:[%s9426 + $0x38] sm:$0xf]
        %v9442 = vld [vmem:[%s9426 + $0x3c] sm:$0xf]
        %v9451 = vunpack.c.l.b16 %v9418
        %v9452 = vunpack.c.l.b16 %v9419
        %v9453 = vunpack.c.l.b16 %v9420
        %v9454 = vunpack.c.l.b16 %v9421
        %v9455 = vunpack.c.l.b16 %v9422
        %v9456 = vunpack.c.l.b16 %v9423
        %v9457 = vunpack.c.l.b16 %v9424
        %v9458 = vunpack.c.l.b16 %v9425
        %v9459 = vpack.c.b16 %v9451, %v9451
        %v9460 = vpack.c.b16 %v9452, %v9452
        %v9461 = vpack.c.b16 %v9453, %v9453
        %v9462 = vpack.c.b16 %v9454, %v9454
        %v9463 = vpack.c.b16 %v9455, %v9455
        %v9464 = vpack.c.b16 %v9456, %v9456
        %v9465 = vpack.c.b16 %v9457, %v9457
        %v9466 = vpack.c.b16 %v9458, %v9458
        %v9467 = vunpack.c.l.b16 %v9459
        %v9468 = vunpack.c.l.b16 %v9460
        %v9469 = vunpack.c.l.b16 %v9461
        %v9470 = vunpack.c.l.b16 %v9462
        %v9471 = vunpack.c.l.b16 %v9463
        %v9472 = vunpack.c.l.b16 %v9464
        %v9473 = vunpack.c.l.b16 %v9465
        %v9474 = vunpack.c.l.b16 %v9466
        %v9475 = vrot.slane %v9467, 4
        %v9476 = vrot.slane %v9468, 3
        %v9477 = vsel %vm2104, %v9476, %v9475
        %v9478 = vrot.slane %v9469, 2
        %v9479 = vsel %vm2107, %v9478, %v9477
        %v9480 = vrot.slane %v9470, 1
        %v9481 = vsel %vm2110, %v9480, %v9479
        %v9482 = vsel %vm2113, %v9471, %v9481
        %v9483 = vrot.slane %v9472, 7
        %v9484 = vsel %vm2116, %v9483, %v9482
        %v9485 = vrot.slane %v9473, 6
        %v9486 = vsel %vm2119, %v9485, %v9484
        %v9487 = vrot.slane %v9474, 5
        %v9488 = vsel %vm2122, %v9487, %v9486
        %v9489 = vpack.c.b16 %v9488, %v9488
        %v9507 = vunpack.c.l.b16 %v9427
        %v9508 = vunpack.c.l.b16 %v9428
        %v9509 = vunpack.c.l.b16 %v9429
        %v9510 = vunpack.c.l.b16 %v9430
        %v9511 = vunpack.c.l.b16 %v9431
        %v9512 = vunpack.c.l.b16 %v9432
        %v9513 = vunpack.c.l.b16 %v9433
        %v9514 = vunpack.c.l.b16 %v9434
        %v9515 = vunpack.c.l.b16 %v9435
        %v9516 = vunpack.c.l.b16 %v9436
        %v9517 = vunpack.c.l.b16 %v9437
        %v9518 = vunpack.c.l.b16 %v9438
        %v9519 = vunpack.c.l.b16 %v9439
        %v9520 = vunpack.c.l.b16 %v9440
        %v9521 = vunpack.c.l.b16 %v9441
        %v9522 = vunpack.c.l.b16 %v9442
        %v9523 = vpack.c.b16 %v9508, %v9507
        %v9524 = vpack.c.b16 %v9510, %v9509
        %v9525 = vpack.c.b16 %v9512, %v9511
        %v9526 = vpack.c.b16 %v9514, %v9513
        %v9527 = vpack.c.b16 %v9516, %v9515
        %v9528 = vpack.c.b16 %v9518, %v9517
        %v9529 = vpack.c.b16 %v9520, %v9519
        %v9530 = vpack.c.b16 %v9522, %v9521
        %9539 = vmatprep.subr.bf16.mxu0 0
        %9540 = vmatpush1.bf16.msra.mxu0 %v9530
        %9541 = vmatprep.subr.bf16.mxu0 0
        %9542 = vmatpush1.bf16.msra.mxu0 %v9529
        %9543 = vmatprep.subr.bf16.mxu0 0
        %9544 = vmatpush1.bf16.msra.mxu0 %v9528
        %9545 = vmatprep.subr.bf16.mxu0 0
        %9546 = vmatpush1.bf16.msra.mxu0 %v9527
        %9547 = vmatprep.subr.bf16.mxu0 0
        %9548 = vmatpush1.bf16.msra.mxu0 %v9526
        %9549 = vmatprep.subr.bf16.mxu0 0
        %9550 = vmatpush1.bf16.msra.mxu0 %v9525
        %9551 = vmatprep.subr.bf16.mxu0 0
        %9552 = vmatpush1.bf16.msra.mxu0 %v9524
        %9553 = vmatprep.subr.bf16.mxu0 0
        %9554 = vmatpush1.bf16.msra.mxu0 %v9523
        %9555 = vmatprep.subr.bf16.mxu0 0
        %9556 = vmatpush2.bf16.msra.mxu0 0
        %9557 = vmatprep.subr.bf16.mxu0 0
        %9558 = vmatpush2.bf16.msra.mxu0 0
        %9559 = vmatprep.subr.bf16.mxu0 0
        %9560 = vmatpush2.bf16.msra.mxu0 0
        %9561 = vmatprep.subr.bf16.mxu0 0
        %9562 = vmatpush2.bf16.msra.mxu0 0
        %9563 = vmatprep.subr.bf16.mxu0 0
        %9564 = vmatpush2.bf16.msra.mxu0 0
        %9565 = vmatprep.subr.bf16.mxu0 0
        %9566 = vmatpush2.bf16.msra.mxu0 0
        %9567 = vmatprep.subr.bf16.mxu0 0
        %9568 = vmatpush2.bf16.msra.mxu0 0
        %9569 = vmatprep.subr.bf16.mxu0 0
        %9570 = vmatpush2.bf16.msra.mxu0 0
        %9571 = vmatprep.mubr.bf16.mxu0 0
        %9572 = vmatmul.mubr.bf16.gmra.mxu0 %v9489
        %v9573 = vpop.f32.mrf.mxu0
        %v9574 = vadd.f32 0.0, %v9573
        %v9575 = vpop.f32.mrf.mxu0
        %v9576 = vpop.f32.mrf.mxu0
        %v9577 = vpop.f32.mrf.mxu0
        %9578 = vdwg.mxu0
        %v9579 = vadd.f32 %v9417, %v9574
        %s9580 = scalar_lea.vmem %s3, 3392
        %v9581 = vld [vmem:[%s9580] sm:$0xf]
        %v9582 = vld [vmem:[%s9580 + $0x4] sm:$0xf]
        %v9583 = vld [vmem:[%s9580 + $0x8] sm:$0xf]
        %v9584 = vld [vmem:[%s9580 + $0xc] sm:$0xf]
        %v9585 = vld [vmem:[%s9580 + $0x10] sm:$0xf]
        %v9586 = vld [vmem:[%s9580 + $0x14] sm:$0xf]
        %v9587 = vld [vmem:[%s9580 + $0x18] sm:$0xf]
        %v9588 = vld [vmem:[%s9580 + $0x1c] sm:$0xf]
        %v9589 = vld [vmem:[%s9580 + $0x20] sm:$0xf]
        %v9590 = vld [vmem:[%s9580 + $0x24] sm:$0xf]
        %v9591 = vld [vmem:[%s9580 + $0x28] sm:$0xf]
        %v9592 = vld [vmem:[%s9580 + $0x2c] sm:$0xf]
        %v9593 = vld [vmem:[%s9580 + $0x30] sm:$0xf]
        %v9594 = vld [vmem:[%s9580 + $0x34] sm:$0xf]
        %v9595 = vld [vmem:[%s9580 + $0x38] sm:$0xf]
        %v9596 = vld [vmem:[%s9580 + $0x3c] sm:$0xf]
        %v9597 = vrot.slane %v9467, 5
        %v9598 = vrot.slane %v9468, 4
        %v9599 = vsel %vm2104, %v9598, %v9597
        %v9600 = vrot.slane %v9469, 3
        %v9601 = vsel %vm2107, %v9600, %v9599
        %v9602 = vrot.slane %v9470, 2
        %v9603 = vsel %vm2110, %v9602, %v9601
        %v9604 = vrot.slane %v9471, 1
        %v9605 = vsel %vm2113, %v9604, %v9603
        %v9606 = vsel %vm2116, %v9472, %v9605
        %v9607 = vrot.slane %v9473, 7
        %v9608 = vsel %vm2119, %v9607, %v9606
        %v9609 = vrot.slane %v9474, 6
        %v9610 = vsel %vm2122, %v9609, %v9608
        %v9611 = vpack.c.b16 %v9610, %v9610
        %v9629 = vunpack.c.l.b16 %v9581
        %v9630 = vunpack.c.l.b16 %v9582
        %v9631 = vunpack.c.l.b16 %v9583
        %v9632 = vunpack.c.l.b16 %v9584
        %v9633 = vunpack.c.l.b16 %v9585
        %v9634 = vunpack.c.l.b16 %v9586
        %v9635 = vunpack.c.l.b16 %v9587
        %v9636 = vunpack.c.l.b16 %v9588
        %v9637 = vunpack.c.l.b16 %v9589
        %v9638 = vunpack.c.l.b16 %v9590
        %v9639 = vunpack.c.l.b16 %v9591
        %v9640 = vunpack.c.l.b16 %v9592
        %v9641 = vunpack.c.l.b16 %v9593
        %v9642 = vunpack.c.l.b16 %v9594
        %v9643 = vunpack.c.l.b16 %v9595
        %v9644 = vunpack.c.l.b16 %v9596
        %v9645 = vpack.c.b16 %v9630, %v9629
        %v9646 = vpack.c.b16 %v9632, %v9631
        %v9647 = vpack.c.b16 %v9634, %v9633
        %v9648 = vpack.c.b16 %v9636, %v9635
        %v9649 = vpack.c.b16 %v9638, %v9637
        %v9650 = vpack.c.b16 %v9640, %v9639
        %v9651 = vpack.c.b16 %v9642, %v9641
        %v9652 = vpack.c.b16 %v9644, %v9643
        %9661 = vmatprep.subr.bf16.mxu0 0
        %9662 = vmatpush1.bf16.msra.mxu0 %v9652
        %9663 = vmatprep.subr.bf16.mxu0 0
        %9664 = vmatpush1.bf16.msra.mxu0 %v9651
        %9665 = vmatprep.subr.bf16.mxu0 0
        %9666 = vmatpush1.bf16.msra.mxu0 %v9650
        %9667 = vmatprep.subr.bf16.mxu0 0
        %9668 = vmatpush1.bf16.msra.mxu0 %v9649
        %9669 = vmatprep.subr.bf16.mxu0 0
        %9670 = vmatpush1.bf16.msra.mxu0 %v9648
        %9671 = vmatprep.subr.bf16.mxu0 0
        %9672 = vmatpush1.bf16.msra.mxu0 %v9647
        %9673 = vmatprep.subr.bf16.mxu0 0
        %9674 = vmatpush1.bf16.msra.mxu0 %v9646
        %9675 = vmatprep.subr.bf16.mxu0 0
        %9676 = vmatpush1.bf16.msra.mxu0 %v9645
        %9677 = vmatprep.subr.bf16.mxu0 0
        %9678 = vmatpush2.bf16.msra.mxu0 0
        %9679 = vmatprep.subr.bf16.mxu0 0
        %9680 = vmatpush2.bf16.msra.mxu0 0
        %9681 = vmatprep.subr.bf16.mxu0 0
        %9682 = vmatpush2.bf16.msra.mxu0 0
        %9683 = vmatprep.subr.bf16.mxu0 0
        %9684 = vmatpush2.bf16.msra.mxu0 0
        %9685 = vmatprep.subr.bf16.mxu0 0
        %9686 = vmatpush2.bf16.msra.mxu0 0
        %9687 = vmatprep.subr.bf16.mxu0 0
        %9688 = vmatpush2.bf16.msra.mxu0 0
        %9689 = vmatprep.subr.bf16.mxu0 0
        %9690 = vmatpush2.bf16.msra.mxu0 0
        %9691 = vmatprep.subr.bf16.mxu0 0
        %9692 = vmatpush2.bf16.msra.mxu0 0
        %9693 = vmatprep.mubr.bf16.mxu0 0
        %9694 = vmatmul.mubr.bf16.gmra.mxu0 %v9611
        %v9695 = vpop.f32.mrf.mxu0
        %v9696 = vadd.f32 0.0, %v9695
        %v9697 = vpop.f32.mrf.mxu0
        %v9698 = vpop.f32.mrf.mxu0
        %v9699 = vpop.f32.mrf.mxu0
        %9700 = vdwg.mxu0
        %v9701 = vadd.f32 %v9579, %v9696
        %v9702 = vld [vmem:[#allocation2 + $0x18] sm:$0x8]
        %v9703 = vld [vmem:[#allocation2 + $0x38] sm:$0x8]
        %v9704 = vld [vmem:[#allocation2 + $0x58] sm:$0x8]
        %v9705 = vld [vmem:[#allocation2 + $0x78] sm:$0x8]
        %v9706 = vld [vmem:[#allocation2 + $0x98] sm:$0x8]
        %v9707 = vld [vmem:[#allocation2 + $0xb8] sm:$0x8]
        %v9708 = vld [vmem:[#allocation2 + $0xd8] sm:$0x8]
        %v9709 = vld [vmem:[#allocation2 + $0xf8] sm:$0x8]
        %s9710 = scalar_lea.vmem %s3, 3456
        %v9711 = vld [vmem:[%s9710] sm:$0xf]
        %v9712 = vld [vmem:[%s9710 + $0x4] sm:$0xf]
        %v9713 = vld [vmem:[%s9710 + $0x8] sm:$0xf]
        %v9714 = vld [vmem:[%s9710 + $0xc] sm:$0xf]
        %v9715 = vld [vmem:[%s9710 + $0x10] sm:$0xf]
        %v9716 = vld [vmem:[%s9710 + $0x14] sm:$0xf]
        %v9717 = vld [vmem:[%s9710 + $0x18] sm:$0xf]
        %v9718 = vld [vmem:[%s9710 + $0x1c] sm:$0xf]
        %v9719 = vld [vmem:[%s9710 + $0x20] sm:$0xf]
        %v9720 = vld [vmem:[%s9710 + $0x24] sm:$0xf]
        %v9721 = vld [vmem:[%s9710 + $0x28] sm:$0xf]
        %v9722 = vld [vmem:[%s9710 + $0x2c] sm:$0xf]
        %v9723 = vld [vmem:[%s9710 + $0x30] sm:$0xf]
        %v9724 = vld [vmem:[%s9710 + $0x34] sm:$0xf]
        %v9725 = vld [vmem:[%s9710 + $0x38] sm:$0xf]
        %v9726 = vld [vmem:[%s9710 + $0x3c] sm:$0xf]
        %v9735 = vunpack.c.l.b16 %v9702
        %v9736 = vunpack.c.l.b16 %v9703
        %v9737 = vunpack.c.l.b16 %v9704
        %v9738 = vunpack.c.l.b16 %v9705
        %v9739 = vunpack.c.l.b16 %v9706
        %v9740 = vunpack.c.l.b16 %v9707
        %v9741 = vunpack.c.l.b16 %v9708
        %v9742 = vunpack.c.l.b16 %v9709
        %v9743 = vpack.c.b16 %v9735, %v9735
        %v9744 = vpack.c.b16 %v9736, %v9736
        %v9745 = vpack.c.b16 %v9737, %v9737
        %v9746 = vpack.c.b16 %v9738, %v9738
        %v9747 = vpack.c.b16 %v9739, %v9739
        %v9748 = vpack.c.b16 %v9740, %v9740
        %v9749 = vpack.c.b16 %v9741, %v9741
        %v9750 = vpack.c.b16 %v9742, %v9742
        %v9751 = vunpack.c.l.b16 %v9743
        %v9752 = vunpack.c.l.b16 %v9744
        %v9753 = vunpack.c.l.b16 %v9745
        %v9754 = vunpack.c.l.b16 %v9746
        %v9755 = vunpack.c.l.b16 %v9747
        %v9756 = vunpack.c.l.b16 %v9748
        %v9757 = vunpack.c.l.b16 %v9749
        %v9758 = vunpack.c.l.b16 %v9750
        %v9759 = vrot.slane %v9751, 6
        %v9760 = vrot.slane %v9752, 5
        %v9761 = vsel %vm2104, %v9760, %v9759
        %v9762 = vrot.slane %v9753, 4
        %v9763 = vsel %vm2107, %v9762, %v9761
        %v9764 = vrot.slane %v9754, 3
        %v9765 = vsel %vm2110, %v9764, %v9763
        %v9766 = vrot.slane %v9755, 2
        %v9767 = vsel %vm2113, %v9766, %v9765
        %v9768 = vrot.slane %v9756, 1
        %v9769 = vsel %vm2116, %v9768, %v9767
        %v9770 = vsel %vm2119, %v9757, %v9769
        %v9771 = vrot.slane %v9758, 7
        %v9772 = vsel %vm2122, %v9771, %v9770
        %v9773 = vpack.c.b16 %v9772, %v9772
        %v9791 = vunpack.c.l.b16 %v9711
        %v9792 = vunpack.c.l.b16 %v9712
        %v9793 = vunpack.c.l.b16 %v9713
        %v9794 = vunpack.c.l.b16 %v9714
        %v9795 = vunpack.c.l.b16 %v9715
        %v9796 = vunpack.c.l.b16 %v9716
        %v9797 = vunpack.c.l.b16 %v9717
        %v9798 = vunpack.c.l.b16 %v9718
        %v9799 = vunpack.c.l.b16 %v9719
        %v9800 = vunpack.c.l.b16 %v9720
        %v9801 = vunpack.c.l.b16 %v9721
        %v9802 = vunpack.c.l.b16 %v9722
        %v9803 = vunpack.c.l.b16 %v9723
        %v9804 = vunpack.c.l.b16 %v9724
        %v9805 = vunpack.c.l.b16 %v9725
        %v9806 = vunpack.c.l.b16 %v9726
        %v9807 = vpack.c.b16 %v9792, %v9791
        %v9808 = vpack.c.b16 %v9794, %v9793
        %v9809 = vpack.c.b16 %v9796, %v9795
        %v9810 = vpack.c.b16 %v9798, %v9797
        %v9811 = vpack.c.b16 %v9800, %v9799
        %v9812 = vpack.c.b16 %v9802, %v9801
        %v9813 = vpack.c.b16 %v9804, %v9803
        %v9814 = vpack.c.b16 %v9806, %v9805
        %9823 = vmatprep.subr.bf16.mxu0 0
        %9824 = vmatpush1.bf16.msra.mxu0 %v9814
        %9825 = vmatprep.subr.bf16.mxu0 0
        %9826 = vmatpush1.bf16.msra.mxu0 %v9813
        %9827 = vmatprep.subr.bf16.mxu0 0
        %9828 = vmatpush1.bf16.msra.mxu0 %v9812
        %9829 = vmatprep.subr.bf16.mxu0 0
        %9830 = vmatpush1.bf16.msra.mxu0 %v9811
        %9831 = vmatprep.subr.bf16.mxu0 0
        %9832 = vmatpush1.bf16.msra.mxu0 %v9810
        %9833 = vmatprep.subr.bf16.mxu0 0
        %9834 = vmatpush1.bf16.msra.mxu0 %v9809
        %9835 = vmatprep.subr.bf16.mxu0 0
        %9836 = vmatpush1.bf16.msra.mxu0 %v9808
        %9837 = vmatprep.subr.bf16.mxu0 0
        %9838 = vmatpush1.bf16.msra.mxu0 %v9807
        %9839 = vmatprep.subr.bf16.mxu0 0
        %9840 = vmatpush2.bf16.msra.mxu0 0
        %9841 = vmatprep.subr.bf16.mxu0 0
        %9842 = vmatpush2.bf16.msra.mxu0 0
        %9843 = vmatprep.subr.bf16.mxu0 0
        %9844 = vmatpush2.bf16.msra.mxu0 0
        %9845 = vmatprep.subr.bf16.mxu0 0
        %9846 = vmatpush2.bf16.msra.mxu0 0
        %9847 = vmatprep.subr.bf16.mxu0 0
        %9848 = vmatpush2.bf16.msra.mxu0 0
        %9849 = vmatprep.subr.bf16.mxu0 0
        %9850 = vmatpush2.bf16.msra.mxu0 0
        %9851 = vmatprep.subr.bf16.mxu0 0
        %9852 = vmatpush2.bf16.msra.mxu0 0
        %9853 = vmatprep.subr.bf16.mxu0 0
        %9854 = vmatpush2.bf16.msra.mxu0 0
        %9855 = vmatprep.mubr.bf16.mxu0 0
        %9856 = vmatmul.mubr.bf16.gmra.mxu0 %v9773
        %v9857 = vpop.f32.mrf.mxu0
        %v9858 = vadd.f32 0.0, %v9857
        %v9859 = vpop.f32.mrf.mxu0
        %v9860 = vpop.f32.mrf.mxu0
        %v9861 = vpop.f32.mrf.mxu0
        %9862 = vdwg.mxu0
        %v9863 = vadd.f32 %v9701, %v9858
        %s9864 = scalar_lea.vmem %s3, 3520
        %v9865 = vld [vmem:[%s9864] sm:$0xf]
        %v9866 = vld [vmem:[%s9864 + $0x4] sm:$0xf]
        %v9867 = vld [vmem:[%s9864 + $0x8] sm:$0xf]
        %v9868 = vld [vmem:[%s9864 + $0xc] sm:$0xf]
        %v9869 = vld [vmem:[%s9864 + $0x10] sm:$0xf]
        %v9870 = vld [vmem:[%s9864 + $0x14] sm:$0xf]
        %v9871 = vld [vmem:[%s9864 + $0x18] sm:$0xf]
        %v9872 = vld [vmem:[%s9864 + $0x1c] sm:$0xf]
        %v9873 = vld [vmem:[%s9864 + $0x20] sm:$0xf]
        %v9874 = vld [vmem:[%s9864 + $0x24] sm:$0xf]
        %v9875 = vld [vmem:[%s9864 + $0x28] sm:$0xf]
        %v9876 = vld [vmem:[%s9864 + $0x2c] sm:$0xf]
        %v9877 = vld [vmem:[%s9864 + $0x30] sm:$0xf]
        %v9878 = vld [vmem:[%s9864 + $0x34] sm:$0xf]
        %v9879 = vld [vmem:[%s9864 + $0x38] sm:$0xf]
        %v9880 = vld [vmem:[%s9864 + $0x3c] sm:$0xf]
        %v9881 = vrot.slane %v9751, 7
        %v9882 = vrot.slane %v9752, 6
        %v9883 = vsel %vm2104, %v9882, %v9881
        %v9884 = vrot.slane %v9753, 5
        %v9885 = vsel %vm2107, %v9884, %v9883
        %v9886 = vrot.slane %v9754, 4
        %v9887 = vsel %vm2110, %v9886, %v9885
        %v9888 = vrot.slane %v9755, 3
        %v9889 = vsel %vm2113, %v9888, %v9887
        %v9890 = vrot.slane %v9756, 2
        %v9891 = vsel %vm2116, %v9890, %v9889
        %v9892 = vrot.slane %v9757, 1
        %v9893 = vsel %vm2119, %v9892, %v9891
        %v9894 = vsel %vm2122, %v9758, %v9893
        %v9895 = vpack.c.b16 %v9894, %v9894
        %v9913 = vunpack.c.l.b16 %v9865
        %v9914 = vunpack.c.l.b16 %v9866
        %v9915 = vunpack.c.l.b16 %v9867
        %v9916 = vunpack.c.l.b16 %v9868
        %v9917 = vunpack.c.l.b16 %v9869
        %v9918 = vunpack.c.l.b16 %v9870
        %v9919 = vunpack.c.l.b16 %v9871
        %v9920 = vunpack.c.l.b16 %v9872
        %v9921 = vunpack.c.l.b16 %v9873
        %v9922 = vunpack.c.l.b16 %v9874
        %v9923 = vunpack.c.l.b16 %v9875
        %v9924 = vunpack.c.l.b16 %v9876
        %v9925 = vunpack.c.l.b16 %v9877
        %v9926 = vunpack.c.l.b16 %v9878
        %v9927 = vunpack.c.l.b16 %v9879
        %v9928 = vunpack.c.l.b16 %v9880
        %v9929 = vpack.c.b16 %v9914, %v9913
        %v9930 = vpack.c.b16 %v9916, %v9915
        %v9931 = vpack.c.b16 %v9918, %v9917
        %v9932 = vpack.c.b16 %v9920, %v9919
        %v9933 = vpack.c.b16 %v9922, %v9921
        %v9934 = vpack.c.b16 %v9924, %v9923
        %v9935 = vpack.c.b16 %v9926, %v9925
        %v9936 = vpack.c.b16 %v9928, %v9927
        %9945 = vmatprep.subr.bf16.mxu0 0
        %9946 = vmatpush1.bf16.msra.mxu0 %v9936
        %9947 = vmatprep.subr.bf16.mxu0 0
        %9948 = vmatpush1.bf16.msra.mxu0 %v9935
        %9949 = vmatprep.subr.bf16.mxu0 0
        %9950 = vmatpush1.bf16.msra.mxu0 %v9934
        %9951 = vmatprep.subr.bf16.mxu0 0
        %9952 = vmatpush1.bf16.msra.mxu0 %v9933
        %9953 = vmatprep.subr.bf16.mxu0 0
        %9954 = vmatpush1.bf16.msra.mxu0 %v9932
        %9955 = vmatprep.subr.bf16.mxu0 0
        %9956 = vmatpush1.bf16.msra.mxu0 %v9931
        %9957 = vmatprep.subr.bf16.mxu0 0
        %9958 = vmatpush1.bf16.msra.mxu0 %v9930
        %9959 = vmatprep.subr.bf16.mxu0 0
        %9960 = vmatpush1.bf16.msra.mxu0 %v9929
        %9961 = vmatprep.subr.bf16.mxu0 0
        %9962 = vmatpush2.bf16.msra.mxu0 0
        %9963 = vmatprep.subr.bf16.mxu0 0
        %9964 = vmatpush2.bf16.msra.mxu0 0
        %9965 = vmatprep.subr.bf16.mxu0 0
        %9966 = vmatpush2.bf16.msra.mxu0 0
        %9967 = vmatprep.subr.bf16.mxu0 0
        %9968 = vmatpush2.bf16.msra.mxu0 0
        %9969 = vmatprep.subr.bf16.mxu0 0
        %9970 = vmatpush2.bf16.msra.mxu0 0
        %9971 = vmatprep.subr.bf16.mxu0 0
        %9972 = vmatpush2.bf16.msra.mxu0 0
        %9973 = vmatprep.subr.bf16.mxu0 0
        %9974 = vmatpush2.bf16.msra.mxu0 0
        %9975 = vmatprep.subr.bf16.mxu0 0
        %9976 = vmatpush2.bf16.msra.mxu0 0
        %9977 = vmatprep.mubr.bf16.mxu0 0
        %9978 = vmatmul.mubr.bf16.gmra.mxu0 %v9895
        %v9979 = vpop.f32.mrf.mxu0
        %v9980 = vadd.f32 0.0, %v9979
        %v9981 = vpop.f32.mrf.mxu0
        %v9982 = vpop.f32.mrf.mxu0
        %v9983 = vpop.f32.mrf.mxu0
        %9984 = vdwg.mxu0
        %v9985 = vadd.f32 %v9863, %v9980
        %v9986 = vld [vmem:[#allocation2 + $0x1c] sm:$0x1]
        %v9987 = vld [vmem:[#allocation2 + $0x3c] sm:$0x1]
        %v9988 = vld [vmem:[#allocation2 + $0x5c] sm:$0x1]
        %v9989 = vld [vmem:[#allocation2 + $0x7c] sm:$0x1]
        %v9990 = vld [vmem:[#allocation2 + $0x9c] sm:$0x1]
        %v9991 = vld [vmem:[#allocation2 + $0xbc] sm:$0x1]
        %v9992 = vld [vmem:[#allocation2 + $0xdc] sm:$0x1]
        %v9993 = vld [vmem:[#allocation2 + $0xfc] sm:$0x1]
        %s9994 = scalar_lea.vmem %s3, 3584
        %v9995 = vld [vmem:[%s9994] sm:$0xf]
        %v9996 = vld [vmem:[%s9994 + $0x4] sm:$0xf]
        %v9997 = vld [vmem:[%s9994 + $0x8] sm:$0xf]
        %v9998 = vld [vmem:[%s9994 + $0xc] sm:$0xf]
        %v9999 = vld [vmem:[%s9994 + $0x10] sm:$0xf]
        %v10000 = vld [vmem:[%s9994 + $0x14] sm:$0xf]
        %v10001 = vld [vmem:[%s9994 + $0x18] sm:$0xf]
        %v10002 = vld [vmem:[%s9994 + $0x1c] sm:$0xf]
        %v10003 = vld [vmem:[%s9994 + $0x20] sm:$0xf]
        %v10004 = vld [vmem:[%s9994 + $0x24] sm:$0xf]
        %v10005 = vld [vmem:[%s9994 + $0x28] sm:$0xf]
        %v10006 = vld [vmem:[%s9994 + $0x2c] sm:$0xf]
        %v10007 = vld [vmem:[%s9994 + $0x30] sm:$0xf]
        %v10008 = vld [vmem:[%s9994 + $0x34] sm:$0xf]
        %v10009 = vld [vmem:[%s9994 + $0x38] sm:$0xf]
        %v10010 = vld [vmem:[%s9994 + $0x3c] sm:$0xf]
        %v10019 = vunpack.c.l.b16 %v9986
        %v10020 = vunpack.c.l.b16 %v9987
        %v10021 = vunpack.c.l.b16 %v9988
        %v10022 = vunpack.c.l.b16 %v9989
        %v10023 = vunpack.c.l.b16 %v9990
        %v10024 = vunpack.c.l.b16 %v9991
        %v10025 = vunpack.c.l.b16 %v9992
        %v10026 = vunpack.c.l.b16 %v9993
        %v10027 = vpack.c.b16 %v10019, %v10019
        %v10028 = vpack.c.b16 %v10020, %v10020
        %v10029 = vpack.c.b16 %v10021, %v10021
        %v10030 = vpack.c.b16 %v10022, %v10022
        %v10031 = vpack.c.b16 %v10023, %v10023
        %v10032 = vpack.c.b16 %v10024, %v10024
        %v10033 = vpack.c.b16 %v10025, %v10025
        %v10034 = vpack.c.b16 %v10026, %v10026
        %v10035 = vunpack.c.l.b16 %v10027
        %v10036 = vunpack.c.l.b16 %v10028
        %v10037 = vunpack.c.l.b16 %v10029
        %v10038 = vunpack.c.l.b16 %v10030
        %v10039 = vunpack.c.l.b16 %v10031
        %v10040 = vunpack.c.l.b16 %v10032
        %v10041 = vunpack.c.l.b16 %v10033
        %v10042 = vunpack.c.l.b16 %v10034
        %v10043 = vrot.slane %v10036, 7
        %v10044 = vsel %vm2104, %v10043, %v10035
        %v10045 = vrot.slane %v10037, 6
        %v10046 = vsel %vm2107, %v10045, %v10044
        %v10047 = vrot.slane %v10038, 5
        %v10048 = vsel %vm2110, %v10047, %v10046
        %v10049 = vrot.slane %v10039, 4
        %v10050 = vsel %vm2113, %v10049, %v10048
        %v10051 = vrot.slane %v10040, 3
        %v10052 = vsel %vm2116, %v10051, %v10050
        %v10053 = vrot.slane %v10041, 2
        %v10054 = vsel %vm2119, %v10053, %v10052
        %v10055 = vrot.slane %v10042, 1
        %v10056 = vsel %vm2122, %v10055, %v10054
        %v10057 = vpack.c.b16 %v10056, %v10056
        %v10075 = vunpack.c.l.b16 %v9995
        %v10076 = vunpack.c.l.b16 %v9996
        %v10077 = vunpack.c.l.b16 %v9997
        %v10078 = vunpack.c.l.b16 %v9998
        %v10079 = vunpack.c.l.b16 %v9999
        %v10080 = vunpack.c.l.b16 %v10000
        %v10081 = vunpack.c.l.b16 %v10001
        %v10082 = vunpack.c.l.b16 %v10002
        %v10083 = vunpack.c.l.b16 %v10003
        %v10084 = vunpack.c.l.b16 %v10004
        %v10085 = vunpack.c.l.b16 %v10005
        %v10086 = vunpack.c.l.b16 %v10006
        %v10087 = vunpack.c.l.b16 %v10007
        %v10088 = vunpack.c.l.b16 %v10008
        %v10089 = vunpack.c.l.b16 %v10009
        %v10090 = vunpack.c.l.b16 %v10010
        %v10091 = vpack.c.b16 %v10076, %v10075
        %v10092 = vpack.c.b16 %v10078, %v10077
        %v10093 = vpack.c.b16 %v10080, %v10079
        %v10094 = vpack.c.b16 %v10082, %v10081
        %v10095 = vpack.c.b16 %v10084, %v10083
        %v10096 = vpack.c.b16 %v10086, %v10085
        %v10097 = vpack.c.b16 %v10088, %v10087
        %v10098 = vpack.c.b16 %v10090, %v10089
        %10107 = vmatprep.subr.bf16.mxu0 0
        %10108 = vmatpush1.bf16.msra.mxu0 %v10098
        %10109 = vmatprep.subr.bf16.mxu0 0
        %10110 = vmatpush1.bf16.msra.mxu0 %v10097
        %10111 = vmatprep.subr.bf16.mxu0 0
        %10112 = vmatpush1.bf16.msra.mxu0 %v10096
        %10113 = vmatprep.subr.bf16.mxu0 0
        %10114 = vmatpush1.bf16.msra.mxu0 %v10095
        %10115 = vmatprep.subr.bf16.mxu0 0
        %10116 = vmatpush1.bf16.msra.mxu0 %v10094
        %10117 = vmatprep.subr.bf16.mxu0 0
        %10118 = vmatpush1.bf16.msra.mxu0 %v10093
        %10119 = vmatprep.subr.bf16.mxu0 0
        %10120 = vmatpush1.bf16.msra.mxu0 %v10092
        %10121 = vmatprep.subr.bf16.mxu0 0
        %10122 = vmatpush1.bf16.msra.mxu0 %v10091
        %10123 = vmatprep.subr.bf16.mxu0 0
        %10124 = vmatpush2.bf16.msra.mxu0 0
        %10125 = vmatprep.subr.bf16.mxu0 0
        %10126 = vmatpush2.bf16.msra.mxu0 0
        %10127 = vmatprep.subr.bf16.mxu0 0
        %10128 = vmatpush2.bf16.msra.mxu0 0
        %10129 = vmatprep.subr.bf16.mxu0 0
        %10130 = vmatpush2.bf16.msra.mxu0 0
        %10131 = vmatprep.subr.bf16.mxu0 0
        %10132 = vmatpush2.bf16.msra.mxu0 0
        %10133 = vmatprep.subr.bf16.mxu0 0
        %10134 = vmatpush2.bf16.msra.mxu0 0
        %10135 = vmatprep.subr.bf16.mxu0 0
        %10136 = vmatpush2.bf16.msra.mxu0 0
        %10137 = vmatprep.subr.bf16.mxu0 0
        %10138 = vmatpush2.bf16.msra.mxu0 0
        %10139 = vmatprep.mubr.bf16.mxu0 0
        %10140 = vmatmul.mubr.bf16.gmra.mxu0 %v10057
        %v10141 = vpop.f32.mrf.mxu0
        %v10142 = vadd.f32 0.0, %v10141
        %v10143 = vpop.f32.mrf.mxu0
        %v10144 = vpop.f32.mrf.mxu0
        %v10145 = vpop.f32.mrf.mxu0
        %10146 = vdwg.mxu0
        %v10147 = vadd.f32 %v9985, %v10142
        %s10148 = scalar_lea.vmem %s3, 3648
        %v10149 = vld [vmem:[%s10148] sm:$0xf]
        %v10150 = vld [vmem:[%s10148 + $0x4] sm:$0xf]
        %v10151 = vld [vmem:[%s10148 + $0x8] sm:$0xf]
        %v10152 = vld [vmem:[%s10148 + $0xc] sm:$0xf]
        %v10153 = vld [vmem:[%s10148 + $0x10] sm:$0xf]
        %v10154 = vld [vmem:[%s10148 + $0x14] sm:$0xf]
        %v10155 = vld [vmem:[%s10148 + $0x18] sm:$0xf]
        %v10156 = vld [vmem:[%s10148 + $0x1c] sm:$0xf]
        %v10157 = vld [vmem:[%s10148 + $0x20] sm:$0xf]
        %v10158 = vld [vmem:[%s10148 + $0x24] sm:$0xf]
        %v10159 = vld [vmem:[%s10148 + $0x28] sm:$0xf]
        %v10160 = vld [vmem:[%s10148 + $0x2c] sm:$0xf]
        %v10161 = vld [vmem:[%s10148 + $0x30] sm:$0xf]
        %v10162 = vld [vmem:[%s10148 + $0x34] sm:$0xf]
        %v10163 = vld [vmem:[%s10148 + $0x38] sm:$0xf]
        %v10164 = vld [vmem:[%s10148 + $0x3c] sm:$0xf]
        %v10165 = vrot.slane %v10035, 1
        %v10166 = vsel %vm2104, %v10036, %v10165
        %v10167 = vrot.slane %v10037, 7
        %v10168 = vsel %vm2107, %v10167, %v10166
        %v10169 = vrot.slane %v10038, 6
        %v10170 = vsel %vm2110, %v10169, %v10168
        %v10171 = vrot.slane %v10039, 5
        %v10172 = vsel %vm2113, %v10171, %v10170
        %v10173 = vrot.slane %v10040, 4
        %v10174 = vsel %vm2116, %v10173, %v10172
        %v10175 = vrot.slane %v10041, 3
        %v10176 = vsel %vm2119, %v10175, %v10174
        %v10177 = vrot.slane %v10042, 2
        %v10178 = vsel %vm2122, %v10177, %v10176
        %v10179 = vpack.c.b16 %v10178, %v10178
        %v10197 = vunpack.c.l.b16 %v10149
        %v10198 = vunpack.c.l.b16 %v10150
        %v10199 = vunpack.c.l.b16 %v10151
        %v10200 = vunpack.c.l.b16 %v10152
        %v10201 = vunpack.c.l.b16 %v10153
        %v10202 = vunpack.c.l.b16 %v10154
        %v10203 = vunpack.c.l.b16 %v10155
        %v10204 = vunpack.c.l.b16 %v10156
        %v10205 = vunpack.c.l.b16 %v10157
        %v10206 = vunpack.c.l.b16 %v10158
        %v10207 = vunpack.c.l.b16 %v10159
        %v10208 = vunpack.c.l.b16 %v10160
        %v10209 = vunpack.c.l.b16 %v10161
        %v10210 = vunpack.c.l.b16 %v10162
        %v10211 = vunpack.c.l.b16 %v10163
        %v10212 = vunpack.c.l.b16 %v10164
        %v10213 = vpack.c.b16 %v10198, %v10197
        %v10214 = vpack.c.b16 %v10200, %v10199
        %v10215 = vpack.c.b16 %v10202, %v10201
        %v10216 = vpack.c.b16 %v10204, %v10203
        %v10217 = vpack.c.b16 %v10206, %v10205
        %v10218 = vpack.c.b16 %v10208, %v10207
        %v10219 = vpack.c.b16 %v10210, %v10209
        %v10220 = vpack.c.b16 %v10212, %v10211
        %10229 = vmatprep.subr.bf16.mxu0 0
        %10230 = vmatpush1.bf16.msra.mxu0 %v10220
        %10231 = vmatprep.subr.bf16.mxu0 0
        %10232 = vmatpush1.bf16.msra.mxu0 %v10219
        %10233 = vmatprep.subr.bf16.mxu0 0
        %10234 = vmatpush1.bf16.msra.mxu0 %v10218
        %10235 = vmatprep.subr.bf16.mxu0 0
        %10236 = vmatpush1.bf16.msra.mxu0 %v10217
        %10237 = vmatprep.subr.bf16.mxu0 0
        %10238 = vmatpush1.bf16.msra.mxu0 %v10216
        %10239 = vmatprep.subr.bf16.mxu0 0
        %10240 = vmatpush1.bf16.msra.mxu0 %v10215
        %10241 = vmatprep.subr.bf16.mxu0 0
        %10242 = vmatpush1.bf16.msra.mxu0 %v10214
        %10243 = vmatprep.subr.bf16.mxu0 0
        %10244 = vmatpush1.bf16.msra.mxu0 %v10213
        %10245 = vmatprep.subr.bf16.mxu0 0
        %10246 = vmatpush2.bf16.msra.mxu0 0
        %10247 = vmatprep.subr.bf16.mxu0 0
        %10248 = vmatpush2.bf16.msra.mxu0 0
        %10249 = vmatprep.subr.bf16.mxu0 0
        %10250 = vmatpush2.bf16.msra.mxu0 0
        %10251 = vmatprep.subr.bf16.mxu0 0
        %10252 = vmatpush2.bf16.msra.mxu0 0
        %10253 = vmatprep.subr.bf16.mxu0 0
        %10254 = vmatpush2.bf16.msra.mxu0 0
        %10255 = vmatprep.subr.bf16.mxu0 0
        %10256 = vmatpush2.bf16.msra.mxu0 0
        %10257 = vmatprep.subr.bf16.mxu0 0
        %10258 = vmatpush2.bf16.msra.mxu0 0
        %10259 = vmatprep.subr.bf16.mxu0 0
        %10260 = vmatpush2.bf16.msra.mxu0 0
        %10261 = vmatprep.mubr.bf16.mxu0 0
        %10262 = vmatmul.mubr.bf16.gmra.mxu0 %v10179
        %v10263 = vpop.f32.mrf.mxu0
        %v10264 = vadd.f32 0.0, %v10263
        %v10265 = vpop.f32.mrf.mxu0
        %v10266 = vpop.f32.mrf.mxu0
        %v10267 = vpop.f32.mrf.mxu0
        %10268 = vdwg.mxu0
        %v10269 = vadd.f32 %v10147, %v10264
        %v10270 = vld [vmem:[#allocation2 + $0x1c] sm:$0x2]
        %v10271 = vld [vmem:[#allocation2 + $0x3c] sm:$0x2]
        %v10272 = vld [vmem:[#allocation2 + $0x5c] sm:$0x2]
        %v10273 = vld [vmem:[#allocation2 + $0x7c] sm:$0x2]
        %v10274 = vld [vmem:[#allocation2 + $0x9c] sm:$0x2]
        %v10275 = vld [vmem:[#allocation2 + $0xbc] sm:$0x2]
        %v10276 = vld [vmem:[#allocation2 + $0xdc] sm:$0x2]
        %v10277 = vld [vmem:[#allocation2 + $0xfc] sm:$0x2]
        %s10278 = scalar_lea.vmem %s3, 3712
        %v10279 = vld [vmem:[%s10278] sm:$0xf]
        %v10280 = vld [vmem:[%s10278 + $0x4] sm:$0xf]
        %v10281 = vld [vmem:[%s10278 + $0x8] sm:$0xf]
        %v10282 = vld [vmem:[%s10278 + $0xc] sm:$0xf]
        %v10283 = vld [vmem:[%s10278 + $0x10] sm:$0xf]
        %v10284 = vld [vmem:[%s10278 + $0x14] sm:$0xf]
        %v10285 = vld [vmem:[%s10278 + $0x18] sm:$0xf]
        %v10286 = vld [vmem:[%s10278 + $0x1c] sm:$0xf]
        %v10287 = vld [vmem:[%s10278 + $0x20] sm:$0xf]
        %v10288 = vld [vmem:[%s10278 + $0x24] sm:$0xf]
        %v10289 = vld [vmem:[%s10278 + $0x28] sm:$0xf]
        %v10290 = vld [vmem:[%s10278 + $0x2c] sm:$0xf]
        %v10291 = vld [vmem:[%s10278 + $0x30] sm:$0xf]
        %v10292 = vld [vmem:[%s10278 + $0x34] sm:$0xf]
        %v10293 = vld [vmem:[%s10278 + $0x38] sm:$0xf]
        %v10294 = vld [vmem:[%s10278 + $0x3c] sm:$0xf]
        %v10303 = vunpack.c.l.b16 %v10270
        %v10304 = vunpack.c.l.b16 %v10271
        %v10305 = vunpack.c.l.b16 %v10272
        %v10306 = vunpack.c.l.b16 %v10273
        %v10307 = vunpack.c.l.b16 %v10274
        %v10308 = vunpack.c.l.b16 %v10275
        %v10309 = vunpack.c.l.b16 %v10276
        %v10310 = vunpack.c.l.b16 %v10277
        %v10311 = vpack.c.b16 %v10303, %v10303
        %v10312 = vpack.c.b16 %v10304, %v10304
        %v10313 = vpack.c.b16 %v10305, %v10305
        %v10314 = vpack.c.b16 %v10306, %v10306
        %v10315 = vpack.c.b16 %v10307, %v10307
        %v10316 = vpack.c.b16 %v10308, %v10308
        %v10317 = vpack.c.b16 %v10309, %v10309
        %v10318 = vpack.c.b16 %v10310, %v10310
        %v10319 = vunpack.c.l.b16 %v10311
        %v10320 = vunpack.c.l.b16 %v10312
        %v10321 = vunpack.c.l.b16 %v10313
        %v10322 = vunpack.c.l.b16 %v10314
        %v10323 = vunpack.c.l.b16 %v10315
        %v10324 = vunpack.c.l.b16 %v10316
        %v10325 = vunpack.c.l.b16 %v10317
        %v10326 = vunpack.c.l.b16 %v10318
        %v10327 = vrot.slane %v10319, 2
        %v10328 = vrot.slane %v10320, 1
        %v10329 = vsel %vm2104, %v10328, %v10327
        %v10330 = vsel %vm2107, %v10321, %v10329
        %v10331 = vrot.slane %v10322, 7
        %v10332 = vsel %vm2110, %v10331, %v10330
        %v10333 = vrot.slane %v10323, 6
        %v10334 = vsel %vm2113, %v10333, %v10332
        %v10335 = vrot.slane %v10324, 5
        %v10336 = vsel %vm2116, %v10335, %v10334
        %v10337 = vrot.slane %v10325, 4
        %v10338 = vsel %vm2119, %v10337, %v10336
        %v10339 = vrot.slane %v10326, 3
        %v10340 = vsel %vm2122, %v10339, %v10338
        %v10341 = vpack.c.b16 %v10340, %v10340
        %v10359 = vunpack.c.l.b16 %v10279
        %v10360 = vunpack.c.l.b16 %v10280
        %v10361 = vunpack.c.l.b16 %v10281
        %v10362 = vunpack.c.l.b16 %v10282
        %v10363 = vunpack.c.l.b16 %v10283
        %v10364 = vunpack.c.l.b16 %v10284
        %v10365 = vunpack.c.l.b16 %v10285
        %v10366 = vunpack.c.l.b16 %v10286
        %v10367 = vunpack.c.l.b16 %v10287
        %v10368 = vunpack.c.l.b16 %v10288
        %v10369 = vunpack.c.l.b16 %v10289
        %v10370 = vunpack.c.l.b16 %v10290
        %v10371 = vunpack.c.l.b16 %v10291
        %v10372 = vunpack.c.l.b16 %v10292
        %v10373 = vunpack.c.l.b16 %v10293
        %v10374 = vunpack.c.l.b16 %v10294
        %v10375 = vpack.c.b16 %v10360, %v10359
        %v10376 = vpack.c.b16 %v10362, %v10361
        %v10377 = vpack.c.b16 %v10364, %v10363
        %v10378 = vpack.c.b16 %v10366, %v10365
        %v10379 = vpack.c.b16 %v10368, %v10367
        %v10380 = vpack.c.b16 %v10370, %v10369
        %v10381 = vpack.c.b16 %v10372, %v10371
        %v10382 = vpack.c.b16 %v10374, %v10373
        %10391 = vmatprep.subr.bf16.mxu0 0
        %10392 = vmatpush1.bf16.msra.mxu0 %v10382
        %10393 = vmatprep.subr.bf16.mxu0 0
        %10394 = vmatpush1.bf16.msra.mxu0 %v10381
        %10395 = vmatprep.subr.bf16.mxu0 0
        %10396 = vmatpush1.bf16.msra.mxu0 %v10380
        %10397 = vmatprep.subr.bf16.mxu0 0
        %10398 = vmatpush1.bf16.msra.mxu0 %v10379
        %10399 = vmatprep.subr.bf16.mxu0 0
        %10400 = vmatpush1.bf16.msra.mxu0 %v10378
        %10401 = vmatprep.subr.bf16.mxu0 0
        %10402 = vmatpush1.bf16.msra.mxu0 %v10377
        %10403 = vmatprep.subr.bf16.mxu0 0
        %10404 = vmatpush1.bf16.msra.mxu0 %v10376
        %10405 = vmatprep.subr.bf16.mxu0 0
        %10406 = vmatpush1.bf16.msra.mxu0 %v10375
        %10407 = vmatprep.subr.bf16.mxu0 0
        %10408 = vmatpush2.bf16.msra.mxu0 0
        %10409 = vmatprep.subr.bf16.mxu0 0
        %10410 = vmatpush2.bf16.msra.mxu0 0
        %10411 = vmatprep.subr.bf16.mxu0 0
        %10412 = vmatpush2.bf16.msra.mxu0 0
        %10413 = vmatprep.subr.bf16.mxu0 0
        %10414 = vmatpush2.bf16.msra.mxu0 0
        %10415 = vmatprep.subr.bf16.mxu0 0
        %10416 = vmatpush2.bf16.msra.mxu0 0
        %10417 = vmatprep.subr.bf16.mxu0 0
        %10418 = vmatpush2.bf16.msra.mxu0 0
        %10419 = vmatprep.subr.bf16.mxu0 0
        %10420 = vmatpush2.bf16.msra.mxu0 0
        %10421 = vmatprep.subr.bf16.mxu0 0
        %10422 = vmatpush2.bf16.msra.mxu0 0
        %10423 = vmatprep.mubr.bf16.mxu0 0
        %10424 = vmatmul.mubr.bf16.gmra.mxu0 %v10341
        %v10425 = vpop.f32.mrf.mxu0
        %v10426 = vadd.f32 0.0, %v10425
        %v10427 = vpop.f32.mrf.mxu0
        %v10428 = vpop.f32.mrf.mxu0
        %v10429 = vpop.f32.mrf.mxu0
        %10430 = vdwg.mxu0
        %v10431 = vadd.f32 %v10269, %v10426
        %s10432 = scalar_lea.vmem %s3, 3776
        %v10433 = vld [vmem:[%s10432] sm:$0xf]
        %v10434 = vld [vmem:[%s10432 + $0x4] sm:$0xf]
        %v10435 = vld [vmem:[%s10432 + $0x8] sm:$0xf]
        %v10436 = vld [vmem:[%s10432 + $0xc] sm:$0xf]
        %v10437 = vld [vmem:[%s10432 + $0x10] sm:$0xf]
        %v10438 = vld [vmem:[%s10432 + $0x14] sm:$0xf]
        %v10439 = vld [vmem:[%s10432 + $0x18] sm:$0xf]
        %v10440 = vld [vmem:[%s10432 + $0x1c] sm:$0xf]
        %v10441 = vld [vmem:[%s10432 + $0x20] sm:$0xf]
        %v10442 = vld [vmem:[%s10432 + $0x24] sm:$0xf]
        %v10443 = vld [vmem:[%s10432 + $0x28] sm:$0xf]
        %v10444 = vld [vmem:[%s10432 + $0x2c] sm:$0xf]
        %v10445 = vld [vmem:[%s10432 + $0x30] sm:$0xf]
        %v10446 = vld [vmem:[%s10432 + $0x34] sm:$0xf]
        %v10447 = vld [vmem:[%s10432 + $0x38] sm:$0xf]
        %v10448 = vld [vmem:[%s10432 + $0x3c] sm:$0xf]
        %v10449 = vrot.slane %v10319, 3
        %v10450 = vrot.slane %v10320, 2
        %v10451 = vsel %vm2104, %v10450, %v10449
        %v10452 = vrot.slane %v10321, 1
        %v10453 = vsel %vm2107, %v10452, %v10451
        %v10454 = vsel %vm2110, %v10322, %v10453
        %v10455 = vrot.slane %v10323, 7
        %v10456 = vsel %vm2113, %v10455, %v10454
        %v10457 = vrot.slane %v10324, 6
        %v10458 = vsel %vm2116, %v10457, %v10456
        %v10459 = vrot.slane %v10325, 5
        %v10460 = vsel %vm2119, %v10459, %v10458
        %v10461 = vrot.slane %v10326, 4
        %v10462 = vsel %vm2122, %v10461, %v10460
        %v10463 = vpack.c.b16 %v10462, %v10462
        %v10481 = vunpack.c.l.b16 %v10433
        %v10482 = vunpack.c.l.b16 %v10434
        %v10483 = vunpack.c.l.b16 %v10435
        %v10484 = vunpack.c.l.b16 %v10436
        %v10485 = vunpack.c.l.b16 %v10437
        %v10486 = vunpack.c.l.b16 %v10438
        %v10487 = vunpack.c.l.b16 %v10439
        %v10488 = vunpack.c.l.b16 %v10440
        %v10489 = vunpack.c.l.b16 %v10441
        %v10490 = vunpack.c.l.b16 %v10442
        %v10491 = vunpack.c.l.b16 %v10443
        %v10492 = vunpack.c.l.b16 %v10444
        %v10493 = vunpack.c.l.b16 %v10445
        %v10494 = vunpack.c.l.b16 %v10446
        %v10495 = vunpack.c.l.b16 %v10447
        %v10496 = vunpack.c.l.b16 %v10448
        %v10497 = vpack.c.b16 %v10482, %v10481
        %v10498 = vpack.c.b16 %v10484, %v10483
        %v10499 = vpack.c.b16 %v10486, %v10485
        %v10500 = vpack.c.b16 %v10488, %v10487
        %v10501 = vpack.c.b16 %v10490, %v10489
        %v10502 = vpack.c.b16 %v10492, %v10491
        %v10503 = vpack.c.b16 %v10494, %v10493
        %v10504 = vpack.c.b16 %v10496, %v10495
        %10513 = vmatprep.subr.bf16.mxu0 0
        %10514 = vmatpush1.bf16.msra.mxu0 %v10504
        %10515 = vmatprep.subr.bf16.mxu0 0
        %10516 = vmatpush1.bf16.msra.mxu0 %v10503
        %10517 = vmatprep.subr.bf16.mxu0 0
        %10518 = vmatpush1.bf16.msra.mxu0 %v10502
        %10519 = vmatprep.subr.bf16.mxu0 0
        %10520 = vmatpush1.bf16.msra.mxu0 %v10501
        %10521 = vmatprep.subr.bf16.mxu0 0
        %10522 = vmatpush1.bf16.msra.mxu0 %v10500
        %10523 = vmatprep.subr.bf16.mxu0 0
        %10524 = vmatpush1.bf16.msra.mxu0 %v10499
        %10525 = vmatprep.subr.bf16.mxu0 0
        %10526 = vmatpush1.bf16.msra.mxu0 %v10498
        %10527 = vmatprep.subr.bf16.mxu0 0
        %10528 = vmatpush1.bf16.msra.mxu0 %v10497
        %10529 = vmatprep.subr.bf16.mxu0 0
        %10530 = vmatpush2.bf16.msra.mxu0 0
        %10531 = vmatprep.subr.bf16.mxu0 0
        %10532 = vmatpush2.bf16.msra.mxu0 0
        %10533 = vmatprep.subr.bf16.mxu0 0
        %10534 = vmatpush2.bf16.msra.mxu0 0
        %10535 = vmatprep.subr.bf16.mxu0 0
        %10536 = vmatpush2.bf16.msra.mxu0 0
        %10537 = vmatprep.subr.bf16.mxu0 0
        %10538 = vmatpush2.bf16.msra.mxu0 0
        %10539 = vmatprep.subr.bf16.mxu0 0
        %10540 = vmatpush2.bf16.msra.mxu0 0
        %10541 = vmatprep.subr.bf16.mxu0 0
        %10542 = vmatpush2.bf16.msra.mxu0 0
        %10543 = vmatprep.subr.bf16.mxu0 0
        %10544 = vmatpush2.bf16.msra.mxu0 0
        %10545 = vmatprep.mubr.bf16.mxu0 0
        %10546 = vmatmul.mubr.bf16.gmra.mxu0 %v10463
        %v10547 = vpop.f32.mrf.mxu0
        %v10548 = vadd.f32 0.0, %v10547
        %v10549 = vpop.f32.mrf.mxu0
        %v10550 = vpop.f32.mrf.mxu0
        %v10551 = vpop.f32.mrf.mxu0
        %10552 = vdwg.mxu0
        %v10553 = vadd.f32 %v10431, %v10548
        %v10554 = vld [vmem:[#allocation2 + $0x1c] sm:$0x4]
        %v10555 = vld [vmem:[#allocation2 + $0x3c] sm:$0x4]
        %v10556 = vld [vmem:[#allocation2 + $0x5c] sm:$0x4]
        %v10557 = vld [vmem:[#allocation2 + $0x7c] sm:$0x4]
        %v10558 = vld [vmem:[#allocation2 + $0x9c] sm:$0x4]
        %v10559 = vld [vmem:[#allocation2 + $0xbc] sm:$0x4]
        %v10560 = vld [vmem:[#allocation2 + $0xdc] sm:$0x4]
        %v10561 = vld [vmem:[#allocation2 + $0xfc] sm:$0x4]
        %s10562 = scalar_lea.vmem %s3, 3840
        %v10563 = vld [vmem:[%s10562] sm:$0xf]
        %v10564 = vld [vmem:[%s10562 + $0x4] sm:$0xf]
        %v10565 = vld [vmem:[%s10562 + $0x8] sm:$0xf]
        %v10566 = vld [vmem:[%s10562 + $0xc] sm:$0xf]
        %v10567 = vld [vmem:[%s10562 + $0x10] sm:$0xf]
        %v10568 = vld [vmem:[%s10562 + $0x14] sm:$0xf]
        %v10569 = vld [vmem:[%s10562 + $0x18] sm:$0xf]
        %v10570 = vld [vmem:[%s10562 + $0x1c] sm:$0xf]
        %v10571 = vld [vmem:[%s10562 + $0x20] sm:$0xf]
        %v10572 = vld [vmem:[%s10562 + $0x24] sm:$0xf]
        %v10573 = vld [vmem:[%s10562 + $0x28] sm:$0xf]
        %v10574 = vld [vmem:[%s10562 + $0x2c] sm:$0xf]
        %v10575 = vld [vmem:[%s10562 + $0x30] sm:$0xf]
        %v10576 = vld [vmem:[%s10562 + $0x34] sm:$0xf]
        %v10577 = vld [vmem:[%s10562 + $0x38] sm:$0xf]
        %v10578 = vld [vmem:[%s10562 + $0x3c] sm:$0xf]
        %v10587 = vunpack.c.l.b16 %v10554
        %v10588 = vunpack.c.l.b16 %v10555
        %v10589 = vunpack.c.l.b16 %v10556
        %v10590 = vunpack.c.l.b16 %v10557
        %v10591 = vunpack.c.l.b16 %v10558
        %v10592 = vunpack.c.l.b16 %v10559
        %v10593 = vunpack.c.l.b16 %v10560
        %v10594 = vunpack.c.l.b16 %v10561
        %v10595 = vpack.c.b16 %v10587, %v10587
        %v10596 = vpack.c.b16 %v10588, %v10588
        %v10597 = vpack.c.b16 %v10589, %v10589
        %v10598 = vpack.c.b16 %v10590, %v10590
        %v10599 = vpack.c.b16 %v10591, %v10591
        %v10600 = vpack.c.b16 %v10592, %v10592
        %v10601 = vpack.c.b16 %v10593, %v10593
        %v10602 = vpack.c.b16 %v10594, %v10594
        %v10603 = vunpack.c.l.b16 %v10595
        %v10604 = vunpack.c.l.b16 %v10596
        %v10605 = vunpack.c.l.b16 %v10597
        %v10606 = vunpack.c.l.b16 %v10598
        %v10607 = vunpack.c.l.b16 %v10599
        %v10608 = vunpack.c.l.b16 %v10600
        %v10609 = vunpack.c.l.b16 %v10601
        %v10610 = vunpack.c.l.b16 %v10602
        %v10611 = vrot.slane %v10603, 4
        %v10612 = vrot.slane %v10604, 3
        %v10613 = vsel %vm2104, %v10612, %v10611
        %v10614 = vrot.slane %v10605, 2
        %v10615 = vsel %vm2107, %v10614, %v10613
        %v10616 = vrot.slane %v10606, 1
        %v10617 = vsel %vm2110, %v10616, %v10615
        %v10618 = vsel %vm2113, %v10607, %v10617
        %v10619 = vrot.slane %v10608, 7
        %v10620 = vsel %vm2116, %v10619, %v10618
        %v10621 = vrot.slane %v10609, 6
        %v10622 = vsel %vm2119, %v10621, %v10620
        %v10623 = vrot.slane %v10610, 5
        %v10624 = vsel %vm2122, %v10623, %v10622
        %v10625 = vpack.c.b16 %v10624, %v10624
        %v10643 = vunpack.c.l.b16 %v10563
        %v10644 = vunpack.c.l.b16 %v10564
        %v10645 = vunpack.c.l.b16 %v10565
        %v10646 = vunpack.c.l.b16 %v10566
        %v10647 = vunpack.c.l.b16 %v10567
        %v10648 = vunpack.c.l.b16 %v10568
        %v10649 = vunpack.c.l.b16 %v10569
        %v10650 = vunpack.c.l.b16 %v10570
        %v10651 = vunpack.c.l.b16 %v10571
        %v10652 = vunpack.c.l.b16 %v10572
        %v10653 = vunpack.c.l.b16 %v10573
        %v10654 = vunpack.c.l.b16 %v10574
        %v10655 = vunpack.c.l.b16 %v10575
        %v10656 = vunpack.c.l.b16 %v10576
        %v10657 = vunpack.c.l.b16 %v10577
        %v10658 = vunpack.c.l.b16 %v10578
        %v10659 = vpack.c.b16 %v10644, %v10643
        %v10660 = vpack.c.b16 %v10646, %v10645
        %v10661 = vpack.c.b16 %v10648, %v10647
        %v10662 = vpack.c.b16 %v10650, %v10649
        %v10663 = vpack.c.b16 %v10652, %v10651
        %v10664 = vpack.c.b16 %v10654, %v10653
        %v10665 = vpack.c.b16 %v10656, %v10655
        %v10666 = vpack.c.b16 %v10658, %v10657
        %10675 = vmatprep.subr.bf16.mxu0 0
        %10676 = vmatpush1.bf16.msra.mxu0 %v10666
        %10677 = vmatprep.subr.bf16.mxu0 0
        %10678 = vmatpush1.bf16.msra.mxu0 %v10665
        %10679 = vmatprep.subr.bf16.mxu0 0
        %10680 = vmatpush1.bf16.msra.mxu0 %v10664
        %10681 = vmatprep.subr.bf16.mxu0 0
        %10682 = vmatpush1.bf16.msra.mxu0 %v10663
        %10683 = vmatprep.subr.bf16.mxu0 0
        %10684 = vmatpush1.bf16.msra.mxu0 %v10662
        %10685 = vmatprep.subr.bf16.mxu0 0
        %10686 = vmatpush1.bf16.msra.mxu0 %v10661
        %10687 = vmatprep.subr.bf16.mxu0 0
        %10688 = vmatpush1.bf16.msra.mxu0 %v10660
        %10689 = vmatprep.subr.bf16.mxu0 0
        %10690 = vmatpush1.bf16.msra.mxu0 %v10659
        %10691 = vmatprep.subr.bf16.mxu0 0
        %10692 = vmatpush2.bf16.msra.mxu0 0
        %10693 = vmatprep.subr.bf16.mxu0 0
        %10694 = vmatpush2.bf16.msra.mxu0 0
        %10695 = vmatprep.subr.bf16.mxu0 0
        %10696 = vmatpush2.bf16.msra.mxu0 0
        %10697 = vmatprep.subr.bf16.mxu0 0
        %10698 = vmatpush2.bf16.msra.mxu0 0
        %10699 = vmatprep.subr.bf16.mxu0 0
        %10700 = vmatpush2.bf16.msra.mxu0 0
        %10701 = vmatprep.subr.bf16.mxu0 0
        %10702 = vmatpush2.bf16.msra.mxu0 0
        %10703 = vmatprep.subr.bf16.mxu0 0
        %10704 = vmatpush2.bf16.msra.mxu0 0
        %10705 = vmatprep.subr.bf16.mxu0 0
        %10706 = vmatpush2.bf16.msra.mxu0 0
        %10707 = vmatprep.mubr.bf16.mxu0 0
        %10708 = vmatmul.mubr.bf16.gmra.mxu0 %v10625
        %v10709 = vpop.f32.mrf.mxu0
        %v10710 = vadd.f32 0.0, %v10709
        %v10711 = vpop.f32.mrf.mxu0
        %v10712 = vpop.f32.mrf.mxu0
        %v10713 = vpop.f32.mrf.mxu0
        %10714 = vdwg.mxu0
        %v10715 = vadd.f32 %v10553, %v10710
        %s10716 = scalar_lea.vmem %s3, 3904
        %v10717 = vld [vmem:[%s10716] sm:$0xf]
        %v10718 = vld [vmem:[%s10716 + $0x4] sm:$0xf]
        %v10719 = vld [vmem:[%s10716 + $0x8] sm:$0xf]
        %v10720 = vld [vmem:[%s10716 + $0xc] sm:$0xf]
        %v10721 = vld [vmem:[%s10716 + $0x10] sm:$0xf]
        %v10722 = vld [vmem:[%s10716 + $0x14] sm:$0xf]
        %v10723 = vld [vmem:[%s10716 + $0x18] sm:$0xf]
        %v10724 = vld [vmem:[%s10716 + $0x1c] sm:$0xf]
        %v10725 = vld [vmem:[%s10716 + $0x20] sm:$0xf]
        %v10726 = vld [vmem:[%s10716 + $0x24] sm:$0xf]
        %v10727 = vld [vmem:[%s10716 + $0x28] sm:$0xf]
        %v10728 = vld [vmem:[%s10716 + $0x2c] sm:$0xf]
        %v10729 = vld [vmem:[%s10716 + $0x30] sm:$0xf]
        %v10730 = vld [vmem:[%s10716 + $0x34] sm:$0xf]
        %v10731 = vld [vmem:[%s10716 + $0x38] sm:$0xf]
        %v10732 = vld [vmem:[%s10716 + $0x3c] sm:$0xf]
        %v10733 = vrot.slane %v10603, 5
        %v10734 = vrot.slane %v10604, 4
        %v10735 = vsel %vm2104, %v10734, %v10733
        %v10736 = vrot.slane %v10605, 3
        %v10737 = vsel %vm2107, %v10736, %v10735
        %v10738 = vrot.slane %v10606, 2
        %v10739 = vsel %vm2110, %v10738, %v10737
        %v10740 = vrot.slane %v10607, 1
        %v10741 = vsel %vm2113, %v10740, %v10739
        %v10742 = vsel %vm2116, %v10608, %v10741
        %v10743 = vrot.slane %v10609, 7
        %v10744 = vsel %vm2119, %v10743, %v10742
        %v10745 = vrot.slane %v10610, 6
        %v10746 = vsel %vm2122, %v10745, %v10744
        %v10747 = vpack.c.b16 %v10746, %v10746
        %v10765 = vunpack.c.l.b16 %v10717
        %v10766 = vunpack.c.l.b16 %v10718
        %v10767 = vunpack.c.l.b16 %v10719
        %v10768 = vunpack.c.l.b16 %v10720
        %v10769 = vunpack.c.l.b16 %v10721
        %v10770 = vunpack.c.l.b16 %v10722
        %v10771 = vunpack.c.l.b16 %v10723
        %v10772 = vunpack.c.l.b16 %v10724
        %v10773 = vunpack.c.l.b16 %v10725
        %v10774 = vunpack.c.l.b16 %v10726
        %v10775 = vunpack.c.l.b16 %v10727
        %v10776 = vunpack.c.l.b16 %v10728
        %v10777 = vunpack.c.l.b16 %v10729
        %v10778 = vunpack.c.l.b16 %v10730
        %v10779 = vunpack.c.l.b16 %v10731
        %v10780 = vunpack.c.l.b16 %v10732
        %v10781 = vpack.c.b16 %v10766, %v10765
        %v10782 = vpack.c.b16 %v10768, %v10767
        %v10783 = vpack.c.b16 %v10770, %v10769
        %v10784 = vpack.c.b16 %v10772, %v10771
        %v10785 = vpack.c.b16 %v10774, %v10773
        %v10786 = vpack.c.b16 %v10776, %v10775
        %v10787 = vpack.c.b16 %v10778, %v10777
        %v10788 = vpack.c.b16 %v10780, %v10779
        %10797 = vmatprep.subr.bf16.mxu0 0
        %10798 = vmatpush1.bf16.msra.mxu0 %v10788
        %10799 = vmatprep.subr.bf16.mxu0 0
        %10800 = vmatpush1.bf16.msra.mxu0 %v10787
        %10801 = vmatprep.subr.bf16.mxu0 0
        %10802 = vmatpush1.bf16.msra.mxu0 %v10786
        %10803 = vmatprep.subr.bf16.mxu0 0
        %10804 = vmatpush1.bf16.msra.mxu0 %v10785
        %10805 = vmatprep.subr.bf16.mxu0 0
        %10806 = vmatpush1.bf16.msra.mxu0 %v10784
        %10807 = vmatprep.subr.bf16.mxu0 0
        %10808 = vmatpush1.bf16.msra.mxu0 %v10783
        %10809 = vmatprep.subr.bf16.mxu0 0
        %10810 = vmatpush1.bf16.msra.mxu0 %v10782
        %10811 = vmatprep.subr.bf16.mxu0 0
        %10812 = vmatpush1.bf16.msra.mxu0 %v10781
        %10813 = vmatprep.subr.bf16.mxu0 0
        %10814 = vmatpush2.bf16.msra.mxu0 0
        %10815 = vmatprep.subr.bf16.mxu0 0
        %10816 = vmatpush2.bf16.msra.mxu0 0
        %10817 = vmatprep.subr.bf16.mxu0 0
        %10818 = vmatpush2.bf16.msra.mxu0 0
        %10819 = vmatprep.subr.bf16.mxu0 0
        %10820 = vmatpush2.bf16.msra.mxu0 0
        %10821 = vmatprep.subr.bf16.mxu0 0
        %10822 = vmatpush2.bf16.msra.mxu0 0
        %10823 = vmatprep.subr.bf16.mxu0 0
        %10824 = vmatpush2.bf16.msra.mxu0 0
        %10825 = vmatprep.subr.bf16.mxu0 0
        %10826 = vmatpush2.bf16.msra.mxu0 0
        %10827 = vmatprep.subr.bf16.mxu0 0
        %10828 = vmatpush2.bf16.msra.mxu0 0
        %10829 = vmatprep.mubr.bf16.mxu0 0
        %10830 = vmatmul.mubr.bf16.gmra.mxu0 %v10747
        %v10831 = vpop.f32.mrf.mxu0
        %v10832 = vadd.f32 0.0, %v10831
        %v10833 = vpop.f32.mrf.mxu0
        %v10834 = vpop.f32.mrf.mxu0
        %v10835 = vpop.f32.mrf.mxu0
        %10836 = vdwg.mxu0
        %v10837 = vadd.f32 %v10715, %v10832
        %v10838 = vld [vmem:[#allocation2 + $0x1c] sm:$0x8]
        %v10839 = vld [vmem:[#allocation2 + $0x3c] sm:$0x8]
        %v10840 = vld [vmem:[#allocation2 + $0x5c] sm:$0x8]
        %v10841 = vld [vmem:[#allocation2 + $0x7c] sm:$0x8]
        %v10842 = vld [vmem:[#allocation2 + $0x9c] sm:$0x8]
        %v10843 = vld [vmem:[#allocation2 + $0xbc] sm:$0x8]
        %v10844 = vld [vmem:[#allocation2 + $0xdc] sm:$0x8]
        %v10845 = vld [vmem:[#allocation2 + $0xfc] sm:$0x8]
        %s10846 = scalar_lea.vmem %s3, 3968
        %v10847 = vld [vmem:[%s10846] sm:$0xf]
        %v10848 = vld [vmem:[%s10846 + $0x4] sm:$0xf]
        %v10849 = vld [vmem:[%s10846 + $0x8] sm:$0xf]
        %v10850 = vld [vmem:[%s10846 + $0xc] sm:$0xf]
        %v10851 = vld [vmem:[%s10846 + $0x10] sm:$0xf]
        %v10852 = vld [vmem:[%s10846 + $0x14] sm:$0xf]
        %v10853 = vld [vmem:[%s10846 + $0x18] sm:$0xf]
        %v10854 = vld [vmem:[%s10846 + $0x1c] sm:$0xf]
        %v10855 = vld [vmem:[%s10846 + $0x20] sm:$0xf]
        %v10856 = vld [vmem:[%s10846 + $0x24] sm:$0xf]
        %v10857 = vld [vmem:[%s10846 + $0x28] sm:$0xf]
        %v10858 = vld [vmem:[%s10846 + $0x2c] sm:$0xf]
        %v10859 = vld [vmem:[%s10846 + $0x30] sm:$0xf]
        %v10860 = vld [vmem:[%s10846 + $0x34] sm:$0xf]
        %v10861 = vld [vmem:[%s10846 + $0x38] sm:$0xf]
        %v10862 = vld [vmem:[%s10846 + $0x3c] sm:$0xf]
        %v10871 = vunpack.c.l.b16 %v10838
        %v10872 = vunpack.c.l.b16 %v10839
        %v10873 = vunpack.c.l.b16 %v10840
        %v10874 = vunpack.c.l.b16 %v10841
        %v10875 = vunpack.c.l.b16 %v10842
        %v10876 = vunpack.c.l.b16 %v10843
        %v10877 = vunpack.c.l.b16 %v10844
        %v10878 = vunpack.c.l.b16 %v10845
        %v10879 = vpack.c.b16 %v10871, %v10871
        %v10880 = vpack.c.b16 %v10872, %v10872
        %v10881 = vpack.c.b16 %v10873, %v10873
        %v10882 = vpack.c.b16 %v10874, %v10874
        %v10883 = vpack.c.b16 %v10875, %v10875
        %v10884 = vpack.c.b16 %v10876, %v10876
        %v10885 = vpack.c.b16 %v10877, %v10877
        %v10886 = vpack.c.b16 %v10878, %v10878
        %v10887 = vunpack.c.l.b16 %v10879
        %v10888 = vunpack.c.l.b16 %v10880
        %v10889 = vunpack.c.l.b16 %v10881
        %v10890 = vunpack.c.l.b16 %v10882
        %v10891 = vunpack.c.l.b16 %v10883
        %v10892 = vunpack.c.l.b16 %v10884
        %v10893 = vunpack.c.l.b16 %v10885
        %v10894 = vunpack.c.l.b16 %v10886
        %v10895 = vrot.slane %v10887, 6
        %v10896 = vrot.slane %v10888, 5
        %v10897 = vsel %vm2104, %v10896, %v10895
        %v10898 = vrot.slane %v10889, 4
        %v10899 = vsel %vm2107, %v10898, %v10897
        %v10900 = vrot.slane %v10890, 3
        %v10901 = vsel %vm2110, %v10900, %v10899
        %v10902 = vrot.slane %v10891, 2
        %v10903 = vsel %vm2113, %v10902, %v10901
        %v10904 = vrot.slane %v10892, 1
        %v10905 = vsel %vm2116, %v10904, %v10903
        %v10906 = vsel %vm2119, %v10893, %v10905
        %v10907 = vrot.slane %v10894, 7
        %v10908 = vsel %vm2122, %v10907, %v10906
        %v10909 = vpack.c.b16 %v10908, %v10908
        %v10927 = vunpack.c.l.b16 %v10847
        %v10928 = vunpack.c.l.b16 %v10848
        %v10929 = vunpack.c.l.b16 %v10849
        %v10930 = vunpack.c.l.b16 %v10850
        %v10931 = vunpack.c.l.b16 %v10851
        %v10932 = vunpack.c.l.b16 %v10852
        %v10933 = vunpack.c.l.b16 %v10853
        %v10934 = vunpack.c.l.b16 %v10854
        %v10935 = vunpack.c.l.b16 %v10855
        %v10936 = vunpack.c.l.b16 %v10856
        %v10937 = vunpack.c.l.b16 %v10857
        %v10938 = vunpack.c.l.b16 %v10858
        %v10939 = vunpack.c.l.b16 %v10859
        %v10940 = vunpack.c.l.b16 %v10860
        %v10941 = vunpack.c.l.b16 %v10861
        %v10942 = vunpack.c.l.b16 %v10862
        %v10943 = vpack.c.b16 %v10928, %v10927
        %v10944 = vpack.c.b16 %v10930, %v10929
        %v10945 = vpack.c.b16 %v10932, %v10931
        %v10946 = vpack.c.b16 %v10934, %v10933
        %v10947 = vpack.c.b16 %v10936, %v10935
        %v10948 = vpack.c.b16 %v10938, %v10937
        %v10949 = vpack.c.b16 %v10940, %v10939
        %v10950 = vpack.c.b16 %v10942, %v10941
        %10959 = vmatprep.subr.bf16.mxu0 0
        %10960 = vmatpush1.bf16.msra.mxu0 %v10950
        %10961 = vmatprep.subr.bf16.mxu0 0
        %10962 = vmatpush1.bf16.msra.mxu0 %v10949
        %10963 = vmatprep.subr.bf16.mxu0 0
        %10964 = vmatpush1.bf16.msra.mxu0 %v10948
        %10965 = vmatprep.subr.bf16.mxu0 0
        %10966 = vmatpush1.bf16.msra.mxu0 %v10947
        %10967 = vmatprep.subr.bf16.mxu0 0
        %10968 = vmatpush1.bf16.msra.mxu0 %v10946
        %10969 = vmatprep.subr.bf16.mxu0 0
        %10970 = vmatpush1.bf16.msra.mxu0 %v10945
        %10971 = vmatprep.subr.bf16.mxu0 0
        %10972 = vmatpush1.bf16.msra.mxu0 %v10944
        %10973 = vmatprep.subr.bf16.mxu0 0
        %10974 = vmatpush1.bf16.msra.mxu0 %v10943
        %10975 = vmatprep.subr.bf16.mxu0 0
        %10976 = vmatpush2.bf16.msra.mxu0 0
        %10977 = vmatprep.subr.bf16.mxu0 0
        %10978 = vmatpush2.bf16.msra.mxu0 0
        %10979 = vmatprep.subr.bf16.mxu0 0
        %10980 = vmatpush2.bf16.msra.mxu0 0
        %10981 = vmatprep.subr.bf16.mxu0 0
        %10982 = vmatpush2.bf16.msra.mxu0 0
        %10983 = vmatprep.subr.bf16.mxu0 0
        %10984 = vmatpush2.bf16.msra.mxu0 0
        %10985 = vmatprep.subr.bf16.mxu0 0
        %10986 = vmatpush2.bf16.msra.mxu0 0
        %10987 = vmatprep.subr.bf16.mxu0 0
        %10988 = vmatpush2.bf16.msra.mxu0 0
        %10989 = vmatprep.subr.bf16.mxu0 0
        %10990 = vmatpush2.bf16.msra.mxu0 0
        %10991 = vmatprep.mubr.bf16.mxu0 0
        %10992 = vmatmul.mubr.bf16.gmra.mxu0 %v10909
        %v10993 = vpop.f32.mrf.mxu0
        %v10994 = vadd.f32 0.0, %v10993
        %v10995 = vpop.f32.mrf.mxu0
        %v10996 = vpop.f32.mrf.mxu0
        %v10997 = vpop.f32.mrf.mxu0
        %10998 = vdwg.mxu0
        %v10999 = vadd.f32 %v10837, %v10994
        %s11000 = scalar_lea.vmem %s3, 4032
        %v11001 = vld [vmem:[%s11000] sm:$0xf]
        %v11002 = vld [vmem:[%s11000 + $0x4] sm:$0xf]
        %v11003 = vld [vmem:[%s11000 + $0x8] sm:$0xf]
        %v11004 = vld [vmem:[%s11000 + $0xc] sm:$0xf]
        %v11005 = vld [vmem:[%s11000 + $0x10] sm:$0xf]
        %v11006 = vld [vmem:[%s11000 + $0x14] sm:$0xf]
        %v11007 = vld [vmem:[%s11000 + $0x18] sm:$0xf]
        %v11008 = vld [vmem:[%s11000 + $0x1c] sm:$0xf]
        %v11009 = vld [vmem:[%s11000 + $0x20] sm:$0xf]
        %v11010 = vld [vmem:[%s11000 + $0x24] sm:$0xf]
        %v11011 = vld [vmem:[%s11000 + $0x28] sm:$0xf]
        %v11012 = vld [vmem:[%s11000 + $0x2c] sm:$0xf]
        %v11013 = vld [vmem:[%s11000 + $0x30] sm:$0xf]
        %v11014 = vld [vmem:[%s11000 + $0x34] sm:$0xf]
        %v11015 = vld [vmem:[%s11000 + $0x38] sm:$0xf]
        %v11016 = vld [vmem:[%s11000 + $0x3c] sm:$0xf]
        %v11017 = vrot.slane %v10887, 7
        %v11018 = vrot.slane %v10888, 6
        %v11019 = vsel %vm2104, %v11018, %v11017
        %v11020 = vrot.slane %v10889, 5
        %v11021 = vsel %vm2107, %v11020, %v11019
        %v11022 = vrot.slane %v10890, 4
        %v11023 = vsel %vm2110, %v11022, %v11021
        %v11024 = vrot.slane %v10891, 3
        %v11025 = vsel %vm2113, %v11024, %v11023
        %v11026 = vrot.slane %v10892, 2
        %v11027 = vsel %vm2116, %v11026, %v11025
        %v11028 = vrot.slane %v10893, 1
        %v11029 = vsel %vm2119, %v11028, %v11027
        %v11030 = vsel %vm2122, %v10894, %v11029
        %v11031 = vpack.c.b16 %v11030, %v11030
        %v11049 = vunpack.c.l.b16 %v11001
        %v11050 = vunpack.c.l.b16 %v11002
        %v11051 = vunpack.c.l.b16 %v11003
        %v11052 = vunpack.c.l.b16 %v11004
        %v11053 = vunpack.c.l.b16 %v11005
        %v11054 = vunpack.c.l.b16 %v11006
        %v11055 = vunpack.c.l.b16 %v11007
        %v11056 = vunpack.c.l.b16 %v11008
        %v11057 = vunpack.c.l.b16 %v11009
        %v11058 = vunpack.c.l.b16 %v11010
        %v11059 = vunpack.c.l.b16 %v11011
        %v11060 = vunpack.c.l.b16 %v11012
        %v11061 = vunpack.c.l.b16 %v11013
        %v11062 = vunpack.c.l.b16 %v11014
        %v11063 = vunpack.c.l.b16 %v11015
        %v11064 = vunpack.c.l.b16 %v11016
        %v11065 = vpack.c.b16 %v11050, %v11049
        %v11066 = vpack.c.b16 %v11052, %v11051
        %v11067 = vpack.c.b16 %v11054, %v11053
        %v11068 = vpack.c.b16 %v11056, %v11055
        %v11069 = vpack.c.b16 %v11058, %v11057
        %v11070 = vpack.c.b16 %v11060, %v11059
        %v11071 = vpack.c.b16 %v11062, %v11061
        %v11072 = vpack.c.b16 %v11064, %v11063
        %11081 = vmatprep.subr.bf16.mxu0 0
        %11082 = vmatpush1.bf16.msra.mxu0 %v11072
        %11083 = vmatprep.subr.bf16.mxu0 0
        %11084 = vmatpush1.bf16.msra.mxu0 %v11071
        %11085 = vmatprep.subr.bf16.mxu0 0
        %11086 = vmatpush1.bf16.msra.mxu0 %v11070
        %11087 = vmatprep.subr.bf16.mxu0 0
        %11088 = vmatpush1.bf16.msra.mxu0 %v11069
        %11089 = vmatprep.subr.bf16.mxu0 0
        %11090 = vmatpush1.bf16.msra.mxu0 %v11068
        %11091 = vmatprep.subr.bf16.mxu0 0
        %11092 = vmatpush1.bf16.msra.mxu0 %v11067
        %11093 = vmatprep.subr.bf16.mxu0 0
        %11094 = vmatpush1.bf16.msra.mxu0 %v11066
        %11095 = vmatprep.subr.bf16.mxu0 0
        %11096 = vmatpush1.bf16.msra.mxu0 %v11065
        %11097 = vmatprep.subr.bf16.mxu0 0
        %11098 = vmatpush2.bf16.msra.mxu0 0
        %11099 = vmatprep.subr.bf16.mxu0 0
        %11100 = vmatpush2.bf16.msra.mxu0 0
        %11101 = vmatprep.subr.bf16.mxu0 0
        %11102 = vmatpush2.bf16.msra.mxu0 0
        %11103 = vmatprep.subr.bf16.mxu0 0
        %11104 = vmatpush2.bf16.msra.mxu0 0
        %11105 = vmatprep.subr.bf16.mxu0 0
        %11106 = vmatpush2.bf16.msra.mxu0 0
        %11107 = vmatprep.subr.bf16.mxu0 0
        %11108 = vmatpush2.bf16.msra.mxu0 0
        %11109 = vmatprep.subr.bf16.mxu0 0
        %11110 = vmatpush2.bf16.msra.mxu0 0
        %11111 = vmatprep.subr.bf16.mxu0 0
        %11112 = vmatpush2.bf16.msra.mxu0 0
        %11113 = vmatprep.mubr.bf16.mxu0 0
        %11114 = vmatmul.mubr.bf16.gmra.mxu0 %v11031
        %v11115 = vpop.f32.mrf.mxu0
        %v11116 = vadd.f32 0.0, %v11115
        %v11117 = vpop.f32.mrf.mxu0
        %v11118 = vpop.f32.mrf.mxu0
        %v11119 = vpop.f32.mrf.mxu0
        %11120 = vdwg.mxu0
        %v11121 = vadd.f32 %v10999, %v11116
        %v11122 = vld [vmem:[%s4] sm:$0x1]
        %v11124 = vlaneseq
        %v11125 = vshrl.u32 %v11124, 7
        %v11126 = vsub.s32 0, %v11125
        %v11127 = vrot.slane %v11122, %v11126
        %v11129 = vadd.f32 %v11121, %v11127
        %11130 = vst [vmem:[%s220] sm:$0xff] %v11129
        %s11131 = sand.u32 %s137, 1
        %s11132 = scalar_lea.sflag [#allocation4], %s11131
        %s11133 = sand.u32 %s137, 1
        %s11134 = smul.addr %s11133, 8
        %s11135 = scalar_lea.vmem [#allocation3], %s11134
        // Predicated region
        $region41: #{_lambda_.1} parent=39 // pred_check
          %p11136 = pneg %p147
        $region42: #{_lambda_.1} parent=39 // pred_check_branch
          %11138 = sbr.rel (%p11136) target = $region44
        $region43: #{_lambda_.1} parent=39 // pred_region
          %s11140 = ssub.s32 128, 128
          %11141 = vsyncadd %s11132, %s11140
          %s11142 = smul.addr %s19, 128
          %s11143 = scalar_lea.hbm %s5, %s11142
          %s11145 = sshll.u32 %s11135, 4
          %s11146 = int_to_ptr.vmem [resolvable:$true] %s11145
          %11148 = dma.vmem_to_hbm [thread:$0]  %s11146, 128, %s11143, %s11132
        $region44: #{_lambda_.1} parent=39 // pred_fallthru
          _
      $region40: #{_lambda_.1} parent=5 // pred_fallthru
        _
      %p11149 = scmp.le.s32.totalorder 2, %s14
      // Predicated region
      $region45: #{_lambda_.1} parent=5 // pred_check
        %p11150 = pneg %p11149
      $region46: #{_lambda_.1} parent=5 // pred_check_branch
        %11152 = sbr.rel (%p11150) target = $region48
      $region47: #{_lambda_.1} parent=5 // pred_region
        %s11153 = ssub.s32 %s14, 2
        // Predicated region
        $region49: #{_lambda_.1} parent=47 // pred_check
          %p11154 = pneg %p153
        $region50: #{_lambda_.1} parent=47 // pred_check_branch
          %11156 = sbr.rel (%p11154) target = $region52
        $region51: #{_lambda_.1} parent=47 // pred_region
          %s11157 = sand.u32 %s138, 1
          %s11158 = scalar_lea.sflag [#allocation4], %s11157
          %s11159 = sand.u32 %s138, 1
          %s11160 = smul.addr %s11159, 8
          %s11161 = scalar_lea.vmem [#allocation3], %s11160
          %11162 = dma.done %s11158, 128
        $region52: #{_lambda_.1} parent=47 // pred_fallthru
          _
      $region48: #{_lambda_.1} parent=5 // pred_fallthru
        _
    $region6: #{_lambda_.1} parent=1 // loop_footer
      %s18 = sadd.s32 1, %s14
    $region7: #{_lambda_.1} parent=1 // loop_footer_branch
      %13 = sbr.rel target = $region3
    $region8: #{_lambda_.1} parent=1 // loop_exit
      _
    %11163 = vsyncpa [#allocation4], 1
    %s11164 = scalar_lea.sflag [#allocation4], 1
    %11165 = vsyncpa %s11164, 1

</llo_original>
